<compile_context>
chip_gen: v7x
topology: tpu7x:2x2x1
jax: 0.10.0
libtpu: 0.0.40
codegen_flags: <defaults>
</compile_context>

<pallas_src>
import numpy as np

import jax
import jax.numpy as jnp
from jax.experimental import pallas as pl
from jax.experimental.pallas import tpu as pltpu

VMEM = pl.BlockSpec(memory_space=pltpu.MemorySpace.VMEM)

BLK = 16                    # lanes reserved per conv channel (max padded width = 16)
NCH = 7                     # conv output channels
LANES = NCH * BLK           # 112
FINAL_W = 14                # final CNN width
SEQ_LEN = 14                # final CNN height == LSTM sequence length

# (Hin, Win, Cin, pool H-stride) for the 7 conv+pool blocks (input x is (B, 66, 7))
LAYER_CFG = (
    (66, 7, 1, 2), (34, 8, 7, 2), (18, 9, 7, 2),
    (10, 10, 7, 1), (11, 11, 7, 1), (12, 12, 7, 1), (13, 13, 7, 1),
)
MAX_ROWS = max(h for h, _, _, _ in LAYER_CFG) + 2      # 68 (halo scratch rows)


# --------------------------------------------------------------------------
# Kernel 1: fused CNN stack (all 7 conv+relu+pool layers in one pallas_call)
# --------------------------------------------------------------------------
def _cnn_kernel(x_ref, *refs):
    n_l = len(LAYER_CFG)
    wrefs = refs[:2 * n_l]                       # (Mcat_0, brow_0, ..., Mcat_6, brow_6)
    se_ref, so_ref = refs[2 * n_l], refs[2 * n_l + 1]
    out_ref = refs[2 * n_l + 2]
    pad_ref = refs[2 * n_l + 3]                  # VMEM halo scratch (68, 128)

    x = x_ref[0]                                 # (66, 7)
    h0, w0 = x.shape
    # place input into the 16-lane block convention (value w -> lane w+1)
    cur = jnp.concatenate(
        [jnp.zeros((h0, 1), jnp.float32), x,
         jnp.zeros((h0, BLK - 1 - w0), jnp.float32)], axis=1)          # (66, 16)

    for l, (hin, win, cin, sh) in enumerate(LAYER_CFG):
        lin = cin * BLK
        m_ref, b_ref = wrefs[2 * l], wrefs[2 * l + 1]

        # stage the activation with a zero row-halo in VMEM scratch
        zrow = jnp.zeros((1, pad_ref.shape[1]), jnp.float32)
        pad_ref[0:1, :] = zrow
        pad_ref[hin + 1:hin + 2, :] = zrow
        pad_ref[1:hin + 1, 0:lin] = cur

        # 3x3 conv + bias + ReLU as ONE lane-dense MXU matmul
        rows = jnp.concatenate(
            [pad_ref[0:hin, 0:lin], pad_ref[1:hin + 1, 0:lin],
             pad_ref[2:hin + 2, 0:lin]], axis=1)                       # (hin, 3*lin)
        conv = jnp.maximum(
            jnp.dot(rows, m_ref[...], preferred_element_type=jnp.float32)
            + b_ref[...], 0.0)                                         # (hin, 112)

        # MaxPool width direction (kernel 2, stride 1, pad 1): shifted-lane max
        shifted = jnp.concatenate(
            [jnp.zeros((hin, 1), jnp.float32), conv[:, :LANES - 1]], axis=1)
        wp = jnp.maximum(conv, shifted)                                # (hin, 112)

        # MaxPool height direction
        if sh == 2:
            hout = hin // 2 + 1
            hp = jnp.maximum(
                jnp.dot(se_ref[0:hout, 0:hin], wp,
                        preferred_element_type=jnp.float32),
                jnp.dot(so_ref[0:hout, 0:hin], wp,
                        preferred_element_type=jnp.float32))
        else:
            hout = hin + 1
            pad_ref[1:hin + 1, 0:LANES] = wp
            hp = jnp.maximum(pad_ref[0:hout, 0:LANES],
                             pad_ref[1:hout + 1, 0:LANES])
        cur = hp                                                       # (hout, 112)

    # TODO(synk): nn.Dropout(0.2) is train-time stochastic; eval-mode identity here.
    out_ref[0] = cur                                                   # (14, 112)


def cnn_stack(x, conv_mats, sel_e, sel_o):
    B = x.shape[0]
    in_specs = [pl.BlockSpec((1,) + x.shape[1:], lambda b: (0, 0, 0) if False else (b, 0, 0))]
    args = [x]
    for (m, br) in conv_mats:
        in_specs.append(pl.BlockSpec(m.shape, lambda b: (0, 0)))
        in_specs.append(pl.BlockSpec(br.shape, lambda b: (0, 0)))
        args += [m, br]
    in_specs += [pl.BlockSpec(sel_e.shape, lambda b: (0, 0)),
                 pl.BlockSpec(sel_o.shape, lambda b: (0, 0))]
    args += [sel_e, sel_o]
    return pl.pallas_call(
        _cnn_kernel,
        out_shape=jax.ShapeDtypeStruct((B, SEQ_LEN, LANES), jnp.float32),
        grid=(B,),
        in_specs=in_specs,
        out_specs=pl.BlockSpec((1, SEQ_LEN, LANES), lambda b: (b, 0, 0)),
        scratch_shapes=[pltpu.VMEM((MAX_ROWS, 128), jnp.float32)],
        compiler_params=pltpu.CompilerParams(dimension_semantics=("parallel",)),
    )(*args)


# --------------------------------------------------------------------------
# Kernel 2: fused bidirectional LSTM + (degenerate) attention + MLP head
# --------------------------------------------------------------------------
def _sigmoid(x):
    # sigmoid(x) = 0.5 * (1 + tanh(x/2)): keeps the transcendental on the EUP,
    # no VALU-side reciprocal on the serial recurrence path.
    return 0.5 * jnp.tanh(0.5 * x) + 0.5


def _bilstm_head_kernel(x_ref, win_ref, bin_ref, wrec_ref,
                        fc1w_ref, fc1b_ref, fc2w_ref, fc2b_ref,
                        out_ref, xg_ref, hf_ref, hb_ref):
    T, B, F2 = x_ref.shape
    H = wrec_ref.shape[0] // 2
    G = 2 * H                                  # per-gate width (fwd|bwd interleaved)

    # Input projections of every step, both directions, in one MXU matmul.
    x2 = x_ref[...].reshape(T * B, F2)
    xg = jnp.dot(x2, win_ref[...], preferred_element_type=jnp.float32) + bin_ref[...]
    xg_ref[...] = xg.reshape(T, B, 4 * G)

    h = jnp.zeros((B, 2 * H), jnp.float32)     # [h_fwd | h_bwd]
    c = jnp.zeros((B, 2 * H), jnp.float32)
    for t in range(T):                         # static unroll (T = 14)
        gates = xg_ref[t] + jnp.dot(h, wrec_ref[...],
                                    preferred_element_type=jnp.float32)  # (B, 8H)
        i = _sigmoid(gates[:, 0:G])            # 128-lane aligned gate slices
        f = _sigmoid(gates[:, G:2 * G])
        g = jnp.tanh(gates[:, 2 * G:3 * G])
        o = _sigmoid(gates[:, 3 * G:4 * G])
        c = f * c + i * g
        h = o * jnp.tanh(c)
        hf_ref[t] = h[:, 0:H]                  # forward hidden state of time t
        hb_ref[T - 1 - t] = h[:, H:2 * H]      # backward hidden state of time T-1-t

    # Attention: scores are broadcast identically over the 2H channels, so the
    # softmax is EXACTLY uniform (1/(2H)); e1/e2/attention_weights cannot affect
    # the output and attention_output == channel mean of lstm_out.
    sf = jnp.sum(hf_ref[...], axis=2)          # (T, B)
    sb = jnp.sum(hb_ref[...], axis=2)          # (T, B)
    ao = (sf + sb) * (1.0 / (2.0 * H))         # (T, B) == attention_output^T

    z1 = jnp.maximum(
        jnp.dot(fc1w_ref[...], ao, preferred_element_type=jnp.float32)
        + fc1b_ref[...], 0.0)                  # (8, B)
    out_ref[...] = (jnp.dot(fc2w_ref[...], z1, preferred_element_type=jnp.float32)
                    + fc2b_ref[...])           # (num_classes, B)


def bilstm_attn_head(xcat, w_in, b_in, w_rec, fc1_w, fc1_b, fc2_w, fc2_b):
    T, B, _ = xcat.shape
    H = w_rec.shape[0] // 2
    C = fc2_w.shape[0]
    return pl.pallas_call(
        _bilstm_head_kernel,
        out_shape=jax.ShapeDtypeStruct((C, B), jnp.float32),
        in_specs=[VMEM] * 8,
        out_specs=VMEM,
        scratch_shapes=[
            pltpu.VMEM((T, B, 8 * H), jnp.float32),   # precomputed input projections
            pltpu.VMEM((T, B, H), jnp.float32),       # forward hidden states
            pltpu.VMEM((T, B, H), jnp.float32),       # backward hidden states
        ],
    )(xcat, w_in, b_in, w_rec, fc1_w, fc1_b, fc2_w, fc2_b)


# --------------------------------------------------------------------------
# Parameter preparation (torch-shaped params -> kernel-ready lane-dense tensors)
# --------------------------------------------------------------------------
def _conv_mats(w, b, win):
    """w: (Cout, Cin, 3, 3) OIHW, b: (Cout,) -> Mcat (3*Cin*16, 112), brow (1, 112)."""
    cout, cin = int(w.shape[0]), int(w.shape[1])
    P = np.zeros((3, BLK, BLK), np.float32)
    for dx in range(3):
        for wo in range(win):
            P[dx, wo + dx, wo + 1] = 1.0       # padded-input lane wo+dx -> output lane wo+1
    Pj = jnp.asarray(P)
    mats = []
    for dy in range(3):
        m4 = jnp.einsum('oid,dpq->ipoq', w[:, :, dy, :], Pj)   # (Cin,16,Cout,16)
        mats.append(m4.reshape(cin * BLK, cout * BLK))
    mcat = jnp.concatenate(mats, axis=0)                        # (3*Cin*16, 112)
    mask = np.zeros((BLK,), np.float32)
    mask[1:win + 1] = 1.0                                       # bias only on real columns
    brow = (b[:, None] * jnp.asarray(mask)[None, :]).reshape(1, cout * BLK)
    return mcat, brow


def _blocked_ih(w_ih):
    """torch (4H, 7*14) -> (7*16, 4H); feature c*14+w lands on lane 16c + w + 1."""
    wt = w_ih.T.reshape(NCH, FINAL_W, -1)
    wt = jnp.pad(wt, ((0, 0), (1, 1), (0, 0)))
    return wt.reshape(NCH * BLK, -1)


def prepare_params(p):
    kp = {}
    kp["conv"] = [_conv_mats(p[f"conv{l}_w"], p[f"conv{l}_b"], win)
                  for l, (_, win, _, _) in enumerate(LAYER_CFG)]

    ho = np.arange(34)[:, None]
    r = np.arange(66)[None, :]
    kp["sel_e"] = jnp.asarray((r == 2 * ho - 1).astype(np.float32))
    kp["sel_o"] = jnp.asarray((r == 2 * ho).astype(np.float32))

    H = int(p["w_hh_f"].shape[1])
    bf = _blocked_ih(p["w_ih_f"])
    bb = _blocked_ih(p["w_ih_b"])
    w_in = jnp.zeros((2 * NCH * BLK, 8 * H), jnp.float32)
    b_in = jnp.zeros((1, 8 * H), jnp.float32)
    w_rec = jnp.zeros((2 * H, 8 * H), jnp.float32)
    for k in range(4):                         # torch gate order (i, f, g, o)
        cf = slice(2 * H * k, 2 * H * k + H)           # fwd columns of gate k
        cb = slice(2 * H * k + H, 2 * H * (k + 1))     # bwd columns of gate k
        g = slice(H * k, H * (k + 1))
        w_in = w_in.at[0:NCH * BLK, cf].set(bf[:, g])
        w_in = w_in.at[NCH * BLK:, cb].set(bb[:, g])
        b_in = b_in.at[0, cf].set(p["b_ih_f"][g] + p["b_hh_f"][g])
        b_in = b_in.at[0, cb].set(p["b_ih_b"][g] + p["b_hh_b"][g])
        w_rec = w_rec.at[0:H, cf].set(p["w_hh_f"][g, :].T)
        w_rec = w_rec.at[H:, cb].set(p["w_hh_b"][g, :].T)
    kp["w_in"], kp["b_in"], kp["w_rec"] = w_in, b_in, w_rec
    kp["fc1_w"], kp["fc1_b"] = p["fc1_w"], p["fc1_b"][:, None]
    kp["fc2_w"], kp["fc2_b"] = p["fc2_w"], p["fc2_b"][:, None]
    return kp


# --------------------------------------------------------------------------
# Full forward + deterministic parameter init (torch-equivalent shapes)
# --------------------------------------------------------------------------
def clsa_entropy_forward(params, x, e1, e2):
    # e1, e2 and the (14,1) attention weight provably do not change the output
    # (uniform softmax over identically-broadcast scores); accepted for parity.
    del e1, e2
    kp = prepare_params(params)

    seq = cnn_stack(x.astype(jnp.float32), kp["conv"], kp["sel_e"], kp["sel_o"])
    # (B, 14, 112) blocked features; build [x_t | x_{T-1-t}] so one matmul covers
    # both LSTM directions' input projections (all reshapes stay outside kernels).
    xb = jnp.transpose(seq, (1, 0, 2))                   # (T, B, 112)
    xcat = jnp.concatenate([xb, xb[::-1]], axis=-1)      # (T, B, 224)

    out = bilstm_attn_head(xcat, kp["w_in"], kp["b_in"], kp["w_rec"],
                           kp["fc1_w"], kp["fc1_b"], kp["fc2_w"], kp["fc2_b"])
    return out.T                                         # (B, num_classes)


def init_params(key, hidden=64, num_classes=2):
    ks = jax.random.split(key, 24)

    def n(k, shape, s=0.1):
        return (s * jax.random.normal(k, shape)).astype(jnp.float32)

    p = {}
    cin = 1
    for i in range(7):
        p[f"conv{i}_w"] = n(ks[i], (NCH, cin, 3, 3))     # torch OIHW
        p[f"conv{i}_b"] = n(jax.random.fold_in(ks[i], 1), (NCH,))
        cin = NCH
    D = NCH * FINAL_W                                    # 98
    p["w_ih_f"] = n(ks[8], (4 * hidden, D))
    p["w_hh_f"] = n(ks[9], (4 * hidden, hidden))
    p["b_ih_f"] = n(ks[10], (4 * hidden,))
    p["b_hh_f"] = n(ks[11], (4 * hidden,))
    p["w_ih_b"] = n(ks[12], (4 * hidden, D))
    p["w_hh_b"] = n(ks[13], (4 * hidden, hidden))
    p["b_ih_b"] = n(ks[14], (4 * hidden,))
    p["b_hh_b"] = n(ks[15], (4 * hidden,))
    p["attn_w"] = n(ks[16], (14, 1), s=0.5)              # mathematically unused
    p["fc1_w"] = n(ks[17], (8, 14))
    p["fc1_b"] = n(ks[18], (8,))
    p["fc2_w"] = n(ks[19], (num_classes, 8))
    p["fc2_b"] = n(ks[20], (num_classes,))
    return p


if __name__ == "__main__":
    key = jax.random.PRNGKey(0)
    kx, k1, k2, kp = jax.random.split(key, 4)

    B = 2                        # input (66, 7) pools down to the required (14, 14)
    x = jax.random.normal(kx, (B, 66, 7), jnp.float32)
    e1 = jax.random.normal(k1, (B, 1, 7), jnp.float32)
    e2 = jax.random.normal(k2, (B, 1, 7), jnp.float32)
    params = init_params(kp, hidden=64, num_classes=2)

    out = jax.jit(clsa_entropy_forward)(params, x, e1, e2)
    jax.block_until_ready(out)
    assert out.shape == (B, 2) and out.dtype == jnp.float32
    print("KERNEL_OK")
</pallas_src>

<mosaic_0001>
module attributes {stable_mosaic.version = 11 : i64} {
  func.func @_cnn_kernel(%arg0: i32, %arg1: memref<1x66x7xf32, #tpu.memory_space<vmem>>, %arg2: memref<48x112xf32, #tpu.memory_space<vmem>>, %arg3: memref<1x112xf32, #tpu.memory_space<vmem>>, %arg4: memref<336x112xf32, #tpu.memory_space<vmem>>, %arg5: memref<1x112xf32, #tpu.memory_space<vmem>>, %arg6: memref<336x112xf32, #tpu.memory_space<vmem>>, %arg7: memref<1x112xf32, #tpu.memory_space<vmem>>, %arg8: memref<336x112xf32, #tpu.memory_space<vmem>>, %arg9: memref<1x112xf32, #tpu.memory_space<vmem>>, %arg10: memref<336x112xf32, #tpu.memory_space<vmem>>, %arg11: memref<1x112xf32, #tpu.memory_space<vmem>>, %arg12: memref<336x112xf32, #tpu.memory_space<vmem>>, %arg13: memref<1x112xf32, #tpu.memory_space<vmem>>, %arg14: memref<336x112xf32, #tpu.memory_space<vmem>>, %arg15: memref<1x112xf32, #tpu.memory_space<vmem>>, %arg16: memref<34x66xf32, #tpu.memory_space<vmem>>, %arg17: memref<34x66xf32, #tpu.memory_space<vmem>>, %arg18: memref<1x14x112xf32, #tpu.memory_space<vmem>>, %arg19: memref<68x128xf32, #tpu.memory_space<vmem>>) attributes {dimension_semantics = [#tpu.dimension_semantics<parallel>], iteration_bounds = array<i64: 2>, scalar_prefetch = 0 : i64, scratch_operands = 1 : i64, tpu.core_type = #tpu.core_type<tc>, window_params = [{transform_indices = @transform_0, window_bounds = array<i64: 1, 66, 7>}, {pipeline_mode = #tpu.pipeline_mode<synchronous>, transform_indices = @transform_1, window_bounds = array<i64: 48, 112>}, {pipeline_mode = #tpu.pipeline_mode<synchronous>, transform_indices = @transform_2, window_bounds = array<i64: 1, 112>}, {pipeline_mode = #tpu.pipeline_mode<synchronous>, transform_indices = @transform_3, window_bounds = array<i64: 336, 112>}, {pipeline_mode = #tpu.pipeline_mode<synchronous>, transform_indices = @transform_4, window_bounds = array<i64: 1, 112>}, {pipeline_mode = #tpu.pipeline_mode<synchronous>, transform_indices = @transform_5, window_bounds = array<i64: 336, 112>}, {pipeline_mode = #tpu.pipeline_mode<synchronous>, transform_indices = @transform_6, window_bounds = array<i64: 1, 112>}, {pipeline_mode = #tpu.pipeline_mode<synchronous>, transform_indices = @transform_7, window_bounds = array<i64: 336, 112>}, {pipeline_mode = #tpu.pipeline_mode<synchronous>, transform_indices = @transform_8, window_bounds = array<i64: 1, 112>}, {pipeline_mode = #tpu.pipeline_mode<synchronous>, transform_indices = @transform_9, window_bounds = array<i64: 336, 112>}, {pipeline_mode = #tpu.pipeline_mode<synchronous>, transform_indices = @transform_10, window_bounds = array<i64: 1, 112>}, {pipeline_mode = #tpu.pipeline_mode<synchronous>, transform_indices = @transform_11, window_bounds = array<i64: 336, 112>}, {pipeline_mode = #tpu.pipeline_mode<synchronous>, transform_indices = @transform_12, window_bounds = array<i64: 1, 112>}, {pipeline_mode = #tpu.pipeline_mode<synchronous>, transform_indices = @transform_13, window_bounds = array<i64: 336, 112>}, {pipeline_mode = #tpu.pipeline_mode<synchronous>, transform_indices = @transform_14, window_bounds = array<i64: 1, 112>}, {pipeline_mode = #tpu.pipeline_mode<synchronous>, transform_indices = @transform_15, window_bounds = array<i64: 34, 66>}, {pipeline_mode = #tpu.pipeline_mode<synchronous>, transform_indices = @transform_16, window_bounds = array<i64: 34, 66>}, {transform_indices = @transform_17, window_bounds = array<i64: 1, 14, 112>}]} {
    %c0 = arith.constant 0 : index
    %c0_0 = arith.constant 0 : index
    %c0_1 = arith.constant 0 : index
    %0 = vector.load %arg1[%c0, %c0_0, %c0_1] : memref<1x66x7xf32, #tpu.memory_space<vmem>>, vector<1x66x7xf32>
    %1 = vector.shape_cast %0 : vector<1x66x7xf32> to vector<66x7xf32>
    %cst = arith.constant 0.000000e+00 : f32
    %2 = vector.broadcast %cst : f32 to vector<66x1xf32>
    %cst_2 = arith.constant 0.000000e+00 : f32
    %3 = vector.broadcast %cst_2 : f32 to vector<66x8xf32>
    %4 = tpu.concatenate %2, %1, %3 in 1 : vector<66x1xf32>, vector<66x7xf32>, vector<66x8xf32> -> vector<66x16xf32>
    %cst_3 = arith.constant 0.000000e+00 : f32
    %5 = vector.broadcast %cst_3 : f32 to vector<1x128xf32>
    %c0_4 = arith.constant 0 : index
    %c0_5 = arith.constant 0 : index
    %6 = vector.load %arg19[%c0_4, %c0_5] : memref<68x128xf32, #tpu.memory_space<vmem>>, vector<1x128xf32>
    tpu.vector_store %arg19[%c0_4, %c0_5], %5 {strides = array<i32>} : memref<68x128xf32, #tpu.memory_space<vmem>>, vector<1x128xf32>,
    %c67 = arith.constant 67 : index
    %c0_6 = arith.constant 0 : index
    %7 = vector.load %arg19[%c67, %c0_6] : memref<68x128xf32, #tpu.memory_space<vmem>>, vector<1x128xf32>
    tpu.vector_store %arg19[%c67, %c0_6], %5 {strides = array<i32>} : memref<68x128xf32, #tpu.memory_space<vmem>>, vector<1x128xf32>,
    %c1 = arith.constant 1 : index
    %c0_7 = arith.constant 0 : index
    %8 = vector.load %arg19[%c1, %c0_7] : memref<68x128xf32, #tpu.memory_space<vmem>>, vector<66x16xf32>
    tpu.vector_store %arg19[%c1, %c0_7], %4 {strides = array<i32>} : memref<68x128xf32, #tpu.memory_space<vmem>>, vector<66x16xf32>,
    %c0_8 = arith.constant 0 : index
    %c0_9 = arith.constant 0 : index
    %9 = vector.load %arg19[%c0_8, %c0_9] : memref<68x128xf32, #tpu.memory_space<vmem>>, vector<66x16xf32>
    %c1_10 = arith.constant 1 : index
    %c0_11 = arith.constant 0 : index
    %10 = vector.load %arg19[%c1_10, %c0_11] : memref<68x128xf32, #tpu.memory_space<vmem>>, vector<66x16xf32>
    %c2 = arith.constant 2 : index
    %c0_12 = arith.constant 0 : index
    %11 = vector.load %arg19[%c2, %c0_12] : memref<68x128xf32, #tpu.memory_space<vmem>>, vector<66x16xf32>
    %12 = tpu.concatenate %9, %10, %11 in 1 : vector<66x16xf32>, vector<66x16xf32>, vector<66x16xf32> -> vector<66x48xf32>
    %c0_13 = arith.constant 0 : index
    %c0_14 = arith.constant 0 : index
    %13 = vector.load %arg2[%c0_13, %c0_14] : memref<48x112xf32, #tpu.memory_space<vmem>>, vector<48x112xf32>
    %cst_15 = arith.constant dense<0.000000e+00> : vector<66x112xf32>
    %14 = tpu.matmul %12, %13, %cst_15 {dimension_numbers = #tpu.dot_dimension_numbers<[1], [0], [0], [1], [0, 0, 1, 1], [], []>} : vector<66x48xf32>, vector<48x112xf32>, vector<66x112xf32> -> vector<66x112xf32>
    %c0_16 = arith.constant 0 : index
    %c0_17 = arith.constant 0 : index
    %15 = vector.load %arg3[%c0_16, %c0_17] : memref<1x112xf32, #tpu.memory_space<vmem>>, vector<1x112xf32>
    %16 = vector.broadcast %15 : vector<1x112xf32> to vector<66x112xf32>
    %17 = arith.addf %14, %16 : vector<66x112xf32>
    %cst_18 = arith.constant 0.000000e+00 : f32
    %18 = vector.broadcast %cst_18 : f32 to vector<66x112xf32>
    %19 = arith.maximumf %17, %18 : vector<66x112xf32>
    %cst_19 = arith.constant 0.000000e+00 : f32
    %20 = vector.broadcast %cst_19 : f32 to vector<66x1xf32>
    %21 = vector.extract_strided_slice %19 {offsets = [0, 0], sizes = [66, 111], strides = [1, 1]} : vector<66x112xf32> to vector<66x111xf32>
    %22 = tpu.concatenate %20, %21 in 1 : vector<66x1xf32>, vector<66x111xf32> -> vector<66x112xf32>
    %23 = arith.maximumf %19, %22 : vector<66x112xf32>
    %c0_20 = arith.constant 0 : index
    %c0_21 = arith.constant 0 : index
    %24 = vector.load %arg16[%c0_20, %c0_21] : memref<34x66xf32, #tpu.memory_space<vmem>>, vector<34x66xf32>
    %cst_22 = arith.constant dense<0.000000e+00> : vector<34x112xf32>
    %25 = tpu.matmul %24, %23, %cst_22 {dimension_numbers = #tpu.dot_dimension_numbers<[1], [0], [0], [1], [0, 0, 1, 1], [], []>} : vector<34x66xf32>, vector<66x112xf32>, vector<34x112xf32> -> vector<34x112xf32>
    %c0_23 = arith.constant 0 : index
    %c0_24 = arith.constant 0 : index
    %26 = vector.load %arg17[%c0_23, %c0_24] : memref<34x66xf32, #tpu.memory_space<vmem>>, vector<34x66xf32>
    %cst_25 = arith.constant dense<0.000000e+00> : vector<34x112xf32>
    %27 = tpu.matmul %26, %23, %cst_25 {dimension_numbers = #tpu.dot_dimension_numbers<[1], [0], [0], [1], [0, 0, 1, 1], [], []>} : vector<34x66xf32>, vector<66x112xf32>, vector<34x112xf32> -> vector<34x112xf32>
    %28 = arith.maximumf %25, %27 : vector<34x112xf32>
    %cst_26 = arith.constant 0.000000e+00 : f32
    %29 = vector.broadcast %cst_26 : f32 to vector<1x128xf32>
    %c0_27 = arith.constant 0 : index
    %c0_28 = arith.constant 0 : index
    %30 = vector.load %arg19[%c0_27, %c0_28] : memref<68x128xf32, #tpu.memory_space<vmem>>, vector<1x128xf32>
    tpu.vector_store %arg19[%c0_27, %c0_28], %29 {strides = array<i32>} : memref<68x128xf32, #tpu.memory_space<vmem>>, vector<1x128xf32>,
    %c35 = arith.constant 35 : index
    %c0_29 = arith.constant 0 : index
    %31 = vector.load %arg19[%c35, %c0_29] : memref<68x128xf32, #tpu.memory_space<vmem>>, vector<1x128xf32>
    tpu.vector_store %arg19[%c35, %c0_29], %29 {strides = array<i32>} : memref<68x128xf32, #tpu.memory_space<vmem>>, vector<1x128xf32>,
    %c1_30 = arith.constant 1 : index
    %c0_31 = arith.constant 0 : index
    %32 = vector.load %arg19[%c1_30, %c0_31] : memref<68x128xf32, #tpu.memory_space<vmem>>, vector<34x112xf32>
    tpu.vector_store %arg19[%c1_30, %c0_31], %28 {strides = array<i32>} : memref<68x128xf32, #tpu.memory_space<vmem>>, vector<34x112xf32>,
    %c0_32 = arith.constant 0 : index
    %c0_33 = arith.constant 0 : index
    %33 = vector.load %arg19[%c0_32, %c0_33] : memref<68x128xf32, #tpu.memory_space<vmem>>, vector<34x112xf32>
    %c1_34 = arith.constant 1 : index
    %c0_35 = arith.constant 0 : index
    %34 = vector.load %arg19[%c1_34, %c0_35] : memref<68x128xf32, #tpu.memory_space<vmem>>, vector<34x112xf32>
    %c2_36 = arith.constant 2 : index
    %c0_37 = arith.constant 0 : index
    %35 = vector.load %arg19[%c2_36, %c0_37] : memref<68x128xf32, #tpu.memory_space<vmem>>, vector<34x112xf32>
    %36 = tpu.concatenate %33, %34, %35 in 1 : vector<34x112xf32>, vector<34x112xf32>, vector<34x112xf32> -> vector<34x336xf32>
    %c0_38 = arith.constant 0 : index
    %c0_39 = arith.constant 0 : index
    %37 = vector.load %arg4[%c0_38, %c0_39] : memref<336x112xf32, #tpu.memory_space<vmem>>, vector<336x112xf32>
    %cst_40 = arith.constant dense<0.000000e+00> : vector<34x112xf32>
    %38 = tpu.matmul %36, %37, %cst_40 {dimension_numbers = #tpu.dot_dimension_numbers<[1], [0], [0], [1], [0, 0, 1, 1], [], []>} : vector<34x336xf32>, vector<336x112xf32>, vector<34x112xf32> -> vector<34x112xf32>
    %c0_41 = arith.constant 0 : index
    %c0_42 = arith.constant 0 : index
    %39 = vector.load %arg5[%c0_41, %c0_42] : memref<1x112xf32, #tpu.memory_space<vmem>>, vector<1x112xf32>
    %40 = vector.broadcast %39 : vector<1x112xf32> to vector<34x112xf32>
    %41 = arith.addf %38, %40 : vector<34x112xf32>
    %cst_43 = arith.constant 0.000000e+00 : f32
    %42 = vector.broadcast %cst_43 : f32 to vector<34x112xf32>
    %43 = arith.maximumf %41, %42 : vector<34x112xf32>
    %cst_44 = arith.constant 0.000000e+00 : f32
    %44 = vector.broadcast %cst_44 : f32 to vector<34x1xf32>
    %45 = vector.extract_strided_slice %43 {offsets = [0, 0], sizes = [34, 111], strides = [1, 1]} : vector<34x112xf32> to vector<34x111xf32>
    %46 = tpu.concatenate %44, %45 in 1 : vector<34x1xf32>, vector<34x111xf32> -> vector<34x112xf32>
    %47 = arith.maximumf %43, %46 : vector<34x112xf32>
    %c0_45 = arith.constant 0 : index
    %c0_46 = arith.constant 0 : index
    %48 = vector.load %arg16[%c0_45, %c0_46] : memref<34x66xf32, #tpu.memory_space<vmem>>, vector<18x34xf32>
    %cst_47 = arith.constant dense<0.000000e+00> : vector<18x112xf32>
    %49 = tpu.matmul %48, %47, %cst_47 {dimension_numbers = #tpu.dot_dimension_numbers<[1], [0], [0], [1], [0, 0, 1, 1], [], []>} : vector<18x34xf32>, vector<34x112xf32>, vector<18x112xf32> -> vector<18x112xf32>
    %c0_48 = arith.constant 0 : index
    %c0_49 = arith.constant 0 : index
    %50 = vector.load %arg17[%c0_48, %c0_49] : memref<34x66xf32, #tpu.memory_space<vmem>>, vector<18x34xf32>
    %cst_50 = arith.constant dense<0.000000e+00> : vector<18x112xf32>
    %51 = tpu.matmul %50, %47, %cst_50 {dimension_numbers = #tpu.dot_dimension_numbers<[1], [0], [0], [1], [0, 0, 1, 1], [], []>} : vector<18x34xf32>, vector<34x112xf32>, vector<18x112xf32> -> vector<18x112xf32>
    %52 = arith.maximumf %49, %51 : vector<18x112xf32>
    %cst_51 = arith.constant 0.000000e+00 : f32
    %53 = vector.broadcast %cst_51 : f32 to vector<1x128xf32>
    %c0_52 = arith.constant 0 : index
    %c0_53 = arith.constant 0 : index
    %54 = vector.load %arg19[%c0_52, %c0_53] : memref<68x128xf32, #tpu.memory_space<vmem>>, vector<1x128xf32>
    tpu.vector_store %arg19[%c0_52, %c0_53], %53 {strides = array<i32>} : memref<68x128xf32, #tpu.memory_space<vmem>>, vector<1x128xf32>,
    %c19 = arith.constant 19 : index
    %c0_54 = arith.constant 0 : index
    %55 = vector.load %arg19[%c19, %c0_54] : memref<68x128xf32, #tpu.memory_space<vmem>>, vector<1x128xf32>
    tpu.vector_store %arg19[%c19, %c0_54], %53 {strides = array<i32>} : memref<68x128xf32, #tpu.memory_space<vmem>>, vector<1x128xf32>,
    %c1_55 = arith.constant 1 : index
    %c0_56 = arith.constant 0 : index
    %56 = vector.load %arg19[%c1_55, %c0_56] : memref<68x128xf32, #tpu.memory_space<vmem>>, vector<18x112xf32>
    tpu.vector_store %arg19[%c1_55, %c0_56], %52 {strides = array<i32>} : memref<68x128xf32, #tpu.memory_space<vmem>>, vector<18x112xf32>,
    %c0_57 = arith.constant 0 : index
    %c0_58 = arith.constant 0 : index
    %57 = vector.load %arg19[%c0_57, %c0_58] : memref<68x128xf32, #tpu.memory_space<vmem>>, vector<18x112xf32>
    %c1_59 = arith.constant 1 : index
    %c0_60 = arith.constant 0 : index
    %58 = vector.load %arg19[%c1_59, %c0_60] : memref<68x128xf32, #tpu.memory_space<vmem>>, vector<18x112xf32>
    %c2_61 = arith.constant 2 : index
    %c0_62 = arith.constant 0 : index
    %59 = vector.load %arg19[%c2_61, %c0_62] : memref<68x128xf32, #tpu.memory_space<vmem>>, vector<18x112xf32>
    %60 = tpu.concatenate %57, %58, %59 in 1 : vector<18x112xf32>, vector<18x112xf32>, vector<18x112xf32> -> vector<18x336xf32>
    %c0_63 = arith.constant 0 : index
    %c0_64 = arith.constant 0 : index
    %61 = vector.load %arg6[%c0_63, %c0_64] : memref<336x112xf32, #tpu.memory_space<vmem>>, vector<336x112xf32>
    %cst_65 = arith.constant dense<0.000000e+00> : vector<18x112xf32>
    %62 = tpu.matmul %60, %61, %cst_65 {dimension_numbers = #tpu.dot_dimension_numbers<[1], [0], [0], [1], [0, 0, 1, 1], [], []>} : vector<18x336xf32>, vector<336x112xf32>, vector<18x112xf32> -> vector<18x112xf32>
    %c0_66 = arith.constant 0 : index
    %c0_67 = arith.constant 0 : index
    %63 = vector.load %arg7[%c0_66, %c0_67] : memref<1x112xf32, #tpu.memory_space<vmem>>, vector<1x112xf32>
    %64 = vector.broadcast %63 : vector<1x112xf32> to vector<18x112xf32>
    %65 = arith.addf %62, %64 : vector<18x112xf32>
    %cst_68 = arith.constant 0.000000e+00 : f32
    %66 = vector.broadcast %cst_68 : f32 to vector<18x112xf32>
    %67 = arith.maximumf %65, %66 : vector<18x112xf32>
    %cst_69 = arith.constant 0.000000e+00 : f32
    %68 = vector.broadcast %cst_69 : f32 to vector<18x1xf32>
    %69 = vector.extract_strided_slice %67 {offsets = [0, 0], sizes = [18, 111], strides = [1, 1]} : vector<18x112xf32> to vector<18x111xf32>
    %70 = tpu.concatenate %68, %69 in 1 : vector<18x1xf32>, vector<18x111xf32> -> vector<18x112xf32>
    %71 = arith.maximumf %67, %70 : vector<18x112xf32>
    %c0_70 = arith.constant 0 : index
    %c0_71 = arith.constant 0 : index
    %72 = vector.load %arg16[%c0_70, %c0_71] : memref<34x66xf32, #tpu.memory_space<vmem>>, vector<10x18xf32>
    %cst_72 = arith.constant dense<0.000000e+00> : vector<10x112xf32>
    %73 = tpu.matmul %72, %71, %cst_72 {dimension_numbers = #tpu.dot_dimension_numbers<[1], [0], [0], [1], [0, 0, 1, 1], [], []>} : vector<10x18xf32>, vector<18x112xf32>, vector<10x112xf32> -> vector<10x112xf32>
    %c0_73 = arith.constant 0 : index
    %c0_74 = arith.constant 0 : index
    %74 = vector.load %arg17[%c0_73, %c0_74] : memref<34x66xf32, #tpu.memory_space<vmem>>, vector<10x18xf32>
    %cst_75 = arith.constant dense<0.000000e+00> : vector<10x112xf32>
    %75 = tpu.matmul %74, %71, %cst_75 {dimension_numbers = #tpu.dot_dimension_numbers<[1], [0], [0], [1], [0, 0, 1, 1], [], []>} : vector<10x18xf32>, vector<18x112xf32>, vector<10x112xf32> -> vector<10x112xf32>
    %76 = arith.maximumf %73, %75 : vector<10x112xf32>
    %cst_76 = arith.constant 0.000000e+00 : f32
    %77 = vector.broadcast %cst_76 : f32 to vector<1x128xf32>
    %c0_77 = arith.constant 0 : index
    %c0_78 = arith.constant 0 : index
    %78 = vector.load %arg19[%c0_77, %c0_78] : memref<68x128xf32, #tpu.memory_space<vmem>>, vector<1x128xf32>
    tpu.vector_store %arg19[%c0_77, %c0_78], %77 {strides = array<i32>} : memref<68x128xf32, #tpu.memory_space<vmem>>, vector<1x128xf32>,
    %c11 = arith.constant 11 : index
    %c0_79 = arith.constant 0 : index
    %79 = vector.load %arg19[%c11, %c0_79] : memref<68x128xf32, #tpu.memory_space<vmem>>, vector<1x128xf32>
    tpu.vector_store %arg19[%c11, %c0_79], %77 {strides = array<i32>} : memref<68x128xf32, #tpu.memory_space<vmem>>, vector<1x128xf32>,
    %c1_80 = arith.constant 1 : index
    %c0_81 = arith.constant 0 : index
    %80 = vector.load %arg19[%c1_80, %c0_81] : memref<68x128xf32, #tpu.memory_space<vmem>>, vector<10x112xf32>
    tpu.vector_store %arg19[%c1_80, %c0_81], %76 {strides = array<i32>} : memref<68x128xf32, #tpu.memory_space<vmem>>, vector<10x112xf32>,
    %c0_82 = arith.constant 0 : index
    %c0_83 = arith.constant 0 : index
    %81 = vector.load %arg19[%c0_82, %c0_83] : memref<68x128xf32, #tpu.memory_space<vmem>>, vector<10x112xf32>
    %c1_84 = arith.constant 1 : index
    %c0_85 = arith.constant 0 : index
    %82 = vector.load %arg19[%c1_84, %c0_85] : memref<68x128xf32, #tpu.memory_space<vmem>>, vector<10x112xf32>
    %c2_86 = arith.constant 2 : index
    %c0_87 = arith.constant 0 : index
    %83 = vector.load %arg19[%c2_86, %c0_87] : memref<68x128xf32, #tpu.memory_space<vmem>>, vector<10x112xf32>
    %84 = tpu.concatenate %81, %82, %83 in 1 : vector<10x112xf32>, vector<10x112xf32>, vector<10x112xf32> -> vector<10x336xf32>
    %c0_88 = arith.constant 0 : index
    %c0_89 = arith.constant 0 : index
    %85 = vector.load %arg8[%c0_88, %c0_89] : memref<336x112xf32, #tpu.memory_space<vmem>>, vector<336x112xf32>
    %cst_90 = arith.constant dense<0.000000e+00> : vector<10x112xf32>
    %86 = tpu.matmul %84, %85, %cst_90 {dimension_numbers = #tpu.dot_dimension_numbers<[1], [0], [0], [1], [0, 0, 1, 1], [], []>} : vector<10x336xf32>, vector<336x112xf32>, vector<10x112xf32> -> vector<10x112xf32>
    %c0_91 = arith.constant 0 : index
    %c0_92 = arith.constant 0 : index
    %87 = vector.load %arg9[%c0_91, %c0_92] : memref<1x112xf32, #tpu.memory_space<vmem>>, vector<1x112xf32>
    %88 = vector.broadcast %87 : vector<1x112xf32> to vector<10x112xf32>
    %89 = arith.addf %86, %88 : vector<10x112xf32>
    %cst_93 = arith.constant 0.000000e+00 : f32
    %90 = vector.broadcast %cst_93 : f32 to vector<10x112xf32>
    %91 = arith.maximumf %89, %90 : vector<10x112xf32>
    %cst_94 = arith.constant 0.000000e+00 : f32
    %92 = vector.broadcast %cst_94 : f32 to vector<10x1xf32>
    %93 = vector.extract_strided_slice %91 {offsets = [0, 0], sizes = [10, 111], strides = [1, 1]} : vector<10x112xf32> to vector<10x111xf32>
    %94 = tpu.concatenate %92, %93 in 1 : vector<10x1xf32>, vector<10x111xf32> -> vector<10x112xf32>
    %95 = arith.maximumf %91, %94 : vector<10x112xf32>
    %c1_95 = arith.constant 1 : index
    %c0_96 = arith.constant 0 : index
    %96 = vector.load %arg19[%c1_95, %c0_96] : memref<68x128xf32, #tpu.memory_space<vmem>>, vector<10x112xf32>
    tpu.vector_store %arg19[%c1_95, %c0_96], %95 {strides = array<i32>} : memref<68x128xf32, #tpu.memory_space<vmem>>, vector<10x112xf32>,
    %c0_97 = arith.constant 0 : index
    %c0_98 = arith.constant 0 : index
    %97 = vector.load %arg19[%c0_97, %c0_98] : memref<68x128xf32, #tpu.memory_space<vmem>>, vector<11x112xf32>
    %c1_99 = arith.constant 1 : index
    %c0_100 = arith.constant 0 : index
    %98 = vector.load %arg19[%c1_99, %c0_100] : memref<68x128xf32, #tpu.memory_space<vmem>>, vector<11x112xf32>
    %99 = arith.maximumf %97, %98 : vector<11x112xf32>
    %cst_101 = arith.constant 0.000000e+00 : f32
    %100 = vector.broadcast %cst_101 : f32 to vector<1x128xf32>
    %c0_102 = arith.constant 0 : index
    %c0_103 = arith.constant 0 : index
    %101 = vector.load %arg19[%c0_102, %c0_103] : memref<68x128xf32, #tpu.memory_space<vmem>>, vector<1x128xf32>
    tpu.vector_store %arg19[%c0_102, %c0_103], %100 {strides = array<i32>} : memref<68x128xf32, #tpu.memory_space<vmem>>, vector<1x128xf32>,
    %c12 = arith.constant 12 : index
    %c0_104 = arith.constant 0 : index
    %102 = vector.load %arg19[%c12, %c0_104] : memref<68x128xf32, #tpu.memory_space<vmem>>, vector<1x128xf32>
    tpu.vector_store %arg19[%c12, %c0_104], %100 {strides = array<i32>} : memref<68x128xf32, #tpu.memory_space<vmem>>, vector<1x128xf32>,
    %c1_105 = arith.constant 1 : index
    %c0_106 = arith.constant 0 : index
    %103 = vector.load %arg19[%c1_105, %c0_106] : memref<68x128xf32, #tpu.memory_space<vmem>>, vector<11x112xf32>
    tpu.vector_store %arg19[%c1_105, %c0_106], %99 {strides = array<i32>} : memref<68x128xf32, #tpu.memory_space<vmem>>, vector<11x112xf32>,
    %c0_107 = arith.constant 0 : index
    %c0_108 = arith.constant 0 : index
    %104 = vector.load %arg19[%c0_107, %c0_108] : memref<68x128xf32, #tpu.memory_space<vmem>>, vector<11x112xf32>
    %c1_109 = arith.constant 1 : index
    %c0_110 = arith.constant 0 : index
    %105 = vector.load %arg19[%c1_109, %c0_110] : memref<68x128xf32, #tpu.memory_space<vmem>>, vector<11x112xf32>
    %c2_111 = arith.constant 2 : index
    %c0_112 = arith.constant 0 : index
    %106 = vector.load %arg19[%c2_111, %c0_112] : memref<68x128xf32, #tpu.memory_space<vmem>>, vector<11x112xf32>
    %107 = tpu.concatenate %104, %105, %106 in 1 : vector<11x112xf32>, vector<11x112xf32>, vector<11x112xf32> -> vector<11x336xf32>
    %c0_113 = arith.constant 0 : index
    %c0_114 = arith.constant 0 : index
    %108 = vector.load %arg10[%c0_113, %c0_114] : memref<336x112xf32, #tpu.memory_space<vmem>>, vector<336x112xf32>
    %cst_115 = arith.constant dense<0.000000e+00> : vector<11x112xf32>
    %109 = tpu.matmul %107, %108, %cst_115 {dimension_numbers = #tpu.dot_dimension_numbers<[1], [0], [0], [1], [0, 0, 1, 1], [], []>} : vector<11x336xf32>, vector<336x112xf32>, vector<11x112xf32> -> vector<11x112xf32>
    %c0_116 = arith.constant 0 : index
    %c0_117 = arith.constant 0 : index
    %110 = vector.load %arg11[%c0_116, %c0_117] : memref<1x112xf32, #tpu.memory_space<vmem>>, vector<1x112xf32>
    %111 = vector.broadcast %110 : vector<1x112xf32> to vector<11x112xf32>
    %112 = arith.addf %109, %111 : vector<11x112xf32>
    %cst_118 = arith.constant 0.000000e+00 : f32
    %113 = vector.broadcast %cst_118 : f32 to vector<11x112xf32>
    %114 = arith.maximumf %112, %113 : vector<11x112xf32>
    %cst_119 = arith.constant 0.000000e+00 : f32
    %115 = vector.broadcast %cst_119 : f32 to vector<11x1xf32>
    %116 = vector.extract_strided_slice %114 {offsets = [0, 0], sizes = [11, 111], strides = [1, 1]} : vector<11x112xf32> to vector<11x111xf32>
    %117 = tpu.concatenate %115, %116 in 1 : vector<11x1xf32>, vector<11x111xf32> -> vector<11x112xf32>
    %118 = arith.maximumf %114, %117 : vector<11x112xf32>
    %c1_120 = arith.constant 1 : index
    %c0_121 = arith.constant 0 : index
    %119 = vector.load %arg19[%c1_120, %c0_121] : memref<68x128xf32, #tpu.memory_space<vmem>>, vector<11x112xf32>
    tpu.vector_store %arg19[%c1_120, %c0_121], %118 {strides = array<i32>} : memref<68x128xf32, #tpu.memory_space<vmem>>, vector<11x112xf32>,
    %c0_122 = arith.constant 0 : index
    %c0_123 = arith.constant 0 : index
    %120 = vector.load %arg19[%c0_122, %c0_123] : memref<68x128xf32, #tpu.memory_space<vmem>>, vector<12x112xf32>
    %c1_124 = arith.constant 1 : index
    %c0_125 = arith.constant 0 : index
    %121 = vector.load %arg19[%c1_124, %c0_125] : memref<68x128xf32, #tpu.memory_space<vmem>>, vector<12x112xf32>
    %122 = arith.maximumf %120, %121 : vector<12x112xf32>
    %cst_126 = arith.constant 0.000000e+00 : f32
    %123 = vector.broadcast %cst_126 : f32 to vector<1x128xf32>
    %c0_127 = arith.constant 0 : index
    %c0_128 = arith.constant 0 : index
    %124 = vector.load %arg19[%c0_127, %c0_128] : memref<68x128xf32, #tpu.memory_space<vmem>>, vector<1x128xf32>
    tpu.vector_store %arg19[%c0_127, %c0_128], %123 {strides = array<i32>} : memref<68x128xf32, #tpu.memory_space<vmem>>, vector<1x128xf32>,
    %c13 = arith.constant 13 : index
    %c0_129 = arith.constant 0 : index
    %125 = vector.load %arg19[%c13, %c0_129] : memref<68x128xf32, #tpu.memory_space<vmem>>, vector<1x128xf32>
    tpu.vector_store %arg19[%c13, %c0_129], %123 {strides = array<i32>} : memref<68x128xf32, #tpu.memory_space<vmem>>, vector<1x128xf32>,
    %c1_130 = arith.constant 1 : index
    %c0_131 = arith.constant 0 : index
    %126 = vector.load %arg19[%c1_130, %c0_131] : memref<68x128xf32, #tpu.memory_space<vmem>>, vector<12x112xf32>
    tpu.vector_store %arg19[%c1_130, %c0_131], %122 {strides = array<i32>} : memref<68x128xf32, #tpu.memory_space<vmem>>, vector<12x112xf32>,
    %c0_132 = arith.constant 0 : index
    %c0_133 = arith.constant 0 : index
    %127 = vector.load %arg19[%c0_132, %c0_133] : memref<68x128xf32, #tpu.memory_space<vmem>>, vector<12x112xf32>
    %c1_134 = arith.constant 1 : index
    %c0_135 = arith.constant 0 : index
    %128 = vector.load %arg19[%c1_134, %c0_135] : memref<68x128xf32, #tpu.memory_space<vmem>>, vector<12x112xf32>
    %c2_136 = arith.constant 2 : index
    %c0_137 = arith.constant 0 : index
    %129 = vector.load %arg19[%c2_136, %c0_137] : memref<68x128xf32, #tpu.memory_space<vmem>>, vector<12x112xf32>
    %130 = tpu.concatenate %127, %128, %129 in 1 : vector<12x112xf32>, vector<12x112xf32>, vector<12x112xf32> -> vector<12x336xf32>
    %c0_138 = arith.constant 0 : index
    %c0_139 = arith.constant 0 : index
    %131 = vector.load %arg12[%c0_138, %c0_139] : memref<336x112xf32, #tpu.memory_space<vmem>>, vector<336x112xf32>
    %cst_140 = arith.constant dense<0.000000e+00> : vector<12x112xf32>
    %132 = tpu.matmul %130, %131, %cst_140 {dimension_numbers = #tpu.dot_dimension_numbers<[1], [0], [0], [1], [0, 0, 1, 1], [], []>} : vector<12x336xf32>, vector<336x112xf32>, vector<12x112xf32> -> vector<12x112xf32>
    %c0_141 = arith.constant 0 : index
    %c0_142 = arith.constant 0 : index
    %133 = vector.load %arg13[%c0_141, %c0_142] : memref<1x112xf32, #tpu.memory_space<vmem>>, vector<1x112xf32>
    %134 = vector.broadcast %133 : vector<1x112xf32> to vector<12x112xf32>
    %135 = arith.addf %132, %134 : vector<12x112xf32>
    %cst_143 = arith.constant 0.000000e+00 : f32
    %136 = vector.broadcast %cst_143 : f32 to vector<12x112xf32>
    %137 = arith.maximumf %135, %136 : vector<12x112xf32>
    %cst_144 = arith.constant 0.000000e+00 : f32
    %138 = vector.broadcast %cst_144 : f32 to vector<12x1xf32>
    %139 = vector.extract_strided_slice %137 {offsets = [0, 0], sizes = [12, 111], strides = [1, 1]} : vector<12x112xf32> to vector<12x111xf32>
    %140 = tpu.concatenate %138, %139 in 1 : vector<12x1xf32>, vector<12x111xf32> -> vector<12x112xf32>
    %141 = arith.maximumf %137, %140 : vector<12x112xf32>
    %c1_145 = arith.constant 1 : index
    %c0_146 = arith.constant 0 : index
    %142 = vector.load %arg19[%c1_145, %c0_146] : memref<68x128xf32, #tpu.memory_space<vmem>>, vector<12x112xf32>
    tpu.vector_store %arg19[%c1_145, %c0_146], %141 {strides = array<i32>} : memref<68x128xf32, #tpu.memory_space<vmem>>, vector<12x112xf32>,
    %c0_147 = arith.constant 0 : index
    %c0_148 = arith.constant 0 : index
    %143 = vector.load %arg19[%c0_147, %c0_148] : memref<68x128xf32, #tpu.memory_space<vmem>>, vector<13x112xf32>
    %c1_149 = arith.constant 1 : index
    %c0_150 = arith.constant 0 : index
    %144 = vector.load %arg19[%c1_149, %c0_150] : memref<68x128xf32, #tpu.memory_space<vmem>>, vector<13x112xf32>
    %145 = arith.maximumf %143, %144 : vector<13x112xf32>
    %cst_151 = arith.constant 0.000000e+00 : f32
    %146 = vector.broadcast %cst_151 : f32 to vector<1x128xf32>
    %c0_152 = arith.constant 0 : index
    %c0_153 = arith.constant 0 : index
    %147 = vector.load %arg19[%c0_152, %c0_153] : memref<68x128xf32, #tpu.memory_space<vmem>>, vector<1x128xf32>
    tpu.vector_store %arg19[%c0_152, %c0_153], %146 {strides = array<i32>} : memref<68x128xf32, #tpu.memory_space<vmem>>, vector<1x128xf32>,
    %c14 = arith.constant 14 : index
    %c0_154 = arith.constant 0 : index
    %148 = vector.load %arg19[%c14, %c0_154] : memref<68x128xf32, #tpu.memory_space<vmem>>, vector<1x128xf32>
    tpu.vector_store %arg19[%c14, %c0_154], %146 {strides = array<i32>} : memref<68x128xf32, #tpu.memory_space<vmem>>, vector<1x128xf32>,
    %c1_155 = arith.constant 1 : index
    %c0_156 = arith.constant 0 : index
    %149 = vector.load %arg19[%c1_155, %c0_156] : memref<68x128xf32, #tpu.memory_space<vmem>>, vector<13x112xf32>
    tpu.vector_store %arg19[%c1_155, %c0_156], %145 {strides = array<i32>} : memref<68x128xf32, #tpu.memory_space<vmem>>, vector<13x112xf32>,
    %c0_157 = arith.constant 0 : index
    %c0_158 = arith.constant 0 : index
    %150 = vector.load %arg19[%c0_157, %c0_158] : memref<68x128xf32, #tpu.memory_space<vmem>>, vector<13x112xf32>
    %c1_159 = arith.constant 1 : index
    %c0_160 = arith.constant 0 : index
    %151 = vector.load %arg19[%c1_159, %c0_160] : memref<68x128xf32, #tpu.memory_space<vmem>>, vector<13x112xf32>
    %c2_161 = arith.constant 2 : index
    %c0_162 = arith.constant 0 : index
    %152 = vector.load %arg19[%c2_161, %c0_162] : memref<68x128xf32, #tpu.memory_space<vmem>>, vector<13x112xf32>
    %153 = tpu.concatenate %150, %151, %152 in 1 : vector<13x112xf32>, vector<13x112xf32>, vector<13x112xf32> -> vector<13x336xf32>
    %c0_163 = arith.constant 0 : index
    %c0_164 = arith.constant 0 : index
    %154 = vector.load %arg14[%c0_163, %c0_164] : memref<336x112xf32, #tpu.memory_space<vmem>>, vector<336x112xf32>
    %cst_165 = arith.constant dense<0.000000e+00> : vector<13x112xf32>
    %155 = tpu.matmul %153, %154, %cst_165 {dimension_numbers = #tpu.dot_dimension_numbers<[1], [0], [0], [1], [0, 0, 1, 1], [], []>} : vector<13x336xf32>, vector<336x112xf32>, vector<13x112xf32> -> vector<13x112xf32>
    %c0_166 = arith.constant 0 : index
    %c0_167 = arith.constant 0 : index
    %156 = vector.load %arg15[%c0_166, %c0_167] : memref<1x112xf32, #tpu.memory_space<vmem>>, vector<1x112xf32>
    %157 = vector.broadcast %156 : vector<1x112xf32> to vector<13x112xf32>
    %158 = arith.addf %155, %157 : vector<13x112xf32>
    %cst_168 = arith.constant 0.000000e+00 : f32
    %159 = vector.broadcast %cst_168 : f32 to vector<13x112xf32>
    %160 = arith.maximumf %158, %159 : vector<13x112xf32>
    %cst_169 = arith.constant 0.000000e+00 : f32
    %161 = vector.broadcast %cst_169 : f32 to vector<13x1xf32>
    %162 = vector.extract_strided_slice %160 {offsets = [0, 0], sizes = [13, 111], strides = [1, 1]} : vector<13x112xf32> to vector<13x111xf32>
    %163 = tpu.concatenate %161, %162 in 1 : vector<13x1xf32>, vector<13x111xf32> -> vector<13x112xf32>
    %164 = arith.maximumf %160, %163 : vector<13x112xf32>
    %c1_170 = arith.constant 1 : index
    %c0_171 = arith.constant 0 : index
    %165 = vector.load %arg19[%c1_170, %c0_171] : memref<68x128xf32, #tpu.memory_space<vmem>>, vector<13x112xf32>
    tpu.vector_store %arg19[%c1_170, %c0_171], %164 {strides = array<i32>} : memref<68x128xf32, #tpu.memory_space<vmem>>, vector<13x112xf32>,
    %c0_172 = arith.constant 0 : index
    %c0_173 = arith.constant 0 : index
    %166 = vector.load %arg19[%c0_172, %c0_173] : memref<68x128xf32, #tpu.memory_space<vmem>>, vector<14x112xf32>
    %c1_174 = arith.constant 1 : index
    %c0_175 = arith.constant 0 : index
    %167 = vector.load %arg19[%c1_174, %c0_175] : memref<68x128xf32, #tpu.memory_space<vmem>>, vector<14x112xf32>
    %168 = arith.maximumf %166, %167 : vector<14x112xf32>
    %c0_176 = arith.constant 0 : index
    %c0_177 = arith.constant 0 : index
    %c0_178 = arith.constant 0 : index
    %169 = vector.load %arg18[%c0_176, %c0_177, %c0_178] : memref<1x14x112xf32, #tpu.memory_space<vmem>>, vector<1x14x112xf32>
    %170 = vector.shape_cast %169 : vector<1x14x112xf32> to vector<14x112xf32>
    %171 = vector.shape_cast %168 : vector<14x112xf32> to vector<1x14x112xf32>
    tpu.vector_store %arg18[%c0_176, %c0_177, %c0_178], %171 {strides = array<i32>} : memref<1x14x112xf32, #tpu.memory_space<vmem>>, vector<1x14x112xf32>,
    return
  }
  func.func @transform_0(%arg0: i32) -> (i32, i32, i32) {
    %c0_i32 = arith.constant 0 : i32
    %c0_i32_0 = arith.constant 0 : i32
    %c0_i32_1 = arith.constant 0 : i32
    return %arg0, %c0_i32, %c0_i32_0 : i32, i32, i32
  }
  func.func @transform_1(%arg0: i32) -> (i32, i32) {
    %c0_i32 = arith.constant 0 : i32
    %c0_i32_0 = arith.constant 0 : i32
    %c0_i32_1 = arith.constant 0 : i32
    return %c0_i32, %c0_i32_0 : i32, i32
  }
  func.func @transform_2(%arg0: i32) -> (i32, i32) {
    %c0_i32 = arith.constant 0 : i32
    %c0_i32_0 = arith.constant 0 : i32
    %c0_i32_1 = arith.constant 0 : i32
    return %c0_i32, %c0_i32_0 : i32, i32
  }
  func.func @transform_3(%arg0: i32) -> (i32, i32) {
    %c0_i32 = arith.constant 0 : i32
    %c0_i32_0 = arith.constant 0 : i32
    %c0_i32_1 = arith.constant 0 : i32
    return %c0_i32, %c0_i32_0 : i32, i32
  }
  func.func @transform_4(%arg0: i32) -> (i32, i32) {
    %c0_i32 = arith.constant 0 : i32
    %c0_i32_0 = arith.constant 0 : i32
    %c0_i32_1 = arith.constant 0 : i32
    return %c0_i32, %c0_i32_0 : i32, i32
  }
  func.func @transform_5(%arg0: i32) -> (i32, i32) {
    %c0_i32 = arith.constant 0 : i32
    %c0_i32_0 = arith.constant 0 : i32
    %c0_i32_1 = arith.constant 0 : i32
    return %c0_i32, %c0_i32_0 : i32, i32
  }
  func.func @transform_6(%arg0: i32) -> (i32, i32) {
    %c0_i32 = arith.constant 0 : i32
    %c0_i32_0 = arith.constant 0 : i32
    %c0_i32_1 = arith.constant 0 : i32
    return %c0_i32, %c0_i32_0 : i32, i32
  }
  func.func @transform_7(%arg0: i32) -> (i32, i32) {
    %c0_i32 = arith.constant 0 : i32
    %c0_i32_0 = arith.constant 0 : i32
    %c0_i32_1 = arith.constant 0 : i32
    return %c0_i32, %c0_i32_0 : i32, i32
  }
  func.func @transform_8(%arg0: i32) -> (i32, i32) {
    %c0_i32 = arith.constant 0 : i32
    %c0_i32_0 = arith.constant 0 : i32
    %c0_i32_1 = arith.constant 0 : i32
    return %c0_i32, %c0_i32_0 : i32, i32
  }
  func.func @transform_9(%arg0: i32) -> (i32, i32) {
    %c0_i32 = arith.constant 0 : i32
    %c0_i32_0 = arith.constant 0 : i32
    %c0_i32_1 = arith.constant 0 : i32
    return %c0_i32, %c0_i32_0 : i32, i32
  }
  func.func @transform_10(%arg0: i32) -> (i32, i32) {
    %c0_i32 = arith.constant 0 : i32
    %c0_i32_0 = arith.constant 0 : i32
    %c0_i32_1 = arith.constant 0 : i32
    return %c0_i32, %c0_i32_0 : i32, i32
  }
  func.func @transform_11(%arg0: i32) -> (i32, i32) {
    %c0_i32 = arith.constant 0 : i32
    %c0_i32_0 = arith.constant 0 : i32
    %c0_i32_1 = arith.constant 0 : i32
    return %c0_i32, %c0_i32_0 : i32, i32
  }
  func.func @transform_12(%arg0: i32) -> (i32, i32) {
    %c0_i32 = arith.constant 0 : i32
    %c0_i32_0 = arith.constant 0 : i32
    %c0_i32_1 = arith.constant 0 : i32
    return %c0_i32, %c0_i32_0 : i32, i32
  }
  func.func @transform_13(%arg0: i32) -> (i32, i32) {
    %c0_i32 = arith.constant 0 : i32
    %c0_i32_0 = arith.constant 0 : i32
    %c0_i32_1 = arith.constant 0 : i32
    return %c0_i32, %c0_i32_0 : i32, i32
  }
  func.func @transform_14(%arg0: i32) -> (i32, i32) {
    %c0_i32 = arith.constant 0 : i32
    %c0_i32_0 = arith.constant 0 : i32
    %c0_i32_1 = arith.constant 0 : i32
    return %c0_i32, %c0_i32_0 : i32, i32
  }
  func.func @transform_15(%arg0: i32) -> (i32, i32) {
    %c0_i32 = arith.constant 0 : i32
    %c0_i32_0 = arith.constant 0 : i32
    %c0_i32_1 = arith.constant 0 : i32
    return %c0_i32, %c0_i32_0 : i32, i32
  }
  func.func @transform_16(%arg0: i32) -> (i32, i32) {
    %c0_i32 = arith.constant 0 : i32
    %c0_i32_0 = arith.constant 0 : i32
    %c0_i32_1 = arith.constant 0 : i32
    return %c0_i32, %c0_i32_0 : i32, i32
  }
  func.func @transform_17(%arg0: i32) -> (i32, i32, i32) {
    %c0_i32 = arith.constant 0 : i32
    %c0_i32_0 = arith.constant 0 : i32
    %c0_i32_1 = arith.constant 0 : i32
    return %arg0, %c0_i32, %c0_i32_0 : i32, i32, i32
  }
}

module attributes {stable_mosaic.version = 11 : i64} {
  func.func @_bilstm_head_kernel(%arg0: memref<14x2x224xf32, #tpu.memory_space<vmem>>, %arg1: memref<224x512xf32, #tpu.memory_space<vmem>>, %arg2: memref<1x512xf32, #tpu.memory_space<vmem>>, %arg3: memref<128x512xf32, #tpu.memory_space<vmem>>, %arg4: memref<8x14xf32, #tpu.memory_space<vmem>>, %arg5: memref<8x1xf32, #tpu.memory_space<vmem>>, %arg6: memref<2x8xf32, #tpu.memory_space<vmem>>, %arg7: memref<2x1xf32, #tpu.memory_space<vmem>>, %arg8: memref<2x2xf32, #tpu.memory_space<vmem>>, %arg9: memref<14x2x512xf32, #tpu.memory_space<vmem>>, %arg10: memref<14x2x64xf32, #tpu.memory_space<vmem>>, %arg11: memref<14x2x64xf32, #tpu.memory_space<vmem>>) attributes {dimension_semantics = [], scalar_prefetch = 0 : i64, scratch_operands = 3 : i64, tpu.core_type = #tpu.core_type<tc>} {
    %c0 = arith.constant 0 : index
    %c0_0 = arith.constant 0 : index
    %c0_1 = arith.constant 0 : index
    %0 = vector.load %arg0[%c0, %c0_0, %c0_1] : memref<14x2x224xf32, #tpu.memory_space<vmem>>, vector<14x2x224xf32>
    %1 = vector.shape_cast %0 : vector<14x2x224xf32> to vector<28x224xf32>
    %c0_2 = arith.constant 0 : index
    %c0_3 = arith.constant 0 : index
    %2 = vector.load %arg1[%c0_2, %c0_3] : memref<224x512xf32, #tpu.memory_space<vmem>>, vector<224x512xf32>
    %cst = arith.constant dense<0.000000e+00> : vector<28x512xf32>
    %3 = tpu.matmul %1, %2, %cst {dimension_numbers = #tpu.dot_dimension_numbers<[1], [0], [0], [1], [0, 0, 1, 1], [], []>} : vector<28x224xf32>, vector<224x512xf32>, vector<28x512xf32> -> vector<28x512xf32>
    %c0_4 = arith.constant 0 : index
    %c0_5 = arith.constant 0 : index
    %4 = vector.load %arg2[%c0_4, %c0_5] : memref<1x512xf32, #tpu.memory_space<vmem>>, vector<1x512xf32>
    %5 = vector.broadcast %4 : vector<1x512xf32> to vector<28x512xf32>
    %6 = arith.addf %3, %5 : vector<28x512xf32>
    %7 = vector.shape_cast %6 : vector<28x512xf32> to vector<14x2x512xf32>
    %c0_6 = arith.constant 0 : index
    %c0_7 = arith.constant 0 : index
    %c0_8 = arith.constant 0 : index
    %8 = vector.load %arg9[%c0_6, %c0_7, %c0_8] : memref<14x2x512xf32, #tpu.memory_space<vmem>>, vector<14x2x512xf32>
    tpu.vector_store %arg9[%c0_6, %c0_7, %c0_8], %7 {strides = array<i32>} : memref<14x2x512xf32, #tpu.memory_space<vmem>>, vector<14x2x512xf32>,
    %cst_9 = arith.constant 0.000000e+00 : f32
    %9 = vector.broadcast %cst_9 : f32 to vector<2x128xf32>
    %cst_10 = arith.constant 0.000000e+00 : f32
    %10 = vector.broadcast %cst_10 : f32 to vector<2x128xf32>
    %c0_11 = arith.constant 0 : index
    %c0_12 = arith.constant 0 : index
    %c0_13 = arith.constant 0 : index
    %11 = vector.load %arg9[%c0_11, %c0_12, %c0_13] : memref<14x2x512xf32, #tpu.memory_space<vmem>>, vector<1x2x512xf32>
    %12 = vector.shape_cast %11 : vector<1x2x512xf32> to vector<2x512xf32>
    %c0_14 = arith.constant 0 : index
    %c0_15 = arith.constant 0 : index
    %13 = vector.load %arg3[%c0_14, %c0_15] : memref<128x512xf32, #tpu.memory_space<vmem>>, vector<128x512xf32>
    %cst_16 = arith.constant dense<0.000000e+00> : vector<2x512xf32>
    %14 = tpu.matmul %9, %13, %cst_16 {dimension_numbers = #tpu.dot_dimension_numbers<[1], [0], [0], [1], [0, 0, 1, 1], [], []>} : vector<2x128xf32>, vector<128x512xf32>, vector<2x512xf32> -> vector<2x512xf32>
    %15 = arith.addf %12, %14 : vector<2x512xf32>
    %16 = vector.extract_strided_slice %15 {offsets = [0, 0], sizes = [2, 128], strides = [1, 1]} : vector<2x512xf32> to vector<2x128xf32>
    %cst_17 = arith.constant 5.000000e-01 : f32
    %17 = vector.broadcast %cst_17 : f32 to vector<2x128xf32>
    %18 = arith.mulf %17, %16 : vector<2x128xf32>
    %19 = math.tanh %18 : vector<2x128xf32>
    %cst_18 = arith.constant 5.000000e-01 : f32
    %20 = vector.broadcast %cst_18 : f32 to vector<2x128xf32>
    %21 = arith.mulf %20, %19 : vector<2x128xf32>
    %cst_19 = arith.constant 5.000000e-01 : f32
    %22 = vector.broadcast %cst_19 : f32 to vector<2x128xf32>
    %23 = arith.addf %21, %22 : vector<2x128xf32>
    %24 = vector.extract_strided_slice %15 {offsets = [0, 128], sizes = [2, 128], strides = [1, 1]} : vector<2x512xf32> to vector<2x128xf32>
    %cst_20 = arith.constant 5.000000e-01 : f32
    %25 = vector.broadcast %cst_20 : f32 to vector<2x128xf32>
    %26 = arith.mulf %25, %24 : vector<2x128xf32>
    %27 = math.tanh %26 : vector<2x128xf32>
    %cst_21 = arith.constant 5.000000e-01 : f32
    %28 = vector.broadcast %cst_21 : f32 to vector<2x128xf32>
    %29 = arith.mulf %28, %27 : vector<2x128xf32>
    %cst_22 = arith.constant 5.000000e-01 : f32
    %30 = vector.broadcast %cst_22 : f32 to vector<2x128xf32>
    %31 = arith.addf %29, %30 : vector<2x128xf32>
    %32 = vector.extract_strided_slice %15 {offsets = [0, 256], sizes = [2, 128], strides = [1, 1]} : vector<2x512xf32> to vector<2x128xf32>
    %33 = math.tanh %32 : vector<2x128xf32>
    %34 = vector.extract_strided_slice %15 {offsets = [0, 384], sizes = [2, 128], strides = [1, 1]} : vector<2x512xf32> to vector<2x128xf32>
    %cst_23 = arith.constant 5.000000e-01 : f32
    %35 = vector.broadcast %cst_23 : f32 to vector<2x128xf32>
    %36 = arith.mulf %35, %34 : vector<2x128xf32>
    %37 = math.tanh %36 : vector<2x128xf32>
    %cst_24 = arith.constant 5.000000e-01 : f32
    %38 = vector.broadcast %cst_24 : f32 to vector<2x128xf32>
    %39 = arith.mulf %38, %37 : vector<2x128xf32>
    %cst_25 = arith.constant 5.000000e-01 : f32
    %40 = vector.broadcast %cst_25 : f32 to vector<2x128xf32>
    %41 = arith.addf %39, %40 : vector<2x128xf32>
    %42 = arith.mulf %31, %10 : vector<2x128xf32>
    %43 = arith.mulf %23, %33 : vector<2x128xf32>
    %44 = arith.addf %42, %43 : vector<2x128xf32>
    %45 = math.tanh %44 : vector<2x128xf32>
    %46 = arith.mulf %41, %45 : vector<2x128xf32>
    %47 = vector.extract_strided_slice %46 {offsets = [0, 0], sizes = [2, 64], strides = [1, 1]} : vector<2x128xf32> to vector<2x64xf32>
    %c0_26 = arith.constant 0 : index
    %c0_27 = arith.constant 0 : index
    %c0_28 = arith.constant 0 : index
    %48 = vector.load %arg10[%c0_26, %c0_27, %c0_28] : memref<14x2x64xf32, #tpu.memory_space<vmem>>, vector<1x2x64xf32>
    %49 = vector.shape_cast %48 : vector<1x2x64xf32> to vector<2x64xf32>
    %50 = vector.shape_cast %47 : vector<2x64xf32> to vector<1x2x64xf32>
    tpu.vector_store %arg10[%c0_26, %c0_27, %c0_28], %50 {strides = array<i32>} : memref<14x2x64xf32, #tpu.memory_space<vmem>>, vector<1x2x64xf32>,
    %51 = vector.extract_strided_slice %46 {offsets = [0, 64], sizes = [2, 64], strides = [1, 1]} : vector<2x128xf32> to vector<2x64xf32>
    %c13 = arith.constant 13 : index
    %c0_29 = arith.constant 0 : index
    %c0_30 = arith.constant 0 : index
    %52 = vector.load %arg11[%c13, %c0_29, %c0_30] : memref<14x2x64xf32, #tpu.memory_space<vmem>>, vector<1x2x64xf32>
    %53 = vector.shape_cast %52 : vector<1x2x64xf32> to vector<2x64xf32>
    %54 = vector.shape_cast %51 : vector<2x64xf32> to vector<1x2x64xf32>
    tpu.vector_store %arg11[%c13, %c0_29, %c0_30], %54 {strides = array<i32>} : memref<14x2x64xf32, #tpu.memory_space<vmem>>, vector<1x2x64xf32>,
    %c1 = arith.constant 1 : index
    %c0_31 = arith.constant 0 : index
    %c0_32 = arith.constant 0 : index
    %55 = vector.load %arg9[%c1, %c0_31, %c0_32] : memref<14x2x512xf32, #tpu.memory_space<vmem>>, vector<1x2x512xf32>
    %56 = vector.shape_cast %55 : vector<1x2x512xf32> to vector<2x512xf32>
    %c0_33 = arith.constant 0 : index
    %c0_34 = arith.constant 0 : index
    %57 = vector.load %arg3[%c0_33, %c0_34] : memref<128x512xf32, #tpu.memory_space<vmem>>, vector<128x512xf32>
    %cst_35 = arith.constant dense<0.000000e+00> : vector<2x512xf32>
    %58 = tpu.matmul %46, %57, %cst_35 {dimension_numbers = #tpu.dot_dimension_numbers<[1], [0], [0], [1], [0, 0, 1, 1], [], []>} : vector<2x128xf32>, vector<128x512xf32>, vector<2x512xf32> -> vector<2x512xf32>
    %59 = arith.addf %56, %58 : vector<2x512xf32>
    %60 = vector.extract_strided_slice %59 {offsets = [0, 0], sizes = [2, 128], strides = [1, 1]} : vector<2x512xf32> to vector<2x128xf32>
    %cst_36 = arith.constant 5.000000e-01 : f32
    %61 = vector.broadcast %cst_36 : f32 to vector<2x128xf32>
    %62 = arith.mulf %61, %60 : vector<2x128xf32>
    %63 = math.tanh %62 : vector<2x128xf32>
    %cst_37 = arith.constant 5.000000e-01 : f32
    %64 = vector.broadcast %cst_37 : f32 to vector<2x128xf32>
    %65 = arith.mulf %64, %63 : vector<2x128xf32>
    %cst_38 = arith.constant 5.000000e-01 : f32
    %66 = vector.broadcast %cst_38 : f32 to vector<2x128xf32>
    %67 = arith.addf %65, %66 : vector<2x128xf32>
    %68 = vector.extract_strided_slice %59 {offsets = [0, 128], sizes = [2, 128], strides = [1, 1]} : vector<2x512xf32> to vector<2x128xf32>
    %cst_39 = arith.constant 5.000000e-01 : f32
    %69 = vector.broadcast %cst_39 : f32 to vector<2x128xf32>
    %70 = arith.mulf %69, %68 : vector<2x128xf32>
    %71 = math.tanh %70 : vector<2x128xf32>
    %cst_40 = arith.constant 5.000000e-01 : f32
    %72 = vector.broadcast %cst_40 : f32 to vector<2x128xf32>
    %73 = arith.mulf %72, %71 : vector<2x128xf32>
    %cst_41 = arith.constant 5.000000e-01 : f32
    %74 = vector.broadcast %cst_41 : f32 to vector<2x128xf32>
    %75 = arith.addf %73, %74 : vector<2x128xf32>
    %76 = vector.extract_strided_slice %59 {offsets = [0, 256], sizes = [2, 128], strides = [1, 1]} : vector<2x512xf32> to vector<2x128xf32>
    %77 = math.tanh %76 : vector<2x128xf32>
    %78 = vector.extract_strided_slice %59 {offsets = [0, 384], sizes = [2, 128], strides = [1, 1]} : vector<2x512xf32> to vector<2x128xf32>
    %cst_42 = arith.constant 5.000000e-01 : f32
    %79 = vector.broadcast %cst_42 : f32 to vector<2x128xf32>
    %80 = arith.mulf %79, %78 : vector<2x128xf32>
    %81 = math.tanh %80 : vector<2x128xf32>
    %cst_43 = arith.constant 5.000000e-01 : f32
    %82 = vector.broadcast %cst_43 : f32 to vector<2x128xf32>
    %83 = arith.mulf %82, %81 : vector<2x128xf32>
    %cst_44 = arith.constant 5.000000e-01 : f32
    %84 = vector.broadcast %cst_44 : f32 to vector<2x128xf32>
    %85 = arith.addf %83, %84 : vector<2x128xf32>
    %86 = arith.mulf %75, %44 : vector<2x128xf32>
    %87 = arith.mulf %67, %77 : vector<2x128xf32>
    %88 = arith.addf %86, %87 : vector<2x128xf32>
    %89 = math.tanh %88 : vector<2x128xf32>
    %90 = arith.mulf %85, %89 : vector<2x128xf32>
    %91 = vector.extract_strided_slice %90 {offsets = [0, 0], sizes = [2, 64], strides = [1, 1]} : vector<2x128xf32> to vector<2x64xf32>
    %c1_45 = arith.constant 1 : index
    %c0_46 = arith.constant 0 : index
    %c0_47 = arith.constant 0 : index
    %92 = vector.load %arg10[%c1_45, %c0_46, %c0_47] : memref<14x2x64xf32, #tpu.memory_space<vmem>>, vector<1x2x64xf32>
    %93 = vector.shape_cast %92 : vector<1x2x64xf32> to vector<2x64xf32>
    %94 = vector.shape_cast %91 : vector<2x64xf32> to vector<1x2x64xf32>
    tpu.vector_store %arg10[%c1_45, %c0_46, %c0_47], %94 {strides = array<i32>} : memref<14x2x64xf32, #tpu.memory_space<vmem>>, vector<1x2x64xf32>,
    %95 = vector.extract_strided_slice %90 {offsets = [0, 64], sizes = [2, 64], strides = [1, 1]} : vector<2x128xf32> to vector<2x64xf32>
    %c12 = arith.constant 12 : index
    %c0_48 = arith.constant 0 : index
    %c0_49 = arith.constant 0 : index
    %96 = vector.load %arg11[%c12, %c0_48, %c0_49] : memref<14x2x64xf32, #tpu.memory_space<vmem>>, vector<1x2x64xf32>
    %97 = vector.shape_cast %96 : vector<1x2x64xf32> to vector<2x64xf32>
    %98 = vector.shape_cast %95 : vector<2x64xf32> to vector<1x2x64xf32>
    tpu.vector_store %arg11[%c12, %c0_48, %c0_49], %98 {strides = array<i32>} : memref<14x2x64xf32, #tpu.memory_space<vmem>>, vector<1x2x64xf32>,
    %c2 = arith.constant 2 : index
    %c0_50 = arith.constant 0 : index
    %c0_51 = arith.constant 0 : index
    %99 = vector.load %arg9[%c2, %c0_50, %c0_51] : memref<14x2x512xf32, #tpu.memory_space<vmem>>, vector<1x2x512xf32>
    %100 = vector.shape_cast %99 : vector<1x2x512xf32> to vector<2x512xf32>
    %c0_52 = arith.constant 0 : index
    %c0_53 = arith.constant 0 : index
    %101 = vector.load %arg3[%c0_52, %c0_53] : memref<128x512xf32, #tpu.memory_space<vmem>>, vector<128x512xf32>
    %cst_54 = arith.constant dense<0.000000e+00> : vector<2x512xf32>
    %102 = tpu.matmul %90, %101, %cst_54 {dimension_numbers = #tpu.dot_dimension_numbers<[1], [0], [0], [1], [0, 0, 1, 1], [], []>} : vector<2x128xf32>, vector<128x512xf32>, vector<2x512xf32> -> vector<2x512xf32>
    %103 = arith.addf %100, %102 : vector<2x512xf32>
    %104 = vector.extract_strided_slice %103 {offsets = [0, 0], sizes = [2, 128], strides = [1, 1]} : vector<2x512xf32> to vector<2x128xf32>
    %cst_55 = arith.constant 5.000000e-01 : f32
    %105 = vector.broadcast %cst_55 : f32 to vector<2x128xf32>
    %106 = arith.mulf %105, %104 : vector<2x128xf32>
    %107 = math.tanh %106 : vector<2x128xf32>
    %cst_56 = arith.constant 5.000000e-01 : f32
    %108 = vector.broadcast %cst_56 : f32 to vector<2x128xf32>
    %109 = arith.mulf %108, %107 : vector<2x128xf32>
    %cst_57 = arith.constant 5.000000e-01 : f32
    %110 = vector.broadcast %cst_57 : f32 to vector<2x128xf32>
    %111 = arith.addf %109, %110 : vector<2x128xf32>
    %112 = vector.extract_strided_slice %103 {offsets = [0, 128], sizes = [2, 128], strides = [1, 1]} : vector<2x512xf32> to vector<2x128xf32>
    %cst_58 = arith.constant 5.000000e-01 : f32
    %113 = vector.broadcast %cst_58 : f32 to vector<2x128xf32>
    %114 = arith.mulf %113, %112 : vector<2x128xf32>
    %115 = math.tanh %114 : vector<2x128xf32>
    %cst_59 = arith.constant 5.000000e-01 : f32
    %116 = vector.broadcast %cst_59 : f32 to vector<2x128xf32>
    %117 = arith.mulf %116, %115 : vector<2x128xf32>
    %cst_60 = arith.constant 5.000000e-01 : f32
    %118 = vector.broadcast %cst_60 : f32 to vector<2x128xf32>
    %119 = arith.addf %117, %118 : vector<2x128xf32>
    %120 = vector.extract_strided_slice %103 {offsets = [0, 256], sizes = [2, 128], strides = [1, 1]} : vector<2x512xf32> to vector<2x128xf32>
    %121 = math.tanh %120 : vector<2x128xf32>
    %122 = vector.extract_strided_slice %103 {offsets = [0, 384], sizes = [2, 128], strides = [1, 1]} : vector<2x512xf32> to vector<2x128xf32>
    %cst_61 = arith.constant 5.000000e-01 : f32
    %123 = vector.broadcast %cst_61 : f32 to vector<2x128xf32>
    %124 = arith.mulf %123, %122 : vector<2x128xf32>
    %125 = math.tanh %124 : vector<2x128xf32>
    %cst_62 = arith.constant 5.000000e-01 : f32
    %126 = vector.broadcast %cst_62 : f32 to vector<2x128xf32>
    %127 = arith.mulf %126, %125 : vector<2x128xf32>
    %cst_63 = arith.constant 5.000000e-01 : f32
    %128 = vector.broadcast %cst_63 : f32 to vector<2x128xf32>
    %129 = arith.addf %127, %128 : vector<2x128xf32>
    %130 = arith.mulf %119, %88 : vector<2x128xf32>
    %131 = arith.mulf %111, %121 : vector<2x128xf32>
    %132 = arith.addf %130, %131 : vector<2x128xf32>
    %133 = math.tanh %132 : vector<2x128xf32>
    %134 = arith.mulf %129, %133 : vector<2x128xf32>
    %135 = vector.extract_strided_slice %134 {offsets = [0, 0], sizes = [2, 64], strides = [1, 1]} : vector<2x128xf32> to vector<2x64xf32>
    %c2_64 = arith.constant 2 : index
    %c0_65 = arith.constant 0 : index
    %c0_66 = arith.constant 0 : index
    %136 = vector.load %arg10[%c2_64, %c0_65, %c0_66] : memref<14x2x64xf32, #tpu.memory_space<vmem>>, vector<1x2x64xf32>
    %137 = vector.shape_cast %136 : vector<1x2x64xf32> to vector<2x64xf32>
    %138 = vector.shape_cast %135 : vector<2x64xf32> to vector<1x2x64xf32>
    tpu.vector_store %arg10[%c2_64, %c0_65, %c0_66], %138 {strides = array<i32>} : memref<14x2x64xf32, #tpu.memory_space<vmem>>, vector<1x2x64xf32>,
    %139 = vector.extract_strided_slice %134 {offsets = [0, 64], sizes = [2, 64], strides = [1, 1]} : vector<2x128xf32> to vector<2x64xf32>
    %c11 = arith.constant 11 : index
    %c0_67 = arith.constant 0 : index
    %c0_68 = arith.constant 0 : index
    %140 = vector.load %arg11[%c11, %c0_67, %c0_68] : memref<14x2x64xf32, #tpu.memory_space<vmem>>, vector<1x2x64xf32>
    %141 = vector.shape_cast %140 : vector<1x2x64xf32> to vector<2x64xf32>
    %142 = vector.shape_cast %139 : vector<2x64xf32> to vector<1x2x64xf32>
    tpu.vector_store %arg11[%c11, %c0_67, %c0_68], %142 {strides = array<i32>} : memref<14x2x64xf32, #tpu.memory_space<vmem>>, vector<1x2x64xf32>,
    %c3 = arith.constant 3 : index
    %c0_69 = arith.constant 0 : index
    %c0_70 = arith.constant 0 : index
    %143 = vector.load %arg9[%c3, %c0_69, %c0_70] : memref<14x2x512xf32, #tpu.memory_space<vmem>>, vector<1x2x512xf32>
    %144 = vector.shape_cast %143 : vector<1x2x512xf32> to vector<2x512xf32>
    %c0_71 = arith.constant 0 : index
    %c0_72 = arith.constant 0 : index
    %145 = vector.load %arg3[%c0_71, %c0_72] : memref<128x512xf32, #tpu.memory_space<vmem>>, vector<128x512xf32>
    %cst_73 = arith.constant dense<0.000000e+00> : vector<2x512xf32>
    %146 = tpu.matmul %134, %145, %cst_73 {dimension_numbers = #tpu.dot_dimension_numbers<[1], [0], [0], [1], [0, 0, 1, 1], [], []>} : vector<2x128xf32>, vector<128x512xf32>, vector<2x512xf32> -> vector<2x512xf32>
    %147 = arith.addf %144, %146 : vector<2x512xf32>
    %148 = vector.extract_strided_slice %147 {offsets = [0, 0], sizes = [2, 128], strides = [1, 1]} : vector<2x512xf32> to vector<2x128xf32>
    %cst_74 = arith.constant 5.000000e-01 : f32
    %149 = vector.broadcast %cst_74 : f32 to vector<2x128xf32>
    %150 = arith.mulf %149, %148 : vector<2x128xf32>
    %151 = math.tanh %150 : vector<2x128xf32>
    %cst_75 = arith.constant 5.000000e-01 : f32
    %152 = vector.broadcast %cst_75 : f32 to vector<2x128xf32>
    %153 = arith.mulf %152, %151 : vector<2x128xf32>
    %cst_76 = arith.constant 5.000000e-01 : f32
    %154 = vector.broadcast %cst_76 : f32 to vector<2x128xf32>
    %155 = arith.addf %153, %154 : vector<2x128xf32>
    %156 = vector.extract_strided_slice %147 {offsets = [0, 128], sizes = [2, 128], strides = [1, 1]} : vector<2x512xf32> to vector<2x128xf32>
    %cst_77 = arith.constant 5.000000e-01 : f32
    %157 = vector.broadcast %cst_77 : f32 to vector<2x128xf32>
    %158 = arith.mulf %157, %156 : vector<2x128xf32>
    %159 = math.tanh %158 : vector<2x128xf32>
    %cst_78 = arith.constant 5.000000e-01 : f32
    %160 = vector.broadcast %cst_78 : f32 to vector<2x128xf32>
    %161 = arith.mulf %160, %159 : vector<2x128xf32>
    %cst_79 = arith.constant 5.000000e-01 : f32
    %162 = vector.broadcast %cst_79 : f32 to vector<2x128xf32>
    %163 = arith.addf %161, %162 : vector<2x128xf32>
    %164 = vector.extract_strided_slice %147 {offsets = [0, 256], sizes = [2, 128], strides = [1, 1]} : vector<2x512xf32> to vector<2x128xf32>
    %165 = math.tanh %164 : vector<2x128xf32>
    %166 = vector.extract_strided_slice %147 {offsets = [0, 384], sizes = [2, 128], strides = [1, 1]} : vector<2x512xf32> to vector<2x128xf32>
    %cst_80 = arith.constant 5.000000e-01 : f32
    %167 = vector.broadcast %cst_80 : f32 to vector<2x128xf32>
    %168 = arith.mulf %167, %166 : vector<2x128xf32>
    %169 = math.tanh %168 : vector<2x128xf32>
    %cst_81 = arith.constant 5.000000e-01 : f32
    %170 = vector.broadcast %cst_81 : f32 to vector<2x128xf32>
    %171 = arith.mulf %170, %169 : vector<2x128xf32>
    %cst_82 = arith.constant 5.000000e-01 : f32
    %172 = vector.broadcast %cst_82 : f32 to vector<2x128xf32>
    %173 = arith.addf %171, %172 : vector<2x128xf32>
    %174 = arith.mulf %163, %132 : vector<2x128xf32>
    %175 = arith.mulf %155, %165 : vector<2x128xf32>
    %176 = arith.addf %174, %175 : vector<2x128xf32>
    %177 = math.tanh %176 : vector<2x128xf32>
    %178 = arith.mulf %173, %177 : vector<2x128xf32>
    %179 = vector.extract_strided_slice %178 {offsets = [0, 0], sizes = [2, 64], strides = [1, 1]} : vector<2x128xf32> to vector<2x64xf32>
    %c3_83 = arith.constant 3 : index
    %c0_84 = arith.constant 0 : index
    %c0_85 = arith.constant 0 : index
    %180 = vector.load %arg10[%c3_83, %c0_84, %c0_85] : memref<14x2x64xf32, #tpu.memory_space<vmem>>, vector<1x2x64xf32>
    %181 = vector.shape_cast %180 : vector<1x2x64xf32> to vector<2x64xf32>
    %182 = vector.shape_cast %179 : vector<2x64xf32> to vector<1x2x64xf32>
    tpu.vector_store %arg10[%c3_83, %c0_84, %c0_85], %182 {strides = array<i32>} : memref<14x2x64xf32, #tpu.memory_space<vmem>>, vector<1x2x64xf32>,
    %183 = vector.extract_strided_slice %178 {offsets = [0, 64], sizes = [2, 64], strides = [1, 1]} : vector<2x128xf32> to vector<2x64xf32>
    %c10 = arith.constant 10 : index
    %c0_86 = arith.constant 0 : index
    %c0_87 = arith.constant 0 : index
    %184 = vector.load %arg11[%c10, %c0_86, %c0_87] : memref<14x2x64xf32, #tpu.memory_space<vmem>>, vector<1x2x64xf32>
    %185 = vector.shape_cast %184 : vector<1x2x64xf32> to vector<2x64xf32>
    %186 = vector.shape_cast %183 : vector<2x64xf32> to vector<1x2x64xf32>
    tpu.vector_store %arg11[%c10, %c0_86, %c0_87], %186 {strides = array<i32>} : memref<14x2x64xf32, #tpu.memory_space<vmem>>, vector<1x2x64xf32>,
    %c4 = arith.constant 4 : index
    %c0_88 = arith.constant 0 : index
    %c0_89 = arith.constant 0 : index
    %187 = vector.load %arg9[%c4, %c0_88, %c0_89] : memref<14x2x512xf32, #tpu.memory_space<vmem>>, vector<1x2x512xf32>
    %188 = vector.shape_cast %187 : vector<1x2x512xf32> to vector<2x512xf32>
    %c0_90 = arith.constant 0 : index
    %c0_91 = arith.constant 0 : index
    %189 = vector.load %arg3[%c0_90, %c0_91] : memref<128x512xf32, #tpu.memory_space<vmem>>, vector<128x512xf32>
    %cst_92 = arith.constant dense<0.000000e+00> : vector<2x512xf32>
    %190 = tpu.matmul %178, %189, %cst_92 {dimension_numbers = #tpu.dot_dimension_numbers<[1], [0], [0], [1], [0, 0, 1, 1], [], []>} : vector<2x128xf32>, vector<128x512xf32>, vector<2x512xf32> -> vector<2x512xf32>
    %191 = arith.addf %188, %190 : vector<2x512xf32>
    %192 = vector.extract_strided_slice %191 {offsets = [0, 0], sizes = [2, 128], strides = [1, 1]} : vector<2x512xf32> to vector<2x128xf32>
    %cst_93 = arith.constant 5.000000e-01 : f32
    %193 = vector.broadcast %cst_93 : f32 to vector<2x128xf32>
    %194 = arith.mulf %193, %192 : vector<2x128xf32>
    %195 = math.tanh %194 : vector<2x128xf32>
    %cst_94 = arith.constant 5.000000e-01 : f32
    %196 = vector.broadcast %cst_94 : f32 to vector<2x128xf32>
    %197 = arith.mulf %196, %195 : vector<2x128xf32>
    %cst_95 = arith.constant 5.000000e-01 : f32
    %198 = vector.broadcast %cst_95 : f32 to vector<2x128xf32>
    %199 = arith.addf %197, %198 : vector<2x128xf32>
    %200 = vector.extract_strided_slice %191 {offsets = [0, 128], sizes = [2, 128], strides = [1, 1]} : vector<2x512xf32> to vector<2x128xf32>
    %cst_96 = arith.constant 5.000000e-01 : f32
    %201 = vector.broadcast %cst_96 : f32 to vector<2x128xf32>
    %202 = arith.mulf %201, %200 : vector<2x128xf32>
    %203 = math.tanh %202 : vector<2x128xf32>
    %cst_97 = arith.constant 5.000000e-01 : f32
    %204 = vector.broadcast %cst_97 : f32 to vector<2x128xf32>
    %205 = arith.mulf %204, %203 : vector<2x128xf32>
    %cst_98 = arith.constant 5.000000e-01 : f32
    %206 = vector.broadcast %cst_98 : f32 to vector<2x128xf32>
    %207 = arith.addf %205, %206 : vector<2x128xf32>
    %208 = vector.extract_strided_slice %191 {offsets = [0, 256], sizes = [2, 128], strides = [1, 1]} : vector<2x512xf32> to vector<2x128xf32>
    %209 = math.tanh %208 : vector<2x128xf32>
    %210 = vector.extract_strided_slice %191 {offsets = [0, 384], sizes = [2, 128], strides = [1, 1]} : vector<2x512xf32> to vector<2x128xf32>
    %cst_99 = arith.constant 5.000000e-01 : f32
    %211 = vector.broadcast %cst_99 : f32 to vector<2x128xf32>
    %212 = arith.mulf %211, %210 : vector<2x128xf32>
    %213 = math.tanh %212 : vector<2x128xf32>
    %cst_100 = arith.constant 5.000000e-01 : f32
    %214 = vector.broadcast %cst_100 : f32 to vector<2x128xf32>
    %215 = arith.mulf %214, %213 : vector<2x128xf32>
    %cst_101 = arith.constant 5.000000e-01 : f32
    %216 = vector.broadcast %cst_101 : f32 to vector<2x128xf32>
    %217 = arith.addf %215, %216 : vector<2x128xf32>
    %218 = arith.mulf %207, %176 : vector<2x128xf32>
    %219 = arith.mulf %199, %209 : vector<2x128xf32>
    %220 = arith.addf %218, %219 : vector<2x128xf32>
    %221 = math.tanh %220 : vector<2x128xf32>
    %222 = arith.mulf %217, %221 : vector<2x128xf32>
    %223 = vector.extract_strided_slice %222 {offsets = [0, 0], sizes = [2, 64], strides = [1, 1]} : vector<2x128xf32> to vector<2x64xf32>
    %c4_102 = arith.constant 4 : index
    %c0_103 = arith.constant 0 : index
    %c0_104 = arith.constant 0 : index
    %224 = vector.load %arg10[%c4_102, %c0_103, %c0_104] : memref<14x2x64xf32, #tpu.memory_space<vmem>>, vector<1x2x64xf32>
    %225 = vector.shape_cast %224 : vector<1x2x64xf32> to vector<2x64xf32>
    %226 = vector.shape_cast %223 : vector<2x64xf32> to vector<1x2x64xf32>
    tpu.vector_store %arg10[%c4_102, %c0_103, %c0_104], %226 {strides = array<i32>} : memref<14x2x64xf32, #tpu.memory_space<vmem>>, vector<1x2x64xf32>,
    %227 = vector.extract_strided_slice %222 {offsets = [0, 64], sizes = [2, 64], strides = [1, 1]} : vector<2x128xf32> to vector<2x64xf32>
    %c9 = arith.constant 9 : index
    %c0_105 = arith.constant 0 : index
    %c0_106 = arith.constant 0 : index
    %228 = vector.load %arg11[%c9, %c0_105, %c0_106] : memref<14x2x64xf32, #tpu.memory_space<vmem>>, vector<1x2x64xf32>
    %229 = vector.shape_cast %228 : vector<1x2x64xf32> to vector<2x64xf32>
    %230 = vector.shape_cast %227 : vector<2x64xf32> to vector<1x2x64xf32>
    tpu.vector_store %arg11[%c9, %c0_105, %c0_106], %230 {strides = array<i32>} : memref<14x2x64xf32, #tpu.memory_space<vmem>>, vector<1x2x64xf32>,
    %c5 = arith.constant 5 : index
    %c0_107 = arith.constant 0 : index
    %c0_108 = arith.constant 0 : index
    %231 = vector.load %arg9[%c5, %c0_107, %c0_108] : memref<14x2x512xf32, #tpu.memory_space<vmem>>, vector<1x2x512xf32>
    %232 = vector.shape_cast %231 : vector<1x2x512xf32> to vector<2x512xf32>
    %c0_109 = arith.constant 0 : index
    %c0_110 = arith.constant 0 : index
    %233 = vector.load %arg3[%c0_109, %c0_110] : memref<128x512xf32, #tpu.memory_space<vmem>>, vector<128x512xf32>
    %cst_111 = arith.constant dense<0.000000e+00> : vector<2x512xf32>
    %234 = tpu.matmul %222, %233, %cst_111 {dimension_numbers = #tpu.dot_dimension_numbers<[1], [0], [0], [1], [0, 0, 1, 1], [], []>} : vector<2x128xf32>, vector<128x512xf32>, vector<2x512xf32> -> vector<2x512xf32>
    %235 = arith.addf %232, %234 : vector<2x512xf32>
    %236 = vector.extract_strided_slice %235 {offsets = [0, 0], sizes = [2, 128], strides = [1, 1]} : vector<2x512xf32> to vector<2x128xf32>
    %cst_112 = arith.constant 5.000000e-01 : f32
    %237 = vector.broadcast %cst_112 : f32 to vector<2x128xf32>
    %238 = arith.mulf %237, %236 : vector<2x128xf32>
    %239 = math.tanh %238 : vector<2x128xf32>
    %cst_113 = arith.constant 5.000000e-01 : f32
    %240 = vector.broadcast %cst_113 : f32 to vector<2x128xf32>
    %241 = arith.mulf %240, %239 : vector<2x128xf32>
    %cst_114 = arith.constant 5.000000e-01 : f32
    %242 = vector.broadcast %cst_114 : f32 to vector<2x128xf32>
    %243 = arith.addf %241, %242 : vector<2x128xf32>
    %244 = vector.extract_strided_slice %235 {offsets = [0, 128], sizes = [2, 128], strides = [1, 1]} : vector<2x512xf32> to vector<2x128xf32>
    %cst_115 = arith.constant 5.000000e-01 : f32
    %245 = vector.broadcast %cst_115 : f32 to vector<2x128xf32>
    %246 = arith.mulf %245, %244 : vector<2x128xf32>
    %247 = math.tanh %246 : vector<2x128xf32>
    %cst_116 = arith.constant 5.000000e-01 : f32
    %248 = vector.broadcast %cst_116 : f32 to vector<2x128xf32>
    %249 = arith.mulf %248, %247 : vector<2x128xf32>
    %cst_117 = arith.constant 5.000000e-01 : f32
    %250 = vector.broadcast %cst_117 : f32 to vector<2x128xf32>
    %251 = arith.addf %249, %250 : vector<2x128xf32>
    %252 = vector.extract_strided_slice %235 {offsets = [0, 256], sizes = [2, 128], strides = [1, 1]} : vector<2x512xf32> to vector<2x128xf32>
    %253 = math.tanh %252 : vector<2x128xf32>
    %254 = vector.extract_strided_slice %235 {offsets = [0, 384], sizes = [2, 128], strides = [1, 1]} : vector<2x512xf32> to vector<2x128xf32>
    %cst_118 = arith.constant 5.000000e-01 : f32
    %255 = vector.broadcast %cst_118 : f32 to vector<2x128xf32>
    %256 = arith.mulf %255, %254 : vector<2x128xf32>
    %257 = math.tanh %256 : vector<2x128xf32>
    %cst_119 = arith.constant 5.000000e-01 : f32
    %258 = vector.broadcast %cst_119 : f32 to vector<2x128xf32>
    %259 = arith.mulf %258, %257 : vector<2x128xf32>
    %cst_120 = arith.constant 5.000000e-01 : f32
    %260 = vector.broadcast %cst_120 : f32 to vector<2x128xf32>
    %261 = arith.addf %259, %260 : vector<2x128xf32>
    %262 = arith.mulf %251, %220 : vector<2x128xf32>
    %263 = arith.mulf %243, %253 : vector<2x128xf32>
    %264 = arith.addf %262, %263 : vector<2x128xf32>
    %265 = math.tanh %264 : vector<2x128xf32>
    %266 = arith.mulf %261, %265 : vector<2x128xf32>
    %267 = vector.extract_strided_slice %266 {offsets = [0, 0], sizes = [2, 64], strides = [1, 1]} : vector<2x128xf32> to vector<2x64xf32>
    %c5_121 = arith.constant 5 : index
    %c0_122 = arith.constant 0 : index
    %c0_123 = arith.constant 0 : index
    %268 = vector.load %arg10[%c5_121, %c0_122, %c0_123] : memref<14x2x64xf32, #tpu.memory_space<vmem>>, vector<1x2x64xf32>
    %269 = vector.shape_cast %268 : vector<1x2x64xf32> to vector<2x64xf32>
    %270 = vector.shape_cast %267 : vector<2x64xf32> to vector<1x2x64xf32>
    tpu.vector_store %arg10[%c5_121, %c0_122, %c0_123], %270 {strides = array<i32>} : memref<14x2x64xf32, #tpu.memory_space<vmem>>, vector<1x2x64xf32>,
    %271 = vector.extract_strided_slice %266 {offsets = [0, 64], sizes = [2, 64], strides = [1, 1]} : vector<2x128xf32> to vector<2x64xf32>
    %c8 = arith.constant 8 : index
    %c0_124 = arith.constant 0 : index
    %c0_125 = arith.constant 0 : index
    %272 = vector.load %arg11[%c8, %c0_124, %c0_125] : memref<14x2x64xf32, #tpu.memory_space<vmem>>, vector<1x2x64xf32>
    %273 = vector.shape_cast %272 : vector<1x2x64xf32> to vector<2x64xf32>
    %274 = vector.shape_cast %271 : vector<2x64xf32> to vector<1x2x64xf32>
    tpu.vector_store %arg11[%c8, %c0_124, %c0_125], %274 {strides = array<i32>} : memref<14x2x64xf32, #tpu.memory_space<vmem>>, vector<1x2x64xf32>,
    %c6 = arith.constant 6 : index
    %c0_126 = arith.constant 0 : index
    %c0_127 = arith.constant 0 : index
    %275 = vector.load %arg9[%c6, %c0_126, %c0_127] : memref<14x2x512xf32, #tpu.memory_space<vmem>>, vector<1x2x512xf32>
    %276 = vector.shape_cast %275 : vector<1x2x512xf32> to vector<2x512xf32>
    %c0_128 = arith.constant 0 : index
    %c0_129 = arith.constant 0 : index
    %277 = vector.load %arg3[%c0_128, %c0_129] : memref<128x512xf32, #tpu.memory_space<vmem>>, vector<128x512xf32>
    %cst_130 = arith.constant dense<0.000000e+00> : vector<2x512xf32>
    %278 = tpu.matmul %266, %277, %cst_130 {dimension_numbers = #tpu.dot_dimension_numbers<[1], [0], [0], [1], [0, 0, 1, 1], [], []>} : vector<2x128xf32>, vector<128x512xf32>, vector<2x512xf32> -> vector<2x512xf32>
    %279 = arith.addf %276, %278 : vector<2x512xf32>
    %280 = vector.extract_strided_slice %279 {offsets = [0, 0], sizes = [2, 128], strides = [1, 1]} : vector<2x512xf32> to vector<2x128xf32>
    %cst_131 = arith.constant 5.000000e-01 : f32
    %281 = vector.broadcast %cst_131 : f32 to vector<2x128xf32>
    %282 = arith.mulf %281, %280 : vector<2x128xf32>
    %283 = math.tanh %282 : vector<2x128xf32>
    %cst_132 = arith.constant 5.000000e-01 : f32
    %284 = vector.broadcast %cst_132 : f32 to vector<2x128xf32>
    %285 = arith.mulf %284, %283 : vector<2x128xf32>
    %cst_133 = arith.constant 5.000000e-01 : f32
    %286 = vector.broadcast %cst_133 : f32 to vector<2x128xf32>
    %287 = arith.addf %285, %286 : vector<2x128xf32>
    %288 = vector.extract_strided_slice %279 {offsets = [0, 128], sizes = [2, 128], strides = [1, 1]} : vector<2x512xf32> to vector<2x128xf32>
    %cst_134 = arith.constant 5.000000e-01 : f32
    %289 = vector.broadcast %cst_134 : f32 to vector<2x128xf32>
    %290 = arith.mulf %289, %288 : vector<2x128xf32>
    %291 = math.tanh %290 : vector<2x128xf32>
    %cst_135 = arith.constant 5.000000e-01 : f32
    %292 = vector.broadcast %cst_135 : f32 to vector<2x128xf32>
    %293 = arith.mulf %292, %291 : vector<2x128xf32>
    %cst_136 = arith.constant 5.000000e-01 : f32
    %294 = vector.broadcast %cst_136 : f32 to vector<2x128xf32>
    %295 = arith.addf %293, %294 : vector<2x128xf32>
    %296 = vector.extract_strided_slice %279 {offsets = [0, 256], sizes = [2, 128], strides = [1, 1]} : vector<2x512xf32> to vector<2x128xf32>
    %297 = math.tanh %296 : vector<2x128xf32>
    %298 = vector.extract_strided_slice %279 {offsets = [0, 384], sizes = [2, 128], strides = [1, 1]} : vector<2x512xf32> to vector<2x128xf32>
    %cst_137 = arith.constant 5.000000e-01 : f32
    %299 = vector.broadcast %cst_137 : f32 to vector<2x128xf32>
    %300 = arith.mulf %299, %298 : vector<2x128xf32>
    %301 = math.tanh %300 : vector<2x128xf32>
    %cst_138 = arith.constant 5.000000e-01 : f32
    %302 = vector.broadcast %cst_138 : f32 to vector<2x128xf32>
    %303 = arith.mulf %302, %301 : vector<2x128xf32>
    %cst_139 = arith.constant 5.000000e-01 : f32
    %304 = vector.broadcast %cst_139 : f32 to vector<2x128xf32>
    %305 = arith.addf %303, %304 : vector<2x128xf32>
    %306 = arith.mulf %295, %264 : vector<2x128xf32>
    %307 = arith.mulf %287, %297 : vector<2x128xf32>
    %308 = arith.addf %306, %307 : vector<2x128xf32>
    %309 = math.tanh %308 : vector<2x128xf32>
    %310 = arith.mulf %305, %309 : vector<2x128xf32>
    %311 = vector.extract_strided_slice %310 {offsets = [0, 0], sizes = [2, 64], strides = [1, 1]} : vector<2x128xf32> to vector<2x64xf32>
    %c6_140 = arith.constant 6 : index
    %c0_141 = arith.constant 0 : index
    %c0_142 = arith.constant 0 : index
    %312 = vector.load %arg10[%c6_140, %c0_141, %c0_142] : memref<14x2x64xf32, #tpu.memory_space<vmem>>, vector<1x2x64xf32>
    %313 = vector.shape_cast %312 : vector<1x2x64xf32> to vector<2x64xf32>
    %314 = vector.shape_cast %311 : vector<2x64xf32> to vector<1x2x64xf32>
    tpu.vector_store %arg10[%c6_140, %c0_141, %c0_142], %314 {strides = array<i32>} : memref<14x2x64xf32, #tpu.memory_space<vmem>>, vector<1x2x64xf32>,
    %315 = vector.extract_strided_slice %310 {offsets = [0, 64], sizes = [2, 64], strides = [1, 1]} : vector<2x128xf32> to vector<2x64xf32>
    %c7 = arith.constant 7 : index
    %c0_143 = arith.constant 0 : index
    %c0_144 = arith.constant 0 : index
    %316 = vector.load %arg11[%c7, %c0_143, %c0_144] : memref<14x2x64xf32, #tpu.memory_space<vmem>>, vector<1x2x64xf32>
    %317 = vector.shape_cast %316 : vector<1x2x64xf32> to vector<2x64xf32>
    %318 = vector.shape_cast %315 : vector<2x64xf32> to vector<1x2x64xf32>
    tpu.vector_store %arg11[%c7, %c0_143, %c0_144], %318 {strides = array<i32>} : memref<14x2x64xf32, #tpu.memory_space<vmem>>, vector<1x2x64xf32>,
    %c7_145 = arith.constant 7 : index
    %c0_146 = arith.constant 0 : index
    %c0_147 = arith.constant 0 : index
    %319 = vector.load %arg9[%c7_145, %c0_146, %c0_147] : memref<14x2x512xf32, #tpu.memory_space<vmem>>, vector<1x2x512xf32>
    %320 = vector.shape_cast %319 : vector<1x2x512xf32> to vector<2x512xf32>
    %c0_148 = arith.constant 0 : index
    %c0_149 = arith.constant 0 : index
    %321 = vector.load %arg3[%c0_148, %c0_149] : memref<128x512xf32, #tpu.memory_space<vmem>>, vector<128x512xf32>
    %cst_150 = arith.constant dense<0.000000e+00> : vector<2x512xf32>
    %322 = tpu.matmul %310, %321, %cst_150 {dimension_numbers = #tpu.dot_dimension_numbers<[1], [0], [0], [1], [0, 0, 1, 1], [], []>} : vector<2x128xf32>, vector<128x512xf32>, vector<2x512xf32> -> vector<2x512xf32>
    %323 = arith.addf %320, %322 : vector<2x512xf32>
    %324 = vector.extract_strided_slice %323 {offsets = [0, 0], sizes = [2, 128], strides = [1, 1]} : vector<2x512xf32> to vector<2x128xf32>
    %cst_151 = arith.constant 5.000000e-01 : f32
    %325 = vector.broadcast %cst_151 : f32 to vector<2x128xf32>
    %326 = arith.mulf %325, %324 : vector<2x128xf32>
    %327 = math.tanh %326 : vector<2x128xf32>
    %cst_152 = arith.constant 5.000000e-01 : f32
    %328 = vector.broadcast %cst_152 : f32 to vector<2x128xf32>
    %329 = arith.mulf %328, %327 : vector<2x128xf32>
    %cst_153 = arith.constant 5.000000e-01 : f32
    %330 = vector.broadcast %cst_153 : f32 to vector<2x128xf32>
    %331 = arith.addf %329, %330 : vector<2x128xf32>
    %332 = vector.extract_strided_slice %323 {offsets = [0, 128], sizes = [2, 128], strides = [1, 1]} : vector<2x512xf32> to vector<2x128xf32>
    %cst_154 = arith.constant 5.000000e-01 : f32
    %333 = vector.broadcast %cst_154 : f32 to vector<2x128xf32>
    %334 = arith.mulf %333, %332 : vector<2x128xf32>
    %335 = math.tanh %334 : vector<2x128xf32>
    %cst_155 = arith.constant 5.000000e-01 : f32
    %336 = vector.broadcast %cst_155 : f32 to vector<2x128xf32>
    %337 = arith.mulf %336, %335 : vector<2x128xf32>
    %cst_156 = arith.constant 5.000000e-01 : f32
    %338 = vector.broadcast %cst_156 : f32 to vector<2x128xf32>
    %339 = arith.addf %337, %338 : vector<2x128xf32>
    %340 = vector.extract_strided_slice %323 {offsets = [0, 256], sizes = [2, 128], strides = [1, 1]} : vector<2x512xf32> to vector<2x128xf32>
    %341 = math.tanh %340 : vector<2x128xf32>
    %342 = vector.extract_strided_slice %323 {offsets = [0, 384], sizes = [2, 128], strides = [1, 1]} : vector<2x512xf32> to vector<2x128xf32>
    %cst_157 = arith.constant 5.000000e-01 : f32
    %343 = vector.broadcast %cst_157 : f32 to vector<2x128xf32>
    %344 = arith.mulf %343, %342 : vector<2x128xf32>
    %345 = math.tanh %344 : vector<2x128xf32>
    %cst_158 = arith.constant 5.000000e-01 : f32
    %346 = vector.broadcast %cst_158 : f32 to vector<2x128xf32>
    %347 = arith.mulf %346, %345 : vector<2x128xf32>
    %cst_159 = arith.constant 5.000000e-01 : f32
    %348 = vector.broadcast %cst_159 : f32 to vector<2x128xf32>
    %349 = arith.addf %347, %348 : vector<2x128xf32>
    %350 = arith.mulf %339, %308 : vector<2x128xf32>
    %351 = arith.mulf %331, %341 : vector<2x128xf32>
    %352 = arith.addf %350, %351 : vector<2x128xf32>
    %353 = math.tanh %352 : vector<2x128xf32>
    %354 = arith.mulf %349, %353 : vector<2x128xf32>
    %355 = vector.extract_strided_slice %354 {offsets = [0, 0], sizes = [2, 64], strides = [1, 1]} : vector<2x128xf32> to vector<2x64xf32>
    %c7_160 = arith.constant 7 : index
    %c0_161 = arith.constant 0 : index
    %c0_162 = arith.constant 0 : index
    %356 = vector.load %arg10[%c7_160, %c0_161, %c0_162] : memref<14x2x64xf32, #tpu.memory_space<vmem>>, vector<1x2x64xf32>
    %357 = vector.shape_cast %356 : vector<1x2x64xf32> to vector<2x64xf32>
    %358 = vector.shape_cast %355 : vector<2x64xf32> to vector<1x2x64xf32>
    tpu.vector_store %arg10[%c7_160, %c0_161, %c0_162], %358 {strides = array<i32>} : memref<14x2x64xf32, #tpu.memory_space<vmem>>, vector<1x2x64xf32>,
    %359 = vector.extract_strided_slice %354 {offsets = [0, 64], sizes = [2, 64], strides = [1, 1]} : vector<2x128xf32> to vector<2x64xf32>
    %c6_163 = arith.constant 6 : index
    %c0_164 = arith.constant 0 : index
    %c0_165 = arith.constant 0 : index
    %360 = vector.load %arg11[%c6_163, %c0_164, %c0_165] : memref<14x2x64xf32, #tpu.memory_space<vmem>>, vector<1x2x64xf32>
    %361 = vector.shape_cast %360 : vector<1x2x64xf32> to vector<2x64xf32>
    %362 = vector.shape_cast %359 : vector<2x64xf32> to vector<1x2x64xf32>
    tpu.vector_store %arg11[%c6_163, %c0_164, %c0_165], %362 {strides = array<i32>} : memref<14x2x64xf32, #tpu.memory_space<vmem>>, vector<1x2x64xf32>,
    %c8_166 = arith.constant 8 : index
    %c0_167 = arith.constant 0 : index
    %c0_168 = arith.constant 0 : index
    %363 = vector.load %arg9[%c8_166, %c0_167, %c0_168] : memref<14x2x512xf32, #tpu.memory_space<vmem>>, vector<1x2x512xf32>
    %364 = vector.shape_cast %363 : vector<1x2x512xf32> to vector<2x512xf32>
    %c0_169 = arith.constant 0 : index
    %c0_170 = arith.constant 0 : index
    %365 = vector.load %arg3[%c0_169, %c0_170] : memref<128x512xf32, #tpu.memory_space<vmem>>, vector<128x512xf32>
    %cst_171 = arith.constant dense<0.000000e+00> : vector<2x512xf32>
    %366 = tpu.matmul %354, %365, %cst_171 {dimension_numbers = #tpu.dot_dimension_numbers<[1], [0], [0], [1], [0, 0, 1, 1], [], []>} : vector<2x128xf32>, vector<128x512xf32>, vector<2x512xf32> -> vector<2x512xf32>
    %367 = arith.addf %364, %366 : vector<2x512xf32>
    %368 = vector.extract_strided_slice %367 {offsets = [0, 0], sizes = [2, 128], strides = [1, 1]} : vector<2x512xf32> to vector<2x128xf32>
    %cst_172 = arith.constant 5.000000e-01 : f32
    %369 = vector.broadcast %cst_172 : f32 to vector<2x128xf32>
    %370 = arith.mulf %369, %368 : vector<2x128xf32>
    %371 = math.tanh %370 : vector<2x128xf32>
    %cst_173 = arith.constant 5.000000e-01 : f32
    %372 = vector.broadcast %cst_173 : f32 to vector<2x128xf32>
    %373 = arith.mulf %372, %371 : vector<2x128xf32>
    %cst_174 = arith.constant 5.000000e-01 : f32
    %374 = vector.broadcast %cst_174 : f32 to vector<2x128xf32>
    %375 = arith.addf %373, %374 : vector<2x128xf32>
    %376 = vector.extract_strided_slice %367 {offsets = [0, 128], sizes = [2, 128], strides = [1, 1]} : vector<2x512xf32> to vector<2x128xf32>
    %cst_175 = arith.constant 5.000000e-01 : f32
    %377 = vector.broadcast %cst_175 : f32 to vector<2x128xf32>
    %378 = arith.mulf %377, %376 : vector<2x128xf32>
    %379 = math.tanh %378 : vector<2x128xf32>
    %cst_176 = arith.constant 5.000000e-01 : f32
    %380 = vector.broadcast %cst_176 : f32 to vector<2x128xf32>
    %381 = arith.mulf %380, %379 : vector<2x128xf32>
    %cst_177 = arith.constant 5.000000e-01 : f32
    %382 = vector.broadcast %cst_177 : f32 to vector<2x128xf32>
    %383 = arith.addf %381, %382 : vector<2x128xf32>
    %384 = vector.extract_strided_slice %367 {offsets = [0, 256], sizes = [2, 128], strides = [1, 1]} : vector<2x512xf32> to vector<2x128xf32>
    %385 = math.tanh %384 : vector<2x128xf32>
    %386 = vector.extract_strided_slice %367 {offsets = [0, 384], sizes = [2, 128], strides = [1, 1]} : vector<2x512xf32> to vector<2x128xf32>
    %cst_178 = arith.constant 5.000000e-01 : f32
    %387 = vector.broadcast %cst_178 : f32 to vector<2x128xf32>
    %388 = arith.mulf %387, %386 : vector<2x128xf32>
    %389 = math.tanh %388 : vector<2x128xf32>
    %cst_179 = arith.constant 5.000000e-01 : f32
    %390 = vector.broadcast %cst_179 : f32 to vector<2x128xf32>
    %391 = arith.mulf %390, %389 : vector<2x128xf32>
    %cst_180 = arith.constant 5.000000e-01 : f32
    %392 = vector.broadcast %cst_180 : f32 to vector<2x128xf32>
    %393 = arith.addf %391, %392 : vector<2x128xf32>
    %394 = arith.mulf %383, %352 : vector<2x128xf32>
    %395 = arith.mulf %375, %385 : vector<2x128xf32>
    %396 = arith.addf %394, %395 : vector<2x128xf32>
    %397 = math.tanh %396 : vector<2x128xf32>
    %398 = arith.mulf %393, %397 : vector<2x128xf32>
    %399 = vector.extract_strided_slice %398 {offsets = [0, 0], sizes = [2, 64], strides = [1, 1]} : vector<2x128xf32> to vector<2x64xf32>
    %c8_181 = arith.constant 8 : index
    %c0_182 = arith.constant 0 : index
    %c0_183 = arith.constant 0 : index
    %400 = vector.load %arg10[%c8_181, %c0_182, %c0_183] : memref<14x2x64xf32, #tpu.memory_space<vmem>>, vector<1x2x64xf32>
    %401 = vector.shape_cast %400 : vector<1x2x64xf32> to vector<2x64xf32>
    %402 = vector.shape_cast %399 : vector<2x64xf32> to vector<1x2x64xf32>
    tpu.vector_store %arg10[%c8_181, %c0_182, %c0_183], %402 {strides = array<i32>} : memref<14x2x64xf32, #tpu.memory_space<vmem>>, vector<1x2x64xf32>,
    %403 = vector.extract_strided_slice %398 {offsets = [0, 64], sizes = [2, 64], strides = [1, 1]} : vector<2x128xf32> to vector<2x64xf32>
    %c5_184 = arith.constant 5 : index
    %c0_185 = arith.constant 0 : index
    %c0_186 = arith.constant 0 : index
    %404 = vector.load %arg11[%c5_184, %c0_185, %c0_186] : memref<14x2x64xf32, #tpu.memory_space<vmem>>, vector<1x2x64xf32>
    %405 = vector.shape_cast %404 : vector<1x2x64xf32> to vector<2x64xf32>
    %406 = vector.shape_cast %403 : vector<2x64xf32> to vector<1x2x64xf32>
    tpu.vector_store %arg11[%c5_184, %c0_185, %c0_186], %406 {strides = array<i32>} : memref<14x2x64xf32, #tpu.memory_space<vmem>>, vector<1x2x64xf32>,
    %c9_187 = arith.constant 9 : index
    %c0_188 = arith.constant 0 : index
    %c0_189 = arith.constant 0 : index
    %407 = vector.load %arg9[%c9_187, %c0_188, %c0_189] : memref<14x2x512xf32, #tpu.memory_space<vmem>>, vector<1x2x512xf32>
    %408 = vector.shape_cast %407 : vector<1x2x512xf32> to vector<2x512xf32>
    %c0_190 = arith.constant 0 : index
    %c0_191 = arith.constant 0 : index
    %409 = vector.load %arg3[%c0_190, %c0_191] : memref<128x512xf32, #tpu.memory_space<vmem>>, vector<128x512xf32>
    %cst_192 = arith.constant dense<0.000000e+00> : vector<2x512xf32>
    %410 = tpu.matmul %398, %409, %cst_192 {dimension_numbers = #tpu.dot_dimension_numbers<[1], [0], [0], [1], [0, 0, 1, 1], [], []>} : vector<2x128xf32>, vector<128x512xf32>, vector<2x512xf32> -> vector<2x512xf32>
    %411 = arith.addf %408, %410 : vector<2x512xf32>
    %412 = vector.extract_strided_slice %411 {offsets = [0, 0], sizes = [2, 128], strides = [1, 1]} : vector<2x512xf32> to vector<2x128xf32>
    %cst_193 = arith.constant 5.000000e-01 : f32
    %413 = vector.broadcast %cst_193 : f32 to vector<2x128xf32>
    %414 = arith.mulf %413, %412 : vector<2x128xf32>
    %415 = math.tanh %414 : vector<2x128xf32>
    %cst_194 = arith.constant 5.000000e-01 : f32
    %416 = vector.broadcast %cst_194 : f32 to vector<2x128xf32>
    %417 = arith.mulf %416, %415 : vector<2x128xf32>
    %cst_195 = arith.constant 5.000000e-01 : f32
    %418 = vector.broadcast %cst_195 : f32 to vector<2x128xf32>
    %419 = arith.addf %417, %418 : vector<2x128xf32>
    %420 = vector.extract_strided_slice %411 {offsets = [0, 128], sizes = [2, 128], strides = [1, 1]} : vector<2x512xf32> to vector<2x128xf32>
    %cst_196 = arith.constant 5.000000e-01 : f32
    %421 = vector.broadcast %cst_196 : f32 to vector<2x128xf32>
    %422 = arith.mulf %421, %420 : vector<2x128xf32>
    %423 = math.tanh %422 : vector<2x128xf32>
    %cst_197 = arith.constant 5.000000e-01 : f32
    %424 = vector.broadcast %cst_197 : f32 to vector<2x128xf32>
    %425 = arith.mulf %424, %423 : vector<2x128xf32>
    %cst_198 = arith.constant 5.000000e-01 : f32
    %426 = vector.broadcast %cst_198 : f32 to vector<2x128xf32>
    %427 = arith.addf %425, %426 : vector<2x128xf32>
    %428 = vector.extract_strided_slice %411 {offsets = [0, 256], sizes = [2, 128], strides = [1, 1]} : vector<2x512xf32> to vector<2x128xf32>
    %429 = math.tanh %428 : vector<2x128xf32>
    %430 = vector.extract_strided_slice %411 {offsets = [0, 384], sizes = [2, 128], strides = [1, 1]} : vector<2x512xf32> to vector<2x128xf32>
    %cst_199 = arith.constant 5.000000e-01 : f32
    %431 = vector.broadcast %cst_199 : f32 to vector<2x128xf32>
    %432 = arith.mulf %431, %430 : vector<2x128xf32>
    %433 = math.tanh %432 : vector<2x128xf32>
    %cst_200 = arith.constant 5.000000e-01 : f32
    %434 = vector.broadcast %cst_200 : f32 to vector<2x128xf32>
    %435 = arith.mulf %434, %433 : vector<2x128xf32>
    %cst_201 = arith.constant 5.000000e-01 : f32
    %436 = vector.broadcast %cst_201 : f32 to vector<2x128xf32>
    %437 = arith.addf %435, %436 : vector<2x128xf32>
    %438 = arith.mulf %427, %396 : vector<2x128xf32>
    %439 = arith.mulf %419, %429 : vector<2x128xf32>
    %440 = arith.addf %438, %439 : vector<2x128xf32>
    %441 = math.tanh %440 : vector<2x128xf32>
    %442 = arith.mulf %437, %441 : vector<2x128xf32>
    %443 = vector.extract_strided_slice %442 {offsets = [0, 0], sizes = [2, 64], strides = [1, 1]} : vector<2x128xf32> to vector<2x64xf32>
    %c9_202 = arith.constant 9 : index
    %c0_203 = arith.constant 0 : index
    %c0_204 = arith.constant 0 : index
    %444 = vector.load %arg10[%c9_202, %c0_203, %c0_204] : memref<14x2x64xf32, #tpu.memory_space<vmem>>, vector<1x2x64xf32>
    %445 = vector.shape_cast %444 : vector<1x2x64xf32> to vector<2x64xf32>
    %446 = vector.shape_cast %443 : vector<2x64xf32> to vector<1x2x64xf32>
    tpu.vector_store %arg10[%c9_202, %c0_203, %c0_204], %446 {strides = array<i32>} : memref<14x2x64xf32, #tpu.memory_space<vmem>>, vector<1x2x64xf32>,
    %447 = vector.extract_strided_slice %442 {offsets = [0, 64], sizes = [2, 64], strides = [1, 1]} : vector<2x128xf32> to vector<2x64xf32>
    %c4_205 = arith.constant 4 : index
    %c0_206 = arith.constant 0 : index
    %c0_207 = arith.constant 0 : index
    %448 = vector.load %arg11[%c4_205, %c0_206, %c0_207] : memref<14x2x64xf32, #tpu.memory_space<vmem>>, vector<1x2x64xf32>
    %449 = vector.shape_cast %448 : vector<1x2x64xf32> to vector<2x64xf32>
    %450 = vector.shape_cast %447 : vector<2x64xf32> to vector<1x2x64xf32>
    tpu.vector_store %arg11[%c4_205, %c0_206, %c0_207], %450 {strides = array<i32>} : memref<14x2x64xf32, #tpu.memory_space<vmem>>, vector<1x2x64xf32>,
    %c10_208 = arith.constant 10 : index
    %c0_209 = arith.constant 0 : index
    %c0_210 = arith.constant 0 : index
    %451 = vector.load %arg9[%c10_208, %c0_209, %c0_210] : memref<14x2x512xf32, #tpu.memory_space<vmem>>, vector<1x2x512xf32>
    %452 = vector.shape_cast %451 : vector<1x2x512xf32> to vector<2x512xf32>
    %c0_211 = arith.constant 0 : index
    %c0_212 = arith.constant 0 : index
    %453 = vector.load %arg3[%c0_211, %c0_212] : memref<128x512xf32, #tpu.memory_space<vmem>>, vector<128x512xf32>
    %cst_213 = arith.constant dense<0.000000e+00> : vector<2x512xf32>
    %454 = tpu.matmul %442, %453, %cst_213 {dimension_numbers = #tpu.dot_dimension_numbers<[1], [0], [0], [1], [0, 0, 1, 1], [], []>} : vector<2x128xf32>, vector<128x512xf32>, vector<2x512xf32> -> vector<2x512xf32>
    %455 = arith.addf %452, %454 : vector<2x512xf32>
    %456 = vector.extract_strided_slice %455 {offsets = [0, 0], sizes = [2, 128], strides = [1, 1]} : vector<2x512xf32> to vector<2x128xf32>
    %cst_214 = arith.constant 5.000000e-01 : f32
    %457 = vector.broadcast %cst_214 : f32 to vector<2x128xf32>
    %458 = arith.mulf %457, %456 : vector<2x128xf32>
    %459 = math.tanh %458 : vector<2x128xf32>
    %cst_215 = arith.constant 5.000000e-01 : f32
    %460 = vector.broadcast %cst_215 : f32 to vector<2x128xf32>
    %461 = arith.mulf %460, %459 : vector<2x128xf32>
    %cst_216 = arith.constant 5.000000e-01 : f32
    %462 = vector.broadcast %cst_216 : f32 to vector<2x128xf32>
    %463 = arith.addf %461, %462 : vector<2x128xf32>
    %464 = vector.extract_strided_slice %455 {offsets = [0, 128], sizes = [2, 128], strides = [1, 1]} : vector<2x512xf32> to vector<2x128xf32>
    %cst_217 = arith.constant 5.000000e-01 : f32
    %465 = vector.broadcast %cst_217 : f32 to vector<2x128xf32>
    %466 = arith.mulf %465, %464 : vector<2x128xf32>
    %467 = math.tanh %466 : vector<2x128xf32>
    %cst_218 = arith.constant 5.000000e-01 : f32
    %468 = vector.broadcast %cst_218 : f32 to vector<2x128xf32>
    %469 = arith.mulf %468, %467 : vector<2x128xf32>
    %cst_219 = arith.constant 5.000000e-01 : f32
    %470 = vector.broadcast %cst_219 : f32 to vector<2x128xf32>
    %471 = arith.addf %469, %470 : vector<2x128xf32>
    %472 = vector.extract_strided_slice %455 {offsets = [0, 256], sizes = [2, 128], strides = [1, 1]} : vector<2x512xf32> to vector<2x128xf32>
    %473 = math.tanh %472 : vector<2x128xf32>
    %474 = vector.extract_strided_slice %455 {offsets = [0, 384], sizes = [2, 128], strides = [1, 1]} : vector<2x512xf32> to vector<2x128xf32>
    %cst_220 = arith.constant 5.000000e-01 : f32
    %475 = vector.broadcast %cst_220 : f32 to vector<2x128xf32>
    %476 = arith.mulf %475, %474 : vector<2x128xf32>
    %477 = math.tanh %476 : vector<2x128xf32>
    %cst_221 = arith.constant 5.000000e-01 : f32
    %478 = vector.broadcast %cst_221 : f32 to vector<2x128xf32>
    %479 = arith.mulf %478, %477 : vector<2x128xf32>
    %cst_222 = arith.constant 5.000000e-01 : f32
    %480 = vector.broadcast %cst_222 : f32 to vector<2x128xf32>
    %481 = arith.addf %479, %480 : vector<2x128xf32>
    %482 = arith.mulf %471, %440 : vector<2x128xf32>
    %483 = arith.mulf %463, %473 : vector<2x128xf32>
    %484 = arith.addf %482, %483 : vector<2x128xf32>
    %485 = math.tanh %484 : vector<2x128xf32>
    %486 = arith.mulf %481, %485 : vector<2x128xf32>
    %487 = vector.extract_strided_slice %486 {offsets = [0, 0], sizes = [2, 64], strides = [1, 1]} : vector<2x128xf32> to vector<2x64xf32>
    %c10_223 = arith.constant 10 : index
    %c0_224 = arith.constant 0 : index
    %c0_225 = arith.constant 0 : index
    %488 = vector.load %arg10[%c10_223, %c0_224, %c0_225] : memref<14x2x64xf32, #tpu.memory_space<vmem>>, vector<1x2x64xf32>
    %489 = vector.shape_cast %488 : vector<1x2x64xf32> to vector<2x64xf32>
    %490 = vector.shape_cast %487 : vector<2x64xf32> to vector<1x2x64xf32>
    tpu.vector_store %arg10[%c10_223, %c0_224, %c0_225], %490 {strides = array<i32>} : memref<14x2x64xf32, #tpu.memory_space<vmem>>, vector<1x2x64xf32>,
    %491 = vector.extract_strided_slice %486 {offsets = [0, 64], sizes = [2, 64], strides = [1, 1]} : vector<2x128xf32> to vector<2x64xf32>
    %c3_226 = arith.constant 3 : index
    %c0_227 = arith.constant 0 : index
    %c0_228 = arith.constant 0 : index
    %492 = vector.load %arg11[%c3_226, %c0_227, %c0_228] : memref<14x2x64xf32, #tpu.memory_space<vmem>>, vector<1x2x64xf32>
    %493 = vector.shape_cast %492 : vector<1x2x64xf32> to vector<2x64xf32>
    %494 = vector.shape_cast %491 : vector<2x64xf32> to vector<1x2x64xf32>
    tpu.vector_store %arg11[%c3_226, %c0_227, %c0_228], %494 {strides = array<i32>} : memref<14x2x64xf32, #tpu.memory_space<vmem>>, vector<1x2x64xf32>,
    %c11_229 = arith.constant 11 : index
    %c0_230 = arith.constant 0 : index
    %c0_231 = arith.constant 0 : index
    %495 = vector.load %arg9[%c11_229, %c0_230, %c0_231] : memref<14x2x512xf32, #tpu.memory_space<vmem>>, vector<1x2x512xf32>
    %496 = vector.shape_cast %495 : vector<1x2x512xf32> to vector<2x512xf32>
    %c0_232 = arith.constant 0 : index
    %c0_233 = arith.constant 0 : index
    %497 = vector.load %arg3[%c0_232, %c0_233] : memref<128x512xf32, #tpu.memory_space<vmem>>, vector<128x512xf32>
    %cst_234 = arith.constant dense<0.000000e+00> : vector<2x512xf32>
    %498 = tpu.matmul %486, %497, %cst_234 {dimension_numbers = #tpu.dot_dimension_numbers<[1], [0], [0], [1], [0, 0, 1, 1], [], []>} : vector<2x128xf32>, vector<128x512xf32>, vector<2x512xf32> -> vector<2x512xf32>
    %499 = arith.addf %496, %498 : vector<2x512xf32>
    %500 = vector.extract_strided_slice %499 {offsets = [0, 0], sizes = [2, 128], strides = [1, 1]} : vector<2x512xf32> to vector<2x128xf32>
    %cst_235 = arith.constant 5.000000e-01 : f32
    %501 = vector.broadcast %cst_235 : f32 to vector<2x128xf32>
    %502 = arith.mulf %501, %500 : vector<2x128xf32>
    %503 = math.tanh %502 : vector<2x128xf32>
    %cst_236 = arith.constant 5.000000e-01 : f32
    %504 = vector.broadcast %cst_236 : f32 to vector<2x128xf32>
    %505 = arith.mulf %504, %503 : vector<2x128xf32>
    %cst_237 = arith.constant 5.000000e-01 : f32
    %506 = vector.broadcast %cst_237 : f32 to vector<2x128xf32>
    %507 = arith.addf %505, %506 : vector<2x128xf32>
    %508 = vector.extract_strided_slice %499 {offsets = [0, 128], sizes = [2, 128], strides = [1, 1]} : vector<2x512xf32> to vector<2x128xf32>
    %cst_238 = arith.constant 5.000000e-01 : f32
    %509 = vector.broadcast %cst_238 : f32 to vector<2x128xf32>
    %510 = arith.mulf %509, %508 : vector<2x128xf32>
    %511 = math.tanh %510 : vector<2x128xf32>
    %cst_239 = arith.constant 5.000000e-01 : f32
    %512 = vector.broadcast %cst_239 : f32 to vector<2x128xf32>
    %513 = arith.mulf %512, %511 : vector<2x128xf32>
    %cst_240 = arith.constant 5.000000e-01 : f32
    %514 = vector.broadcast %cst_240 : f32 to vector<2x128xf32>
    %515 = arith.addf %513, %514 : vector<2x128xf32>
    %516 = vector.extract_strided_slice %499 {offsets = [0, 256], sizes = [2, 128], strides = [1, 1]} : vector<2x512xf32> to vector<2x128xf32>
    %517 = math.tanh %516 : vector<2x128xf32>
    %518 = vector.extract_strided_slice %499 {offsets = [0, 384], sizes = [2, 128], strides = [1, 1]} : vector<2x512xf32> to vector<2x128xf32>
    %cst_241 = arith.constant 5.000000e-01 : f32
    %519 = vector.broadcast %cst_241 : f32 to vector<2x128xf32>
    %520 = arith.mulf %519, %518 : vector<2x128xf32>
    %521 = math.tanh %520 : vector<2x128xf32>
    %cst_242 = arith.constant 5.000000e-01 : f32
    %522 = vector.broadcast %cst_242 : f32 to vector<2x128xf32>
    %523 = arith.mulf %522, %521 : vector<2x128xf32>
    %cst_243 = arith.constant 5.000000e-01 : f32
    %524 = vector.broadcast %cst_243 : f32 to vector<2x128xf32>
    %525 = arith.addf %523, %524 : vector<2x128xf32>
    %526 = arith.mulf %515, %484 : vector<2x128xf32>
    %527 = arith.mulf %507, %517 : vector<2x128xf32>
    %528 = arith.addf %526, %527 : vector<2x128xf32>
    %529 = math.tanh %528 : vector<2x128xf32>
    %530 = arith.mulf %525, %529 : vector<2x128xf32>
    %531 = vector.extract_strided_slice %530 {offsets = [0, 0], sizes = [2, 64], strides = [1, 1]} : vector<2x128xf32> to vector<2x64xf32>
    %c11_244 = arith.constant 11 : index
    %c0_245 = arith.constant 0 : index
    %c0_246 = arith.constant 0 : index
    %532 = vector.load %arg10[%c11_244, %c0_245, %c0_246] : memref<14x2x64xf32, #tpu.memory_space<vmem>>, vector<1x2x64xf32>
    %533 = vector.shape_cast %532 : vector<1x2x64xf32> to vector<2x64xf32>
    %534 = vector.shape_cast %531 : vector<2x64xf32> to vector<1x2x64xf32>
    tpu.vector_store %arg10[%c11_244, %c0_245, %c0_246], %534 {strides = array<i32>} : memref<14x2x64xf32, #tpu.memory_space<vmem>>, vector<1x2x64xf32>,
    %535 = vector.extract_strided_slice %530 {offsets = [0, 64], sizes = [2, 64], strides = [1, 1]} : vector<2x128xf32> to vector<2x64xf32>
    %c2_247 = arith.constant 2 : index
    %c0_248 = arith.constant 0 : index
    %c0_249 = arith.constant 0 : index
    %536 = vector.load %arg11[%c2_247, %c0_248, %c0_249] : memref<14x2x64xf32, #tpu.memory_space<vmem>>, vector<1x2x64xf32>
    %537 = vector.shape_cast %536 : vector<1x2x64xf32> to vector<2x64xf32>
    %538 = vector.shape_cast %535 : vector<2x64xf32> to vector<1x2x64xf32>
    tpu.vector_store %arg11[%c2_247, %c0_248, %c0_249], %538 {strides = array<i32>} : memref<14x2x64xf32, #tpu.memory_space<vmem>>, vector<1x2x64xf32>,
    %c12_250 = arith.constant 12 : index
    %c0_251 = arith.constant 0 : index
    %c0_252 = arith.constant 0 : index
    %539 = vector.load %arg9[%c12_250, %c0_251, %c0_252] : memref<14x2x512xf32, #tpu.memory_space<vmem>>, vector<1x2x512xf32>
    %540 = vector.shape_cast %539 : vector<1x2x512xf32> to vector<2x512xf32>
    %c0_253 = arith.constant 0 : index
    %c0_254 = arith.constant 0 : index
    %541 = vector.load %arg3[%c0_253, %c0_254] : memref<128x512xf32, #tpu.memory_space<vmem>>, vector<128x512xf32>
    %cst_255 = arith.constant dense<0.000000e+00> : vector<2x512xf32>
    %542 = tpu.matmul %530, %541, %cst_255 {dimension_numbers = #tpu.dot_dimension_numbers<[1], [0], [0], [1], [0, 0, 1, 1], [], []>} : vector<2x128xf32>, vector<128x512xf32>, vector<2x512xf32> -> vector<2x512xf32>
    %543 = arith.addf %540, %542 : vector<2x512xf32>
    %544 = vector.extract_strided_slice %543 {offsets = [0, 0], sizes = [2, 128], strides = [1, 1]} : vector<2x512xf32> to vector<2x128xf32>
    %cst_256 = arith.constant 5.000000e-01 : f32
    %545 = vector.broadcast %cst_256 : f32 to vector<2x128xf32>
    %546 = arith.mulf %545, %544 : vector<2x128xf32>
    %547 = math.tanh %546 : vector<2x128xf32>
    %cst_257 = arith.constant 5.000000e-01 : f32
    %548 = vector.broadcast %cst_257 : f32 to vector<2x128xf32>
    %549 = arith.mulf %548, %547 : vector<2x128xf32>
    %cst_258 = arith.constant 5.000000e-01 : f32
    %550 = vector.broadcast %cst_258 : f32 to vector<2x128xf32>
    %551 = arith.addf %549, %550 : vector<2x128xf32>
    %552 = vector.extract_strided_slice %543 {offsets = [0, 128], sizes = [2, 128], strides = [1, 1]} : vector<2x512xf32> to vector<2x128xf32>
    %cst_259 = arith.constant 5.000000e-01 : f32
    %553 = vector.broadcast %cst_259 : f32 to vector<2x128xf32>
    %554 = arith.mulf %553, %552 : vector<2x128xf32>
    %555 = math.tanh %554 : vector<2x128xf32>
    %cst_260 = arith.constant 5.000000e-01 : f32
    %556 = vector.broadcast %cst_260 : f32 to vector<2x128xf32>
    %557 = arith.mulf %556, %555 : vector<2x128xf32>
    %cst_261 = arith.constant 5.000000e-01 : f32
    %558 = vector.broadcast %cst_261 : f32 to vector<2x128xf32>
    %559 = arith.addf %557, %558 : vector<2x128xf32>
    %560 = vector.extract_strided_slice %543 {offsets = [0, 256], sizes = [2, 128], strides = [1, 1]} : vector<2x512xf32> to vector<2x128xf32>
    %561 = math.tanh %560 : vector<2x128xf32>
    %562 = vector.extract_strided_slice %543 {offsets = [0, 384], sizes = [2, 128], strides = [1, 1]} : vector<2x512xf32> to vector<2x128xf32>
    %cst_262 = arith.constant 5.000000e-01 : f32
    %563 = vector.broadcast %cst_262 : f32 to vector<2x128xf32>
    %564 = arith.mulf %563, %562 : vector<2x128xf32>
    %565 = math.tanh %564 : vector<2x128xf32>
    %cst_263 = arith.constant 5.000000e-01 : f32
    %566 = vector.broadcast %cst_263 : f32 to vector<2x128xf32>
    %567 = arith.mulf %566, %565 : vector<2x128xf32>
    %cst_264 = arith.constant 5.000000e-01 : f32
    %568 = vector.broadcast %cst_264 : f32 to vector<2x128xf32>
    %569 = arith.addf %567, %568 : vector<2x128xf32>
    %570 = arith.mulf %559, %528 : vector<2x128xf32>
    %571 = arith.mulf %551, %561 : vector<2x128xf32>
    %572 = arith.addf %570, %571 : vector<2x128xf32>
    %573 = math.tanh %572 : vector<2x128xf32>
    %574 = arith.mulf %569, %573 : vector<2x128xf32>
    %575 = vector.extract_strided_slice %574 {offsets = [0, 0], sizes = [2, 64], strides = [1, 1]} : vector<2x128xf32> to vector<2x64xf32>
    %c12_265 = arith.constant 12 : index
    %c0_266 = arith.constant 0 : index
    %c0_267 = arith.constant 0 : index
    %576 = vector.load %arg10[%c12_265, %c0_266, %c0_267] : memref<14x2x64xf32, #tpu.memory_space<vmem>>, vector<1x2x64xf32>
    %577 = vector.shape_cast %576 : vector<1x2x64xf32> to vector<2x64xf32>
    %578 = vector.shape_cast %575 : vector<2x64xf32> to vector<1x2x64xf32>
    tpu.vector_store %arg10[%c12_265, %c0_266, %c0_267], %578 {strides = array<i32>} : memref<14x2x64xf32, #tpu.memory_space<vmem>>, vector<1x2x64xf32>,
    %579 = vector.extract_strided_slice %574 {offsets = [0, 64], sizes = [2, 64], strides = [1, 1]} : vector<2x128xf32> to vector<2x64xf32>
    %c1_268 = arith.constant 1 : index
    %c0_269 = arith.constant 0 : index
    %c0_270 = arith.constant 0 : index
    %580 = vector.load %arg11[%c1_268, %c0_269, %c0_270] : memref<14x2x64xf32, #tpu.memory_space<vmem>>, vector<1x2x64xf32>
    %581 = vector.shape_cast %580 : vector<1x2x64xf32> to vector<2x64xf32>
    %582 = vector.shape_cast %579 : vector<2x64xf32> to vector<1x2x64xf32>
    tpu.vector_store %arg11[%c1_268, %c0_269, %c0_270], %582 {strides = array<i32>} : memref<14x2x64xf32, #tpu.memory_space<vmem>>, vector<1x2x64xf32>,
    %c13_271 = arith.constant 13 : index
    %c0_272 = arith.constant 0 : index
    %c0_273 = arith.constant 0 : index
    %583 = vector.load %arg9[%c13_271, %c0_272, %c0_273] : memref<14x2x512xf32, #tpu.memory_space<vmem>>, vector<1x2x512xf32>
    %584 = vector.shape_cast %583 : vector<1x2x512xf32> to vector<2x512xf32>
    %c0_274 = arith.constant 0 : index
    %c0_275 = arith.constant 0 : index
    %585 = vector.load %arg3[%c0_274, %c0_275] : memref<128x512xf32, #tpu.memory_space<vmem>>, vector<128x512xf32>
    %cst_276 = arith.constant dense<0.000000e+00> : vector<2x512xf32>
    %586 = tpu.matmul %574, %585, %cst_276 {dimension_numbers = #tpu.dot_dimension_numbers<[1], [0], [0], [1], [0, 0, 1, 1], [], []>} : vector<2x128xf32>, vector<128x512xf32>, vector<2x512xf32> -> vector<2x512xf32>
    %587 = arith.addf %584, %586 : vector<2x512xf32>
    %588 = vector.extract_strided_slice %587 {offsets = [0, 0], sizes = [2, 128], strides = [1, 1]} : vector<2x512xf32> to vector<2x128xf32>
    %cst_277 = arith.constant 5.000000e-01 : f32
    %589 = vector.broadcast %cst_277 : f32 to vector<2x128xf32>
    %590 = arith.mulf %589, %588 : vector<2x128xf32>
    %591 = math.tanh %590 : vector<2x128xf32>
    %cst_278 = arith.constant 5.000000e-01 : f32
    %592 = vector.broadcast %cst_278 : f32 to vector<2x128xf32>
    %593 = arith.mulf %592, %591 : vector<2x128xf32>
    %cst_279 = arith.constant 5.000000e-01 : f32
    %594 = vector.broadcast %cst_279 : f32 to vector<2x128xf32>
    %595 = arith.addf %593, %594 : vector<2x128xf32>
    %596 = vector.extract_strided_slice %587 {offsets = [0, 128], sizes = [2, 128], strides = [1, 1]} : vector<2x512xf32> to vector<2x128xf32>
    %cst_280 = arith.constant 5.000000e-01 : f32
    %597 = vector.broadcast %cst_280 : f32 to vector<2x128xf32>
    %598 = arith.mulf %597, %596 : vector<2x128xf32>
    %599 = math.tanh %598 : vector<2x128xf32>
    %cst_281 = arith.constant 5.000000e-01 : f32
    %600 = vector.broadcast %cst_281 : f32 to vector<2x128xf32>
    %601 = arith.mulf %600, %599 : vector<2x128xf32>
    %cst_282 = arith.constant 5.000000e-01 : f32
    %602 = vector.broadcast %cst_282 : f32 to vector<2x128xf32>
    %603 = arith.addf %601, %602 : vector<2x128xf32>
    %604 = vector.extract_strided_slice %587 {offsets = [0, 256], sizes = [2, 128], strides = [1, 1]} : vector<2x512xf32> to vector<2x128xf32>
    %605 = math.tanh %604 : vector<2x128xf32>
    %606 = vector.extract_strided_slice %587 {offsets = [0, 384], sizes = [2, 128], strides = [1, 1]} : vector<2x512xf32> to vector<2x128xf32>
    %cst_283 = arith.constant 5.000000e-01 : f32
    %607 = vector.broadcast %cst_283 : f32 to vector<2x128xf32>
    %608 = arith.mulf %607, %606 : vector<2x128xf32>
    %609 = math.tanh %608 : vector<2x128xf32>
    %cst_284 = arith.constant 5.000000e-01 : f32
    %610 = vector.broadcast %cst_284 : f32 to vector<2x128xf32>
    %611 = arith.mulf %610, %609 : vector<2x128xf32>
    %cst_285 = arith.constant 5.000000e-01 : f32
    %612 = vector.broadcast %cst_285 : f32 to vector<2x128xf32>
    %613 = arith.addf %611, %612 : vector<2x128xf32>
    %614 = arith.mulf %603, %572 : vector<2x128xf32>
    %615 = arith.mulf %595, %605 : vector<2x128xf32>
    %616 = arith.addf %614, %615 : vector<2x128xf32>
    %617 = math.tanh %616 : vector<2x128xf32>
    %618 = arith.mulf %613, %617 : vector<2x128xf32>
    %619 = vector.extract_strided_slice %618 {offsets = [0, 0], sizes = [2, 64], strides = [1, 1]} : vector<2x128xf32> to vector<2x64xf32>
    %c13_286 = arith.constant 13 : index
    %c0_287 = arith.constant 0 : index
    %c0_288 = arith.constant 0 : index
    %620 = vector.load %arg10[%c13_286, %c0_287, %c0_288] : memref<14x2x64xf32, #tpu.memory_space<vmem>>, vector<1x2x64xf32>
    %621 = vector.shape_cast %620 : vector<1x2x64xf32> to vector<2x64xf32>
    %622 = vector.shape_cast %619 : vector<2x64xf32> to vector<1x2x64xf32>
    tpu.vector_store %arg10[%c13_286, %c0_287, %c0_288], %622 {strides = array<i32>} : memref<14x2x64xf32, #tpu.memory_space<vmem>>, vector<1x2x64xf32>,
    %623 = vector.extract_strided_slice %618 {offsets = [0, 64], sizes = [2, 64], strides = [1, 1]} : vector<2x128xf32> to vector<2x64xf32>
    %c0_289 = arith.constant 0 : index
    %c0_290 = arith.constant 0 : index
    %c0_291 = arith.constant 0 : index
    %624 = vector.load %arg11[%c0_289, %c0_290, %c0_291] : memref<14x2x64xf32, #tpu.memory_space<vmem>>, vector<1x2x64xf32>
    %625 = vector.shape_cast %624 : vector<1x2x64xf32> to vector<2x64xf32>
    %626 = vector.shape_cast %623 : vector<2x64xf32> to vector<1x2x64xf32>
    tpu.vector_store %arg11[%c0_289, %c0_290, %c0_291], %626 {strides = array<i32>} : memref<14x2x64xf32, #tpu.memory_space<vmem>>, vector<1x2x64xf32>,
    %c0_292 = arith.constant 0 : index
    %c0_293 = arith.constant 0 : index
    %c0_294 = arith.constant 0 : index
    %627 = vector.load %arg10[%c0_292, %c0_293, %c0_294] : memref<14x2x64xf32, #tpu.memory_space<vmem>>, vector<14x2x64xf32>
    %cst_295 = arith.constant dense<0.000000e+00> : vector<14x2xf32>
    %628 = vector.multi_reduction <add>, %627, %cst_295 [2] : vector<14x2x64xf32> to vector<14x2xf32>
    %c0_296 = arith.constant 0 : index
    %c0_297 = arith.constant 0 : index
    %c0_298 = arith.constant 0 : index
    %629 = vector.load %arg11[%c0_296, %c0_297, %c0_298] : memref<14x2x64xf32, #tpu.memory_space<vmem>>, vector<14x2x64xf32>
    %cst_299 = arith.constant dense<0.000000e+00> : vector<14x2xf32>
    %630 = vector.multi_reduction <add>, %629, %cst_299 [2] : vector<14x2x64xf32> to vector<14x2xf32>
    %631 = arith.addf %628, %630 : vector<14x2xf32>
    %cst_300 = arith.constant 7.812500e-03 : f32
    %632 = vector.broadcast %cst_300 : f32 to vector<14x2xf32>
    %633 = arith.mulf %631, %632 : vector<14x2xf32>
    %c0_301 = arith.constant 0 : index
    %c0_302 = arith.constant 0 : index
    %634 = vector.load %arg4[%c0_301, %c0_302] : memref<8x14xf32, #tpu.memory_space<vmem>>, vector<8x14xf32>
    %cst_303 = arith.constant dense<0.000000e+00> : vector<8x2xf32>
    %635 = tpu.matmul %634, %633, %cst_303 {dimension_numbers = #tpu.dot_dimension_numbers<[1], [0], [0], [1], [0, 0, 1, 1], [], []>} : vector<8x14xf32>, vector<14x2xf32>, vector<8x2xf32> -> vector<8x2xf32>
    %c0_304 = arith.constant 0 : index
    %c0_305 = arith.constant 0 : index
    %636 = vector.load %arg5[%c0_304, %c0_305] : memref<8x1xf32, #tpu.memory_space<vmem>>, vector<8x1xf32>
    %637 = vector.broadcast %636 : vector<8x1xf32> to vector<8x2xf32>
    %638 = arith.addf %635, %637 : vector<8x2xf32>
    %cst_306 = arith.constant 0.000000e+00 : f32
    %639 = vector.broadcast %cst_306 : f32 to vector<8x2xf32>
    %640 = arith.maximumf %638, %639 : vector<8x2xf32>
    %c0_307 = arith.constant 0 : index
    %c0_308 = arith.constant 0 : index
    %641 = vector.load %arg6[%c0_307, %c0_308] : memref<2x8xf32, #tpu.memory_space<vmem>>, vector<2x8xf32>
    %cst_309 = arith.constant dense<0.000000e+00> : vector<2x2xf32>
    %642 = tpu.matmul %641, %640, %cst_309 {dimension_numbers = #tpu.dot_dimension_numbers<[1], [0], [0], [1], [0, 0, 1, 1], [], []>} : vector<2x8xf32>, vector<8x2xf32>, vector<2x2xf32> -> vector<2x2xf32>
    %c0_310 = arith.constant 0 : index
    %c0_311 = arith.constant 0 : index
    %643 = vector.load %arg7[%c0_310, %c0_311] : memref<2x1xf32, #tpu.memory_space<vmem>>, vector<2x1xf32>
    %644 = vector.broadcast %643 : vector<2x1xf32> to vector<2x2xf32>
    %645 = arith.addf %642, %644 : vector<2x2xf32>
    %c0_312 = arith.constant 0 : index
    %c0_313 = arith.constant 0 : index
    %646 = vector.load %arg8[%c0_312, %c0_313] : memref<2x2xf32, #tpu.memory_space<vmem>>, vector<2x2xf32>
    tpu.vector_store %arg8[%c0_312, %c0_313], %645 {strides = array<i32>} : memref<2x2xf32, #tpu.memory_space<vmem>>, vector<2x2xf32>,
    return
  }
}

</mosaic_0001>

<llo_original>
// kernel: clsa_entropy_forward.2
$region0: #{clsa_entropy_forward.2}
  #allocation0 [shape = 'u32[]', space=smem, size = 0x4, offset = 0x4, fixed_abs, tag = 'smem constant byte address 0x4 - core index']
  #allocation1 [shape = 'u32[144,128]{1,0:T(1,128)}', space=vmem, size = 0x12000, scoped, tag = 'internal scratch']
  #allocation2 [shape = 'f32[68,128]{1,0:T(8,128)}', space=vmem, size = 0x9000, scoped, tag = 'scratch operand']
  %s0 = inlined_call_operand.vmem [shape: f32[2,66,7], index: 0, kind: input, shape index: {}]
  %s1 = inlined_call_operand.vmem [shape: f32[48,112], index: 1, kind: input, shape index: {}]
  %s2 = inlined_call_operand.vmem [shape: f32[1,112], index: 2, kind: input, shape index: {}]
  %s3 = inlined_call_operand.vmem [shape: f32[336,112], index: 3, kind: input, shape index: {}]
  %s4 = inlined_call_operand.vmem [shape: f32[1,112], index: 4, kind: input, shape index: {}]
  %s5 = inlined_call_operand.vmem [shape: f32[336,112], index: 5, kind: input, shape index: {}]
  %s6 = inlined_call_operand.vmem [shape: f32[1,112], index: 6, kind: input, shape index: {}]
  %s7 = inlined_call_operand.vmem [shape: f32[336,112], index: 7, kind: input, shape index: {}]
  %s8 = inlined_call_operand.vmem [shape: f32[1,112], index: 8, kind: input, shape index: {}]
  %s9 = inlined_call_operand.vmem [shape: f32[336,112], index: 9, kind: input, shape index: {}]
  %s10 = inlined_call_operand.vmem [shape: f32[1,112], index: 10, kind: input, shape index: {}]
  %s11 = inlined_call_operand.vmem [shape: f32[336,112], index: 11, kind: input, shape index: {}]
  %s12 = inlined_call_operand.vmem [shape: f32[1,112], index: 12, kind: input, shape index: {}]
  %s13 = inlined_call_operand.vmem [shape: f32[336,112], index: 13, kind: input, shape index: {}]
  %s14 = inlined_call_operand.vmem [shape: f32[1,112], index: 14, kind: input, shape index: {}]
  %s15 = inlined_call_operand.vmem [shape: f32[34,66], index: 15, kind: input, shape index: {}]
  %s16 = inlined_call_operand.vmem [shape: f32[34,66], index: 16, kind: input, shape index: {}]
  %s17 = inlined_call_operand.vmem [shape: f32[2,14,112], index: 17, kind: output, shape index: {}]
  %s18 = sld [smem:[#allocation0]]
  $region101: #{clsa_entropy_forward.2} parent=0
    _
  %s20 = ssub.s32 1, %s18
  %s21 = scalar_select 0, %s20, %s18
  loop: start=0, step=1, limit=4
  $region2: #{clsa_entropy_forward.2} parent=0 // loop_pre_header
    _
  $region3: #{clsa_entropy_forward.2} parent=0 // loop_header
    %s23 = sphi 0, %s27
    %p24 = scmp.ge.s32.totalorder %s23, 4
    %s33 = sphi 0, %s35
    %s36 = sphi 0, %s33
    %s37 = sphi 0, %s36
    %s53 = sphi 0, %s37
    %s57 = sphi 0, %s57
    %s59 = sphi 0, %s57
    %s60 = sphi 0, %s59
    %s74 = sphi 0, %s60
    %s78 = sphi 0, %s78
    %s80 = sphi 0, %s78
    %s81 = sphi 0, %s80
    %s95 = sphi 0, %s81
    %s99 = sphi 0, %s99
    %s101 = sphi 0, %s99
    %s102 = sphi 0, %s101
    %s116 = sphi 0, %s102
    %s120 = sphi 0, %s120
    %s122 = sphi 0, %s120
    %s123 = sphi 0, %s122
    %s137 = sphi 0, %s123
    %s141 = sphi 0, %s141
    %s143 = sphi 0, %s141
    %s144 = sphi 0, %s143
    %s158 = sphi 0, %s144
    %s162 = sphi 0, %s162
    %s164 = sphi 0, %s162
    %s165 = sphi 0, %s164
    %s179 = sphi 0, %s165
    %s183 = sphi 0, %s183
    %s185 = sphi 0, %s183
    %s186 = sphi 0, %s185
    %s200 = sphi 0, %s186
    %s204 = sphi 0, %s204
    %s206 = sphi 0, %s204
    %s207 = sphi 0, %s206
    %s221 = sphi 0, %s207
    %s225 = sphi 0, %s225
    %s227 = sphi 0, %s225
    %s228 = sphi 0, %s227
    %s242 = sphi 0, %s228
    %s246 = sphi 0, %s246
    %s248 = sphi 0, %s246
    %s249 = sphi 0, %s248
    %s263 = sphi 0, %s249
    %s267 = sphi 0, %s267
    %s269 = sphi 0, %s267
    %s270 = sphi 0, %s269
    %s284 = sphi 0, %s270
    %s288 = sphi 0, %s288
    %s290 = sphi 0, %s288
    %s291 = sphi 0, %s290
    %s305 = sphi 0, %s291
    %s309 = sphi 0, %s309
    %s311 = sphi 0, %s309
    %s312 = sphi 0, %s311
    %s326 = sphi 0, %s312
    %s330 = sphi 0, %s330
    %s332 = sphi 0, %s330
    %s333 = sphi 0, %s332
    %s347 = sphi 0, %s333
    %s351 = sphi 0, %s351
    %s353 = sphi 0, %s351
    %s354 = sphi 0, %s353
    %s368 = sphi 0, %s354
    %s372 = sphi 0, %s372
    %s374 = sphi 0, %s372
    %s375 = sphi 0, %s374
    %s389 = sphi 0, %s375
    %s395 = sphi 0, %s397
    %s398 = sphi 0, %s395
    %s399 = sphi 0, %s398
    %s415 = sphi 0, %s399
  $region4: #{clsa_entropy_forward.2} parent=0 // loop_header_branch
    %26 = sbr.rel (%p24) target = $region8
  $region5: #{clsa_entropy_forward.2} parent=0 // loop_body
    %s28 = ssub.s32 %s23, 1
    %s29 = ssub.s32 %s23, 2
    %s30 = sadd.s32 %s23, 1
    %s31 = ssub.s32 %s23, %s30
    %p32 = scmp.eq.s32.totalorder %s31, 0
    %s34 = sadd.s32 %s33, 1
    %s35 = scalar_select %p32, %s33, %s34
    %p38 = pneg %p32
    %p39 = scmp.eq.s32.totalorder %s23, 1
    %p40 = por %p38, %p39
    %p41 = scmp.ne.s32.totalorder %s33, %s36
    %p42 = scmp.eq.s32.totalorder %s23, 0
    %p43 = por %p41, %p42
    %p44 = scmp.ne.s32.totalorder %s33, %s36
    %p45 = scmp.eq.s32.totalorder %s28, 1
    %p46 = por %p44, %p45
    %p47 = scmp.ne.s32.totalorder %s36, %s37
    %p48 = scmp.eq.s32.totalorder %s28, 0
    %p49 = por %p47, %p48
    %p50 = scmp.ne.s32.totalorder %s36, %s37
    %p51 = scmp.eq.s32.totalorder %s29, 1
    %p52 = por %p50, %p51
    %p54 = scmp.ne.s32.totalorder %s37, %s53
    %p55 = scmp.eq.s32.totalorder %s29, 0
    %p56 = por %p54, %p55
    %s58 = sadd.s32 %s57, 1
    %p61 = scmp.eq.s32.totalorder %s23, 1
    %p62 = scmp.ne.s32.totalorder %s57, %s59
    %p63 = scmp.eq.s32.totalorder %s23, 0
    %p64 = por %p62, %p63
    %p65 = scmp.ne.s32.totalorder %s57, %s59
    %p66 = scmp.eq.s32.totalorder %s28, 1
    %p67 = por %p65, %p66
    %p68 = scmp.ne.s32.totalorder %s59, %s60
    %p69 = scmp.eq.s32.totalorder %s28, 0
    %p70 = por %p68, %p69
    %p71 = scmp.ne.s32.totalorder %s59, %s60
    %p72 = scmp.eq.s32.totalorder %s29, 1
    %p73 = por %p71, %p72
    %p75 = scmp.ne.s32.totalorder %s60, %s74
    %p76 = scmp.eq.s32.totalorder %s29, 0
    %p77 = por %p75, %p76
    %s79 = sadd.s32 %s78, 1
    %p82 = scmp.eq.s32.totalorder %s23, 1
    %p83 = scmp.ne.s32.totalorder %s78, %s80
    %p84 = scmp.eq.s32.totalorder %s23, 0
    %p85 = por %p83, %p84
    %p86 = scmp.ne.s32.totalorder %s78, %s80
    %p87 = scmp.eq.s32.totalorder %s28, 1
    %p88 = por %p86, %p87
    %p89 = scmp.ne.s32.totalorder %s80, %s81
    %p90 = scmp.eq.s32.totalorder %s28, 0
    %p91 = por %p89, %p90
    %p92 = scmp.ne.s32.totalorder %s80, %s81
    %p93 = scmp.eq.s32.totalorder %s29, 1
    %p94 = por %p92, %p93
    %p96 = scmp.ne.s32.totalorder %s81, %s95
    %p97 = scmp.eq.s32.totalorder %s29, 0
    %p98 = por %p96, %p97
    %s100 = sadd.s32 %s99, 1
    %p103 = scmp.eq.s32.totalorder %s23, 1
    %p104 = scmp.ne.s32.totalorder %s99, %s101
    %p105 = scmp.eq.s32.totalorder %s23, 0
    %p106 = por %p104, %p105
    %p107 = scmp.ne.s32.totalorder %s99, %s101
    %p108 = scmp.eq.s32.totalorder %s28, 1
    %p109 = por %p107, %p108
    %p110 = scmp.ne.s32.totalorder %s101, %s102
    %p111 = scmp.eq.s32.totalorder %s28, 0
    %p112 = por %p110, %p111
    %p113 = scmp.ne.s32.totalorder %s101, %s102
    %p114 = scmp.eq.s32.totalorder %s29, 1
    %p115 = por %p113, %p114
    %p117 = scmp.ne.s32.totalorder %s102, %s116
    %p118 = scmp.eq.s32.totalorder %s29, 0
    %p119 = por %p117, %p118
    %s121 = sadd.s32 %s120, 1
    %p124 = scmp.eq.s32.totalorder %s23, 1
    %p125 = scmp.ne.s32.totalorder %s120, %s122
    %p126 = scmp.eq.s32.totalorder %s23, 0
    %p127 = por %p125, %p126
    %p128 = scmp.ne.s32.totalorder %s120, %s122
    %p129 = scmp.eq.s32.totalorder %s28, 1
    %p130 = por %p128, %p129
    %p131 = scmp.ne.s32.totalorder %s122, %s123
    %p132 = scmp.eq.s32.totalorder %s28, 0
    %p133 = por %p131, %p132
    %p134 = scmp.ne.s32.totalorder %s122, %s123
    %p135 = scmp.eq.s32.totalorder %s29, 1
    %p136 = por %p134, %p135
    %p138 = scmp.ne.s32.totalorder %s123, %s137
    %p139 = scmp.eq.s32.totalorder %s29, 0
    %p140 = por %p138, %p139
    %s142 = sadd.s32 %s141, 1
    %p145 = scmp.eq.s32.totalorder %s23, 1
    %p146 = scmp.ne.s32.totalorder %s141, %s143
    %p147 = scmp.eq.s32.totalorder %s23, 0
    %p148 = por %p146, %p147
    %p149 = scmp.ne.s32.totalorder %s141, %s143
    %p150 = scmp.eq.s32.totalorder %s28, 1
    %p151 = por %p149, %p150
    %p152 = scmp.ne.s32.totalorder %s143, %s144
    %p153 = scmp.eq.s32.totalorder %s28, 0
    %p154 = por %p152, %p153
    %p155 = scmp.ne.s32.totalorder %s143, %s144
    %p156 = scmp.eq.s32.totalorder %s29, 1
    %p157 = por %p155, %p156
    %p159 = scmp.ne.s32.totalorder %s144, %s158
    %p160 = scmp.eq.s32.totalorder %s29, 0
    %p161 = por %p159, %p160
    %s163 = sadd.s32 %s162, 1
    %p166 = scmp.eq.s32.totalorder %s23, 1
    %p167 = scmp.ne.s32.totalorder %s162, %s164
    %p168 = scmp.eq.s32.totalorder %s23, 0
    %p169 = por %p167, %p168
    %p170 = scmp.ne.s32.totalorder %s162, %s164
    %p171 = scmp.eq.s32.totalorder %s28, 1
    %p172 = por %p170, %p171
    %p173 = scmp.ne.s32.totalorder %s164, %s165
    %p174 = scmp.eq.s32.totalorder %s28, 0
    %p175 = por %p173, %p174
    %p176 = scmp.ne.s32.totalorder %s164, %s165
    %p177 = scmp.eq.s32.totalorder %s29, 1
    %p178 = por %p176, %p177
    %p180 = scmp.ne.s32.totalorder %s165, %s179
    %p181 = scmp.eq.s32.totalorder %s29, 0
    %p182 = por %p180, %p181
    %s184 = sadd.s32 %s183, 1
    %p187 = scmp.eq.s32.totalorder %s23, 1
    %p188 = scmp.ne.s32.totalorder %s183, %s185
    %p189 = scmp.eq.s32.totalorder %s23, 0
    %p190 = por %p188, %p189
    %p191 = scmp.ne.s32.totalorder %s183, %s185
    %p192 = scmp.eq.s32.totalorder %s28, 1
    %p193 = por %p191, %p192
    %p194 = scmp.ne.s32.totalorder %s185, %s186
    %p195 = scmp.eq.s32.totalorder %s28, 0
    %p196 = por %p194, %p195
    %p197 = scmp.ne.s32.totalorder %s185, %s186
    %p198 = scmp.eq.s32.totalorder %s29, 1
    %p199 = por %p197, %p198
    %p201 = scmp.ne.s32.totalorder %s186, %s200
    %p202 = scmp.eq.s32.totalorder %s29, 0
    %p203 = por %p201, %p202
    %s205 = sadd.s32 %s204, 1
    %p208 = scmp.eq.s32.totalorder %s23, 1
    %p209 = scmp.ne.s32.totalorder %s204, %s206
    %p210 = scmp.eq.s32.totalorder %s23, 0
    %p211 = por %p209, %p210
    %p212 = scmp.ne.s32.totalorder %s204, %s206
    %p213 = scmp.eq.s32.totalorder %s28, 1
    %p214 = por %p212, %p213
    %p215 = scmp.ne.s32.totalorder %s206, %s207
    %p216 = scmp.eq.s32.totalorder %s28, 0
    %p217 = por %p215, %p216
    %p218 = scmp.ne.s32.totalorder %s206, %s207
    %p219 = scmp.eq.s32.totalorder %s29, 1
    %p220 = por %p218, %p219
    %p222 = scmp.ne.s32.totalorder %s207, %s221
    %p223 = scmp.eq.s32.totalorder %s29, 0
    %p224 = por %p222, %p223
    %s226 = sadd.s32 %s225, 1
    %p229 = scmp.eq.s32.totalorder %s23, 1
    %p230 = scmp.ne.s32.totalorder %s225, %s227
    %p231 = scmp.eq.s32.totalorder %s23, 0
    %p232 = por %p230, %p231
    %p233 = scmp.ne.s32.totalorder %s225, %s227
    %p234 = scmp.eq.s32.totalorder %s28, 1
    %p235 = por %p233, %p234
    %p236 = scmp.ne.s32.totalorder %s227, %s228
    %p237 = scmp.eq.s32.totalorder %s28, 0
    %p238 = por %p236, %p237
    %p239 = scmp.ne.s32.totalorder %s227, %s228
    %p240 = scmp.eq.s32.totalorder %s29, 1
    %p241 = por %p239, %p240
    %p243 = scmp.ne.s32.totalorder %s228, %s242
    %p244 = scmp.eq.s32.totalorder %s29, 0
    %p245 = por %p243, %p244
    %s247 = sadd.s32 %s246, 1
    %p250 = scmp.eq.s32.totalorder %s23, 1
    %p251 = scmp.ne.s32.totalorder %s246, %s248
    %p252 = scmp.eq.s32.totalorder %s23, 0
    %p253 = por %p251, %p252
    %p254 = scmp.ne.s32.totalorder %s246, %s248
    %p255 = scmp.eq.s32.totalorder %s28, 1
    %p256 = por %p254, %p255
    %p257 = scmp.ne.s32.totalorder %s248, %s249
    %p258 = scmp.eq.s32.totalorder %s28, 0
    %p259 = por %p257, %p258
    %p260 = scmp.ne.s32.totalorder %s248, %s249
    %p261 = scmp.eq.s32.totalorder %s29, 1
    %p262 = por %p260, %p261
    %p264 = scmp.ne.s32.totalorder %s249, %s263
    %p265 = scmp.eq.s32.totalorder %s29, 0
    %p266 = por %p264, %p265
    %s268 = sadd.s32 %s267, 1
    %p271 = scmp.eq.s32.totalorder %s23, 1
    %p272 = scmp.ne.s32.totalorder %s267, %s269
    %p273 = scmp.eq.s32.totalorder %s23, 0
    %p274 = por %p272, %p273
    %p275 = scmp.ne.s32.totalorder %s267, %s269
    %p276 = scmp.eq.s32.totalorder %s28, 1
    %p277 = por %p275, %p276
    %p278 = scmp.ne.s32.totalorder %s269, %s270
    %p279 = scmp.eq.s32.totalorder %s28, 0
    %p280 = por %p278, %p279
    %p281 = scmp.ne.s32.totalorder %s269, %s270
    %p282 = scmp.eq.s32.totalorder %s29, 1
    %p283 = por %p281, %p282
    %p285 = scmp.ne.s32.totalorder %s270, %s284
    %p286 = scmp.eq.s32.totalorder %s29, 0
    %p287 = por %p285, %p286
    %s289 = sadd.s32 %s288, 1
    %p292 = scmp.eq.s32.totalorder %s23, 1
    %p293 = scmp.ne.s32.totalorder %s288, %s290
    %p294 = scmp.eq.s32.totalorder %s23, 0
    %p295 = por %p293, %p294
    %p296 = scmp.ne.s32.totalorder %s288, %s290
    %p297 = scmp.eq.s32.totalorder %s28, 1
    %p298 = por %p296, %p297
    %p299 = scmp.ne.s32.totalorder %s290, %s291
    %p300 = scmp.eq.s32.totalorder %s28, 0
    %p301 = por %p299, %p300
    %p302 = scmp.ne.s32.totalorder %s290, %s291
    %p303 = scmp.eq.s32.totalorder %s29, 1
    %p304 = por %p302, %p303
    %p306 = scmp.ne.s32.totalorder %s291, %s305
    %p307 = scmp.eq.s32.totalorder %s29, 0
    %p308 = por %p306, %p307
    %s310 = sadd.s32 %s309, 1
    %p313 = scmp.eq.s32.totalorder %s23, 1
    %p314 = scmp.ne.s32.totalorder %s309, %s311
    %p315 = scmp.eq.s32.totalorder %s23, 0
    %p316 = por %p314, %p315
    %p317 = scmp.ne.s32.totalorder %s309, %s311
    %p318 = scmp.eq.s32.totalorder %s28, 1
    %p319 = por %p317, %p318
    %p320 = scmp.ne.s32.totalorder %s311, %s312
    %p321 = scmp.eq.s32.totalorder %s28, 0
    %p322 = por %p320, %p321
    %p323 = scmp.ne.s32.totalorder %s311, %s312
    %p324 = scmp.eq.s32.totalorder %s29, 1
    %p325 = por %p323, %p324
    %p327 = scmp.ne.s32.totalorder %s312, %s326
    %p328 = scmp.eq.s32.totalorder %s29, 0
    %p329 = por %p327, %p328
    %s331 = sadd.s32 %s330, 1
    %p334 = scmp.eq.s32.totalorder %s23, 1
    %p335 = scmp.ne.s32.totalorder %s330, %s332
    %p336 = scmp.eq.s32.totalorder %s23, 0
    %p337 = por %p335, %p336
    %p338 = scmp.ne.s32.totalorder %s330, %s332
    %p339 = scmp.eq.s32.totalorder %s28, 1
    %p340 = por %p338, %p339
    %p341 = scmp.ne.s32.totalorder %s332, %s333
    %p342 = scmp.eq.s32.totalorder %s28, 0
    %p343 = por %p341, %p342
    %p344 = scmp.ne.s32.totalorder %s332, %s333
    %p345 = scmp.eq.s32.totalorder %s29, 1
    %p346 = por %p344, %p345
    %p348 = scmp.ne.s32.totalorder %s333, %s347
    %p349 = scmp.eq.s32.totalorder %s29, 0
    %p350 = por %p348, %p349
    %s352 = sadd.s32 %s351, 1
    %p355 = scmp.eq.s32.totalorder %s23, 1
    %p356 = scmp.ne.s32.totalorder %s351, %s353
    %p357 = scmp.eq.s32.totalorder %s23, 0
    %p358 = por %p356, %p357
    %p359 = scmp.ne.s32.totalorder %s351, %s353
    %p360 = scmp.eq.s32.totalorder %s28, 1
    %p361 = por %p359, %p360
    %p362 = scmp.ne.s32.totalorder %s353, %s354
    %p363 = scmp.eq.s32.totalorder %s28, 0
    %p364 = por %p362, %p363
    %p365 = scmp.ne.s32.totalorder %s353, %s354
    %p366 = scmp.eq.s32.totalorder %s29, 1
    %p367 = por %p365, %p366
    %p369 = scmp.ne.s32.totalorder %s354, %s368
    %p370 = scmp.eq.s32.totalorder %s29, 0
    %p371 = por %p369, %p370
    %s373 = sadd.s32 %s372, 1
    %p376 = scmp.eq.s32.totalorder %s23, 1
    %p377 = scmp.ne.s32.totalorder %s372, %s374
    %p378 = scmp.eq.s32.totalorder %s23, 0
    %p379 = por %p377, %p378
    %p380 = scmp.ne.s32.totalorder %s372, %s374
    %p381 = scmp.eq.s32.totalorder %s28, 1
    %p382 = por %p380, %p381
    %p383 = scmp.ne.s32.totalorder %s374, %s375
    %p384 = scmp.eq.s32.totalorder %s28, 0
    %p385 = por %p383, %p384
    %p386 = scmp.ne.s32.totalorder %s374, %s375
    %p387 = scmp.eq.s32.totalorder %s29, 1
    %p388 = por %p386, %p387
    %p390 = scmp.ne.s32.totalorder %s375, %s389
    %p391 = scmp.eq.s32.totalorder %s29, 0
    %p392 = por %p390, %p391
    %s393 = ssub.s32 %s23, %s30
    %p394 = scmp.eq.s32.totalorder %s393, 0
    %s396 = sadd.s32 %s395, 1
    %s397 = scalar_select %p394, %s395, %s396
    %p400 = pneg %p394
    %p401 = scmp.eq.s32.totalorder %s23, 1
    %p402 = por %p400, %p401
    %p403 = scmp.ne.s32.totalorder %s395, %s398
    %p404 = scmp.eq.s32.totalorder %s23, 0
    %p405 = por %p403, %p404
    %p406 = scmp.ne.s32.totalorder %s395, %s398
    %p407 = scmp.eq.s32.totalorder %s28, 1
    %p408 = por %p406, %p407
    %p409 = scmp.ne.s32.totalorder %s398, %s399
    %p410 = scmp.eq.s32.totalorder %s28, 0
    %p411 = por %p409, %p410
    %p412 = scmp.ne.s32.totalorder %s398, %s399
    %p413 = scmp.eq.s32.totalorder %s29, 1
    %p414 = por %p412, %p413
    %p416 = scmp.ne.s32.totalorder %s399, %s415
    %p417 = scmp.eq.s32.totalorder %s29, 0
    %p418 = por %p416, %p417
    %p419 = scmp.le.s32.totalorder 1, %s23
    %p420 = scmp.lt.s32.totalorder %s23, 3
    %p421 = pnand %p419, %p420
    %p422 = pneg %p421
    // Predicated region
    $region9: #{clsa_entropy_forward.2} parent=5 // pred_check
      _
    $region10: #{clsa_entropy_forward.2} parent=5 // pred_check_branch
      %424 = sbr.rel (%p421) target = $region12
    $region11: #{clsa_entropy_forward.2} parent=5 // pred_region
      %s425 = ssub.s32 %s23, 1
      // Predicated region
      $region13: #{clsa_entropy_forward.2} parent=11 // pred_check
        %p426 = pneg %p70
      $region14: #{clsa_entropy_forward.2} parent=11 // pred_check_branch
        %428 = sbr.rel (%p426) target = $region16
      $region15: #{clsa_entropy_forward.2} parent=11 // pred_region
        _
      $region16: #{clsa_entropy_forward.2} parent=11 // pred_fallthru
        _
      // Predicated region
      $region17: #{clsa_entropy_forward.2} parent=11 // pred_check
        %p429 = pneg %p91
      $region18: #{clsa_entropy_forward.2} parent=11 // pred_check_branch
        %431 = sbr.rel (%p429) target = $region20
      $region19: #{clsa_entropy_forward.2} parent=11 // pred_region
        _
      $region20: #{clsa_entropy_forward.2} parent=11 // pred_fallthru
        _
      // Predicated region
      $region21: #{clsa_entropy_forward.2} parent=11 // pred_check
        %p432 = pneg %p112
      $region22: #{clsa_entropy_forward.2} parent=11 // pred_check_branch
        %434 = sbr.rel (%p432) target = $region24
      $region23: #{clsa_entropy_forward.2} parent=11 // pred_region
        _
      $region24: #{clsa_entropy_forward.2} parent=11 // pred_fallthru
        _
      // Predicated region
      $region25: #{clsa_entropy_forward.2} parent=11 // pred_check
        %p435 = pneg %p133
      $region26: #{clsa_entropy_forward.2} parent=11 // pred_check_branch
        %437 = sbr.rel (%p435) target = $region28
      $region27: #{clsa_entropy_forward.2} parent=11 // pred_region
        _
      $region28: #{clsa_entropy_forward.2} parent=11 // pred_fallthru
        _
      // Predicated region
      $region29: #{clsa_entropy_forward.2} parent=11 // pred_check
        %p438 = pneg %p154
      $region30: #{clsa_entropy_forward.2} parent=11 // pred_check_branch
        %440 = sbr.rel (%p438) target = $region32
      $region31: #{clsa_entropy_forward.2} parent=11 // pred_region
        _
      $region32: #{clsa_entropy_forward.2} parent=11 // pred_fallthru
        _
      // Predicated region
      $region33: #{clsa_entropy_forward.2} parent=11 // pred_check
        %p441 = pneg %p175
      $region34: #{clsa_entropy_forward.2} parent=11 // pred_check_branch
        %443 = sbr.rel (%p441) target = $region36
      $region35: #{clsa_entropy_forward.2} parent=11 // pred_region
        _
      $region36: #{clsa_entropy_forward.2} parent=11 // pred_fallthru
        _
      // Predicated region
      $region37: #{clsa_entropy_forward.2} parent=11 // pred_check
        %p444 = pneg %p196
      $region38: #{clsa_entropy_forward.2} parent=11 // pred_check_branch
        %446 = sbr.rel (%p444) target = $region40
      $region39: #{clsa_entropy_forward.2} parent=11 // pred_region
        _
      $region40: #{clsa_entropy_forward.2} parent=11 // pred_fallthru
        _
      // Predicated region
      $region41: #{clsa_entropy_forward.2} parent=11 // pred_check
        %p447 = pneg %p217
      $region42: #{clsa_entropy_forward.2} parent=11 // pred_check_branch
        %449 = sbr.rel (%p447) target = $region44
      $region43: #{clsa_entropy_forward.2} parent=11 // pred_region
        _
      $region44: #{clsa_entropy_forward.2} parent=11 // pred_fallthru
        _
      // Predicated region
      $region45: #{clsa_entropy_forward.2} parent=11 // pred_check
        %p450 = pneg %p238
      $region46: #{clsa_entropy_forward.2} parent=11 // pred_check_branch
        %452 = sbr.rel (%p450) target = $region48
      $region47: #{clsa_entropy_forward.2} parent=11 // pred_region
        _
      $region48: #{clsa_entropy_forward.2} parent=11 // pred_fallthru
        _
      // Predicated region
      $region49: #{clsa_entropy_forward.2} parent=11 // pred_check
        %p453 = pneg %p259
      $region50: #{clsa_entropy_forward.2} parent=11 // pred_check_branch
        %455 = sbr.rel (%p453) target = $region52
      $region51: #{clsa_entropy_forward.2} parent=11 // pred_region
        _
      $region52: #{clsa_entropy_forward.2} parent=11 // pred_fallthru
        _
      // Predicated region
      $region53: #{clsa_entropy_forward.2} parent=11 // pred_check
        %p456 = pneg %p280
      $region54: #{clsa_entropy_forward.2} parent=11 // pred_check_branch
        %458 = sbr.rel (%p456) target = $region56
      $region55: #{clsa_entropy_forward.2} parent=11 // pred_region
        _
      $region56: #{clsa_entropy_forward.2} parent=11 // pred_fallthru
        _
      // Predicated region
      $region57: #{clsa_entropy_forward.2} parent=11 // pred_check
        %p459 = pneg %p301
      $region58: #{clsa_entropy_forward.2} parent=11 // pred_check_branch
        %461 = sbr.rel (%p459) target = $region60
      $region59: #{clsa_entropy_forward.2} parent=11 // pred_region
        _
      $region60: #{clsa_entropy_forward.2} parent=11 // pred_fallthru
        _
      // Predicated region
      $region61: #{clsa_entropy_forward.2} parent=11 // pred_check
        %p462 = pneg %p322
      $region62: #{clsa_entropy_forward.2} parent=11 // pred_check_branch
        %464 = sbr.rel (%p462) target = $region64
      $region63: #{clsa_entropy_forward.2} parent=11 // pred_region
        _
      $region64: #{clsa_entropy_forward.2} parent=11 // pred_fallthru
        _
      // Predicated region
      $region65: #{clsa_entropy_forward.2} parent=11 // pred_check
        %p465 = pneg %p343
      $region66: #{clsa_entropy_forward.2} parent=11 // pred_check_branch
        %467 = sbr.rel (%p465) target = $region68
      $region67: #{clsa_entropy_forward.2} parent=11 // pred_region
        _
      $region68: #{clsa_entropy_forward.2} parent=11 // pred_fallthru
        _
      // Predicated region
      $region69: #{clsa_entropy_forward.2} parent=11 // pred_check
        %p468 = pneg %p364
      $region70: #{clsa_entropy_forward.2} parent=11 // pred_check_branch
        %470 = sbr.rel (%p468) target = $region72
      $region71: #{clsa_entropy_forward.2} parent=11 // pred_region
        _
      $region72: #{clsa_entropy_forward.2} parent=11 // pred_fallthru
        _
      // Predicated region
      $region73: #{clsa_entropy_forward.2} parent=11 // pred_check
        %p471 = pneg %p385
      $region74: #{clsa_entropy_forward.2} parent=11 // pred_check_branch
        %473 = sbr.rel (%p471) target = $region76
      $region75: #{clsa_entropy_forward.2} parent=11 // pred_region
        _
      $region76: #{clsa_entropy_forward.2} parent=11 // pred_fallthru
        _
    $region12: #{clsa_entropy_forward.2} parent=5 // pred_fallthru
      _
    %p474 = scmp.lt.s32.totalorder %s23, 2
    // Predicated region
    $region77: #{clsa_entropy_forward.2} parent=5 // pred_check
      %p475 = pneg %p474
    $region78: #{clsa_entropy_forward.2} parent=5 // pred_check_branch
      %477 = sbr.rel (%p475) target = $region80
    $region79: #{clsa_entropy_forward.2} parent=5 // pred_region
      // Predicated region
      $region81: #{clsa_entropy_forward.2} parent=79 // pred_check
        %p478 = pneg %p43
      $region82: #{clsa_entropy_forward.2} parent=79 // pred_check_branch
        %480 = sbr.rel (%p478) target = $region84
      $region83: #{clsa_entropy_forward.2} parent=79 // pred_region
        %p481 = scmp.lt.s32.totalorder %s23, 1
        %s482 = scalar_select %p481, %s23, 1
        %s483 = smul.addr %s482, 9
        %s484 = smul.addr %s483, 8
        %s485 = scalar_lea.vmem %s0, %s484
      $region84: #{clsa_entropy_forward.2} parent=79 // pred_fallthru
        _
    $region80: #{clsa_entropy_forward.2} parent=5 // pred_fallthru
      _
    %p486 = scmp.le.s32.totalorder 1, %s23
    %p487 = scmp.lt.s32.totalorder %s23, 3
    %p488 = pnand %p486, %p487
    %p489 = pneg %p488
    // Predicated region
    $region85: #{clsa_entropy_forward.2} parent=5 // pred_check
      _
    $region86: #{clsa_entropy_forward.2} parent=5 // pred_check_branch
      %491 = sbr.rel (%p488) target = $region88
    $region87: #{clsa_entropy_forward.2} parent=5 // pred_region
      %s492 = ssub.s32 %s23, 1
      %p493 = scmp.lt.s32.totalorder %s28, 1
      %s494 = scalar_select %p493, %s28, 1
      %s495 = smul.addr %s494, 9
      %s496 = smul.addr %s495, 8
      %s497 = scalar_lea.vmem %s0, %s496
      %p498 = pneg %p49
      %p499 = pneg %p46
      %p500 = pneg %p70
      %p501 = pneg %p67
      %p502 = pneg %p91
      %p503 = pneg %p88
      %p504 = pneg %p112
      %p505 = pneg %p109
      %p506 = pneg %p133
      %p507 = pneg %p130
      %p508 = pneg %p154
      %p509 = pneg %p151
      %p510 = pneg %p175
      %p511 = pneg %p172
      %p512 = pneg %p196
      %p513 = pneg %p193
      %p514 = pneg %p217
      %p515 = pneg %p214
      %p516 = pneg %p238
      %p517 = pneg %p235
      %p518 = pneg %p259
      %p519 = pneg %p256
      %p520 = pneg %p280
      %p521 = pneg %p277
      %p522 = pneg %p301
      %p523 = pneg %p298
      %p524 = pneg %p322
      %p525 = pneg %p319
      %p526 = pneg %p343
      %p527 = pneg %p340
      %p528 = pneg %p364
      %p529 = pneg %p361
      %p530 = pneg %p385
      %p531 = pneg %p382
      %p532 = pneg %p411
      %p533 = pneg %p408
      %p534 = scmp.lt.s32.totalorder %s28, 1
      %s535 = scalar_select %p534, %s28, 1
      %s536 = smul.addr %s535, 2
      %s537 = smul.addr %s536, 8
      %s538 = scalar_lea.vmem %s17, %s537
      %p539 = scmp.lt.s32.totalorder %s28, 1
      %s540 = scalar_select %p539, %s28, 1
      %s541 = smul.addr %s540, 9
      %s542 = smul.addr %s541, 8
      %s543 = scalar_lea.vmem %s0, %s542
      %p544 = scmp.lt.s32.totalorder %s28, 1
      %s545 = scalar_select %p544, %s28, 1
      %s546 = smul.addr %s545, 2
      %s547 = smul.addr %s546, 8
      %s548 = scalar_lea.vmem %s17, %s547
      %v549 = vld [vmem:[%s543] sm:$0xff]
      %v550 = vld [vmem:[%s543 + $0x8] sm:$0xff]
      %v551 = vld [vmem:[%s543 + $0x10] sm:$0xff]
      %v552 = vld [vmem:[%s543 + $0x18] sm:$0xff]
      %v553 = vld [vmem:[%s543 + $0x20] sm:$0xff]
      %v554 = vld [vmem:[%s543 + $0x28] sm:$0xff]
      %v555 = vld [vmem:[%s543 + $0x30] sm:$0xff]
      %v556 = vld [vmem:[%s543 + $0x38] sm:$0xff]
      %v557 = vld [vmem:[%s543 + $0x40] sm:$0x3]
      %567 = vrot.lane.b32.xlu0 %v549, 1
      %v568 = vpop.permute.xlu0 %567
      %569 = vrot.lane.b32.xlu0 %v550, 1
      %v570 = vpop.permute.xlu0 %569
      %571 = vrot.lane.b32.xlu0 %v551, 1
      %v572 = vpop.permute.xlu0 %571
      %573 = vrot.lane.b32.xlu0 %v552, 1
      %v574 = vpop.permute.xlu0 %573
      %575 = vrot.lane.b32.xlu0 %v553, 1
      %v576 = vpop.permute.xlu0 %575
      %577 = vrot.lane.b32.xlu0 %v554, 1
      %v578 = vpop.permute.xlu0 %577
      %579 = vrot.lane.b32.xlu0 %v555, 1
      %v580 = vpop.permute.xlu0 %579
      %581 = vrot.lane.b32.xlu0 %v556, 1
      %v582 = vpop.permute.xlu0 %581
      %583 = vrot.lane.b32.xlu0 %v557, 1
      %v584 = vpop.permute.xlu0 %583
      %vm594 = vcmask 7168
      %v595 = vsel %vm594, 0.0, %v568
      %v596 = vsel %vm594, 0.0, %v570
      %v597 = vsel %vm594, 0.0, %v572
      %v598 = vsel %vm594, 0.0, %v574
      %v599 = vsel %vm594, 0.0, %v576
      %v600 = vsel %vm594, 0.0, %v578
      %v601 = vsel %vm594, 0.0, %v580
      %v602 = vsel %vm594, 0.0, %v582
      %v603 = vsel %vm594, 0.0, %v584
      %vm604 = vcmask 64512
      %v605 = vsel %vm604, %v595, 0.0
      %v606 = vsel %vm604, %v596, 0.0
      %v607 = vsel %vm604, %v597, 0.0
      %v608 = vsel %vm604, %v598, 0.0
      %v609 = vsel %vm604, %v599, 0.0
      %v610 = vsel %vm604, %v600, 0.0
      %v611 = vsel %vm604, %v601, 0.0
      %v612 = vsel %vm604, %v602, 0.0
      %v613 = vsel %vm604, %v603, 0.0
      %614 = vst [vmem:[#allocation2] sm:$0x1] 0.0
      %615 = vst [vmem:[#allocation2 + $0x43] sm:$0x1] 0.0
      %vm616 = vcmask 130048
      %617 = vst.msk [vmem:[#allocation2 + $0x1] sm:$0xff] %vm616, %v605
      %618 = vst.msk [vmem:[#allocation2 + $0x9] sm:$0xff] %vm616, %v606
      %619 = vst.msk [vmem:[#allocation2 + $0x11] sm:$0xff] %vm616, %v607
      %620 = vst.msk [vmem:[#allocation2 + $0x19] sm:$0xff] %vm616, %v608
      %621 = vst.msk [vmem:[#allocation2 + $0x21] sm:$0xff] %vm616, %v609
      %622 = vst.msk [vmem:[#allocation2 + $0x29] sm:$0xff] %vm616, %v610
      %623 = vst.msk [vmem:[#allocation2 + $0x31] sm:$0xff] %vm616, %v611
      %624 = vst.msk [vmem:[#allocation2 + $0x39] sm:$0xff] %vm616, %v612
      %vm625 = vcmask 123904
      %626 = vst.msk [vmem:[#allocation2 + $0x41] sm:$0x3] %vm625, %v613
      %v627 = vld [vmem:[#allocation2] sm:$0xff]
      %v628 = vld [vmem:[#allocation2 + $0x8] sm:$0xff]
      %v629 = vld [vmem:[#allocation2 + $0x10] sm:$0xff]
      %v630 = vld [vmem:[#allocation2 + $0x18] sm:$0xff]
      %v631 = vld [vmem:[#allocation2 + $0x20] sm:$0xff]
      %v632 = vld [vmem:[#allocation2 + $0x28] sm:$0xff]
      %v633 = vld [vmem:[#allocation2 + $0x30] sm:$0xff]
      %v634 = vld [vmem:[#allocation2 + $0x38] sm:$0xff]
      %v635 = vld [vmem:[#allocation2 + $0x40] sm:$0x3]
      %v636 = vld [vmem:[#allocation2 + $0x1] sm:$0xff]
      %v637 = vld [vmem:[#allocation2 + $0x9] sm:$0xff]
      %v638 = vld [vmem:[#allocation2 + $0x11] sm:$0xff]
      %v639 = vld [vmem:[#allocation2 + $0x19] sm:$0xff]
      %v640 = vld [vmem:[#allocation2 + $0x21] sm:$0xff]
      %v641 = vld [vmem:[#allocation2 + $0x29] sm:$0xff]
      %v642 = vld [vmem:[#allocation2 + $0x31] sm:$0xff]
      %v643 = vld [vmem:[#allocation2 + $0x39] sm:$0xff]
      %v644 = vld [vmem:[#allocation2 + $0x41] sm:$0x3]
      %v645 = vld [vmem:[#allocation2 + $0x2] sm:$0xff]
      %v646 = vld [vmem:[#allocation2 + $0xa] sm:$0xff]
      %v647 = vld [vmem:[#allocation2 + $0x12] sm:$0xff]
      %v648 = vld [vmem:[#allocation2 + $0x1a] sm:$0xff]
      %v649 = vld [vmem:[#allocation2 + $0x22] sm:$0xff]
      %v650 = vld [vmem:[#allocation2 + $0x2a] sm:$0xff]
      %v651 = vld [vmem:[#allocation2 + $0x32] sm:$0xff]
      %v652 = vld [vmem:[#allocation2 + $0x3a] sm:$0xff]
      %v653 = vld [vmem:[#allocation2 + $0x42] sm:$0x3]
      %663 = vrot.lane.b32.xlu0 %v636, 16
      %v664 = vpop.permute.xlu0 %663
      %665 = vrot.lane.b32.xlu0 %v637, 16
      %v666 = vpop.permute.xlu0 %665
      %667 = vrot.lane.b32.xlu0 %v638, 16
      %v668 = vpop.permute.xlu0 %667
      %669 = vrot.lane.b32.xlu0 %v639, 16
      %v670 = vpop.permute.xlu0 %669
      %671 = vrot.lane.b32.xlu0 %v640, 16
      %v672 = vpop.permute.xlu0 %671
      %673 = vrot.lane.b32.xlu0 %v641, 16
      %v674 = vpop.permute.xlu0 %673
      %675 = vrot.lane.b32.xlu0 %v642, 16
      %v676 = vpop.permute.xlu0 %675
      %677 = vrot.lane.b32.xlu0 %v643, 16
      %v678 = vpop.permute.xlu0 %677
      %679 = vrot.lane.b32.xlu0 %v644, 16
      %v680 = vpop.permute.xlu0 %679
      %699 = vrot.lane.b32.xlu0 %v645, 32
      %v700 = vpop.permute.xlu0 %699
      %701 = vrot.lane.b32.xlu0 %v646, 32
      %v702 = vpop.permute.xlu0 %701
      %703 = vrot.lane.b32.xlu0 %v647, 32
      %v704 = vpop.permute.xlu0 %703
      %705 = vrot.lane.b32.xlu0 %v648, 32
      %v706 = vpop.permute.xlu0 %705
      %707 = vrot.lane.b32.xlu0 %v649, 32
      %v708 = vpop.permute.xlu0 %707
      %709 = vrot.lane.b32.xlu0 %v650, 32
      %v710 = vpop.permute.xlu0 %709
      %711 = vrot.lane.b32.xlu0 %v651, 32
      %v712 = vpop.permute.xlu0 %711
      %713 = vrot.lane.b32.xlu0 %v652, 32
      %v714 = vpop.permute.xlu0 %713
      %715 = vrot.lane.b32.xlu0 %v653, 32
      %v716 = vpop.permute.xlu0 %715
      %v726 = vsel %vm616, %v627, %v664
      %v727 = vsel %vm616, %v628, %v666
      %v728 = vsel %vm616, %v629, %v668
      %v729 = vsel %vm616, %v630, %v670
      %v730 = vsel %vm616, %v631, %v672
      %v731 = vsel %vm616, %v632, %v674
      %v732 = vsel %vm616, %v633, %v676
      %v733 = vsel %vm616, %v634, %v678
      %v734 = vsel %vm616, %v635, %v680
      %vm735 = vcmask 261120
      %v736 = vsel %vm735, %v726, %v700
      %v737 = vsel %vm735, %v727, %v702
      %v738 = vsel %vm735, %v728, %v704
      %v739 = vsel %vm735, %v729, %v706
      %v740 = vsel %vm735, %v730, %v708
      %v741 = vsel %vm735, %v731, %v710
      %v742 = vsel %vm735, %v732, %v712
      %v743 = vsel %vm735, %v733, %v714
      %v744 = vsel %vm735, %v734, %v716
      %v745 = vld [vmem:[%s1] sm:$0xff]
      %v746 = vld [vmem:[%s1 + $0x8] sm:$0xff]
      %v747 = vld [vmem:[%s1 + $0x10] sm:$0xff]
      %v748 = vld [vmem:[%s1 + $0x18] sm:$0xff]
      %v749 = vld [vmem:[%s1 + $0x20] sm:$0xff]
      %v750 = vld [vmem:[%s1 + $0x28] sm:$0xff]
      %v751 = vld [vmem:[%s2] sm:$0x1]
      %v753 = vlaneseq
      %v754 = vshrl.u32 %v753, 7
      %v755 = vsub.s32 0, %v754
      %v756 = vrot.slane %v751, %v755
      %vm758 = vcmask 392192
      %v760 = vsel %vm758, %v736, 0
      %v763 = vsel %vm758, %v737, 0
      %v766 = vsel %vm758, %v738, 0
      %v769 = vsel %vm758, %v739, 0
      %v772 = vsel %vm758, %v740, 0
      %v775 = vsel %vm758, %v741, 0
      %v778 = vsel %vm758, %v742, 0
      %v781 = vsel %vm758, %v743, 0
      %v784 = vsel %vm758, %v744, 0
      %786 = vmatprep.subr.mxu0 0.0
      %787 = vmatpush1.msra.mxu0 %v745
      %788 = vmatprep.subr.mxu0 0.0
      %789 = vmatpush1.msra.mxu0 %v746
      %790 = vmatprep.subr.mxu0 0.0
      %791 = vmatpush1.msra.mxu0 %v747
      %792 = vmatprep.subr.mxu0 0.0
      %793 = vmatpush1.msra.mxu0 %v748
      %794 = vmatprep.subr.mxu0 0.0
      %795 = vmatpush1.msra.mxu0 %v749
      %796 = vmatprep.subr.mxu0 0.0
      %797 = vmatpush1.msra.mxu0 %v750
      %798 = vmatprep.subr.mxu0 0.0
      %799 = vmatpush1.msra.mxu0 0.0
      %800 = vmatprep.subr.mxu0 0.0
      %801 = vmatpush1.msra.mxu0 0.0
      %802 = vmatprep.subr.mxu0 0.0
      %803 = vmatpush1.msra.mxu0 0.0
      %804 = vmatprep.subr.mxu0 0.0
      %805 = vmatpush1.msra.mxu0 0.0
      %806 = vmatprep.subr.mxu0 0.0
      %807 = vmatpush1.msra.mxu0 0.0
      %808 = vmatprep.subr.mxu0 0.0
      %809 = vmatpush1.msra.mxu0 0.0
      %810 = vmatprep.subr.mxu0 0.0
      %811 = vmatpush1.msra.mxu0 0.0
      %812 = vmatprep.subr.mxu0 0.0
      %813 = vmatpush1.msra.mxu0 0.0
      %814 = vmatprep.subr.mxu0 0.0
      %815 = vmatpush1.msra.mxu0 0.0
      %816 = vmatprep.subr.mxu0 0.0
      %817 = vmatpush1.msra.mxu0 0.0
      %818 = vmatprep.subr.mxu0 0.0
      %819 = vmatpush1.msra.mxu0 0.0
      %820 = vmatprep.subr.mxu0 0.0
      %821 = vmatpush1.msra.mxu0 0.0
      %822 = vmatprep.subr.mxu0 0.0
      %823 = vmatpush1.msra.mxu0 0.0
      %824 = vmatprep.subr.mxu0 0.0
      %825 = vmatpush1.msra.mxu0 0.0
      %826 = vmatprep.subr.mxu0 0.0
      %827 = vmatpush1.msra.mxu0 0.0
      %828 = vmatprep.subr.mxu0 0.0
      %829 = vmatpush1.msra.mxu0 0.0
      %830 = vmatprep.subr.mxu0 0.0
      %831 = vmatpush1.msra.mxu0 0.0
      %832 = vmatprep.subr.mxu0 0.0
      %833 = vmatpush1.msra.mxu0 0.0
      %834 = vmatprep.subr.mxu0 0.0
      %835 = vmatpush1.msra.mxu0 0.0
      %836 = vmatprep.subr.mxu0 0.0
      %837 = vmatpush1.msra.mxu0 0.0
      %838 = vmatprep.subr.mxu0 0.0
      %839 = vmatpush1.msra.mxu0 0.0
      %840 = vmatprep.subr.mxu0 0.0
      %841 = vmatpush1.msra.mxu0 0.0
      %842 = vmatprep.subr.mxu0 0.0
      %843 = vmatpush1.msra.mxu0 0.0
      %844 = vmatprep.subr.mxu0 0.0
      %845 = vmatpush1.msra.mxu0 0.0
      %846 = vmatprep.subr.mxu0 0.0
      %847 = vmatpush1.msra.mxu0 0.0
      %848 = vmatprep.subr.mxu0 0.0
      %849 = vmatpush1.msra.mxu0 0.0
      %850 = vmatprep.mubr.f32.mxu0 0.0
      %851 = vmatmul.mubr.f32.gmra.mrb[0].mxu0 %v760
      %v852 = vpop.f32.mrb[0].mxu0
      %v853 = vadd.f32 %v756, %v852
      %v854 = vpop.f32.mrb[0].mxu0
      %855 = vmatprep.mubr.f32.mxu0 0.0
      %856 = vmatmul.mubr.f32.gmra.mrb[0].mxu0 %v763
      %v857 = vpop.f32.mrb[0].mxu0
      %v858 = vadd.f32 %v756, %v857
      %v859 = vpop.f32.mrb[0].mxu0
      %860 = vmatprep.mubr.f32.mxu0 0.0
      %861 = vmatmul.mubr.f32.gmra.mrb[0].mxu0 %v766
      %v862 = vpop.f32.mrb[0].mxu0
      %v863 = vadd.f32 %v756, %v862
      %v864 = vpop.f32.mrb[0].mxu0
      %865 = vmatprep.mubr.f32.mxu0 0.0
      %866 = vmatmul.mubr.f32.gmra.mrb[0].mxu0 %v769
      %v867 = vpop.f32.mrb[0].mxu0
      %v868 = vadd.f32 %v756, %v867
      %v869 = vpop.f32.mrb[0].mxu0
      %870 = vmatprep.mubr.f32.mxu0 0.0
      %871 = vmatmul.mubr.f32.gmra.mrb[0].mxu0 %v772
      %v872 = vpop.f32.mrb[0].mxu0
      %v873 = vadd.f32 %v756, %v872
      %v874 = vpop.f32.mrb[0].mxu0
      %875 = vmatprep.mubr.f32.mxu0 0.0
      %876 = vmatmul.mubr.f32.gmra.mrb[0].mxu0 %v775
      %v877 = vpop.f32.mrb[0].mxu0
      %v878 = vadd.f32 %v756, %v877
      %v879 = vpop.f32.mrb[0].mxu0
      %880 = vmatprep.mubr.f32.mxu0 0.0
      %881 = vmatmul.mubr.f32.gmra.mrb[0].mxu0 %v778
      %v882 = vpop.f32.mrb[0].mxu0
      %v883 = vadd.f32 %v756, %v882
      %v884 = vpop.f32.mrb[0].mxu0
      %885 = vmatprep.mubr.f32.mxu0 0.0
      %886 = vmatmul.mubr.f32.gmra.mrb[0].mxu0 %v781
      %v887 = vpop.f32.mrb[0].mxu0
      %v888 = vadd.f32 %v756, %v887
      %v889 = vpop.f32.mrb[0].mxu0
      %890 = vmatprep.mubr.f32.mxu0 0.0
      %891 = vmatmul.mubr.f32.gmra.mrb[0].mxu0 %v784
      %v892 = vpop.f32.mrb[0].mxu0
      %v893 = vadd.f32 %v756, %v892
      %v894 = vpop.f32.mrb[0].mxu0
      %895 = vdwg.mxu0
      %v896 = vmax.f32 %v853, 0.0
      %v897 = vmax.f32 %v858, 0.0
      %v898 = vmax.f32 %v863, 0.0
      %v899 = vmax.f32 %v868, 0.0
      %v900 = vmax.f32 %v873, 0.0
      %v901 = vmax.f32 %v878, 0.0
      %v902 = vmax.f32 %v883, 0.0
      %v903 = vmax.f32 %v888, 0.0
      %v904 = vmax.f32 %v893, 0.0
      %914 = vrot.lane.b32.xlu0 %v896, 1
      %v915 = vpop.permute.xlu0 %914
      %916 = vrot.lane.b32.xlu0 %v897, 1
      %v917 = vpop.permute.xlu0 %916
      %918 = vrot.lane.b32.xlu0 %v898, 1
      %v919 = vpop.permute.xlu0 %918
      %920 = vrot.lane.b32.xlu0 %v899, 1
      %v921 = vpop.permute.xlu0 %920
      %922 = vrot.lane.b32.xlu0 %v900, 1
      %v923 = vpop.permute.xlu0 %922
      %924 = vrot.lane.b32.xlu0 %v901, 1
      %v925 = vpop.permute.xlu0 %924
      %926 = vrot.lane.b32.xlu0 %v902, 1
      %v927 = vpop.permute.xlu0 %926
      %928 = vrot.lane.b32.xlu0 %v903, 1
      %v929 = vpop.permute.xlu0 %928
      %930 = vrot.lane.b32.xlu0 %v904, 1
      %v931 = vpop.permute.xlu0 %930
      %v941 = vsel %vm594, 0.0, %v915
      %v942 = vsel %vm594, 0.0, %v917
      %v943 = vsel %vm594, 0.0, %v919
      %v944 = vsel %vm594, 0.0, %v921
      %v945 = vsel %vm594, 0.0, %v923
      %v946 = vsel %vm594, 0.0, %v925
      %v947 = vsel %vm594, 0.0, %v927
      %v948 = vsel %vm594, 0.0, %v929
      %v949 = vsel %vm594, 0.0, %v931
      %v950 = vmax.f32 %v896, %v941
      %v951 = vmax.f32 %v897, %v942
      %v952 = vmax.f32 %v898, %v943
      %v953 = vmax.f32 %v899, %v944
      %v954 = vmax.f32 %v900, %v945
      %v955 = vmax.f32 %v901, %v946
      %v956 = vmax.f32 %v902, %v947
      %v957 = vmax.f32 %v903, %v948
      %v958 = vmax.f32 %v904, %v949
      %v959 = vld [vmem:[%s15] sm:$0xff]
      %v960 = vld [vmem:[%s15 + $0x8] sm:$0xff]
      %v961 = vld [vmem:[%s15 + $0x10] sm:$0xff]
      %v962 = vld [vmem:[%s15 + $0x18] sm:$0xff]
      %v963 = vld [vmem:[%s15 + $0x20] sm:$0x3]
      %vm964 = vcmask 539648
      %v966 = vsel %vm964, %v959, 0
      %v969 = vsel %vm964, %v960, 0
      %v972 = vsel %vm964, %v961, 0
      %v975 = vsel %vm964, %v962, 0
      %v978 = vsel %vm964, %v963, 0
      %vm980 = vcmask 1041408
      %v982 = vsel %vm980, %v958, 0
      %984 = vmatprep.subr.mxu0 0.0
      %985 = vmatpush1.msra.mxu0 %v950
      %986 = vmatprep.subr.mxu0 0.0
      %987 = vmatpush1.msra.mxu0 %v951
      %988 = vmatprep.subr.mxu0 0.0
      %989 = vmatpush1.msra.mxu0 %v952
      %990 = vmatprep.subr.mxu0 0.0
      %991 = vmatpush1.msra.mxu0 %v953
      %992 = vmatprep.subr.mxu0 0.0
      %993 = vmatpush1.msra.mxu0 %v954
      %994 = vmatprep.subr.mxu0 0.0
      %995 = vmatpush1.msra.mxu0 %v955
      %996 = vmatprep.subr.mxu0 0.0
      %997 = vmatpush1.msra.mxu0 %v956
      %998 = vmatprep.subr.mxu0 0.0
      %999 = vmatpush1.msra.mxu0 %v957
      %1000 = vmatprep.subr.mxu0 0.0
      %1001 = vmatpush1.msra.mxu0 %v982
      %1002 = vmatprep.subr.mxu0 0.0
      %1003 = vmatpush1.msra.mxu0 0.0
      %1004 = vmatprep.subr.mxu0 0.0
      %1005 = vmatpush1.msra.mxu0 0.0
      %1006 = vmatprep.subr.mxu0 0.0
      %1007 = vmatpush1.msra.mxu0 0.0
      %1008 = vmatprep.subr.mxu0 0.0
      %1009 = vmatpush1.msra.mxu0 0.0
      %1010 = vmatprep.subr.mxu0 0.0
      %1011 = vmatpush1.msra.mxu0 0.0
      %1012 = vmatprep.subr.mxu0 0.0
      %1013 = vmatpush1.msra.mxu0 0.0
      %1014 = vmatprep.subr.mxu0 0.0
      %1015 = vmatpush1.msra.mxu0 0.0
      %1016 = vmatprep.subr.mxu0 0.0
      %1017 = vmatpush1.msra.mxu0 0.0
      %1018 = vmatprep.subr.mxu0 0.0
      %1019 = vmatpush1.msra.mxu0 0.0
      %1020 = vmatprep.subr.mxu0 0.0
      %1021 = vmatpush1.msra.mxu0 0.0
      %1022 = vmatprep.subr.mxu0 0.0
      %1023 = vmatpush1.msra.mxu0 0.0
      %1024 = vmatprep.subr.mxu0 0.0
      %1025 = vmatpush1.msra.mxu0 0.0
      %1026 = vmatprep.subr.mxu0 0.0
      %1027 = vmatpush1.msra.mxu0 0.0
      %1028 = vmatprep.subr.mxu0 0.0
      %1029 = vmatpush1.msra.mxu0 0.0
      %1030 = vmatprep.subr.mxu0 0.0
      %1031 = vmatpush1.msra.mxu0 0.0
      %1032 = vmatprep.subr.mxu0 0.0
      %1033 = vmatpush1.msra.mxu0 0.0
      %1034 = vmatprep.subr.mxu0 0.0
      %1035 = vmatpush1.msra.mxu0 0.0
      %1036 = vmatprep.subr.mxu0 0.0
      %1037 = vmatpush1.msra.mxu0 0.0
      %1038 = vmatprep.subr.mxu0 0.0
      %1039 = vmatpush1.msra.mxu0 0.0
      %1040 = vmatprep.subr.mxu0 0.0
      %1041 = vmatpush1.msra.mxu0 0.0
      %1042 = vmatprep.subr.mxu0 0.0
      %1043 = vmatpush1.msra.mxu0 0.0
      %1044 = vmatprep.subr.mxu0 0.0
      %1045 = vmatpush1.msra.mxu0 0.0
      %1046 = vmatprep.subr.mxu0 0.0
      %1047 = vmatpush1.msra.mxu0 0.0
      %1048 = vmatprep.mubr.f32.mxu0 0.0
      %1049 = vmatmul.mubr.f32.gmra.mrb[0].mxu0 %v966
      %v1050 = vpop.f32.mrb[0].mxu0
      %v1051 = vadd.f32 0.0, %v1050
      %v1052 = vpop.f32.mrb[0].mxu0
      %1053 = vmatprep.mubr.f32.mxu0 0.0
      %1054 = vmatmul.mubr.f32.gmra.mrb[0].mxu0 %v969
      %v1055 = vpop.f32.mrb[0].mxu0
      %v1056 = vadd.f32 0.0, %v1055
      %v1057 = vpop.f32.mrb[0].mxu0
      %1058 = vmatprep.mubr.f32.mxu0 0.0
      %1059 = vmatmul.mubr.f32.gmra.mrb[0].mxu0 %v972
      %v1060 = vpop.f32.mrb[0].mxu0
      %v1061 = vadd.f32 0.0, %v1060
      %v1062 = vpop.f32.mrb[0].mxu0
      %1063 = vmatprep.mubr.f32.mxu0 0.0
      %1064 = vmatmul.mubr.f32.gmra.mrb[0].mxu0 %v975
      %v1065 = vpop.f32.mrb[0].mxu0
      %v1066 = vadd.f32 0.0, %v1065
      %v1067 = vpop.f32.mrb[0].mxu0
      %1068 = vmatprep.mubr.f32.mxu0 0.0
      %1069 = vmatmul.mubr.f32.gmra.mrb[0].mxu0 %v978
      %v1070 = vpop.f32.mrb[0].mxu0
      %v1071 = vadd.f32 0.0, %v1070
      %v1072 = vpop.f32.mrb[0].mxu0
      %1073 = vdwg.mxu0
      %v1074 = vld [vmem:[%s16] sm:$0xff]
      %v1075 = vld [vmem:[%s16 + $0x8] sm:$0xff]
      %v1076 = vld [vmem:[%s16 + $0x10] sm:$0xff]
      %v1077 = vld [vmem:[%s16 + $0x18] sm:$0xff]
      %v1078 = vld [vmem:[%s16 + $0x20] sm:$0x3]
      %v1080 = vsel %vm964, %v1074, 0
      %v1083 = vsel %vm964, %v1075, 0
      %v1086 = vsel %vm964, %v1076, 0
      %v1089 = vsel %vm964, %v1077, 0
      %v1092 = vsel %vm964, %v1078, 0
      %1094 = vmatprep.subr.mxu0 0.0
      %1095 = vmatpush1.msra.mxu0 %v950
      %1096 = vmatprep.subr.mxu0 0.0
      %1097 = vmatpush1.msra.mxu0 %v951
      %1098 = vmatprep.subr.mxu0 0.0
      %1099 = vmatpush1.msra.mxu0 %v952
      %1100 = vmatprep.subr.mxu0 0.0
      %1101 = vmatpush1.msra.mxu0 %v953
      %1102 = vmatprep.subr.mxu0 0.0
      %1103 = vmatpush1.msra.mxu0 %v954
      %1104 = vmatprep.subr.mxu0 0.0
      %1105 = vmatpush1.msra.mxu0 %v955
      %1106 = vmatprep.subr.mxu0 0.0
      %1107 = vmatpush1.msra.mxu0 %v956
      %1108 = vmatprep.subr.mxu0 0.0
      %1109 = vmatpush1.msra.mxu0 %v957
      %1110 = vmatprep.subr.mxu0 0.0
      %1111 = vmatpush1.msra.mxu0 %v982
      %1112 = vmatprep.subr.mxu0 0.0
      %1113 = vmatpush1.msra.mxu0 0.0
      %1114 = vmatprep.subr.mxu0 0.0
      %1115 = vmatpush1.msra.mxu0 0.0
      %1116 = vmatprep.subr.mxu0 0.0
      %1117 = vmatpush1.msra.mxu0 0.0
      %1118 = vmatprep.subr.mxu0 0.0
      %1119 = vmatpush1.msra.mxu0 0.0
      %1120 = vmatprep.subr.mxu0 0.0
      %1121 = vmatpush1.msra.mxu0 0.0
      %1122 = vmatprep.subr.mxu0 0.0
      %1123 = vmatpush1.msra.mxu0 0.0
      %1124 = vmatprep.subr.mxu0 0.0
      %1125 = vmatpush1.msra.mxu0 0.0
      %1126 = vmatprep.subr.mxu0 0.0
      %1127 = vmatpush1.msra.mxu0 0.0
      %1128 = vmatprep.subr.mxu0 0.0
      %1129 = vmatpush1.msra.mxu0 0.0
      %1130 = vmatprep.subr.mxu0 0.0
      %1131 = vmatpush1.msra.mxu0 0.0
      %1132 = vmatprep.subr.mxu0 0.0
      %1133 = vmatpush1.msra.mxu0 0.0
      %1134 = vmatprep.subr.mxu0 0.0
      %1135 = vmatpush1.msra.mxu0 0.0
      %1136 = vmatprep.subr.mxu0 0.0
      %1137 = vmatpush1.msra.mxu0 0.0
      %1138 = vmatprep.subr.mxu0 0.0
      %1139 = vmatpush1.msra.mxu0 0.0
      %1140 = vmatprep.subr.mxu0 0.0
      %1141 = vmatpush1.msra.mxu0 0.0
      %1142 = vmatprep.subr.mxu0 0.0
      %1143 = vmatpush1.msra.mxu0 0.0
      %1144 = vmatprep.subr.mxu0 0.0
      %1145 = vmatpush1.msra.mxu0 0.0
      %1146 = vmatprep.subr.mxu0 0.0
      %1147 = vmatpush1.msra.mxu0 0.0
      %1148 = vmatprep.subr.mxu0 0.0
      %1149 = vmatpush1.msra.mxu0 0.0
      %1150 = vmatprep.subr.mxu0 0.0
      %1151 = vmatpush1.msra.mxu0 0.0
      %1152 = vmatprep.subr.mxu0 0.0
      %1153 = vmatpush1.msra.mxu0 0.0
      %1154 = vmatprep.subr.mxu0 0.0
      %1155 = vmatpush1.msra.mxu0 0.0
      %1156 = vmatprep.subr.mxu0 0.0
      %1157 = vmatpush1.msra.mxu0 0.0
      %1158 = vmatprep.mubr.f32.mxu0 0.0
      %1159 = vmatmul.mubr.f32.gmra.mrb[0].mxu0 %v1080
      %v1160 = vpop.f32.mrb[0].mxu0
      %v1161 = vadd.f32 0.0, %v1160
      %v1162 = vpop.f32.mrb[0].mxu0
      %1163 = vmatprep.mubr.f32.mxu0 0.0
      %1164 = vmatmul.mubr.f32.gmra.mrb[0].mxu0 %v1083
      %v1165 = vpop.f32.mrb[0].mxu0
      %v1166 = vadd.f32 0.0, %v1165
      %v1167 = vpop.f32.mrb[0].mxu0
      %1168 = vmatprep.mubr.f32.mxu0 0.0
      %1169 = vmatmul.mubr.f32.gmra.mrb[0].mxu0 %v1086
      %v1170 = vpop.f32.mrb[0].mxu0
      %v1171 = vadd.f32 0.0, %v1170
      %v1172 = vpop.f32.mrb[0].mxu0
      %1173 = vmatprep.mubr.f32.mxu0 0.0
      %1174 = vmatmul.mubr.f32.gmra.mrb[0].mxu0 %v1089
      %v1175 = vpop.f32.mrb[0].mxu0
      %v1176 = vadd.f32 0.0, %v1175
      %v1177 = vpop.f32.mrb[0].mxu0
      %1178 = vmatprep.mubr.f32.mxu0 0.0
      %1179 = vmatmul.mubr.f32.gmra.mrb[0].mxu0 %v1092
      %v1180 = vpop.f32.mrb[0].mxu0
      %v1181 = vadd.f32 0.0, %v1180
      %v1182 = vpop.f32.mrb[0].mxu0
      %1183 = vdwg.mxu0
      %v1184 = vmax.f32 %v1051, %v1161
      %v1185 = vmax.f32 %v1056, %v1166
      %v1186 = vmax.f32 %v1061, %v1171
      %v1187 = vmax.f32 %v1066, %v1176
      %v1188 = vmax.f32 %v1071, %v1181
      %1189 = vst [vmem:[#allocation2] sm:$0x1] 0.0
      %1190 = vst [vmem:[#allocation2 + $0x23] sm:$0x1] 0.0
      %vm1191 = vcmask 916480
      %1192 = vst.msk [vmem:[#allocation2 + $0x1] sm:$0xff] %vm1191, %v1184
      %1193 = vst.msk [vmem:[#allocation2 + $0x9] sm:$0xff] %vm1191, %v1185
      %1194 = vst.msk [vmem:[#allocation2 + $0x11] sm:$0xff] %vm1191, %v1186
      %1195 = vst.msk [vmem:[#allocation2 + $0x19] sm:$0xff] %vm1191, %v1187
      %vm1196 = vcmask 910336
      %1197 = vst.msk [vmem:[#allocation2 + $0x21] sm:$0x3] %vm1196, %v1188
      %v1198 = vld [vmem:[#allocation2] sm:$0xff]
      %v1199 = vld [vmem:[#allocation2 + $0x8] sm:$0xff]
      %v1200 = vld [vmem:[#allocation2 + $0x10] sm:$0xff]
      %v1201 = vld [vmem:[#allocation2 + $0x18] sm:$0xff]
      %v1202 = vld [vmem:[#allocation2 + $0x20] sm:$0x3]
      %v1203 = vld [vmem:[#allocation2 + $0x1] sm:$0xff]
      %v1204 = vld [vmem:[#allocation2 + $0x9] sm:$0xff]
      %v1205 = vld [vmem:[#allocation2 + $0x11] sm:$0xff]
      %v1206 = vld [vmem:[#allocation2 + $0x19] sm:$0xff]
      %v1207 = vld [vmem:[#allocation2 + $0x21] sm:$0x3]
      %v1208 = vld [vmem:[#allocation2 + $0x2] sm:$0xff]
      %v1209 = vld [vmem:[#allocation2 + $0xa] sm:$0xff]
      %v1210 = vld [vmem:[#allocation2 + $0x12] sm:$0xff]
      %v1211 = vld [vmem:[#allocation2 + $0x1a] sm:$0xff]
      %v1212 = vld [vmem:[#allocation2 + $0x22] sm:$0x3]
      %1218 = vrot.lane.b32.xlu0 %v1203, 112
      %v1219 = vpop.permute.xlu0 %1218
      %1220 = vrot.lane.b32.xlu0 %v1204, 112
      %v1221 = vpop.permute.xlu0 %1220
      %1222 = vrot.lane.b32.xlu0 %v1205, 112
      %v1223 = vpop.permute.xlu0 %1222
      %1224 = vrot.lane.b32.xlu0 %v1206, 112
      %v1225 = vpop.permute.xlu0 %1224
      %1226 = vrot.lane.b32.xlu0 %v1207, 112
      %v1227 = vpop.permute.xlu0 %1226
      %1238 = vrot.lane.b32.xlu0 %v1208, 96
      %v1239 = vpop.permute.xlu0 %1238
      %1240 = vrot.lane.b32.xlu0 %v1209, 96
      %v1241 = vpop.permute.xlu0 %1240
      %1242 = vrot.lane.b32.xlu0 %v1210, 96
      %v1243 = vpop.permute.xlu0 %1242
      %1244 = vrot.lane.b32.xlu0 %v1211, 96
      %v1245 = vpop.permute.xlu0 %1244
      %1246 = vrot.lane.b32.xlu0 %v1212, 96
      %v1247 = vpop.permute.xlu0 %1246
      %v1253 = vsel %vm1191, %v1198, %v1219
      %v1254 = vsel %vm1191, %v1199, %v1221
      %v1255 = vsel %vm1191, %v1200, %v1223
      %v1256 = vsel %vm1191, %v1201, %v1225
      %v1257 = vsel %vm1191, %v1202, %v1227
      %vm1258 = vcmask 785408
      %v1259 = vsel %vm1258, %v1219, %v1239
      %v1260 = vsel %vm1258, %v1221, %v1241
      %v1261 = vsel %vm1258, %v1223, %v1243
      %v1262 = vsel %vm1258, %v1225, %v1245
      %v1263 = vsel %vm1258, %v1227, %v1247
      %v1264 = vld [vmem:[%s3] sm:$0xff]
      %v1265 = vld [vmem:[%s3 + $0x8] sm:$0xff]
      %v1266 = vld [vmem:[%s3 + $0x10] sm:$0xff]
      %v1267 = vld [vmem:[%s3 + $0x18] sm:$0xff]
      %v1268 = vld [vmem:[%s3 + $0x20] sm:$0xff]
      %v1269 = vld [vmem:[%s3 + $0x28] sm:$0xff]
      %v1270 = vld [vmem:[%s3 + $0x30] sm:$0xff]
      %v1271 = vld [vmem:[%s3 + $0x38] sm:$0xff]
      %v1272 = vld [vmem:[%s3 + $0x40] sm:$0xff]
      %v1273 = vld [vmem:[%s3 + $0x48] sm:$0xff]
      %v1274 = vld [vmem:[%s3 + $0x50] sm:$0xff]
      %v1275 = vld [vmem:[%s3 + $0x58] sm:$0xff]
      %v1276 = vld [vmem:[%s3 + $0x60] sm:$0xff]
      %v1277 = vld [vmem:[%s3 + $0x68] sm:$0xff]
      %v1278 = vld [vmem:[%s3 + $0x70] sm:$0xff]
      %v1279 = vld [vmem:[%s3 + $0x78] sm:$0xff]
      %v1280 = vld [vmem:[%s3 + $0x80] sm:$0xff]
      %v1281 = vld [vmem:[%s3 + $0x88] sm:$0xff]
      %v1282 = vld [vmem:[%s3 + $0x90] sm:$0xff]
      %v1283 = vld [vmem:[%s3 + $0x98] sm:$0xff]
      %v1284 = vld [vmem:[%s3 + $0xa0] sm:$0xff]
      %v1285 = vld [vmem:[%s3 + $0xa8] sm:$0xff]
      %v1286 = vld [vmem:[%s3 + $0xb0] sm:$0xff]
      %v1287 = vld [vmem:[%s3 + $0xb8] sm:$0xff]
      %v1288 = vld [vmem:[%s3 + $0xc0] sm:$0xff]
      %v1289 = vld [vmem:[%s3 + $0xc8] sm:$0xff]
      %v1290 = vld [vmem:[%s3 + $0xd0] sm:$0xff]
      %v1291 = vld [vmem:[%s3 + $0xd8] sm:$0xff]
      %v1292 = vld [vmem:[%s3 + $0xe0] sm:$0xff]
      %v1293 = vld [vmem:[%s3 + $0xe8] sm:$0xff]
      %v1294 = vld [vmem:[%s3 + $0xf0] sm:$0xff]
      %v1295 = vld [vmem:[%s3 + $0xf8] sm:$0xff]
      %v1296 = vld [vmem:[%s3 + $0x100] sm:$0xff]
      %v1297 = vld [vmem:[%s3 + $0x108] sm:$0xff]
      %v1298 = vld [vmem:[%s3 + $0x110] sm:$0xff]
      %v1299 = vld [vmem:[%s3 + $0x118] sm:$0xff]
      %v1300 = vld [vmem:[%s3 + $0x120] sm:$0xff]
      %v1301 = vld [vmem:[%s3 + $0x128] sm:$0xff]
      %v1302 = vld [vmem:[%s3 + $0x130] sm:$0xff]
      %v1303 = vld [vmem:[%s3 + $0x138] sm:$0xff]
      %v1304 = vld [vmem:[%s3 + $0x140] sm:$0xff]
      %v1305 = vld [vmem:[%s3 + $0x148] sm:$0xff]
      %v1306 = vld [vmem:[%s4] sm:$0x1]
      %v1308 = vlaneseq
      %v1309 = vshrl.u32 %v1308, 7
      %v1310 = vsub.s32 0, %v1309
      %v1311 = vrot.slane %v1306, %v1310
      %vm1313 = vcmask 654336
      %v1314 = vsel %vm1313, %v1239, 0
      %v1316 = vsel %vm1313, %v1241, 0
      %v1318 = vsel %vm1313, %v1243, 0
      %v1320 = vsel %vm1313, %v1245, 0
      %v1322 = vsel %vm1313, %v1247, 0
      %1324 = vmatprep.subr.mxu0 0.0
      %1325 = vmatpush1.msra.mxu0 %v1264
      %1326 = vmatprep.subr.mxu0 0.0
      %1327 = vmatpush1.msra.mxu0 %v1265
      %1328 = vmatprep.subr.mxu0 0.0
      %1329 = vmatpush1.msra.mxu0 %v1266
      %1330 = vmatprep.subr.mxu0 0.0
      %1331 = vmatpush1.msra.mxu0 %v1267
      %1332 = vmatprep.subr.mxu0 0.0
      %1333 = vmatpush1.msra.mxu0 %v1268
      %1334 = vmatprep.subr.mxu0 0.0
      %1335 = vmatpush1.msra.mxu0 %v1269
      %1336 = vmatprep.subr.mxu0 0.0
      %1337 = vmatpush1.msra.mxu0 %v1270
      %1338 = vmatprep.subr.mxu0 0.0
      %1339 = vmatpush1.msra.mxu0 %v1271
      %1340 = vmatprep.subr.mxu0 0.0
      %1341 = vmatpush1.msra.mxu0 %v1272
      %1342 = vmatprep.subr.mxu0 0.0
      %1343 = vmatpush1.msra.mxu0 %v1273
      %1344 = vmatprep.subr.mxu0 0.0
      %1345 = vmatpush1.msra.mxu0 %v1274
      %1346 = vmatprep.subr.mxu0 0.0
      %1347 = vmatpush1.msra.mxu0 %v1275
      %1348 = vmatprep.subr.mxu0 0.0
      %1349 = vmatpush1.msra.mxu0 %v1276
      %1350 = vmatprep.subr.mxu0 0.0
      %1351 = vmatpush1.msra.mxu0 %v1277
      %1352 = vmatprep.subr.mxu0 0.0
      %1353 = vmatpush1.msra.mxu0 %v1278
      %1354 = vmatprep.subr.mxu0 0.0
      %1355 = vmatpush1.msra.mxu0 %v1279
      %1356 = vmatprep.subr.mxu0 0.0
      %1357 = vmatpush1.msra.mxu0 %v1280
      %1358 = vmatprep.subr.mxu0 0.0
      %1359 = vmatpush1.msra.mxu0 %v1281
      %1360 = vmatprep.subr.mxu0 0.0
      %1361 = vmatpush1.msra.mxu0 %v1282
      %1362 = vmatprep.subr.mxu0 0.0
      %1363 = vmatpush1.msra.mxu0 %v1283
      %1364 = vmatprep.subr.mxu0 0.0
      %1365 = vmatpush1.msra.mxu0 %v1284
      %1366 = vmatprep.subr.mxu0 0.0
      %1367 = vmatpush1.msra.mxu0 %v1285
      %1368 = vmatprep.subr.mxu0 0.0
      %1369 = vmatpush1.msra.mxu0 %v1286
      %1370 = vmatprep.subr.mxu0 0.0
      %1371 = vmatpush1.msra.mxu0 %v1287
      %1372 = vmatprep.subr.mxu0 0.0
      %1373 = vmatpush1.msra.mxu0 %v1288
      %1374 = vmatprep.subr.mxu0 0.0
      %1375 = vmatpush1.msra.mxu0 %v1289
      %1376 = vmatprep.subr.mxu0 0.0
      %1377 = vmatpush1.msra.mxu0 %v1290
      %1378 = vmatprep.subr.mxu0 0.0
      %1379 = vmatpush1.msra.mxu0 %v1291
      %1380 = vmatprep.subr.mxu0 0.0
      %1381 = vmatpush1.msra.mxu0 %v1292
      %1382 = vmatprep.subr.mxu0 0.0
      %1383 = vmatpush1.msra.mxu0 %v1293
      %1384 = vmatprep.subr.mxu0 0.0
      %1385 = vmatpush1.msra.mxu0 %v1294
      %1386 = vmatprep.subr.mxu0 0.0
      %1387 = vmatpush1.msra.mxu0 %v1295
      %1388 = vmatprep.mubr.f32.mxu0 %v1259
      %1389 = vmatmul.mubr.f32.gmra.mrb[0].mxu0 %v1253
      %v1390 = vpop.f32.mrb[0].mxu0
      %v1391 = vadd.f32 %v1311, %v1390
      %v1392 = vpop.f32.mrb[0].mxu0
      %1393 = vmatprep.mubr.f32.mxu0 %v1260
      %1394 = vmatmul.mubr.f32.gmra.mrb[0].mxu0 %v1254
      %v1395 = vpop.f32.mrb[0].mxu0
      %v1396 = vadd.f32 %v1311, %v1395
      %v1397 = vpop.f32.mrb[0].mxu0
      %1398 = vmatprep.mubr.f32.mxu0 %v1261
      %1399 = vmatmul.mubr.f32.gmra.mrb[0].mxu0 %v1255
      %v1400 = vpop.f32.mrb[0].mxu0
      %v1401 = vadd.f32 %v1311, %v1400
      %v1402 = vpop.f32.mrb[0].mxu0
      %1403 = vmatprep.mubr.f32.mxu0 %v1262
      %1404 = vmatmul.mubr.f32.gmra.mrb[0].mxu0 %v1256
      %v1405 = vpop.f32.mrb[0].mxu0
      %v1406 = vadd.f32 %v1311, %v1405
      %v1407 = vpop.f32.mrb[0].mxu0
      %1408 = vmatprep.mubr.f32.mxu0 %v1263
      %1409 = vmatmul.mubr.f32.gmra.mrb[0].mxu0 %v1257
      %v1410 = vpop.f32.mrb[0].mxu0
      %v1411 = vadd.f32 %v1311, %v1410
      %v1412 = vpop.f32.mrb[0].mxu0
      %1413 = vdwg.mxu0
      %1414 = vmatprep.subr.mxu0 0.0
      %1415 = vmatpush1.msra.mxu0 %v1296
      %1416 = vmatprep.subr.mxu0 0.0
      %1417 = vmatpush1.msra.mxu0 %v1297
      %1418 = vmatprep.subr.mxu0 0.0
      %1419 = vmatpush1.msra.mxu0 %v1298
      %1420 = vmatprep.subr.mxu0 0.0
      %1421 = vmatpush1.msra.mxu0 %v1299
      %1422 = vmatprep.subr.mxu0 0.0
      %1423 = vmatpush1.msra.mxu0 %v1300
      %1424 = vmatprep.subr.mxu0 0.0
      %1425 = vmatpush1.msra.mxu0 %v1301
      %1426 = vmatprep.subr.mxu0 0.0
      %1427 = vmatpush1.msra.mxu0 %v1302
      %1428 = vmatprep.subr.mxu0 0.0
      %1429 = vmatpush1.msra.mxu0 %v1303
      %1430 = vmatprep.subr.mxu0 0.0
      %1431 = vmatpush1.msra.mxu0 %v1304
      %1432 = vmatprep.subr.mxu0 0.0
      %1433 = vmatpush1.msra.mxu0 %v1305
      %1434 = vmatprep.subr.mxu0 0.0
      %1435 = vmatpush1.msra.mxu0 0.0
      %1436 = vmatprep.subr.mxu0 0.0
      %1437 = vmatpush1.msra.mxu0 0.0
      %1438 = vmatprep.subr.mxu0 0.0
      %1439 = vmatpush1.msra.mxu0 0.0
      %1440 = vmatprep.subr.mxu0 0.0
      %1441 = vmatpush1.msra.mxu0 0.0
      %1442 = vmatprep.subr.mxu0 0.0
      %1443 = vmatpush1.msra.mxu0 0.0
      %1444 = vmatprep.subr.mxu0 0.0
      %1445 = vmatpush1.msra.mxu0 0.0
      %1446 = vmatprep.subr.mxu0 0.0
      %1447 = vmatpush1.msra.mxu0 0.0
      %1448 = vmatprep.subr.mxu0 0.0
      %1449 = vmatpush1.msra.mxu0 0.0
      %1450 = vmatprep.subr.mxu0 0.0
      %1451 = vmatpush1.msra.mxu0 0.0
      %1452 = vmatprep.subr.mxu0 0.0
      %1453 = vmatpush1.msra.mxu0 0.0
      %1454 = vmatprep.subr.mxu0 0.0
      %1455 = vmatpush1.msra.mxu0 0.0
      %1456 = vmatprep.subr.mxu0 0.0
      %1457 = vmatpush1.msra.mxu0 0.0
      %1458 = vmatprep.subr.mxu0 0.0
      %1459 = vmatpush1.msra.mxu0 0.0
      %1460 = vmatprep.subr.mxu0 0.0
      %1461 = vmatpush1.msra.mxu0 0.0
      %1462 = vmatprep.subr.mxu0 0.0
      %1463 = vmatpush1.msra.mxu0 0.0
      %1464 = vmatprep.subr.mxu0 0.0
      %1465 = vmatpush1.msra.mxu0 0.0
      %1466 = vmatprep.subr.mxu0 0.0
      %1467 = vmatpush1.msra.mxu0 0.0
      %1468 = vmatprep.subr.mxu0 0.0
      %1469 = vmatpush1.msra.mxu0 0.0
      %1470 = vmatprep.subr.mxu0 0.0
      %1471 = vmatpush1.msra.mxu0 0.0
      %1472 = vmatprep.subr.mxu0 0.0
      %1473 = vmatpush1.msra.mxu0 0.0
      %1474 = vmatprep.subr.mxu0 0.0
      %1475 = vmatpush1.msra.mxu0 0.0
      %1476 = vmatprep.subr.mxu0 0.0
      %1477 = vmatpush1.msra.mxu0 0.0
      %1478 = vmatprep.mubr.f32.mxu0 0.0
      %1479 = vmatmul.mubr.f32.gmra.mrb[0].mxu0 %v1314
      %v1480 = vpop.f32.mrb[0].mxu0
      %v1481 = vadd.f32 %v1391, %v1480
      %v1482 = vpop.f32.mrb[0].mxu0
      %1483 = vmatprep.mubr.f32.mxu0 0.0
      %1484 = vmatmul.mubr.f32.gmra.mrb[0].mxu0 %v1316
      %v1485 = vpop.f32.mrb[0].mxu0
      %v1486 = vadd.f32 %v1396, %v1485
      %v1487 = vpop.f32.mrb[0].mxu0
      %1488 = vmatprep.mubr.f32.mxu0 0.0
      %1489 = vmatmul.mubr.f32.gmra.mrb[0].mxu0 %v1318
      %v1490 = vpop.f32.mrb[0].mxu0
      %v1491 = vadd.f32 %v1401, %v1490
      %v1492 = vpop.f32.mrb[0].mxu0
      %1493 = vmatprep.mubr.f32.mxu0 0.0
      %1494 = vmatmul.mubr.f32.gmra.mrb[0].mxu0 %v1320
      %v1495 = vpop.f32.mrb[0].mxu0
      %v1496 = vadd.f32 %v1406, %v1495
      %v1497 = vpop.f32.mrb[0].mxu0
      %1498 = vmatprep.mubr.f32.mxu0 0.0
      %1499 = vmatmul.mubr.f32.gmra.mrb[0].mxu0 %v1322
      %v1500 = vpop.f32.mrb[0].mxu0
      %v1501 = vadd.f32 %v1411, %v1500
      %v1502 = vpop.f32.mrb[0].mxu0
      %1503 = vdwg.mxu0
      %v1504 = vmax.f32 %v1481, 0.0
      %v1505 = vmax.f32 %v1486, 0.0
      %v1506 = vmax.f32 %v1491, 0.0
      %v1507 = vmax.f32 %v1496, 0.0
      %v1508 = vmax.f32 %v1501, 0.0
      %1514 = vrot.lane.b32.xlu0 %v1504, 1
      %v1515 = vpop.permute.xlu0 %1514
      %1516 = vrot.lane.b32.xlu0 %v1505, 1
      %v1517 = vpop.permute.xlu0 %1516
      %1518 = vrot.lane.b32.xlu0 %v1506, 1
      %v1519 = vpop.permute.xlu0 %1518
      %1520 = vrot.lane.b32.xlu0 %v1507, 1
      %v1521 = vpop.permute.xlu0 %1520
      %1522 = vrot.lane.b32.xlu0 %v1508, 1
      %v1523 = vpop.permute.xlu0 %1522
      %v1529 = vsel %vm594, 0.0, %v1515
      %v1530 = vsel %vm594, 0.0, %v1517
      %v1531 = vsel %vm594, 0.0, %v1519
      %v1532 = vsel %vm594, 0.0, %v1521
      %v1533 = vsel %vm594, 0.0, %v1523
      %v1534 = vmax.f32 %v1504, %v1529
      %v1535 = vmax.f32 %v1505, %v1530
      %v1536 = vmax.f32 %v1506, %v1531
      %v1537 = vmax.f32 %v1507, %v1532
      %v1538 = vmax.f32 %v1508, %v1533
      %v1539 = vld [vmem:[%s15] sm:$0xff]
      %v1540 = vld [vmem:[%s15 + $0x8] sm:$0xff]
      %v1541 = vld [vmem:[%s15 + $0x10] sm:$0x3]
      %vm1542 = vcmask 277504
      %v1544 = vsel %vm1542, %v1539, 0
      %v1547 = vsel %vm1542, %v1540, 0
      %v1550 = vsel %vm1542, %v1541, 0
      %v1553 = vsel %vm980, %v1538, 0
      %1555 = vmatprep.subr.mxu0 0.0
      %1556 = vmatpush1.msra.mxu0 %v1534
      %1557 = vmatprep.subr.mxu0 0.0
      %1558 = vmatpush1.msra.mxu0 %v1535
      %1559 = vmatprep.subr.mxu0 0.0
      %1560 = vmatpush1.msra.mxu0 %v1536
      %1561 = vmatprep.subr.mxu0 0.0
      %1562 = vmatpush1.msra.mxu0 %v1537
      %1563 = vmatprep.subr.mxu0 0.0
      %1564 = vmatpush1.msra.mxu0 %v1553
      %1565 = vmatprep.subr.mxu0 0.0
      %1566 = vmatpush1.msra.mxu0 0.0
      %1567 = vmatprep.subr.mxu0 0.0
      %1568 = vmatpush1.msra.mxu0 0.0
      %1569 = vmatprep.subr.mxu0 0.0
      %1570 = vmatpush1.msra.mxu0 0.0
      %1571 = vmatprep.subr.mxu0 0.0
      %1572 = vmatpush1.msra.mxu0 0.0
      %1573 = vmatprep.subr.mxu0 0.0
      %1574 = vmatpush1.msra.mxu0 0.0
      %1575 = vmatprep.subr.mxu0 0.0
      %1576 = vmatpush1.msra.mxu0 0.0
      %1577 = vmatprep.subr.mxu0 0.0
      %1578 = vmatpush1.msra.mxu0 0.0
      %1579 = vmatprep.subr.mxu0 0.0
      %1580 = vmatpush1.msra.mxu0 0.0
      %1581 = vmatprep.subr.mxu0 0.0
      %1582 = vmatpush1.msra.mxu0 0.0
      %1583 = vmatprep.subr.mxu0 0.0
      %1584 = vmatpush1.msra.mxu0 0.0
      %1585 = vmatprep.subr.mxu0 0.0
      %1586 = vmatpush1.msra.mxu0 0.0
      %1587 = vmatprep.subr.mxu0 0.0
      %1588 = vmatpush1.msra.mxu0 0.0
      %1589 = vmatprep.subr.mxu0 0.0
      %1590 = vmatpush1.msra.mxu0 0.0
      %1591 = vmatprep.subr.mxu0 0.0
      %1592 = vmatpush1.msra.mxu0 0.0
      %1593 = vmatprep.subr.mxu0 0.0
      %1594 = vmatpush1.msra.mxu0 0.0
      %1595 = vmatprep.subr.mxu0 0.0
      %1596 = vmatpush1.msra.mxu0 0.0
      %1597 = vmatprep.subr.mxu0 0.0
      %1598 = vmatpush1.msra.mxu0 0.0
      %1599 = vmatprep.subr.mxu0 0.0
      %1600 = vmatpush1.msra.mxu0 0.0
      %1601 = vmatprep.subr.mxu0 0.0
      %1602 = vmatpush1.msra.mxu0 0.0
      %1603 = vmatprep.subr.mxu0 0.0
      %1604 = vmatpush1.msra.mxu0 0.0
      %1605 = vmatprep.subr.mxu0 0.0
      %1606 = vmatpush1.msra.mxu0 0.0
      %1607 = vmatprep.subr.mxu0 0.0
      %1608 = vmatpush1.msra.mxu0 0.0
      %1609 = vmatprep.subr.mxu0 0.0
      %1610 = vmatpush1.msra.mxu0 0.0
      %1611 = vmatprep.subr.mxu0 0.0
      %1612 = vmatpush1.msra.mxu0 0.0
      %1613 = vmatprep.subr.mxu0 0.0
      %1614 = vmatpush1.msra.mxu0 0.0
      %1615 = vmatprep.subr.mxu0 0.0
      %1616 = vmatpush1.msra.mxu0 0.0
      %1617 = vmatprep.subr.mxu0 0.0
      %1618 = vmatpush1.msra.mxu0 0.0
      %1619 = vmatprep.mubr.f32.mxu0 0.0
      %1620 = vmatmul.mubr.f32.gmra.mrb[0].mxu0 %v1544
      %v1621 = vpop.f32.mrb[0].mxu0
      %v1622 = vadd.f32 0.0, %v1621
      %v1623 = vpop.f32.mrb[0].mxu0
      %1624 = vmatprep.mubr.f32.mxu0 0.0
      %1625 = vmatmul.mubr.f32.gmra.mrb[0].mxu0 %v1547
      %v1626 = vpop.f32.mrb[0].mxu0
      %v1627 = vadd.f32 0.0, %v1626
      %v1628 = vpop.f32.mrb[0].mxu0
      %1629 = vmatprep.mubr.f32.mxu0 0.0
      %1630 = vmatmul.mubr.f32.gmra.mrb[0].mxu0 %v1550
      %v1631 = vpop.f32.mrb[0].mxu0
      %v1632 = vadd.f32 0.0, %v1631
      %v1633 = vpop.f32.mrb[0].mxu0
      %1634 = vdwg.mxu0
      %v1635 = vld [vmem:[%s16] sm:$0xff]
      %v1636 = vld [vmem:[%s16 + $0x8] sm:$0xff]
      %v1637 = vld [vmem:[%s16 + $0x10] sm:$0x3]
      %v1639 = vsel %vm1542, %v1635, 0
      %v1642 = vsel %vm1542, %v1636, 0
      %v1645 = vsel %vm1542, %v1637, 0
      %1647 = vmatprep.subr.mxu0 0.0
      %1648 = vmatpush1.msra.mxu0 %v1534
      %1649 = vmatprep.subr.mxu0 0.0
      %1650 = vmatpush1.msra.mxu0 %v1535
      %1651 = vmatprep.subr.mxu0 0.0
      %1652 = vmatpush1.msra.mxu0 %v1536
      %1653 = vmatprep.subr.mxu0 0.0
      %1654 = vmatpush1.msra.mxu0 %v1537
      %1655 = vmatprep.subr.mxu0 0.0
      %1656 = vmatpush1.msra.mxu0 %v1553
      %1657 = vmatprep.subr.mxu0 0.0
      %1658 = vmatpush1.msra.mxu0 0.0
      %1659 = vmatprep.subr.mxu0 0.0
      %1660 = vmatpush1.msra.mxu0 0.0
      %1661 = vmatprep.subr.mxu0 0.0
      %1662 = vmatpush1.msra.mxu0 0.0
      %1663 = vmatprep.subr.mxu0 0.0
      %1664 = vmatpush1.msra.mxu0 0.0
      %1665 = vmatprep.subr.mxu0 0.0
      %1666 = vmatpush1.msra.mxu0 0.0
      %1667 = vmatprep.subr.mxu0 0.0
      %1668 = vmatpush1.msra.mxu0 0.0
      %1669 = vmatprep.subr.mxu0 0.0
      %1670 = vmatpush1.msra.mxu0 0.0
      %1671 = vmatprep.subr.mxu0 0.0
      %1672 = vmatpush1.msra.mxu0 0.0
      %1673 = vmatprep.subr.mxu0 0.0
      %1674 = vmatpush1.msra.mxu0 0.0
      %1675 = vmatprep.subr.mxu0 0.0
      %1676 = vmatpush1.msra.mxu0 0.0
      %1677 = vmatprep.subr.mxu0 0.0
      %1678 = vmatpush1.msra.mxu0 0.0
      %1679 = vmatprep.subr.mxu0 0.0
      %1680 = vmatpush1.msra.mxu0 0.0
      %1681 = vmatprep.subr.mxu0 0.0
      %1682 = vmatpush1.msra.mxu0 0.0
      %1683 = vmatprep.subr.mxu0 0.0
      %1684 = vmatpush1.msra.mxu0 0.0
      %1685 = vmatprep.subr.mxu0 0.0
      %1686 = vmatpush1.msra.mxu0 0.0
      %1687 = vmatprep.subr.mxu0 0.0
      %1688 = vmatpush1.msra.mxu0 0.0
      %1689 = vmatprep.subr.mxu0 0.0
      %1690 = vmatpush1.msra.mxu0 0.0
      %1691 = vmatprep.subr.mxu0 0.0
      %1692 = vmatpush1.msra.mxu0 0.0
      %1693 = vmatprep.subr.mxu0 0.0
      %1694 = vmatpush1.msra.mxu0 0.0
      %1695 = vmatprep.subr.mxu0 0.0
      %1696 = vmatpush1.msra.mxu0 0.0
      %1697 = vmatprep.subr.mxu0 0.0
      %1698 = vmatpush1.msra.mxu0 0.0
      %1699 = vmatprep.subr.mxu0 0.0
      %1700 = vmatpush1.msra.mxu0 0.0
      %1701 = vmatprep.subr.mxu0 0.0
      %1702 = vmatpush1.msra.mxu0 0.0
      %1703 = vmatprep.subr.mxu0 0.0
      %1704 = vmatpush1.msra.mxu0 0.0
      %1705 = vmatprep.subr.mxu0 0.0
      %1706 = vmatpush1.msra.mxu0 0.0
      %1707 = vmatprep.subr.mxu0 0.0
      %1708 = vmatpush1.msra.mxu0 0.0
      %1709 = vmatprep.subr.mxu0 0.0
      %1710 = vmatpush1.msra.mxu0 0.0
      %1711 = vmatprep.mubr.f32.mxu0 0.0
      %1712 = vmatmul.mubr.f32.gmra.mrb[0].mxu0 %v1639
      %v1713 = vpop.f32.mrb[0].mxu0
      %v1714 = vadd.f32 0.0, %v1713
      %v1715 = vpop.f32.mrb[0].mxu0
      %1716 = vmatprep.mubr.f32.mxu0 0.0
      %1717 = vmatmul.mubr.f32.gmra.mrb[0].mxu0 %v1642
      %v1718 = vpop.f32.mrb[0].mxu0
      %v1719 = vadd.f32 0.0, %v1718
      %v1720 = vpop.f32.mrb[0].mxu0
      %1721 = vmatprep.mubr.f32.mxu0 0.0
      %1722 = vmatmul.mubr.f32.gmra.mrb[0].mxu0 %v1645
      %v1723 = vpop.f32.mrb[0].mxu0
      %v1724 = vadd.f32 0.0, %v1723
      %v1725 = vpop.f32.mrb[0].mxu0
      %1726 = vdwg.mxu0
      %v1727 = vmax.f32 %v1622, %v1714
      %v1728 = vmax.f32 %v1627, %v1719
      %v1729 = vmax.f32 %v1632, %v1724
      %1730 = vst [vmem:[#allocation2] sm:$0x1] 0.0
      %1731 = vst [vmem:[#allocation2 + $0x13] sm:$0x1] 0.0
      %1732 = vst.msk [vmem:[#allocation2 + $0x1] sm:$0xff] %vm1191, %v1727
      %1733 = vst.msk [vmem:[#allocation2 + $0x9] sm:$0xff] %vm1191, %v1728
      %1734 = vst.msk [vmem:[#allocation2 + $0x11] sm:$0x3] %vm1196, %v1729
      %v1735 = vld [vmem:[#allocation2] sm:$0xff]
      %v1736 = vld [vmem:[#allocation2 + $0x8] sm:$0xff]
      %v1737 = vld [vmem:[#allocation2 + $0x10] sm:$0x3]
      %v1738 = vld [vmem:[#allocation2 + $0x1] sm:$0xff]
      %v1739 = vld [vmem:[#allocation2 + $0x9] sm:$0xff]
      %v1740 = vld [vmem:[#allocation2 + $0x11] sm:$0x3]
      %v1741 = vld [vmem:[#allocation2 + $0x2] sm:$0xff]
      %v1742 = vld [vmem:[#allocation2 + $0xa] sm:$0xff]
      %v1743 = vld [vmem:[#allocation2 + $0x12] sm:$0x3]
      %1747 = vrot.lane.b32.xlu0 %v1738, 112
      %v1748 = vpop.permute.xlu0 %1747
      %1749 = vrot.lane.b32.xlu0 %v1739, 112
      %v1750 = vpop.permute.xlu0 %1749
      %1751 = vrot.lane.b32.xlu0 %v1740, 112
      %v1752 = vpop.permute.xlu0 %1751
      %1759 = vrot.lane.b32.xlu0 %v1741, 96
      %v1760 = vpop.permute.xlu0 %1759
      %1761 = vrot.lane.b32.xlu0 %v1742, 96
      %v1762 = vpop.permute.xlu0 %1761
      %1763 = vrot.lane.b32.xlu0 %v1743, 96
      %v1764 = vpop.permute.xlu0 %1763
      %v1768 = vsel %vm1191, %v1735, %v1748
      %v1769 = vsel %vm1191, %v1736, %v1750
      %v1770 = vsel %vm1191, %v1737, %v1752
      %v1771 = vsel %vm1258, %v1748, %v1760
      %v1772 = vsel %vm1258, %v1750, %v1762
      %v1773 = vsel %vm1258, %v1752, %v1764
      %v1774 = vld [vmem:[%s5] sm:$0xff]
      %v1775 = vld [vmem:[%s5 + $0x8] sm:$0xff]
      %v1776 = vld [vmem:[%s5 + $0x10] sm:$0xff]
      %v1777 = vld [vmem:[%s5 + $0x18] sm:$0xff]
      %v1778 = vld [vmem:[%s5 + $0x20] sm:$0xff]
      %v1779 = vld [vmem:[%s5 + $0x28] sm:$0xff]
      %v1780 = vld [vmem:[%s5 + $0x30] sm:$0xff]
      %v1781 = vld [vmem:[%s5 + $0x38] sm:$0xff]
      %v1782 = vld [vmem:[%s5 + $0x40] sm:$0xff]
      %v1783 = vld [vmem:[%s5 + $0x48] sm:$0xff]
      %v1784 = vld [vmem:[%s5 + $0x50] sm:$0xff]
      %v1785 = vld [vmem:[%s5 + $0x58] sm:$0xff]
      %v1786 = vld [vmem:[%s5 + $0x60] sm:$0xff]
      %v1787 = vld [vmem:[%s5 + $0x68] sm:$0xff]
      %v1788 = vld [vmem:[%s5 + $0x70] sm:$0xff]
      %v1789 = vld [vmem:[%s5 + $0x78] sm:$0xff]
      %v1790 = vld [vmem:[%s5 + $0x80] sm:$0xff]
      %v1791 = vld [vmem:[%s5 + $0x88] sm:$0xff]
      %v1792 = vld [vmem:[%s5 + $0x90] sm:$0xff]
      %v1793 = vld [vmem:[%s5 + $0x98] sm:$0xff]
      %v1794 = vld [vmem:[%s5 + $0xa0] sm:$0xff]
      %v1795 = vld [vmem:[%s5 + $0xa8] sm:$0xff]
      %v1796 = vld [vmem:[%s5 + $0xb0] sm:$0xff]
      %v1797 = vld [vmem:[%s5 + $0xb8] sm:$0xff]
      %v1798 = vld [vmem:[%s5 + $0xc0] sm:$0xff]
      %v1799 = vld [vmem:[%s5 + $0xc8] sm:$0xff]
      %v1800 = vld [vmem:[%s5 + $0xd0] sm:$0xff]
      %v1801 = vld [vmem:[%s5 + $0xd8] sm:$0xff]
      %v1802 = vld [vmem:[%s5 + $0xe0] sm:$0xff]
      %v1803 = vld [vmem:[%s5 + $0xe8] sm:$0xff]
      %v1804 = vld [vmem:[%s5 + $0xf0] sm:$0xff]
      %v1805 = vld [vmem:[%s5 + $0xf8] sm:$0xff]
      %v1806 = vld [vmem:[%s5 + $0x100] sm:$0xff]
      %v1807 = vld [vmem:[%s5 + $0x108] sm:$0xff]
      %v1808 = vld [vmem:[%s5 + $0x110] sm:$0xff]
      %v1809 = vld [vmem:[%s5 + $0x118] sm:$0xff]
      %v1810 = vld [vmem:[%s5 + $0x120] sm:$0xff]
      %v1811 = vld [vmem:[%s5 + $0x128] sm:$0xff]
      %v1812 = vld [vmem:[%s5 + $0x130] sm:$0xff]
      %v1813 = vld [vmem:[%s5 + $0x138] sm:$0xff]
      %v1814 = vld [vmem:[%s5 + $0x140] sm:$0xff]
      %v1815 = vld [vmem:[%s5 + $0x148] sm:$0xff]
      %v1816 = vld [vmem:[%s6] sm:$0x1]
      %v1818 = vlaneseq
      %v1819 = vshrl.u32 %v1818, 7
      %v1820 = vsub.s32 0, %v1819
      %v1821 = vrot.slane %v1816, %v1820
      %v1823 = vsel %vm1313, %v1760, 0
      %v1825 = vsel %vm1313, %v1762, 0
      %v1827 = vsel %vm1313, %v1764, 0
      %1829 = vmatprep.subr.mxu0 0.0
      %1830 = vmatpush1.msra.mxu0 %v1774
      %1831 = vmatprep.subr.mxu0 0.0
      %1832 = vmatpush1.msra.mxu0 %v1775
      %1833 = vmatprep.subr.mxu0 0.0
      %1834 = vmatpush1.msra.mxu0 %v1776
      %1835 = vmatprep.subr.mxu0 0.0
      %1836 = vmatpush1.msra.mxu0 %v1777
      %1837 = vmatprep.subr.mxu0 0.0
      %1838 = vmatpush1.msra.mxu0 %v1778
      %1839 = vmatprep.subr.mxu0 0.0
      %1840 = vmatpush1.msra.mxu0 %v1779
      %1841 = vmatprep.subr.mxu0 0.0
      %1842 = vmatpush1.msra.mxu0 %v1780
      %1843 = vmatprep.subr.mxu0 0.0
      %1844 = vmatpush1.msra.mxu0 %v1781
      %1845 = vmatprep.subr.mxu0 0.0
      %1846 = vmatpush1.msra.mxu0 %v1782
      %1847 = vmatprep.subr.mxu0 0.0
      %1848 = vmatpush1.msra.mxu0 %v1783
      %1849 = vmatprep.subr.mxu0 0.0
      %1850 = vmatpush1.msra.mxu0 %v1784
      %1851 = vmatprep.subr.mxu0 0.0
      %1852 = vmatpush1.msra.mxu0 %v1785
      %1853 = vmatprep.subr.mxu0 0.0
      %1854 = vmatpush1.msra.mxu0 %v1786
      %1855 = vmatprep.subr.mxu0 0.0
      %1856 = vmatpush1.msra.mxu0 %v1787
      %1857 = vmatprep.subr.mxu0 0.0
      %1858 = vmatpush1.msra.mxu0 %v1788
      %1859 = vmatprep.subr.mxu0 0.0
      %1860 = vmatpush1.msra.mxu0 %v1789
      %1861 = vmatprep.subr.mxu0 0.0
      %1862 = vmatpush1.msra.mxu0 %v1790
      %1863 = vmatprep.subr.mxu0 0.0
      %1864 = vmatpush1.msra.mxu0 %v1791
      %1865 = vmatprep.subr.mxu0 0.0
      %1866 = vmatpush1.msra.mxu0 %v1792
      %1867 = vmatprep.subr.mxu0 0.0
      %1868 = vmatpush1.msra.mxu0 %v1793
      %1869 = vmatprep.subr.mxu0 0.0
      %1870 = vmatpush1.msra.mxu0 %v1794
      %1871 = vmatprep.subr.mxu0 0.0
      %1872 = vmatpush1.msra.mxu0 %v1795
      %1873 = vmatprep.subr.mxu0 0.0
      %1874 = vmatpush1.msra.mxu0 %v1796
      %1875 = vmatprep.subr.mxu0 0.0
      %1876 = vmatpush1.msra.mxu0 %v1797
      %1877 = vmatprep.subr.mxu0 0.0
      %1878 = vmatpush1.msra.mxu0 %v1798
      %1879 = vmatprep.subr.mxu0 0.0
      %1880 = vmatpush1.msra.mxu0 %v1799
      %1881 = vmatprep.subr.mxu0 0.0
      %1882 = vmatpush1.msra.mxu0 %v1800
      %1883 = vmatprep.subr.mxu0 0.0
      %1884 = vmatpush1.msra.mxu0 %v1801
      %1885 = vmatprep.subr.mxu0 0.0
      %1886 = vmatpush1.msra.mxu0 %v1802
      %1887 = vmatprep.subr.mxu0 0.0
      %1888 = vmatpush1.msra.mxu0 %v1803
      %1889 = vmatprep.subr.mxu0 0.0
      %1890 = vmatpush1.msra.mxu0 %v1804
      %1891 = vmatprep.subr.mxu0 0.0
      %1892 = vmatpush1.msra.mxu0 %v1805
      %1893 = vmatprep.mubr.f32.mxu0 %v1771
      %1894 = vmatmul.mubr.f32.gmra.mrb[0].mxu0 %v1768
      %v1895 = vpop.f32.mrb[0].mxu0
      %v1896 = vadd.f32 %v1821, %v1895
      %v1897 = vpop.f32.mrb[0].mxu0
      %1898 = vmatprep.mubr.f32.mxu0 %v1772
      %1899 = vmatmul.mubr.f32.gmra.mrb[0].mxu0 %v1769
      %v1900 = vpop.f32.mrb[0].mxu0
      %v1901 = vadd.f32 %v1821, %v1900
      %v1902 = vpop.f32.mrb[0].mxu0
      %1903 = vmatprep.mubr.f32.mxu0 %v1773
      %1904 = vmatmul.mubr.f32.gmra.mrb[0].mxu0 %v1770
      %v1905 = vpop.f32.mrb[0].mxu0
      %v1906 = vadd.f32 %v1821, %v1905
      %v1907 = vpop.f32.mrb[0].mxu0
      %1908 = vdwg.mxu0
      %1909 = vmatprep.subr.mxu0 0.0
      %1910 = vmatpush1.msra.mxu0 %v1806
      %1911 = vmatprep.subr.mxu0 0.0
      %1912 = vmatpush1.msra.mxu0 %v1807
      %1913 = vmatprep.subr.mxu0 0.0
      %1914 = vmatpush1.msra.mxu0 %v1808
      %1915 = vmatprep.subr.mxu0 0.0
      %1916 = vmatpush1.msra.mxu0 %v1809
      %1917 = vmatprep.subr.mxu0 0.0
      %1918 = vmatpush1.msra.mxu0 %v1810
      %1919 = vmatprep.subr.mxu0 0.0
      %1920 = vmatpush1.msra.mxu0 %v1811
      %1921 = vmatprep.subr.mxu0 0.0
      %1922 = vmatpush1.msra.mxu0 %v1812
      %1923 = vmatprep.subr.mxu0 0.0
      %1924 = vmatpush1.msra.mxu0 %v1813
      %1925 = vmatprep.subr.mxu0 0.0
      %1926 = vmatpush1.msra.mxu0 %v1814
      %1927 = vmatprep.subr.mxu0 0.0
      %1928 = vmatpush1.msra.mxu0 %v1815
      %1929 = vmatprep.subr.mxu0 0.0
      %1930 = vmatpush1.msra.mxu0 0.0
      %1931 = vmatprep.subr.mxu0 0.0
      %1932 = vmatpush1.msra.mxu0 0.0
      %1933 = vmatprep.subr.mxu0 0.0
      %1934 = vmatpush1.msra.mxu0 0.0
      %1935 = vmatprep.subr.mxu0 0.0
      %1936 = vmatpush1.msra.mxu0 0.0
      %1937 = vmatprep.subr.mxu0 0.0
      %1938 = vmatpush1.msra.mxu0 0.0
      %1939 = vmatprep.subr.mxu0 0.0
      %1940 = vmatpush1.msra.mxu0 0.0
      %1941 = vmatprep.subr.mxu0 0.0
      %1942 = vmatpush1.msra.mxu0 0.0
      %1943 = vmatprep.subr.mxu0 0.0
      %1944 = vmatpush1.msra.mxu0 0.0
      %1945 = vmatprep.subr.mxu0 0.0
      %1946 = vmatpush1.msra.mxu0 0.0
      %1947 = vmatprep.subr.mxu0 0.0
      %1948 = vmatpush1.msra.mxu0 0.0
      %1949 = vmatprep.subr.mxu0 0.0
      %1950 = vmatpush1.msra.mxu0 0.0
      %1951 = vmatprep.subr.mxu0 0.0
      %1952 = vmatpush1.msra.mxu0 0.0
      %1953 = vmatprep.subr.mxu0 0.0
      %1954 = vmatpush1.msra.mxu0 0.0
      %1955 = vmatprep.subr.mxu0 0.0
      %1956 = vmatpush1.msra.mxu0 0.0
      %1957 = vmatprep.subr.mxu0 0.0
      %1958 = vmatpush1.msra.mxu0 0.0
      %1959 = vmatprep.subr.mxu0 0.0
      %1960 = vmatpush1.msra.mxu0 0.0
      %1961 = vmatprep.subr.mxu0 0.0
      %1962 = vmatpush1.msra.mxu0 0.0
      %1963 = vmatprep.subr.mxu0 0.0
      %1964 = vmatpush1.msra.mxu0 0.0
      %1965 = vmatprep.subr.mxu0 0.0
      %1966 = vmatpush1.msra.mxu0 0.0
      %1967 = vmatprep.subr.mxu0 0.0
      %1968 = vmatpush1.msra.mxu0 0.0
      %1969 = vmatprep.subr.mxu0 0.0
      %1970 = vmatpush1.msra.mxu0 0.0
      %1971 = vmatprep.subr.mxu0 0.0
      %1972 = vmatpush1.msra.mxu0 0.0
      %1973 = vmatprep.mubr.f32.mxu0 0.0
      %1974 = vmatmul.mubr.f32.gmra.mrb[0].mxu0 %v1823
      %v1975 = vpop.f32.mrb[0].mxu0
      %v1976 = vadd.f32 %v1896, %v1975
      %v1977 = vpop.f32.mrb[0].mxu0
      %1978 = vmatprep.mubr.f32.mxu0 0.0
      %1979 = vmatmul.mubr.f32.gmra.mrb[0].mxu0 %v1825
      %v1980 = vpop.f32.mrb[0].mxu0
      %v1981 = vadd.f32 %v1901, %v1980
      %v1982 = vpop.f32.mrb[0].mxu0
      %1983 = vmatprep.mubr.f32.mxu0 0.0
      %1984 = vmatmul.mubr.f32.gmra.mrb[0].mxu0 %v1827
      %v1985 = vpop.f32.mrb[0].mxu0
      %v1986 = vadd.f32 %v1906, %v1985
      %v1987 = vpop.f32.mrb[0].mxu0
      %1988 = vdwg.mxu0
      %v1989 = vmax.f32 %v1976, 0.0
      %v1990 = vmax.f32 %v1981, 0.0
      %v1991 = vmax.f32 %v1986, 0.0
      %1995 = vrot.lane.b32.xlu0 %v1989, 1
      %v1996 = vpop.permute.xlu0 %1995
      %1997 = vrot.lane.b32.xlu0 %v1990, 1
      %v1998 = vpop.permute.xlu0 %1997
      %1999 = vrot.lane.b32.xlu0 %v1991, 1
      %v2000 = vpop.permute.xlu0 %1999
      %v2004 = vsel %vm594, 0.0, %v1996
      %v2005 = vsel %vm594, 0.0, %v1998
      %v2006 = vsel %vm594, 0.0, %v2000
      %v2007 = vmax.f32 %v1989, %v2004
      %v2008 = vmax.f32 %v1990, %v2005
      %v2009 = vmax.f32 %v1991, %v2006
      %v2010 = vld [vmem:[%s15] sm:$0xff]
      %v2011 = vld [vmem:[%s15 + $0x8] sm:$0x3]
      %vm2012 = vcmask 146432
      %v2014 = vsel %vm2012, %v2010, 0
      %v2017 = vsel %vm2012, %v2011, 0
      %v2020 = vsel %vm980, %v2009, 0
      %2022 = vmatprep.subr.mxu0 0.0
      %2023 = vmatpush1.msra.mxu0 %v2007
      %2024 = vmatprep.subr.mxu0 0.0
      %2025 = vmatpush1.msra.mxu0 %v2008
      %2026 = vmatprep.subr.mxu0 0.0
      %2027 = vmatpush1.msra.mxu0 %v2020
      %2028 = vmatprep.subr.mxu0 0.0
      %2029 = vmatpush1.msra.mxu0 0.0
      %2030 = vmatprep.subr.mxu0 0.0
      %2031 = vmatpush1.msra.mxu0 0.0
      %2032 = vmatprep.subr.mxu0 0.0
      %2033 = vmatpush1.msra.mxu0 0.0
      %2034 = vmatprep.subr.mxu0 0.0
      %2035 = vmatpush1.msra.mxu0 0.0
      %2036 = vmatprep.subr.mxu0 0.0
      %2037 = vmatpush1.msra.mxu0 0.0
      %2038 = vmatprep.subr.mxu0 0.0
      %2039 = vmatpush1.msra.mxu0 0.0
      %2040 = vmatprep.subr.mxu0 0.0
      %2041 = vmatpush1.msra.mxu0 0.0
      %2042 = vmatprep.subr.mxu0 0.0
      %2043 = vmatpush1.msra.mxu0 0.0
      %2044 = vmatprep.subr.mxu0 0.0
      %2045 = vmatpush1.msra.mxu0 0.0
      %2046 = vmatprep.subr.mxu0 0.0
      %2047 = vmatpush1.msra.mxu0 0.0
      %2048 = vmatprep.subr.mxu0 0.0
      %2049 = vmatpush1.msra.mxu0 0.0
      %2050 = vmatprep.subr.mxu0 0.0
      %2051 = vmatpush1.msra.mxu0 0.0
      %2052 = vmatprep.subr.mxu0 0.0
      %2053 = vmatpush1.msra.mxu0 0.0
      %2054 = vmatprep.subr.mxu0 0.0
      %2055 = vmatpush1.msra.mxu0 0.0
      %2056 = vmatprep.subr.mxu0 0.0
      %2057 = vmatpush1.msra.mxu0 0.0
      %2058 = vmatprep.subr.mxu0 0.0
      %2059 = vmatpush1.msra.mxu0 0.0
      %2060 = vmatprep.subr.mxu0 0.0
      %2061 = vmatpush1.msra.mxu0 0.0
      %2062 = vmatprep.subr.mxu0 0.0
      %2063 = vmatpush1.msra.mxu0 0.0
      %2064 = vmatprep.subr.mxu0 0.0
      %2065 = vmatpush1.msra.mxu0 0.0
      %2066 = vmatprep.subr.mxu0 0.0
      %2067 = vmatpush1.msra.mxu0 0.0
      %2068 = vmatprep.subr.mxu0 0.0
      %2069 = vmatpush1.msra.mxu0 0.0
      %2070 = vmatprep.subr.mxu0 0.0
      %2071 = vmatpush1.msra.mxu0 0.0
      %2072 = vmatprep.subr.mxu0 0.0
      %2073 = vmatpush1.msra.mxu0 0.0
      %2074 = vmatprep.subr.mxu0 0.0
      %2075 = vmatpush1.msra.mxu0 0.0
      %2076 = vmatprep.subr.mxu0 0.0
      %2077 = vmatpush1.msra.mxu0 0.0
      %2078 = vmatprep.subr.mxu0 0.0
      %2079 = vmatpush1.msra.mxu0 0.0
      %2080 = vmatprep.subr.mxu0 0.0
      %2081 = vmatpush1.msra.mxu0 0.0
      %2082 = vmatprep.subr.mxu0 0.0
      %2083 = vmatpush1.msra.mxu0 0.0
      %2084 = vmatprep.subr.mxu0 0.0
      %2085 = vmatpush1.msra.mxu0 0.0
      %2086 = vmatprep.mubr.f32.mxu0 0.0
      %2087 = vmatmul.mubr.f32.gmra.mrb[0].mxu0 %v2014
      %v2088 = vpop.f32.mrb[0].mxu0
      %v2089 = vadd.f32 0.0, %v2088
      %v2090 = vpop.f32.mrb[0].mxu0
      %2091 = vmatprep.mubr.f32.mxu0 0.0
      %2092 = vmatmul.mubr.f32.gmra.mrb[0].mxu0 %v2017
      %v2093 = vpop.f32.mrb[0].mxu0
      %v2094 = vadd.f32 0.0, %v2093
      %v2095 = vpop.f32.mrb[0].mxu0
      %2096 = vdwg.mxu0
      %v2097 = vld [vmem:[%s16] sm:$0xff]
      %v2098 = vld [vmem:[%s16 + $0x8] sm:$0x3]
      %v2100 = vsel %vm2012, %v2097, 0
      %v2103 = vsel %vm2012, %v2098, 0
      %2105 = vmatprep.subr.mxu0 0.0
      %2106 = vmatpush1.msra.mxu0 %v2007
      %2107 = vmatprep.subr.mxu0 0.0
      %2108 = vmatpush1.msra.mxu0 %v2008
      %2109 = vmatprep.subr.mxu0 0.0
      %2110 = vmatpush1.msra.mxu0 %v2020
      %2111 = vmatprep.subr.mxu0 0.0
      %2112 = vmatpush1.msra.mxu0 0.0
      %2113 = vmatprep.subr.mxu0 0.0
      %2114 = vmatpush1.msra.mxu0 0.0
      %2115 = vmatprep.subr.mxu0 0.0
      %2116 = vmatpush1.msra.mxu0 0.0
      %2117 = vmatprep.subr.mxu0 0.0
      %2118 = vmatpush1.msra.mxu0 0.0
      %2119 = vmatprep.subr.mxu0 0.0
      %2120 = vmatpush1.msra.mxu0 0.0
      %2121 = vmatprep.subr.mxu0 0.0
      %2122 = vmatpush1.msra.mxu0 0.0
      %2123 = vmatprep.subr.mxu0 0.0
      %2124 = vmatpush1.msra.mxu0 0.0
      %2125 = vmatprep.subr.mxu0 0.0
      %2126 = vmatpush1.msra.mxu0 0.0
      %2127 = vmatprep.subr.mxu0 0.0
      %2128 = vmatpush1.msra.mxu0 0.0
      %2129 = vmatprep.subr.mxu0 0.0
      %2130 = vmatpush1.msra.mxu0 0.0
      %2131 = vmatprep.subr.mxu0 0.0
      %2132 = vmatpush1.msra.mxu0 0.0
      %2133 = vmatprep.subr.mxu0 0.0
      %2134 = vmatpush1.msra.mxu0 0.0
      %2135 = vmatprep.subr.mxu0 0.0
      %2136 = vmatpush1.msra.mxu0 0.0
      %2137 = vmatprep.subr.mxu0 0.0
      %2138 = vmatpush1.msra.mxu0 0.0
      %2139 = vmatprep.subr.mxu0 0.0
      %2140 = vmatpush1.msra.mxu0 0.0
      %2141 = vmatprep.subr.mxu0 0.0
      %2142 = vmatpush1.msra.mxu0 0.0
      %2143 = vmatprep.subr.mxu0 0.0
      %2144 = vmatpush1.msra.mxu0 0.0
      %2145 = vmatprep.subr.mxu0 0.0
      %2146 = vmatpush1.msra.mxu0 0.0
      %2147 = vmatprep.subr.mxu0 0.0
      %2148 = vmatpush1.msra.mxu0 0.0
      %2149 = vmatprep.subr.mxu0 0.0
      %2150 = vmatpush1.msra.mxu0 0.0
      %2151 = vmatprep.subr.mxu0 0.0
      %2152 = vmatpush1.msra.mxu0 0.0
      %2153 = vmatprep.subr.mxu0 0.0
      %2154 = vmatpush1.msra.mxu0 0.0
      %2155 = vmatprep.subr.mxu0 0.0
      %2156 = vmatpush1.msra.mxu0 0.0
      %2157 = vmatprep.subr.mxu0 0.0
      %2158 = vmatpush1.msra.mxu0 0.0
      %2159 = vmatprep.subr.mxu0 0.0
      %2160 = vmatpush1.msra.mxu0 0.0
      %2161 = vmatprep.subr.mxu0 0.0
      %2162 = vmatpush1.msra.mxu0 0.0
      %2163 = vmatprep.subr.mxu0 0.0
      %2164 = vmatpush1.msra.mxu0 0.0
      %2165 = vmatprep.subr.mxu0 0.0
      %2166 = vmatpush1.msra.mxu0 0.0
      %2167 = vmatprep.subr.mxu0 0.0
      %2168 = vmatpush1.msra.mxu0 0.0
      %2169 = vmatprep.mubr.f32.mxu0 0.0
      %2170 = vmatmul.mubr.f32.gmra.mrb[0].mxu0 %v2100
      %v2171 = vpop.f32.mrb[0].mxu0
      %v2172 = vadd.f32 0.0, %v2171
      %v2173 = vpop.f32.mrb[0].mxu0
      %2174 = vmatprep.mubr.f32.mxu0 0.0
      %2175 = vmatmul.mubr.f32.gmra.mrb[0].mxu0 %v2103
      %v2176 = vpop.f32.mrb[0].mxu0
      %v2177 = vadd.f32 0.0, %v2176
      %v2178 = vpop.f32.mrb[0].mxu0
      %2179 = vdwg.mxu0
      %v2180 = vmax.f32 %v2089, %v2172
      %v2181 = vmax.f32 %v2094, %v2177
      %2182 = vst [vmem:[#allocation2] sm:$0x1] 0.0
      %2183 = vst [vmem:[#allocation2 + $0xb] sm:$0x1] 0.0
      %2184 = vst.msk [vmem:[#allocation2 + $0x1] sm:$0xff] %vm1191, %v2180
      %2185 = vst.msk [vmem:[#allocation2 + $0x9] sm:$0x3] %vm1196, %v2181
      %v2186 = vld [vmem:[#allocation2] sm:$0xff]
      %v2187 = vld [vmem:[#allocation2 + $0x8] sm:$0x3]
      %v2188 = vld [vmem:[#allocation2 + $0x1] sm:$0xff]
      %v2189 = vld [vmem:[#allocation2 + $0x9] sm:$0x3]
      %v2190 = vld [vmem:[#allocation2 + $0x2] sm:$0xff]
      %v2191 = vld [vmem:[#allocation2 + $0xa] sm:$0x3]
      %2194 = vrot.lane.b32.xlu0 %v2188, 112
      %v2195 = vpop.permute.xlu0 %2194
      %2196 = vrot.lane.b32.xlu0 %v2189, 112
      %v2197 = vpop.permute.xlu0 %2196
      %2202 = vrot.lane.b32.xlu0 %v2190, 96
      %v2203 = vpop.permute.xlu0 %2202
      %2204 = vrot.lane.b32.xlu0 %v2191, 96
      %v2205 = vpop.permute.xlu0 %2204
      %v2208 = vsel %vm1191, %v2186, %v2195
      %v2209 = vsel %vm1191, %v2187, %v2197
      %v2210 = vsel %vm1258, %v2195, %v2203
      %v2211 = vsel %vm1258, %v2197, %v2205
      %v2212 = vld [vmem:[%s7] sm:$0xff]
      %v2213 = vld [vmem:[%s7 + $0x8] sm:$0xff]
      %v2214 = vld [vmem:[%s7 + $0x10] sm:$0xff]
      %v2215 = vld [vmem:[%s7 + $0x18] sm:$0xff]
      %v2216 = vld [vmem:[%s7 + $0x20] sm:$0xff]
      %v2217 = vld [vmem:[%s7 + $0x28] sm:$0xff]
      %v2218 = vld [vmem:[%s7 + $0x30] sm:$0xff]
      %v2219 = vld [vmem:[%s7 + $0x38] sm:$0xff]
      %v2220 = vld [vmem:[%s7 + $0x40] sm:$0xff]
      %v2221 = vld [vmem:[%s7 + $0x48] sm:$0xff]
      %v2222 = vld [vmem:[%s7 + $0x50] sm:$0xff]
      %v2223 = vld [vmem:[%s7 + $0x58] sm:$0xff]
      %v2224 = vld [vmem:[%s7 + $0x60] sm:$0xff]
      %v2225 = vld [vmem:[%s7 + $0x68] sm:$0xff]
      %v2226 = vld [vmem:[%s7 + $0x70] sm:$0xff]
      %v2227 = vld [vmem:[%s7 + $0x78] sm:$0xff]
      %v2228 = vld [vmem:[%s7 + $0x80] sm:$0xff]
      %v2229 = vld [vmem:[%s7 + $0x88] sm:$0xff]
      %v2230 = vld [vmem:[%s7 + $0x90] sm:$0xff]
      %v2231 = vld [vmem:[%s7 + $0x98] sm:$0xff]
      %v2232 = vld [vmem:[%s7 + $0xa0] sm:$0xff]
      %v2233 = vld [vmem:[%s7 + $0xa8] sm:$0xff]
      %v2234 = vld [vmem:[%s7 + $0xb0] sm:$0xff]
      %v2235 = vld [vmem:[%s7 + $0xb8] sm:$0xff]
      %v2236 = vld [vmem:[%s7 + $0xc0] sm:$0xff]
      %v2237 = vld [vmem:[%s7 + $0xc8] sm:$0xff]
      %v2238 = vld [vmem:[%s7 + $0xd0] sm:$0xff]
      %v2239 = vld [vmem:[%s7 + $0xd8] sm:$0xff]
      %v2240 = vld [vmem:[%s7 + $0xe0] sm:$0xff]
      %v2241 = vld [vmem:[%s7 + $0xe8] sm:$0xff]
      %v2242 = vld [vmem:[%s7 + $0xf0] sm:$0xff]
      %v2243 = vld [vmem:[%s7 + $0xf8] sm:$0xff]
      %v2244 = vld [vmem:[%s7 + $0x100] sm:$0xff]
      %v2245 = vld [vmem:[%s7 + $0x108] sm:$0xff]
      %v2246 = vld [vmem:[%s7 + $0x110] sm:$0xff]
      %v2247 = vld [vmem:[%s7 + $0x118] sm:$0xff]
      %v2248 = vld [vmem:[%s7 + $0x120] sm:$0xff]
      %v2249 = vld [vmem:[%s7 + $0x128] sm:$0xff]
      %v2250 = vld [vmem:[%s7 + $0x130] sm:$0xff]
      %v2251 = vld [vmem:[%s7 + $0x138] sm:$0xff]
      %v2252 = vld [vmem:[%s7 + $0x140] sm:$0xff]
      %v2253 = vld [vmem:[%s7 + $0x148] sm:$0xff]
      %v2254 = vld [vmem:[%s8] sm:$0x1]
      %v2256 = vlaneseq
      %v2257 = vshrl.u32 %v2256, 7
      %v2258 = vsub.s32 0, %v2257
      %v2259 = vrot.slane %v2254, %v2258
      %v2261 = vsel %vm1313, %v2203, 0
      %v2263 = vsel %vm1313, %v2205, 0
      %2265 = vmatprep.subr.mxu0 0.0
      %2266 = vmatpush1.msra.mxu0 %v2212
      %2267 = vmatprep.subr.mxu0 0.0
      %2268 = vmatpush1.msra.mxu0 %v2213
      %2269 = vmatprep.subr.mxu0 0.0
      %2270 = vmatpush1.msra.mxu0 %v2214
      %2271 = vmatprep.subr.mxu0 0.0
      %2272 = vmatpush1.msra.mxu0 %v2215
      %2273 = vmatprep.subr.mxu0 0.0
      %2274 = vmatpush1.msra.mxu0 %v2216
      %2275 = vmatprep.subr.mxu0 0.0
      %2276 = vmatpush1.msra.mxu0 %v2217
      %2277 = vmatprep.subr.mxu0 0.0
      %2278 = vmatpush1.msra.mxu0 %v2218
      %2279 = vmatprep.subr.mxu0 0.0
      %2280 = vmatpush1.msra.mxu0 %v2219
      %2281 = vmatprep.subr.mxu0 0.0
      %2282 = vmatpush1.msra.mxu0 %v2220
      %2283 = vmatprep.subr.mxu0 0.0
      %2284 = vmatpush1.msra.mxu0 %v2221
      %2285 = vmatprep.subr.mxu0 0.0
      %2286 = vmatpush1.msra.mxu0 %v2222
      %2287 = vmatprep.subr.mxu0 0.0
      %2288 = vmatpush1.msra.mxu0 %v2223
      %2289 = vmatprep.subr.mxu0 0.0
      %2290 = vmatpush1.msra.mxu0 %v2224
      %2291 = vmatprep.subr.mxu0 0.0
      %2292 = vmatpush1.msra.mxu0 %v2225
      %2293 = vmatprep.subr.mxu0 0.0
      %2294 = vmatpush1.msra.mxu0 %v2226
      %2295 = vmatprep.subr.mxu0 0.0
      %2296 = vmatpush1.msra.mxu0 %v2227
      %2297 = vmatprep.subr.mxu0 0.0
      %2298 = vmatpush1.msra.mxu0 %v2228
      %2299 = vmatprep.subr.mxu0 0.0
      %2300 = vmatpush1.msra.mxu0 %v2229
      %2301 = vmatprep.subr.mxu0 0.0
      %2302 = vmatpush1.msra.mxu0 %v2230
      %2303 = vmatprep.subr.mxu0 0.0
      %2304 = vmatpush1.msra.mxu0 %v2231
      %2305 = vmatprep.subr.mxu0 0.0
      %2306 = vmatpush1.msra.mxu0 %v2232
      %2307 = vmatprep.subr.mxu0 0.0
      %2308 = vmatpush1.msra.mxu0 %v2233
      %2309 = vmatprep.subr.mxu0 0.0
      %2310 = vmatpush1.msra.mxu0 %v2234
      %2311 = vmatprep.subr.mxu0 0.0
      %2312 = vmatpush1.msra.mxu0 %v2235
      %2313 = vmatprep.subr.mxu0 0.0
      %2314 = vmatpush1.msra.mxu0 %v2236
      %2315 = vmatprep.subr.mxu0 0.0
      %2316 = vmatpush1.msra.mxu0 %v2237
      %2317 = vmatprep.subr.mxu0 0.0
      %2318 = vmatpush1.msra.mxu0 %v2238
      %2319 = vmatprep.subr.mxu0 0.0
      %2320 = vmatpush1.msra.mxu0 %v2239
      %2321 = vmatprep.subr.mxu0 0.0
      %2322 = vmatpush1.msra.mxu0 %v2240
      %2323 = vmatprep.subr.mxu0 0.0
      %2324 = vmatpush1.msra.mxu0 %v2241
      %2325 = vmatprep.subr.mxu0 0.0
      %2326 = vmatpush1.msra.mxu0 %v2242
      %2327 = vmatprep.subr.mxu0 0.0
      %2328 = vmatpush1.msra.mxu0 %v2243
      %2329 = vmatprep.mubr.f32.mxu0 %v2210
      %2330 = vmatmul.mubr.f32.gmra.mrb[0].mxu0 %v2208
      %v2331 = vpop.f32.mrb[0].mxu0
      %v2332 = vadd.f32 %v2259, %v2331
      %v2333 = vpop.f32.mrb[0].mxu0
      %2334 = vmatprep.mubr.f32.mxu0 %v2211
      %2335 = vmatmul.mubr.f32.gmra.mrb[0].mxu0 %v2209
      %v2336 = vpop.f32.mrb[0].mxu0
      %v2337 = vadd.f32 %v2259, %v2336
      %v2338 = vpop.f32.mrb[0].mxu0
      %2339 = vdwg.mxu0
      %2340 = vmatprep.subr.mxu0 0.0
      %2341 = vmatpush1.msra.mxu0 %v2244
      %2342 = vmatprep.subr.mxu0 0.0
      %2343 = vmatpush1.msra.mxu0 %v2245
      %2344 = vmatprep.subr.mxu0 0.0
      %2345 = vmatpush1.msra.mxu0 %v2246
      %2346 = vmatprep.subr.mxu0 0.0
      %2347 = vmatpush1.msra.mxu0 %v2247
      %2348 = vmatprep.subr.mxu0 0.0
      %2349 = vmatpush1.msra.mxu0 %v2248
      %2350 = vmatprep.subr.mxu0 0.0
      %2351 = vmatpush1.msra.mxu0 %v2249
      %2352 = vmatprep.subr.mxu0 0.0
      %2353 = vmatpush1.msra.mxu0 %v2250
      %2354 = vmatprep.subr.mxu0 0.0
      %2355 = vmatpush1.msra.mxu0 %v2251
      %2356 = vmatprep.subr.mxu0 0.0
      %2357 = vmatpush1.msra.mxu0 %v2252
      %2358 = vmatprep.subr.mxu0 0.0
      %2359 = vmatpush1.msra.mxu0 %v2253
      %2360 = vmatprep.subr.mxu0 0.0
      %2361 = vmatpush1.msra.mxu0 0.0
      %2362 = vmatprep.subr.mxu0 0.0
      %2363 = vmatpush1.msra.mxu0 0.0
      %2364 = vmatprep.subr.mxu0 0.0
      %2365 = vmatpush1.msra.mxu0 0.0
      %2366 = vmatprep.subr.mxu0 0.0
      %2367 = vmatpush1.msra.mxu0 0.0
      %2368 = vmatprep.subr.mxu0 0.0
      %2369 = vmatpush1.msra.mxu0 0.0
      %2370 = vmatprep.subr.mxu0 0.0
      %2371 = vmatpush1.msra.mxu0 0.0
      %2372 = vmatprep.subr.mxu0 0.0
      %2373 = vmatpush1.msra.mxu0 0.0
      %2374 = vmatprep.subr.mxu0 0.0
      %2375 = vmatpush1.msra.mxu0 0.0
      %2376 = vmatprep.subr.mxu0 0.0
      %2377 = vmatpush1.msra.mxu0 0.0
      %2378 = vmatprep.subr.mxu0 0.0
      %2379 = vmatpush1.msra.mxu0 0.0
      %2380 = vmatprep.subr.mxu0 0.0
      %2381 = vmatpush1.msra.mxu0 0.0
      %2382 = vmatprep.subr.mxu0 0.0
      %2383 = vmatpush1.msra.mxu0 0.0
      %2384 = vmatprep.subr.mxu0 0.0
      %2385 = vmatpush1.msra.mxu0 0.0
      %2386 = vmatprep.subr.mxu0 0.0
      %2387 = vmatpush1.msra.mxu0 0.0
      %2388 = vmatprep.subr.mxu0 0.0
      %2389 = vmatpush1.msra.mxu0 0.0
      %2390 = vmatprep.subr.mxu0 0.0
      %2391 = vmatpush1.msra.mxu0 0.0
      %2392 = vmatprep.subr.mxu0 0.0
      %2393 = vmatpush1.msra.mxu0 0.0
      %2394 = vmatprep.subr.mxu0 0.0
      %2395 = vmatpush1.msra.mxu0 0.0
      %2396 = vmatprep.subr.mxu0 0.0
      %2397 = vmatpush1.msra.mxu0 0.0
      %2398 = vmatprep.subr.mxu0 0.0
      %2399 = vmatpush1.msra.mxu0 0.0
      %2400 = vmatprep.subr.mxu0 0.0
      %2401 = vmatpush1.msra.mxu0 0.0
      %2402 = vmatprep.subr.mxu0 0.0
      %2403 = vmatpush1.msra.mxu0 0.0
      %2404 = vmatprep.mubr.f32.mxu0 0.0
      %2405 = vmatmul.mubr.f32.gmra.mrb[0].mxu0 %v2261
      %v2406 = vpop.f32.mrb[0].mxu0
      %v2407 = vadd.f32 %v2332, %v2406
      %v2408 = vpop.f32.mrb[0].mxu0
      %2409 = vmatprep.mubr.f32.mxu0 0.0
      %2410 = vmatmul.mubr.f32.gmra.mrb[0].mxu0 %v2263
      %v2411 = vpop.f32.mrb[0].mxu0
      %v2412 = vadd.f32 %v2337, %v2411
      %v2413 = vpop.f32.mrb[0].mxu0
      %2414 = vdwg.mxu0
      %v2415 = vmax.f32 %v2407, 0.0
      %v2416 = vmax.f32 %v2412, 0.0
      %2419 = vrot.lane.b32.xlu0 %v2415, 1
      %v2420 = vpop.permute.xlu0 %2419
      %2421 = vrot.lane.b32.xlu0 %v2416, 1
      %v2422 = vpop.permute.xlu0 %2421
      %v2425 = vsel %vm594, 0.0, %v2420
      %v2426 = vsel %vm594, 0.0, %v2422
      %v2427 = vmax.f32 %v2415, %v2425
      %v2428 = vmax.f32 %v2416, %v2426
      %2429 = vst.msk [vmem:[#allocation2 + $0x1] sm:$0xff] %vm1191, %v2427
      %2430 = vst.msk [vmem:[#allocation2 + $0x9] sm:$0x3] %vm1196, %v2428
      %v2431 = vld [vmem:[#allocation2] sm:$0xff]
      %v2432 = vld [vmem:[#allocation2 + $0x8] sm:$0x7]
      %v2433 = vld [vmem:[#allocation2 + $0x1] sm:$0xff]
      %v2434 = vld [vmem:[#allocation2 + $0x9] sm:$0x7]
      %v2435 = vmax.f32 %v2431, %v2433
      %v2436 = vmax.f32 %v2432, %v2434
      %2437 = vst [vmem:[#allocation2] sm:$0x1] 0.0
      %2438 = vst [vmem:[#allocation2 + $0xc] sm:$0x1] 0.0
      %2439 = vst.msk [vmem:[#allocation2 + $0x1] sm:$0xff] %vm1191, %v2435
      %vm2440 = vcmask 911360
      %2441 = vst.msk [vmem:[#allocation2 + $0x9] sm:$0x7] %vm2440, %v2436
      %v2442 = vld [vmem:[#allocation2] sm:$0xff]
      %v2443 = vld [vmem:[#allocation2 + $0x8] sm:$0x7]
      %v2444 = vld [vmem:[#allocation2 + $0x1] sm:$0xff]
      %v2445 = vld [vmem:[#allocation2 + $0x9] sm:$0x7]
      %v2446 = vld [vmem:[#allocation2 + $0x2] sm:$0xff]
      %v2447 = vld [vmem:[#allocation2 + $0xa] sm:$0x7]
      %2450 = vrot.lane.b32.xlu0 %v2444, 112
      %v2451 = vpop.permute.xlu0 %2450
      %2452 = vrot.lane.b32.xlu0 %v2445, 112
      %v2453 = vpop.permute.xlu0 %2452
      %2458 = vrot.lane.b32.xlu0 %v2446, 96
      %v2459 = vpop.permute.xlu0 %2458
      %2460 = vrot.lane.b32.xlu0 %v2447, 96
      %v2461 = vpop.permute.xlu0 %2460
      %v2464 = vsel %vm1191, %v2442, %v2451
      %v2465 = vsel %vm1191, %v2443, %v2453
      %v2466 = vsel %vm1258, %v2451, %v2459
      %v2467 = vsel %vm1258, %v2453, %v2461
      %v2468 = vld [vmem:[%s9] sm:$0xff]
      %v2469 = vld [vmem:[%s9 + $0x8] sm:$0xff]
      %v2470 = vld [vmem:[%s9 + $0x10] sm:$0xff]
      %v2471 = vld [vmem:[%s9 + $0x18] sm:$0xff]
      %v2472 = vld [vmem:[%s9 + $0x20] sm:$0xff]
      %v2473 = vld [vmem:[%s9 + $0x28] sm:$0xff]
      %v2474 = vld [vmem:[%s9 + $0x30] sm:$0xff]
      %v2475 = vld [vmem:[%s9 + $0x38] sm:$0xff]
      %v2476 = vld [vmem:[%s9 + $0x40] sm:$0xff]
      %v2477 = vld [vmem:[%s9 + $0x48] sm:$0xff]
      %v2478 = vld [vmem:[%s9 + $0x50] sm:$0xff]
      %v2479 = vld [vmem:[%s9 + $0x58] sm:$0xff]
      %v2480 = vld [vmem:[%s9 + $0x60] sm:$0xff]
      %v2481 = vld [vmem:[%s9 + $0x68] sm:$0xff]
      %v2482 = vld [vmem:[%s9 + $0x70] sm:$0xff]
      %v2483 = vld [vmem:[%s9 + $0x78] sm:$0xff]
      %v2484 = vld [vmem:[%s9 + $0x80] sm:$0xff]
      %v2485 = vld [vmem:[%s9 + $0x88] sm:$0xff]
      %v2486 = vld [vmem:[%s9 + $0x90] sm:$0xff]
      %v2487 = vld [vmem:[%s9 + $0x98] sm:$0xff]
      %v2488 = vld [vmem:[%s9 + $0xa0] sm:$0xff]
      %v2489 = vld [vmem:[%s9 + $0xa8] sm:$0xff]
      %v2490 = vld [vmem:[%s9 + $0xb0] sm:$0xff]
      %v2491 = vld [vmem:[%s9 + $0xb8] sm:$0xff]
      %v2492 = vld [vmem:[%s9 + $0xc0] sm:$0xff]
      %v2493 = vld [vmem:[%s9 + $0xc8] sm:$0xff]
      %v2494 = vld [vmem:[%s9 + $0xd0] sm:$0xff]
      %v2495 = vld [vmem:[%s9 + $0xd8] sm:$0xff]
      %v2496 = vld [vmem:[%s9 + $0xe0] sm:$0xff]
      %v2497 = vld [vmem:[%s9 + $0xe8] sm:$0xff]
      %v2498 = vld [vmem:[%s9 + $0xf0] sm:$0xff]
      %v2499 = vld [vmem:[%s9 + $0xf8] sm:$0xff]
      %v2500 = vld [vmem:[%s9 + $0x100] sm:$0xff]
      %v2501 = vld [vmem:[%s9 + $0x108] sm:$0xff]
      %v2502 = vld [vmem:[%s9 + $0x110] sm:$0xff]
      %v2503 = vld [vmem:[%s9 + $0x118] sm:$0xff]
      %v2504 = vld [vmem:[%s9 + $0x120] sm:$0xff]
      %v2505 = vld [vmem:[%s9 + $0x128] sm:$0xff]
      %v2506 = vld [vmem:[%s9 + $0x130] sm:$0xff]
      %v2507 = vld [vmem:[%s9 + $0x138] sm:$0xff]
      %v2508 = vld [vmem:[%s9 + $0x140] sm:$0xff]
      %v2509 = vld [vmem:[%s9 + $0x148] sm:$0xff]
      %v2510 = vld [vmem:[%s10] sm:$0x1]
      %v2512 = vlaneseq
      %v2513 = vshrl.u32 %v2512, 7
      %v2514 = vsub.s32 0, %v2513
      %v2515 = vrot.slane %v2510, %v2514
      %v2517 = vsel %vm1313, %v2459, 0
      %v2519 = vsel %vm1313, %v2461, 0
      %2521 = vmatprep.subr.mxu0 0.0
      %2522 = vmatpush1.msra.mxu0 %v2468
      %2523 = vmatprep.subr.mxu0 0.0
      %2524 = vmatpush1.msra.mxu0 %v2469
      %2525 = vmatprep.subr.mxu0 0.0
      %2526 = vmatpush1.msra.mxu0 %v2470
      %2527 = vmatprep.subr.mxu0 0.0
      %2528 = vmatpush1.msra.mxu0 %v2471
      %2529 = vmatprep.subr.mxu0 0.0
      %2530 = vmatpush1.msra.mxu0 %v2472
      %2531 = vmatprep.subr.mxu0 0.0
      %2532 = vmatpush1.msra.mxu0 %v2473
      %2533 = vmatprep.subr.mxu0 0.0
      %2534 = vmatpush1.msra.mxu0 %v2474
      %2535 = vmatprep.subr.mxu0 0.0
      %2536 = vmatpush1.msra.mxu0 %v2475
      %2537 = vmatprep.subr.mxu0 0.0
      %2538 = vmatpush1.msra.mxu0 %v2476
      %2539 = vmatprep.subr.mxu0 0.0
      %2540 = vmatpush1.msra.mxu0 %v2477
      %2541 = vmatprep.subr.mxu0 0.0
      %2542 = vmatpush1.msra.mxu0 %v2478
      %2543 = vmatprep.subr.mxu0 0.0
      %2544 = vmatpush1.msra.mxu0 %v2479
      %2545 = vmatprep.subr.mxu0 0.0
      %2546 = vmatpush1.msra.mxu0 %v2480
      %2547 = vmatprep.subr.mxu0 0.0
      %2548 = vmatpush1.msra.mxu0 %v2481
      %2549 = vmatprep.subr.mxu0 0.0
      %2550 = vmatpush1.msra.mxu0 %v2482
      %2551 = vmatprep.subr.mxu0 0.0
      %2552 = vmatpush1.msra.mxu0 %v2483
      %2553 = vmatprep.subr.mxu0 0.0
      %2554 = vmatpush1.msra.mxu0 %v2484
      %2555 = vmatprep.subr.mxu0 0.0
      %2556 = vmatpush1.msra.mxu0 %v2485
      %2557 = vmatprep.subr.mxu0 0.0
      %2558 = vmatpush1.msra.mxu0 %v2486
      %2559 = vmatprep.subr.mxu0 0.0
      %2560 = vmatpush1.msra.mxu0 %v2487
      %2561 = vmatprep.subr.mxu0 0.0
      %2562 = vmatpush1.msra.mxu0 %v2488
      %2563 = vmatprep.subr.mxu0 0.0
      %2564 = vmatpush1.msra.mxu0 %v2489
      %2565 = vmatprep.subr.mxu0 0.0
      %2566 = vmatpush1.msra.mxu0 %v2490
      %2567 = vmatprep.subr.mxu0 0.0
      %2568 = vmatpush1.msra.mxu0 %v2491
      %2569 = vmatprep.subr.mxu0 0.0
      %2570 = vmatpush1.msra.mxu0 %v2492
      %2571 = vmatprep.subr.mxu0 0.0
      %2572 = vmatpush1.msra.mxu0 %v2493
      %2573 = vmatprep.subr.mxu0 0.0
      %2574 = vmatpush1.msra.mxu0 %v2494
      %2575 = vmatprep.subr.mxu0 0.0
      %2576 = vmatpush1.msra.mxu0 %v2495
      %2577 = vmatprep.subr.mxu0 0.0
      %2578 = vmatpush1.msra.mxu0 %v2496
      %2579 = vmatprep.subr.mxu0 0.0
      %2580 = vmatpush1.msra.mxu0 %v2497
      %2581 = vmatprep.subr.mxu0 0.0
      %2582 = vmatpush1.msra.mxu0 %v2498
      %2583 = vmatprep.subr.mxu0 0.0
      %2584 = vmatpush1.msra.mxu0 %v2499
      %2585 = vmatprep.mubr.f32.mxu0 %v2466
      %2586 = vmatmul.mubr.f32.gmra.mrb[0].mxu0 %v2464
      %v2587 = vpop.f32.mrb[0].mxu0
      %v2588 = vadd.f32 %v2515, %v2587
      %v2589 = vpop.f32.mrb[0].mxu0
      %2590 = vmatprep.mubr.f32.mxu0 %v2467
      %2591 = vmatmul.mubr.f32.gmra.mrb[0].mxu0 %v2465
      %v2592 = vpop.f32.mrb[0].mxu0
      %v2593 = vadd.f32 %v2515, %v2592
      %v2594 = vpop.f32.mrb[0].mxu0
      %2595 = vdwg.mxu0
      %2596 = vmatprep.subr.mxu0 0.0
      %2597 = vmatpush1.msra.mxu0 %v2500
      %2598 = vmatprep.subr.mxu0 0.0
      %2599 = vmatpush1.msra.mxu0 %v2501
      %2600 = vmatprep.subr.mxu0 0.0
      %2601 = vmatpush1.msra.mxu0 %v2502
      %2602 = vmatprep.subr.mxu0 0.0
      %2603 = vmatpush1.msra.mxu0 %v2503
      %2604 = vmatprep.subr.mxu0 0.0
      %2605 = vmatpush1.msra.mxu0 %v2504
      %2606 = vmatprep.subr.mxu0 0.0
      %2607 = vmatpush1.msra.mxu0 %v2505
      %2608 = vmatprep.subr.mxu0 0.0
      %2609 = vmatpush1.msra.mxu0 %v2506
      %2610 = vmatprep.subr.mxu0 0.0
      %2611 = vmatpush1.msra.mxu0 %v2507
      %2612 = vmatprep.subr.mxu0 0.0
      %2613 = vmatpush1.msra.mxu0 %v2508
      %2614 = vmatprep.subr.mxu0 0.0
      %2615 = vmatpush1.msra.mxu0 %v2509
      %2616 = vmatprep.subr.mxu0 0.0
      %2617 = vmatpush1.msra.mxu0 0.0
      %2618 = vmatprep.subr.mxu0 0.0
      %2619 = vmatpush1.msra.mxu0 0.0
      %2620 = vmatprep.subr.mxu0 0.0
      %2621 = vmatpush1.msra.mxu0 0.0
      %2622 = vmatprep.subr.mxu0 0.0
      %2623 = vmatpush1.msra.mxu0 0.0
      %2624 = vmatprep.subr.mxu0 0.0
      %2625 = vmatpush1.msra.mxu0 0.0
      %2626 = vmatprep.subr.mxu0 0.0
      %2627 = vmatpush1.msra.mxu0 0.0
      %2628 = vmatprep.subr.mxu0 0.0
      %2629 = vmatpush1.msra.mxu0 0.0
      %2630 = vmatprep.subr.mxu0 0.0
      %2631 = vmatpush1.msra.mxu0 0.0
      %2632 = vmatprep.subr.mxu0 0.0
      %2633 = vmatpush1.msra.mxu0 0.0
      %2634 = vmatprep.subr.mxu0 0.0
      %2635 = vmatpush1.msra.mxu0 0.0
      %2636 = vmatprep.subr.mxu0 0.0
      %2637 = vmatpush1.msra.mxu0 0.0
      %2638 = vmatprep.subr.mxu0 0.0
      %2639 = vmatpush1.msra.mxu0 0.0
      %2640 = vmatprep.subr.mxu0 0.0
      %2641 = vmatpush1.msra.mxu0 0.0
      %2642 = vmatprep.subr.mxu0 0.0
      %2643 = vmatpush1.msra.mxu0 0.0
      %2644 = vmatprep.subr.mxu0 0.0
      %2645 = vmatpush1.msra.mxu0 0.0
      %2646 = vmatprep.subr.mxu0 0.0
      %2647 = vmatpush1.msra.mxu0 0.0
      %2648 = vmatprep.subr.mxu0 0.0
      %2649 = vmatpush1.msra.mxu0 0.0
      %2650 = vmatprep.subr.mxu0 0.0
      %2651 = vmatpush1.msra.mxu0 0.0
      %2652 = vmatprep.subr.mxu0 0.0
      %2653 = vmatpush1.msra.mxu0 0.0
      %2654 = vmatprep.subr.mxu0 0.0
      %2655 = vmatpush1.msra.mxu0 0.0
      %2656 = vmatprep.subr.mxu0 0.0
      %2657 = vmatpush1.msra.mxu0 0.0
      %2658 = vmatprep.subr.mxu0 0.0
      %2659 = vmatpush1.msra.mxu0 0.0
      %2660 = vmatprep.mubr.f32.mxu0 0.0
      %2661 = vmatmul.mubr.f32.gmra.mrb[0].mxu0 %v2517
      %v2662 = vpop.f32.mrb[0].mxu0
      %v2663 = vadd.f32 %v2588, %v2662
      %v2664 = vpop.f32.mrb[0].mxu0
      %2665 = vmatprep.mubr.f32.mxu0 0.0
      %2666 = vmatmul.mubr.f32.gmra.mrb[0].mxu0 %v2519
      %v2667 = vpop.f32.mrb[0].mxu0
      %v2668 = vadd.f32 %v2593, %v2667
      %v2669 = vpop.f32.mrb[0].mxu0
      %2670 = vdwg.mxu0
      %v2671 = vmax.f32 %v2663, 0.0
      %v2672 = vmax.f32 %v2668, 0.0
      %2675 = vrot.lane.b32.xlu0 %v2671, 1
      %v2676 = vpop.permute.xlu0 %2675
      %2677 = vrot.lane.b32.xlu0 %v2672, 1
      %v2678 = vpop.permute.xlu0 %2677
      %v2681 = vsel %vm594, 0.0, %v2676
      %v2682 = vsel %vm594, 0.0, %v2678
      %v2683 = vmax.f32 %v2671, %v2681
      %v2684 = vmax.f32 %v2672, %v2682
      %2685 = vst.msk [vmem:[#allocation2 + $0x1] sm:$0xff] %vm1191, %v2683
      %2686 = vst.msk [vmem:[#allocation2 + $0x9] sm:$0x7] %vm2440, %v2684
      %v2687 = vld [vmem:[#allocation2] sm:$0xff]
      %v2688 = vld [vmem:[#allocation2 + $0x8] sm:$0xf]
      %v2689 = vld [vmem:[#allocation2 + $0x1] sm:$0xff]
      %v2690 = vld [vmem:[#allocation2 + $0x9] sm:$0xf]
      %v2691 = vmax.f32 %v2687, %v2689
      %v2692 = vmax.f32 %v2688, %v2690
      %2693 = vst [vmem:[#allocation2] sm:$0x1] 0.0
      %2694 = vst [vmem:[#allocation2 + $0xd] sm:$0x1] 0.0
      %2695 = vst.msk [vmem:[#allocation2 + $0x1] sm:$0xff] %vm1191, %v2691
      %vm2696 = vcmask 912384
      %2697 = vst.msk [vmem:[#allocation2 + $0x9] sm:$0xf] %vm2696, %v2692
      %v2698 = vld [vmem:[#allocation2] sm:$0xff]
      %v2699 = vld [vmem:[#allocation2 + $0x8] sm:$0xf]
      %v2700 = vld [vmem:[#allocation2 + $0x1] sm:$0xff]
      %v2701 = vld [vmem:[#allocation2 + $0x9] sm:$0xf]
      %v2702 = vld [vmem:[#allocation2 + $0x2] sm:$0xff]
      %v2703 = vld [vmem:[#allocation2 + $0xa] sm:$0xf]
      %2706 = vrot.lane.b32.xlu0 %v2700, 112
      %v2707 = vpop.permute.xlu0 %2706
      %2708 = vrot.lane.b32.xlu0 %v2701, 112
      %v2709 = vpop.permute.xlu0 %2708
      %2714 = vrot.lane.b32.xlu0 %v2702, 96
      %v2715 = vpop.permute.xlu0 %2714
      %2716 = vrot.lane.b32.xlu0 %v2703, 96
      %v2717 = vpop.permute.xlu0 %2716
      %v2720 = vsel %vm1191, %v2698, %v2707
      %v2721 = vsel %vm1191, %v2699, %v2709
      %v2722 = vsel %vm1258, %v2707, %v2715
      %v2723 = vsel %vm1258, %v2709, %v2717
      %v2724 = vld [vmem:[%s11] sm:$0xff]
      %v2725 = vld [vmem:[%s11 + $0x8] sm:$0xff]
      %v2726 = vld [vmem:[%s11 + $0x10] sm:$0xff]
      %v2727 = vld [vmem:[%s11 + $0x18] sm:$0xff]
      %v2728 = vld [vmem:[%s11 + $0x20] sm:$0xff]
      %v2729 = vld [vmem:[%s11 + $0x28] sm:$0xff]
      %v2730 = vld [vmem:[%s11 + $0x30] sm:$0xff]
      %v2731 = vld [vmem:[%s11 + $0x38] sm:$0xff]
      %v2732 = vld [vmem:[%s11 + $0x40] sm:$0xff]
      %v2733 = vld [vmem:[%s11 + $0x48] sm:$0xff]
      %v2734 = vld [vmem:[%s11 + $0x50] sm:$0xff]
      %v2735 = vld [vmem:[%s11 + $0x58] sm:$0xff]
      %v2736 = vld [vmem:[%s11 + $0x60] sm:$0xff]
      %v2737 = vld [vmem:[%s11 + $0x68] sm:$0xff]
      %v2738 = vld [vmem:[%s11 + $0x70] sm:$0xff]
      %v2739 = vld [vmem:[%s11 + $0x78] sm:$0xff]
      %v2740 = vld [vmem:[%s11 + $0x80] sm:$0xff]
      %v2741 = vld [vmem:[%s11 + $0x88] sm:$0xff]
      %v2742 = vld [vmem:[%s11 + $0x90] sm:$0xff]
      %v2743 = vld [vmem:[%s11 + $0x98] sm:$0xff]
      %v2744 = vld [vmem:[%s11 + $0xa0] sm:$0xff]
      %v2745 = vld [vmem:[%s11 + $0xa8] sm:$0xff]
      %v2746 = vld [vmem:[%s11 + $0xb0] sm:$0xff]
      %v2747 = vld [vmem:[%s11 + $0xb8] sm:$0xff]
      %v2748 = vld [vmem:[%s11 + $0xc0] sm:$0xff]
      %v2749 = vld [vmem:[%s11 + $0xc8] sm:$0xff]
      %v2750 = vld [vmem:[%s11 + $0xd0] sm:$0xff]
      %v2751 = vld [vmem:[%s11 + $0xd8] sm:$0xff]
      %v2752 = vld [vmem:[%s11 + $0xe0] sm:$0xff]
      %v2753 = vld [vmem:[%s11 + $0xe8] sm:$0xff]
      %v2754 = vld [vmem:[%s11 + $0xf0] sm:$0xff]
      %v2755 = vld [vmem:[%s11 + $0xf8] sm:$0xff]
      %v2756 = vld [vmem:[%s11 + $0x100] sm:$0xff]
      %v2757 = vld [vmem:[%s11 + $0x108] sm:$0xff]
      %v2758 = vld [vmem:[%s11 + $0x110] sm:$0xff]
      %v2759 = vld [vmem:[%s11 + $0x118] sm:$0xff]
      %v2760 = vld [vmem:[%s11 + $0x120] sm:$0xff]
      %v2761 = vld [vmem:[%s11 + $0x128] sm:$0xff]
      %v2762 = vld [vmem:[%s11 + $0x130] sm:$0xff]
      %v2763 = vld [vmem:[%s11 + $0x138] sm:$0xff]
      %v2764 = vld [vmem:[%s11 + $0x140] sm:$0xff]
      %v2765 = vld [vmem:[%s11 + $0x148] sm:$0xff]
      %v2766 = vld [vmem:[%s12] sm:$0x1]
      %v2768 = vlaneseq
      %v2769 = vshrl.u32 %v2768, 7
      %v2770 = vsub.s32 0, %v2769
      %v2771 = vrot.slane %v2766, %v2770
      %v2773 = vsel %vm1313, %v2715, 0
      %v2775 = vsel %vm1313, %v2717, 0
      %2777 = vmatprep.subr.mxu0 0.0
      %2778 = vmatpush1.msra.mxu0 %v2724
      %2779 = vmatprep.subr.mxu0 0.0
      %2780 = vmatpush1.msra.mxu0 %v2725
      %2781 = vmatprep.subr.mxu0 0.0
      %2782 = vmatpush1.msra.mxu0 %v2726
      %2783 = vmatprep.subr.mxu0 0.0
      %2784 = vmatpush1.msra.mxu0 %v2727
      %2785 = vmatprep.subr.mxu0 0.0
      %2786 = vmatpush1.msra.mxu0 %v2728
      %2787 = vmatprep.subr.mxu0 0.0
      %2788 = vmatpush1.msra.mxu0 %v2729
      %2789 = vmatprep.subr.mxu0 0.0
      %2790 = vmatpush1.msra.mxu0 %v2730
      %2791 = vmatprep.subr.mxu0 0.0
      %2792 = vmatpush1.msra.mxu0 %v2731
      %2793 = vmatprep.subr.mxu0 0.0
      %2794 = vmatpush1.msra.mxu0 %v2732
      %2795 = vmatprep.subr.mxu0 0.0
      %2796 = vmatpush1.msra.mxu0 %v2733
      %2797 = vmatprep.subr.mxu0 0.0
      %2798 = vmatpush1.msra.mxu0 %v2734
      %2799 = vmatprep.subr.mxu0 0.0
      %2800 = vmatpush1.msra.mxu0 %v2735
      %2801 = vmatprep.subr.mxu0 0.0
      %2802 = vmatpush1.msra.mxu0 %v2736
      %2803 = vmatprep.subr.mxu0 0.0
      %2804 = vmatpush1.msra.mxu0 %v2737
      %2805 = vmatprep.subr.mxu0 0.0
      %2806 = vmatpush1.msra.mxu0 %v2738
      %2807 = vmatprep.subr.mxu0 0.0
      %2808 = vmatpush1.msra.mxu0 %v2739
      %2809 = vmatprep.subr.mxu0 0.0
      %2810 = vmatpush1.msra.mxu0 %v2740
      %2811 = vmatprep.subr.mxu0 0.0
      %2812 = vmatpush1.msra.mxu0 %v2741
      %2813 = vmatprep.subr.mxu0 0.0
      %2814 = vmatpush1.msra.mxu0 %v2742
      %2815 = vmatprep.subr.mxu0 0.0
      %2816 = vmatpush1.msra.mxu0 %v2743
      %2817 = vmatprep.subr.mxu0 0.0
      %2818 = vmatpush1.msra.mxu0 %v2744
      %2819 = vmatprep.subr.mxu0 0.0
      %2820 = vmatpush1.msra.mxu0 %v2745
      %2821 = vmatprep.subr.mxu0 0.0
      %2822 = vmatpush1.msra.mxu0 %v2746
      %2823 = vmatprep.subr.mxu0 0.0
      %2824 = vmatpush1.msra.mxu0 %v2747
      %2825 = vmatprep.subr.mxu0 0.0
      %2826 = vmatpush1.msra.mxu0 %v2748
      %2827 = vmatprep.subr.mxu0 0.0
      %2828 = vmatpush1.msra.mxu0 %v2749
      %2829 = vmatprep.subr.mxu0 0.0
      %2830 = vmatpush1.msra.mxu0 %v2750
      %2831 = vmatprep.subr.mxu0 0.0
      %2832 = vmatpush1.msra.mxu0 %v2751
      %2833 = vmatprep.subr.mxu0 0.0
      %2834 = vmatpush1.msra.mxu0 %v2752
      %2835 = vmatprep.subr.mxu0 0.0
      %2836 = vmatpush1.msra.mxu0 %v2753
      %2837 = vmatprep.subr.mxu0 0.0
      %2838 = vmatpush1.msra.mxu0 %v2754
      %2839 = vmatprep.subr.mxu0 0.0
      %2840 = vmatpush1.msra.mxu0 %v2755
      %2841 = vmatprep.mubr.f32.mxu0 %v2722
      %2842 = vmatmul.mubr.f32.gmra.mrb[0].mxu0 %v2720
      %v2843 = vpop.f32.mrb[0].mxu0
      %v2844 = vadd.f32 %v2771, %v2843
      %v2845 = vpop.f32.mrb[0].mxu0
      %2846 = vmatprep.mubr.f32.mxu0 %v2723
      %2847 = vmatmul.mubr.f32.gmra.mrb[0].mxu0 %v2721
      %v2848 = vpop.f32.mrb[0].mxu0
      %v2849 = vadd.f32 %v2771, %v2848
      %v2850 = vpop.f32.mrb[0].mxu0
      %2851 = vdwg.mxu0
      %2852 = vmatprep.subr.mxu0 0.0
      %2853 = vmatpush1.msra.mxu0 %v2756
      %2854 = vmatprep.subr.mxu0 0.0
      %2855 = vmatpush1.msra.mxu0 %v2757
      %2856 = vmatprep.subr.mxu0 0.0
      %2857 = vmatpush1.msra.mxu0 %v2758
      %2858 = vmatprep.subr.mxu0 0.0
      %2859 = vmatpush1.msra.mxu0 %v2759
      %2860 = vmatprep.subr.mxu0 0.0
      %2861 = vmatpush1.msra.mxu0 %v2760
      %2862 = vmatprep.subr.mxu0 0.0
      %2863 = vmatpush1.msra.mxu0 %v2761
      %2864 = vmatprep.subr.mxu0 0.0
      %2865 = vmatpush1.msra.mxu0 %v2762
      %2866 = vmatprep.subr.mxu0 0.0
      %2867 = vmatpush1.msra.mxu0 %v2763
      %2868 = vmatprep.subr.mxu0 0.0
      %2869 = vmatpush1.msra.mxu0 %v2764
      %2870 = vmatprep.subr.mxu0 0.0
      %2871 = vmatpush1.msra.mxu0 %v2765
      %2872 = vmatprep.subr.mxu0 0.0
      %2873 = vmatpush1.msra.mxu0 0.0
      %2874 = vmatprep.subr.mxu0 0.0
      %2875 = vmatpush1.msra.mxu0 0.0
      %2876 = vmatprep.subr.mxu0 0.0
      %2877 = vmatpush1.msra.mxu0 0.0
      %2878 = vmatprep.subr.mxu0 0.0
      %2879 = vmatpush1.msra.mxu0 0.0
      %2880 = vmatprep.subr.mxu0 0.0
      %2881 = vmatpush1.msra.mxu0 0.0
      %2882 = vmatprep.subr.mxu0 0.0
      %2883 = vmatpush1.msra.mxu0 0.0
      %2884 = vmatprep.subr.mxu0 0.0
      %2885 = vmatpush1.msra.mxu0 0.0
      %2886 = vmatprep.subr.mxu0 0.0
      %2887 = vmatpush1.msra.mxu0 0.0
      %2888 = vmatprep.subr.mxu0 0.0
      %2889 = vmatpush1.msra.mxu0 0.0
      %2890 = vmatprep.subr.mxu0 0.0
      %2891 = vmatpush1.msra.mxu0 0.0
      %2892 = vmatprep.subr.mxu0 0.0
      %2893 = vmatpush1.msra.mxu0 0.0
      %2894 = vmatprep.subr.mxu0 0.0
      %2895 = vmatpush1.msra.mxu0 0.0
      %2896 = vmatprep.subr.mxu0 0.0
      %2897 = vmatpush1.msra.mxu0 0.0
      %2898 = vmatprep.subr.mxu0 0.0
      %2899 = vmatpush1.msra.mxu0 0.0
      %2900 = vmatprep.subr.mxu0 0.0
      %2901 = vmatpush1.msra.mxu0 0.0
      %2902 = vmatprep.subr.mxu0 0.0
      %2903 = vmatpush1.msra.mxu0 0.0
      %2904 = vmatprep.subr.mxu0 0.0
      %2905 = vmatpush1.msra.mxu0 0.0
      %2906 = vmatprep.subr.mxu0 0.0
      %2907 = vmatpush1.msra.mxu0 0.0
      %2908 = vmatprep.subr.mxu0 0.0
      %2909 = vmatpush1.msra.mxu0 0.0
      %2910 = vmatprep.subr.mxu0 0.0
      %2911 = vmatpush1.msra.mxu0 0.0
      %2912 = vmatprep.subr.mxu0 0.0
      %2913 = vmatpush1.msra.mxu0 0.0
      %2914 = vmatprep.subr.mxu0 0.0
      %2915 = vmatpush1.msra.mxu0 0.0
      %2916 = vmatprep.mubr.f32.mxu0 0.0
      %2917 = vmatmul.mubr.f32.gmra.mrb[0].mxu0 %v2773
      %v2918 = vpop.f32.mrb[0].mxu0
      %v2919 = vadd.f32 %v2844, %v2918
      %v2920 = vpop.f32.mrb[0].mxu0
      %2921 = vmatprep.mubr.f32.mxu0 0.0
      %2922 = vmatmul.mubr.f32.gmra.mrb[0].mxu0 %v2775
      %v2923 = vpop.f32.mrb[0].mxu0
      %v2924 = vadd.f32 %v2849, %v2923
      %v2925 = vpop.f32.mrb[0].mxu0
      %2926 = vdwg.mxu0
      %v2927 = vmax.f32 %v2919, 0.0
      %v2928 = vmax.f32 %v2924, 0.0
      %2931 = vrot.lane.b32.xlu0 %v2927, 1
      %v2932 = vpop.permute.xlu0 %2931
      %2933 = vrot.lane.b32.xlu0 %v2928, 1
      %v2934 = vpop.permute.xlu0 %2933
      %v2937 = vsel %vm594, 0.0, %v2932
      %v2938 = vsel %vm594, 0.0, %v2934
      %v2939 = vmax.f32 %v2927, %v2937
      %v2940 = vmax.f32 %v2928, %v2938
      %2941 = vst.msk [vmem:[#allocation2 + $0x1] sm:$0xff] %vm1191, %v2939
      %2942 = vst.msk [vmem:[#allocation2 + $0x9] sm:$0xf] %vm2696, %v2940
      %v2943 = vld [vmem:[#allocation2] sm:$0xff]
      %v2944 = vld [vmem:[#allocation2 + $0x8] sm:$0x1f]
      %v2945 = vld [vmem:[#allocation2 + $0x1] sm:$0xff]
      %v2946 = vld [vmem:[#allocation2 + $0x9] sm:$0x1f]
      %v2947 = vmax.f32 %v2943, %v2945
      %v2948 = vmax.f32 %v2944, %v2946
      %2949 = vst [vmem:[#allocation2] sm:$0x1] 0.0
      %2950 = vst [vmem:[#allocation2 + $0xe] sm:$0x1] 0.0
      %2951 = vst.msk [vmem:[#allocation2 + $0x1] sm:$0xff] %vm1191, %v2947
      %vm2952 = vcmask 913408
      %2953 = vst.msk [vmem:[#allocation2 + $0x9] sm:$0x1f] %vm2952, %v2948
      %v2954 = vld [vmem:[#allocation2] sm:$0xff]
      %v2955 = vld [vmem:[#allocation2 + $0x8] sm:$0x1f]
      %v2956 = vld [vmem:[#allocation2 + $0x1] sm:$0xff]
      %v2957 = vld [vmem:[#allocation2 + $0x9] sm:$0x1f]
      %v2958 = vld [vmem:[#allocation2 + $0x2] sm:$0xff]
      %v2959 = vld [vmem:[#allocation2 + $0xa] sm:$0x1f]
      %2962 = vrot.lane.b32.xlu0 %v2956, 112
      %v2963 = vpop.permute.xlu0 %2962
      %2964 = vrot.lane.b32.xlu0 %v2957, 112
      %v2965 = vpop.permute.xlu0 %2964
      %2970 = vrot.lane.b32.xlu0 %v2958, 96
      %v2971 = vpop.permute.xlu0 %2970
      %2972 = vrot.lane.b32.xlu0 %v2959, 96
      %v2973 = vpop.permute.xlu0 %2972
      %v2976 = vsel %vm1191, %v2954, %v2963
      %v2977 = vsel %vm1191, %v2955, %v2965
      %v2978 = vsel %vm1258, %v2963, %v2971
      %v2979 = vsel %vm1258, %v2965, %v2973
      %v2980 = vld [vmem:[%s13] sm:$0xff]
      %v2981 = vld [vmem:[%s13 + $0x8] sm:$0xff]
      %v2982 = vld [vmem:[%s13 + $0x10] sm:$0xff]
      %v2983 = vld [vmem:[%s13 + $0x18] sm:$0xff]
      %v2984 = vld [vmem:[%s13 + $0x20] sm:$0xff]
      %v2985 = vld [vmem:[%s13 + $0x28] sm:$0xff]
      %v2986 = vld [vmem:[%s13 + $0x30] sm:$0xff]
      %v2987 = vld [vmem:[%s13 + $0x38] sm:$0xff]
      %v2988 = vld [vmem:[%s13 + $0x40] sm:$0xff]
      %v2989 = vld [vmem:[%s13 + $0x48] sm:$0xff]
      %v2990 = vld [vmem:[%s13 + $0x50] sm:$0xff]
      %v2991 = vld [vmem:[%s13 + $0x58] sm:$0xff]
      %v2992 = vld [vmem:[%s13 + $0x60] sm:$0xff]
      %v2993 = vld [vmem:[%s13 + $0x68] sm:$0xff]
      %v2994 = vld [vmem:[%s13 + $0x70] sm:$0xff]
      %v2995 = vld [vmem:[%s13 + $0x78] sm:$0xff]
      %v2996 = vld [vmem:[%s13 + $0x80] sm:$0xff]
      %v2997 = vld [vmem:[%s13 + $0x88] sm:$0xff]
      %v2998 = vld [vmem:[%s13 + $0x90] sm:$0xff]
      %v2999 = vld [vmem:[%s13 + $0x98] sm:$0xff]
      %v3000 = vld [vmem:[%s13 + $0xa0] sm:$0xff]
      %v3001 = vld [vmem:[%s13 + $0xa8] sm:$0xff]
      %v3002 = vld [vmem:[%s13 + $0xb0] sm:$0xff]
      %v3003 = vld [vmem:[%s13 + $0xb8] sm:$0xff]
      %v3004 = vld [vmem:[%s13 + $0xc0] sm:$0xff]
      %v3005 = vld [vmem:[%s13 + $0xc8] sm:$0xff]
      %v3006 = vld [vmem:[%s13 + $0xd0] sm:$0xff]
      %v3007 = vld [vmem:[%s13 + $0xd8] sm:$0xff]
      %v3008 = vld [vmem:[%s13 + $0xe0] sm:$0xff]
      %v3009 = vld [vmem:[%s13 + $0xe8] sm:$0xff]
      %v3010 = vld [vmem:[%s13 + $0xf0] sm:$0xff]
      %v3011 = vld [vmem:[%s13 + $0xf8] sm:$0xff]
      %v3012 = vld [vmem:[%s13 + $0x100] sm:$0xff]
      %v3013 = vld [vmem:[%s13 + $0x108] sm:$0xff]
      %v3014 = vld [vmem:[%s13 + $0x110] sm:$0xff]
      %v3015 = vld [vmem:[%s13 + $0x118] sm:$0xff]
      %v3016 = vld [vmem:[%s13 + $0x120] sm:$0xff]
      %v3017 = vld [vmem:[%s13 + $0x128] sm:$0xff]
      %v3018 = vld [vmem:[%s13 + $0x130] sm:$0xff]
      %v3019 = vld [vmem:[%s13 + $0x138] sm:$0xff]
      %v3020 = vld [vmem:[%s13 + $0x140] sm:$0xff]
      %v3021 = vld [vmem:[%s13 + $0x148] sm:$0xff]
      %v3022 = vld [vmem:[%s14] sm:$0x1]
      %v3024 = vlaneseq
      %v3025 = vshrl.u32 %v3024, 7
      %v3026 = vsub.s32 0, %v3025
      %v3027 = vrot.slane %v3022, %v3026
      %v3029 = vsel %vm1313, %v2971, 0
      %v3031 = vsel %vm1313, %v2973, 0
      %3033 = vmatprep.subr.mxu0 0.0
      %3034 = vmatpush1.msra.mxu0 %v2980
      %3035 = vmatprep.subr.mxu0 0.0
      %3036 = vmatpush1.msra.mxu0 %v2981
      %3037 = vmatprep.subr.mxu0 0.0
      %3038 = vmatpush1.msra.mxu0 %v2982
      %3039 = vmatprep.subr.mxu0 0.0
      %3040 = vmatpush1.msra.mxu0 %v2983
      %3041 = vmatprep.subr.mxu0 0.0
      %3042 = vmatpush1.msra.mxu0 %v2984
      %3043 = vmatprep.subr.mxu0 0.0
      %3044 = vmatpush1.msra.mxu0 %v2985
      %3045 = vmatprep.subr.mxu0 0.0
      %3046 = vmatpush1.msra.mxu0 %v2986
      %3047 = vmatprep.subr.mxu0 0.0
      %3048 = vmatpush1.msra.mxu0 %v2987
      %3049 = vmatprep.subr.mxu0 0.0
      %3050 = vmatpush1.msra.mxu0 %v2988
      %3051 = vmatprep.subr.mxu0 0.0
      %3052 = vmatpush1.msra.mxu0 %v2989
      %3053 = vmatprep.subr.mxu0 0.0
      %3054 = vmatpush1.msra.mxu0 %v2990
      %3055 = vmatprep.subr.mxu0 0.0
      %3056 = vmatpush1.msra.mxu0 %v2991
      %3057 = vmatprep.subr.mxu0 0.0
      %3058 = vmatpush1.msra.mxu0 %v2992
      %3059 = vmatprep.subr.mxu0 0.0
      %3060 = vmatpush1.msra.mxu0 %v2993
      %3061 = vmatprep.subr.mxu0 0.0
      %3062 = vmatpush1.msra.mxu0 %v2994
      %3063 = vmatprep.subr.mxu0 0.0
      %3064 = vmatpush1.msra.mxu0 %v2995
      %3065 = vmatprep.subr.mxu0 0.0
      %3066 = vmatpush1.msra.mxu0 %v2996
      %3067 = vmatprep.subr.mxu0 0.0
      %3068 = vmatpush1.msra.mxu0 %v2997
      %3069 = vmatprep.subr.mxu0 0.0
      %3070 = vmatpush1.msra.mxu0 %v2998
      %3071 = vmatprep.subr.mxu0 0.0
      %3072 = vmatpush1.msra.mxu0 %v2999
      %3073 = vmatprep.subr.mxu0 0.0
      %3074 = vmatpush1.msra.mxu0 %v3000
      %3075 = vmatprep.subr.mxu0 0.0
      %3076 = vmatpush1.msra.mxu0 %v3001
      %3077 = vmatprep.subr.mxu0 0.0
      %3078 = vmatpush1.msra.mxu0 %v3002
      %3079 = vmatprep.subr.mxu0 0.0
      %3080 = vmatpush1.msra.mxu0 %v3003
      %3081 = vmatprep.subr.mxu0 0.0
      %3082 = vmatpush1.msra.mxu0 %v3004
      %3083 = vmatprep.subr.mxu0 0.0
      %3084 = vmatpush1.msra.mxu0 %v3005
      %3085 = vmatprep.subr.mxu0 0.0
      %3086 = vmatpush1.msra.mxu0 %v3006
      %3087 = vmatprep.subr.mxu0 0.0
      %3088 = vmatpush1.msra.mxu0 %v3007
      %3089 = vmatprep.subr.mxu0 0.0
      %3090 = vmatpush1.msra.mxu0 %v3008
      %3091 = vmatprep.subr.mxu0 0.0
      %3092 = vmatpush1.msra.mxu0 %v3009
      %3093 = vmatprep.subr.mxu0 0.0
      %3094 = vmatpush1.msra.mxu0 %v3010
      %3095 = vmatprep.subr.mxu0 0.0
      %3096 = vmatpush1.msra.mxu0 %v3011
      %3097 = vmatprep.mubr.f32.mxu0 %v2978
      %3098 = vmatmul.mubr.f32.gmra.mrb[0].mxu0 %v2976
      %v3099 = vpop.f32.mrb[0].mxu0
      %v3100 = vadd.f32 %v3027, %v3099
      %v3101 = vpop.f32.mrb[0].mxu0
      %3102 = vmatprep.mubr.f32.mxu0 %v2979
      %3103 = vmatmul.mubr.f32.gmra.mrb[0].mxu0 %v2977
      %v3104 = vpop.f32.mrb[0].mxu0
      %v3105 = vadd.f32 %v3027, %v3104
      %v3106 = vpop.f32.mrb[0].mxu0
      %3107 = vdwg.mxu0
      %3108 = vmatprep.subr.mxu0 0.0
      %3109 = vmatpush1.msra.mxu0 %v3012
      %3110 = vmatprep.subr.mxu0 0.0
      %3111 = vmatpush1.msra.mxu0 %v3013
      %3112 = vmatprep.subr.mxu0 0.0
      %3113 = vmatpush1.msra.mxu0 %v3014
      %3114 = vmatprep.subr.mxu0 0.0
      %3115 = vmatpush1.msra.mxu0 %v3015
      %3116 = vmatprep.subr.mxu0 0.0
      %3117 = vmatpush1.msra.mxu0 %v3016
      %3118 = vmatprep.subr.mxu0 0.0
      %3119 = vmatpush1.msra.mxu0 %v3017
      %3120 = vmatprep.subr.mxu0 0.0
      %3121 = vmatpush1.msra.mxu0 %v3018
      %3122 = vmatprep.subr.mxu0 0.0
      %3123 = vmatpush1.msra.mxu0 %v3019
      %3124 = vmatprep.subr.mxu0 0.0
      %3125 = vmatpush1.msra.mxu0 %v3020
      %3126 = vmatprep.subr.mxu0 0.0
      %3127 = vmatpush1.msra.mxu0 %v3021
      %3128 = vmatprep.subr.mxu0 0.0
      %3129 = vmatpush1.msra.mxu0 0.0
      %3130 = vmatprep.subr.mxu0 0.0
      %3131 = vmatpush1.msra.mxu0 0.0
      %3132 = vmatprep.subr.mxu0 0.0
      %3133 = vmatpush1.msra.mxu0 0.0
      %3134 = vmatprep.subr.mxu0 0.0
      %3135 = vmatpush1.msra.mxu0 0.0
      %3136 = vmatprep.subr.mxu0 0.0
      %3137 = vmatpush1.msra.mxu0 0.0
      %3138 = vmatprep.subr.mxu0 0.0
      %3139 = vmatpush1.msra.mxu0 0.0
      %3140 = vmatprep.subr.mxu0 0.0
      %3141 = vmatpush1.msra.mxu0 0.0
      %3142 = vmatprep.subr.mxu0 0.0
      %3143 = vmatpush1.msra.mxu0 0.0
      %3144 = vmatprep.subr.mxu0 0.0
      %3145 = vmatpush1.msra.mxu0 0.0
      %3146 = vmatprep.subr.mxu0 0.0
      %3147 = vmatpush1.msra.mxu0 0.0
      %3148 = vmatprep.subr.mxu0 0.0
      %3149 = vmatpush1.msra.mxu0 0.0
      %3150 = vmatprep.subr.mxu0 0.0
      %3151 = vmatpush1.msra.mxu0 0.0
      %3152 = vmatprep.subr.mxu0 0.0
      %3153 = vmatpush1.msra.mxu0 0.0
      %3154 = vmatprep.subr.mxu0 0.0
      %3155 = vmatpush1.msra.mxu0 0.0
      %3156 = vmatprep.subr.mxu0 0.0
      %3157 = vmatpush1.msra.mxu0 0.0
      %3158 = vmatprep.subr.mxu0 0.0
      %3159 = vmatpush1.msra.mxu0 0.0
      %3160 = vmatprep.subr.mxu0 0.0
      %3161 = vmatpush1.msra.mxu0 0.0
      %3162 = vmatprep.subr.mxu0 0.0
      %3163 = vmatpush1.msra.mxu0 0.0
      %3164 = vmatprep.subr.mxu0 0.0
      %3165 = vmatpush1.msra.mxu0 0.0
      %3166 = vmatprep.subr.mxu0 0.0
      %3167 = vmatpush1.msra.mxu0 0.0
      %3168 = vmatprep.subr.mxu0 0.0
      %3169 = vmatpush1.msra.mxu0 0.0
      %3170 = vmatprep.subr.mxu0 0.0
      %3171 = vmatpush1.msra.mxu0 0.0
      %3172 = vmatprep.mubr.f32.mxu0 0.0
      %3173 = vmatmul.mubr.f32.gmra.mrb[0].mxu0 %v3029
      %v3174 = vpop.f32.mrb[0].mxu0
      %v3175 = vadd.f32 %v3100, %v3174
      %v3176 = vpop.f32.mrb[0].mxu0
      %3177 = vmatprep.mubr.f32.mxu0 0.0
      %3178 = vmatmul.mubr.f32.gmra.mrb[0].mxu0 %v3031
      %v3179 = vpop.f32.mrb[0].mxu0
      %v3180 = vadd.f32 %v3105, %v3179
      %v3181 = vpop.f32.mrb[0].mxu0
      %3182 = vdwg.mxu0
      %v3183 = vmax.f32 %v3175, 0.0
      %v3184 = vmax.f32 %v3180, 0.0
      %3187 = vrot.lane.b32.xlu0 %v3183, 1
      %v3188 = vpop.permute.xlu0 %3187
      %3189 = vrot.lane.b32.xlu0 %v3184, 1
      %v3190 = vpop.permute.xlu0 %3189
      %v3193 = vsel %vm594, 0.0, %v3188
      %v3194 = vsel %vm594, 0.0, %v3190
      %v3195 = vmax.f32 %v3183, %v3193
      %v3196 = vmax.f32 %v3184, %v3194
      %3197 = vst.msk [vmem:[#allocation2 + $0x1] sm:$0xff] %vm1191, %v3195
      %3198 = vst.msk [vmem:[#allocation2 + $0x9] sm:$0x1f] %vm2952, %v3196
      %v3199 = vld [vmem:[#allocation2] sm:$0xff]
      %v3200 = vld [vmem:[#allocation2 + $0x8] sm:$0x3f]
      %v3201 = vld [vmem:[#allocation2 + $0x1] sm:$0xff]
      %v3202 = vld [vmem:[#allocation2 + $0x9] sm:$0x3f]
      %v3203 = vmax.f32 %v3199, %v3201
      %v3204 = vmax.f32 %v3200, %v3202
      %3205 = vst.msk [vmem:[%s548] sm:$0xff] %vm1191, %v3203
      %vm3206 = vcmask 914432
      %3207 = vst.msk [vmem:[%s548 + $0x8] sm:$0x3f] %vm3206, %v3204
      %p3208 = scmp.lt.s32.totalorder %s28, 1
      %s3209 = scalar_select %p3208, %s28, 1
      %s3210 = smul.addr %s3209, 2
      %s3211 = smul.addr %s3210, 8
      %s3212 = scalar_lea.vmem %s17, %s3211
      // Predicated region
      $region89: #{clsa_entropy_forward.2} parent=87 // pred_check
        %p3213 = pneg %p408
      $region90: #{clsa_entropy_forward.2} parent=87 // pred_check_branch
        %3215 = sbr.rel (%p3213) target = $region92
      $region91: #{clsa_entropy_forward.2} parent=87 // pred_region
        _
      $region92: #{clsa_entropy_forward.2} parent=87 // pred_fallthru
        _
    $region88: #{clsa_entropy_forward.2} parent=5 // pred_fallthru
      _
    %p3216 = scmp.le.s32.totalorder 2, %s23
    // Predicated region
    $region93: #{clsa_entropy_forward.2} parent=5 // pred_check
      %p3217 = pneg %p3216
    $region94: #{clsa_entropy_forward.2} parent=5 // pred_check_branch
      %3219 = sbr.rel (%p3217) target = $region96
    $region95: #{clsa_entropy_forward.2} parent=5 // pred_region
      %s3220 = ssub.s32 %s23, 2
      // Predicated region
      $region97: #{clsa_entropy_forward.2} parent=95 // pred_check
        %p3221 = pneg %p414
      $region98: #{clsa_entropy_forward.2} parent=95 // pred_check_branch
        %3223 = sbr.rel (%p3221) target = $region100
      $region99: #{clsa_entropy_forward.2} parent=95 // pred_region
        %p3224 = scmp.lt.s32.totalorder %s29, 1
        %s3225 = scalar_select %p3224, %s29, 1
        %s3226 = smul.addr %s3225, 2
        %s3227 = smul.addr %s3226, 8
        %s3228 = scalar_lea.vmem %s17, %s3227
      $region100: #{clsa_entropy_forward.2} parent=95 // pred_fallthru
        _
    $region96: #{clsa_entropy_forward.2} parent=5 // pred_fallthru
      _
  $region6: #{clsa_entropy_forward.2} parent=0 // loop_footer
    %s27 = sadd.s32 1, %s23
  $region7: #{clsa_entropy_forward.2} parent=0 // loop_footer_branch
    %22 = sbr.rel target = $region3
  $region8: #{clsa_entropy_forward.2} parent=0 // loop_exit
    _

// kernel: clsa_entropy_forward.3
$region0: #{clsa_entropy_forward.3}
  #allocation0 [shape = 'u32[]', space=smem, size = 0x4, offset = 0x4, fixed_abs, tag = 'smem constant byte address 0x4 - core index']
  #allocation1 [shape = 'u32[144,128]{1,0:T(1,128)}', space=vmem, size = 0x12000, scoped, tag = 'internal scratch']
  #allocation2 [shape = 'f32[14,2,512]{2,1,0:T(2,128)}', space=vmem, size = 0xe000, scoped, tag = 'scratch operand']
  #allocation3 [shape = 'f32[14,2,64]{2,1,0:T(2,128)}', space=vmem, size = 0x3800, scoped, tag = 'scratch operand']
  #allocation4 [shape = 'f32[14,2,64]{2,1,0:T(2,128)}', space=vmem, size = 0x3800, scoped, tag = 'scratch operand']
  %s0 = inlined_call_operand.vmem [shape: f32[14,2,224], index: 0, kind: input, shape index: {}]
  %s1 = inlined_call_operand.vmem [shape: f32[224,512], index: 1, kind: input, shape index: {}]
  %s2 = inlined_call_operand.vmem [shape: f32[1,512], index: 2, kind: input, shape index: {}]
  %s3 = inlined_call_operand.vmem [shape: f32[128,512], index: 3, kind: input, shape index: {}]
  %s4 = inlined_call_operand.vmem [shape: f32[8,14], index: 4, kind: input, shape index: {}]
  %s5 = inlined_call_operand.vmem [shape: f32[8,1], index: 5, kind: input, shape index: {}]
  %s6 = inlined_call_operand.vmem [shape: f32[2,8], index: 6, kind: input, shape index: {}]
  %s7 = inlined_call_operand.vmem [shape: f32[2,1], index: 7, kind: input, shape index: {}]
  %s8 = inlined_call_operand.vmem [shape: f32[2,2], index: 8, kind: output, shape index: {}]
  %s9 = sld [smem:[#allocation0]]
  $region42: #{clsa_entropy_forward.3} parent=0
    _
  %s11 = ssub.s32 1, %s9
  %s12 = scalar_select 0, %s11, %s9
  // Predicated region
  $region2: #{clsa_entropy_forward.3} parent=0 // pred_check
    _
  $region3: #{clsa_entropy_forward.3} parent=0 // pred_check_branch
    %14 = sbr.rel (0) target = $region5
  $region4: #{clsa_entropy_forward.3} parent=0 // pred_region
    _
  $region5: #{clsa_entropy_forward.3} parent=0 // pred_fallthru
    _
  // Predicated region
  $region6: #{clsa_entropy_forward.3} parent=0 // pred_check
    _
  $region7: #{clsa_entropy_forward.3} parent=0 // pred_check_branch
    %16 = sbr.rel (0) target = $region9
  $region8: #{clsa_entropy_forward.3} parent=0 // pred_region
    _
  $region9: #{clsa_entropy_forward.3} parent=0 // pred_fallthru
    _
  // Predicated region
  $region10: #{clsa_entropy_forward.3} parent=0 // pred_check
    _
  $region11: #{clsa_entropy_forward.3} parent=0 // pred_check_branch
    %18 = sbr.rel (0) target = $region13
  $region12: #{clsa_entropy_forward.3} parent=0 // pred_region
    _
  $region13: #{clsa_entropy_forward.3} parent=0 // pred_fallthru
    _
  // Predicated region
  $region14: #{clsa_entropy_forward.3} parent=0 // pred_check
    _
  $region15: #{clsa_entropy_forward.3} parent=0 // pred_check_branch
    %20 = sbr.rel (0) target = $region17
  $region16: #{clsa_entropy_forward.3} parent=0 // pred_region
    _
  $region17: #{clsa_entropy_forward.3} parent=0 // pred_fallthru
    _
  // Predicated region
  $region18: #{clsa_entropy_forward.3} parent=0 // pred_check
    _
  $region19: #{clsa_entropy_forward.3} parent=0 // pred_check_branch
    %22 = sbr.rel (0) target = $region21
  $region20: #{clsa_entropy_forward.3} parent=0 // pred_region
    _
  $region21: #{clsa_entropy_forward.3} parent=0 // pred_fallthru
    _
  // Predicated region
  $region22: #{clsa_entropy_forward.3} parent=0 // pred_check
    _
  $region23: #{clsa_entropy_forward.3} parent=0 // pred_check_branch
    %24 = sbr.rel (0) target = $region25
  $region24: #{clsa_entropy_forward.3} parent=0 // pred_region
    _
  $region25: #{clsa_entropy_forward.3} parent=0 // pred_fallthru
    _
  // Predicated region
  $region26: #{clsa_entropy_forward.3} parent=0 // pred_check
    _
  $region27: #{clsa_entropy_forward.3} parent=0 // pred_check_branch
    %26 = sbr.rel (0) target = $region29
  $region28: #{clsa_entropy_forward.3} parent=0 // pred_region
    _
  $region29: #{clsa_entropy_forward.3} parent=0 // pred_fallthru
    _
  // Predicated region
  $region30: #{clsa_entropy_forward.3} parent=0 // pred_check
    _
  $region31: #{clsa_entropy_forward.3} parent=0 // pred_check_branch
    %28 = sbr.rel (0) target = $region33
  $region32: #{clsa_entropy_forward.3} parent=0 // pred_region
    _
  $region33: #{clsa_entropy_forward.3} parent=0 // pred_fallthru
    _
  %v29 = vld [vmem:[%s0] sm:$0xf]
  %v30 = vld [vmem:[%s0 + $0x4] sm:$0xf]
  %v31 = vld [vmem:[%s0 + $0x8] sm:$0xf]
  %v32 = vld [vmem:[%s0 + $0xc] sm:$0xf]
  %v33 = vld [vmem:[%s0 + $0x10] sm:$0xf]
  %v34 = vld [vmem:[%s0 + $0x14] sm:$0xf]
  %v35 = vld [vmem:[%s0 + $0x18] sm:$0xf]
  %v36 = vld [vmem:[%s0 + $0x1c] sm:$0xf]
  %v37 = vld [vmem:[%s0 + $0x20] sm:$0xf]
  %v38 = vld [vmem:[%s0 + $0x24] sm:$0xf]
  %v39 = vld [vmem:[%s0 + $0x28] sm:$0xf]
  %v40 = vld [vmem:[%s0 + $0x2c] sm:$0xf]
  %v41 = vld [vmem:[%s0 + $0x30] sm:$0xf]
  %v42 = vld [vmem:[%s0 + $0x34] sm:$0xf]
  %v43 = vld [vmem:[%s1] sm:$0xff]
  %v44 = vld [vmem:[%s1 + $0x8] sm:$0xff]
  %v45 = vld [vmem:[%s1 + $0x10] sm:$0xff]
  %v46 = vld [vmem:[%s1 + $0x18] sm:$0xff]
  %v47 = vld [vmem:[%s1 + $0x20] sm:$0xff]
  %v48 = vld [vmem:[%s1 + $0x28] sm:$0xff]
  %v49 = vld [vmem:[%s1 + $0x30] sm:$0xff]
  %v50 = vld [vmem:[%s1 + $0x38] sm:$0xff]
  %v51 = vld [vmem:[%s1 + $0x40] sm:$0xff]
  %v52 = vld [vmem:[%s1 + $0x48] sm:$0xff]
  %v53 = vld [vmem:[%s1 + $0x50] sm:$0xff]
  %v54 = vld [vmem:[%s1 + $0x58] sm:$0xff]
  %v55 = vld [vmem:[%s1 + $0x60] sm:$0xff]
  %v56 = vld [vmem:[%s1 + $0x68] sm:$0xff]
  %v57 = vld [vmem:[%s1 + $0x70] sm:$0xff]
  %v58 = vld [vmem:[%s1 + $0x78] sm:$0xff]
  %v59 = vld [vmem:[%s1 + $0x80] sm:$0xff]
  %v60 = vld [vmem:[%s1 + $0x88] sm:$0xff]
  %v61 = vld [vmem:[%s1 + $0x90] sm:$0xff]
  %v62 = vld [vmem:[%s1 + $0x98] sm:$0xff]
  %v63 = vld [vmem:[%s1 + $0xa0] sm:$0xff]
  %v64 = vld [vmem:[%s1 + $0xa8] sm:$0xff]
  %v65 = vld [vmem:[%s1 + $0xb0] sm:$0xff]
  %v66 = vld [vmem:[%s1 + $0xb8] sm:$0xff]
  %v67 = vld [vmem:[%s1 + $0xc0] sm:$0xff]
  %v68 = vld [vmem:[%s1 + $0xc8] sm:$0xff]
  %v69 = vld [vmem:[%s1 + $0xd0] sm:$0xff]
  %v70 = vld [vmem:[%s1 + $0xd8] sm:$0xff]
  %v71 = vld [vmem:[%s1 + $0xe0] sm:$0xff]
  %v72 = vld [vmem:[%s1 + $0xe8] sm:$0xff]
  %v73 = vld [vmem:[%s1 + $0xf0] sm:$0xff]
  %v74 = vld [vmem:[%s1 + $0xf8] sm:$0xff]
  %v75 = vld [vmem:[%s1 + $0x100] sm:$0xff]
  %v76 = vld [vmem:[%s1 + $0x108] sm:$0xff]
  %v77 = vld [vmem:[%s1 + $0x110] sm:$0xff]
  %v78 = vld [vmem:[%s1 + $0x118] sm:$0xff]
  %v79 = vld [vmem:[%s1 + $0x120] sm:$0xff]
  %v80 = vld [vmem:[%s1 + $0x128] sm:$0xff]
  %v81 = vld [vmem:[%s1 + $0x130] sm:$0xff]
  %v82 = vld [vmem:[%s1 + $0x138] sm:$0xff]
  %v83 = vld [vmem:[%s1 + $0x140] sm:$0xff]
  %v84 = vld [vmem:[%s1 + $0x148] sm:$0xff]
  %v85 = vld [vmem:[%s1 + $0x150] sm:$0xff]
  %v86 = vld [vmem:[%s1 + $0x158] sm:$0xff]
  %v87 = vld [vmem:[%s1 + $0x160] sm:$0xff]
  %v88 = vld [vmem:[%s1 + $0x168] sm:$0xff]
  %v89 = vld [vmem:[%s1 + $0x170] sm:$0xff]
  %v90 = vld [vmem:[%s1 + $0x178] sm:$0xff]
  %v91 = vld [vmem:[%s1 + $0x180] sm:$0xff]
  %v92 = vld [vmem:[%s1 + $0x188] sm:$0xff]
  %v93 = vld [vmem:[%s1 + $0x190] sm:$0xff]
  %v94 = vld [vmem:[%s1 + $0x198] sm:$0xff]
  %v95 = vld [vmem:[%s1 + $0x1a0] sm:$0xff]
  %v96 = vld [vmem:[%s1 + $0x1a8] sm:$0xff]
  %v97 = vld [vmem:[%s1 + $0x1b0] sm:$0xff]
  %v98 = vld [vmem:[%s1 + $0x1b8] sm:$0xff]
  %v99 = vld [vmem:[%s1 + $0x1c0] sm:$0xff]
  %v100 = vld [vmem:[%s1 + $0x1c8] sm:$0xff]
  %v101 = vld [vmem:[%s1 + $0x1d0] sm:$0xff]
  %v102 = vld [vmem:[%s1 + $0x1d8] sm:$0xff]
  %v103 = vld [vmem:[%s1 + $0x1e0] sm:$0xff]
  %v104 = vld [vmem:[%s1 + $0x1e8] sm:$0xff]
  %v105 = vld [vmem:[%s1 + $0x1f0] sm:$0xff]
  %v106 = vld [vmem:[%s1 + $0x1f8] sm:$0xff]
  %v107 = vld [vmem:[%s1 + $0x200] sm:$0xff]
  %v108 = vld [vmem:[%s1 + $0x208] sm:$0xff]
  %v109 = vld [vmem:[%s1 + $0x210] sm:$0xff]
  %v110 = vld [vmem:[%s1 + $0x218] sm:$0xff]
  %v111 = vld [vmem:[%s1 + $0x220] sm:$0xff]
  %v112 = vld [vmem:[%s1 + $0x228] sm:$0xff]
  %v113 = vld [vmem:[%s1 + $0x230] sm:$0xff]
  %v114 = vld [vmem:[%s1 + $0x238] sm:$0xff]
  %v115 = vld [vmem:[%s1 + $0x240] sm:$0xff]
  %v116 = vld [vmem:[%s1 + $0x248] sm:$0xff]
  %v117 = vld [vmem:[%s1 + $0x250] sm:$0xff]
  %v118 = vld [vmem:[%s1 + $0x258] sm:$0xff]
  %v119 = vld [vmem:[%s1 + $0x260] sm:$0xff]
  %v120 = vld [vmem:[%s1 + $0x268] sm:$0xff]
  %v121 = vld [vmem:[%s1 + $0x270] sm:$0xff]
  %v122 = vld [vmem:[%s1 + $0x278] sm:$0xff]
  %v123 = vld [vmem:[%s1 + $0x280] sm:$0xff]
  %v124 = vld [vmem:[%s1 + $0x288] sm:$0xff]
  %v125 = vld [vmem:[%s1 + $0x290] sm:$0xff]
  %v126 = vld [vmem:[%s1 + $0x298] sm:$0xff]
  %v127 = vld [vmem:[%s1 + $0x2a0] sm:$0xff]
  %v128 = vld [vmem:[%s1 + $0x2a8] sm:$0xff]
  %v129 = vld [vmem:[%s1 + $0x2b0] sm:$0xff]
  %v130 = vld [vmem:[%s1 + $0x2b8] sm:$0xff]
  %v131 = vld [vmem:[%s1 + $0x2c0] sm:$0xff]
  %v132 = vld [vmem:[%s1 + $0x2c8] sm:$0xff]
  %v133 = vld [vmem:[%s1 + $0x2d0] sm:$0xff]
  %v134 = vld [vmem:[%s1 + $0x2d8] sm:$0xff]
  %v135 = vld [vmem:[%s1 + $0x2e0] sm:$0xff]
  %v136 = vld [vmem:[%s1 + $0x2e8] sm:$0xff]
  %v137 = vld [vmem:[%s1 + $0x2f0] sm:$0xff]
  %v138 = vld [vmem:[%s1 + $0x2f8] sm:$0xff]
  %v139 = vld [vmem:[%s1 + $0x300] sm:$0xff]
  %v140 = vld [vmem:[%s1 + $0x308] sm:$0xff]
  %v141 = vld [vmem:[%s1 + $0x310] sm:$0xff]
  %v142 = vld [vmem:[%s1 + $0x318] sm:$0xff]
  %v143 = vld [vmem:[%s1 + $0x320] sm:$0xff]
  %v144 = vld [vmem:[%s1 + $0x328] sm:$0xff]
  %v145 = vld [vmem:[%s1 + $0x330] sm:$0xff]
  %v146 = vld [vmem:[%s1 + $0x338] sm:$0xff]
  %v147 = vld [vmem:[%s1 + $0x340] sm:$0xff]
  %v148 = vld [vmem:[%s1 + $0x348] sm:$0xff]
  %v149 = vld [vmem:[%s1 + $0x350] sm:$0xff]
  %v150 = vld [vmem:[%s1 + $0x358] sm:$0xff]
  %v151 = vld [vmem:[%s1 + $0x360] sm:$0xff]
  %v152 = vld [vmem:[%s1 + $0x368] sm:$0xff]
  %v153 = vld [vmem:[%s1 + $0x370] sm:$0xff]
  %v154 = vld [vmem:[%s1 + $0x378] sm:$0xff]
  %v155 = vld [vmem:[%s2] sm:$0xf]
  %v157 = vlaneseq
  %v158 = vshrl.u32 %v157, 7
  %v159 = vsub.s32 0, %v158
  %v160 = vrot.slane %v155, %v159
  %v161 = vlaneseq
  %v162 = vshrl.u32 %v161, 7
  %v163 = vsub.s32 1, %v162
  %v164 = vrot.slane %v155, %v163
  %v165 = vlaneseq
  %v166 = vshrl.u32 %v165, 7
  %v167 = vsub.s32 2, %v166
  %v168 = vrot.slane %v155, %v167
  %v169 = vlaneseq
  %v170 = vshrl.u32 %v169, 7
  %v171 = vsub.s32 3, %v170
  %v172 = vrot.slane %v155, %v171
  %v191 = vcombine.low %v29, %v30
  %v192 = vcombine.low %v31, %v32
  %v194 = vunpack.c.l.s4 1983009808
  %v195 = vunpack.c.0.s8 %v194
  %v196 = vlaneseq
  %v197 = vshrl.u32 %v196, 7
  %v198 = vsub.s32 %v195, %v197
  %v199 = vrot.slane %v191, %v198
  %v201 = vunpack.c.l.s4 1983009808
  %v202 = vunpack.c.0.s8 %v201
  %v203 = vlaneseq
  %v204 = vshrl.u32 %v203, 7
  %v205 = vsub.s32 %v202, %v204
  %v206 = vrot.slane %v192, %v205
  %v207 = vcombine.low %v199, %v206
  %v208 = vcombine.high %v199, %v206
  %v209 = vcombine.low %v33, %v34
  %v210 = vcombine.low %v35, %v36
  %v212 = vunpack.c.l.s4 1983009808
  %v213 = vunpack.c.0.s8 %v212
  %v214 = vlaneseq
  %v215 = vshrl.u32 %v214, 7
  %v216 = vsub.s32 %v213, %v215
  %v217 = vrot.slane %v209, %v216
  %v219 = vunpack.c.l.s4 1983009808
  %v220 = vunpack.c.0.s8 %v219
  %v221 = vlaneseq
  %v222 = vshrl.u32 %v221, 7
  %v223 = vsub.s32 %v220, %v222
  %v224 = vrot.slane %v210, %v223
  %v225 = vcombine.low %v217, %v224
  %v226 = vcombine.high %v217, %v224
  %v227 = vcombine.low %v37, %v38
  %v228 = vcombine.low %v39, %v40
  %v230 = vunpack.c.l.s4 1983009808
  %v231 = vunpack.c.0.s8 %v230
  %v232 = vlaneseq
  %v233 = vshrl.u32 %v232, 7
  %v234 = vsub.s32 %v231, %v233
  %v235 = vrot.slane %v227, %v234
  %v237 = vunpack.c.l.s4 1983009808
  %v238 = vunpack.c.0.s8 %v237
  %v239 = vlaneseq
  %v240 = vshrl.u32 %v239, 7
  %v241 = vsub.s32 %v238, %v240
  %v242 = vrot.slane %v228, %v241
  %v243 = vcombine.low %v235, %v242
  %v244 = vcombine.high %v235, %v242
  %v245 = vcombine.low %v41, %v42
  %v247 = vunpack.c.l.s4 1983009808
  %v248 = vunpack.c.0.s8 %v247
  %v249 = vlaneseq
  %v250 = vshrl.u32 %v249, 7
  %v251 = vsub.s32 %v248, %v250
  %v252 = vrot.slane %v245, %v251
  %v253 = vcombine.high %v252, %v252
  %vm258 = vcmask 785408
  %v259 = vsel %vm258, %v208, 0
  %v261 = vsel %vm258, %v226, 0
  %v263 = vsel %vm258, %v244, 0
  %v265 = vsel %vm258, %v253, 0
  %267 = vmatprep.subr.mxu0 %v44
  %268 = vmatpush1.msra.mxu0 %v43
  %269 = vmatprep.subr.mxu0 %v48
  %270 = vmatpush1.msra.mxu0 %v47
  %271 = vmatprep.subr.mxu0 %v52
  %272 = vmatpush1.msra.mxu0 %v51
  %273 = vmatprep.subr.mxu0 %v56
  %274 = vmatpush1.msra.mxu0 %v55
  %275 = vmatprep.subr.mxu0 %v60
  %276 = vmatpush1.msra.mxu0 %v59
  %277 = vmatprep.subr.mxu0 %v64
  %278 = vmatpush1.msra.mxu0 %v63
  %279 = vmatprep.subr.mxu0 %v68
  %280 = vmatpush1.msra.mxu0 %v67
  %281 = vmatprep.subr.mxu0 %v72
  %282 = vmatpush1.msra.mxu0 %v71
  %283 = vmatprep.subr.mxu0 %v76
  %284 = vmatpush1.msra.mxu0 %v75
  %285 = vmatprep.subr.mxu0 %v80
  %286 = vmatpush1.msra.mxu0 %v79
  %287 = vmatprep.subr.mxu0 %v84
  %288 = vmatpush1.msra.mxu0 %v83
  %289 = vmatprep.subr.mxu0 %v88
  %290 = vmatpush1.msra.mxu0 %v87
  %291 = vmatprep.subr.mxu0 %v92
  %292 = vmatpush1.msra.mxu0 %v91
  %293 = vmatprep.subr.mxu0 %v96
  %294 = vmatpush1.msra.mxu0 %v95
  %295 = vmatprep.subr.mxu0 %v100
  %296 = vmatpush1.msra.mxu0 %v99
  %297 = vmatprep.subr.mxu0 %v104
  %298 = vmatpush1.msra.mxu0 %v103
  %299 = vmatprep.subr.mxu0 %v108
  %300 = vmatpush1.msra.mxu0 %v107
  %301 = vmatprep.subr.mxu0 %v112
  %302 = vmatpush1.msra.mxu0 %v111
  %303 = vmatprep.subr.mxu0 %v116
  %304 = vmatpush1.msra.mxu0 %v115
  %305 = vmatprep.subr.mxu0 %v120
  %306 = vmatpush1.msra.mxu0 %v119
  %307 = vmatprep.subr.mxu0 %v124
  %308 = vmatpush1.msra.mxu0 %v123
  %309 = vmatprep.subr.mxu0 %v128
  %310 = vmatpush1.msra.mxu0 %v127
  %311 = vmatprep.subr.mxu0 %v132
  %312 = vmatpush1.msra.mxu0 %v131
  %313 = vmatprep.subr.mxu0 %v136
  %314 = vmatpush1.msra.mxu0 %v135
  %315 = vmatprep.subr.mxu0 %v140
  %316 = vmatpush1.msra.mxu0 %v139
  %317 = vmatprep.subr.mxu0 %v144
  %318 = vmatpush1.msra.mxu0 %v143
  %319 = vmatprep.subr.mxu0 %v148
  %320 = vmatpush1.msra.mxu0 %v147
  %321 = vmatprep.subr.mxu0 %v152
  %322 = vmatpush1.msra.mxu0 %v151
  %323 = vmatprep.subr.mxu0 0.0
  %324 = vmatpush1.msra.mxu0 0.0
  %325 = vmatprep.subr.mxu0 0.0
  %326 = vmatpush1.msra.mxu0 0.0
  %327 = vmatprep.subr.mxu0 0.0
  %328 = vmatpush1.msra.mxu0 0.0
  %329 = vmatprep.subr.mxu0 0.0
  %330 = vmatpush1.msra.mxu0 0.0
  %331 = vmatprep.mubr.f32.mxu0 %v259
  %332 = vmatmul.mubr.f32.gmra.mrb[0].mxu0 %v207
  %v333 = vpop.f32.mrb[0].mxu0
  %v334 = vadd.f32 %v160, %v333
  %v335 = vpop.f32.mrb[0].mxu0
  %v336 = vadd.f32 %v164, %v335
  %337 = vmatprep.mubr.f32.mxu0 %v261
  %338 = vmatmul.mubr.f32.gmra.mrb[0].mxu0 %v225
  %v339 = vpop.f32.mrb[0].mxu0
  %v340 = vadd.f32 %v160, %v339
  %v341 = vpop.f32.mrb[0].mxu0
  %v342 = vadd.f32 %v164, %v341
  %343 = vmatprep.mubr.f32.mxu0 %v263
  %344 = vmatmul.mubr.f32.gmra.mrb[0].mxu0 %v243
  %v345 = vpop.f32.mrb[0].mxu0
  %v346 = vadd.f32 %v160, %v345
  %v347 = vpop.f32.mrb[0].mxu0
  %v348 = vadd.f32 %v164, %v347
  %349 = vmatprep.mubr.f32.mxu0 %v265
  %350 = vmatmul.mubr.f32.gmra.mrb[0].mxu0 %v252
  %v351 = vpop.f32.mrb[0].mxu0
  %v352 = vadd.f32 %v160, %v351
  %v353 = vpop.f32.mrb[0].mxu0
  %v354 = vadd.f32 %v164, %v353
  %355 = vdwg.mxu0
  %356 = vmatprep.subr.mxu0 %v46
  %357 = vmatpush1.msra.mxu0 %v45
  %358 = vmatprep.subr.mxu0 %v50
  %359 = vmatpush1.msra.mxu0 %v49
  %360 = vmatprep.subr.mxu0 %v54
  %361 = vmatpush1.msra.mxu0 %v53
  %362 = vmatprep.subr.mxu0 %v58
  %363 = vmatpush1.msra.mxu0 %v57
  %364 = vmatprep.subr.mxu0 %v62
  %365 = vmatpush1.msra.mxu0 %v61
  %366 = vmatprep.subr.mxu0 %v66
  %367 = vmatpush1.msra.mxu0 %v65
  %368 = vmatprep.subr.mxu0 %v70
  %369 = vmatpush1.msra.mxu0 %v69
  %370 = vmatprep.subr.mxu0 %v74
  %371 = vmatpush1.msra.mxu0 %v73
  %372 = vmatprep.subr.mxu0 %v78
  %373 = vmatpush1.msra.mxu0 %v77
  %374 = vmatprep.subr.mxu0 %v82
  %375 = vmatpush1.msra.mxu0 %v81
  %376 = vmatprep.subr.mxu0 %v86
  %377 = vmatpush1.msra.mxu0 %v85
  %378 = vmatprep.subr.mxu0 %v90
  %379 = vmatpush1.msra.mxu0 %v89
  %380 = vmatprep.subr.mxu0 %v94
  %381 = vmatpush1.msra.mxu0 %v93
  %382 = vmatprep.subr.mxu0 %v98
  %383 = vmatpush1.msra.mxu0 %v97
  %384 = vmatprep.subr.mxu0 %v102
  %385 = vmatpush1.msra.mxu0 %v101
  %386 = vmatprep.subr.mxu0 %v106
  %387 = vmatpush1.msra.mxu0 %v105
  %388 = vmatprep.subr.mxu0 %v110
  %389 = vmatpush1.msra.mxu0 %v109
  %390 = vmatprep.subr.mxu0 %v114
  %391 = vmatpush1.msra.mxu0 %v113
  %392 = vmatprep.subr.mxu0 %v118
  %393 = vmatpush1.msra.mxu0 %v117
  %394 = vmatprep.subr.mxu0 %v122
  %395 = vmatpush1.msra.mxu0 %v121
  %396 = vmatprep.subr.mxu0 %v126
  %397 = vmatpush1.msra.mxu0 %v125
  %398 = vmatprep.subr.mxu0 %v130
  %399 = vmatpush1.msra.mxu0 %v129
  %400 = vmatprep.subr.mxu0 %v134
  %401 = vmatpush1.msra.mxu0 %v133
  %402 = vmatprep.subr.mxu0 %v138
  %403 = vmatpush1.msra.mxu0 %v137
  %404 = vmatprep.subr.mxu0 %v142
  %405 = vmatpush1.msra.mxu0 %v141
  %406 = vmatprep.subr.mxu0 %v146
  %407 = vmatpush1.msra.mxu0 %v145
  %408 = vmatprep.subr.mxu0 %v150
  %409 = vmatpush1.msra.mxu0 %v149
  %410 = vmatprep.subr.mxu0 %v154
  %411 = vmatpush1.msra.mxu0 %v153
  %412 = vmatprep.subr.mxu0 0.0
  %413 = vmatpush1.msra.mxu0 0.0
  %414 = vmatprep.subr.mxu0 0.0
  %415 = vmatpush1.msra.mxu0 0.0
  %416 = vmatprep.subr.mxu0 0.0
  %417 = vmatpush1.msra.mxu0 0.0
  %418 = vmatprep.subr.mxu0 0.0
  %419 = vmatpush1.msra.mxu0 0.0
  %420 = vmatprep.mubr.f32.mxu0 %v259
  %421 = vmatmul.mubr.f32.gmra.mrb[0].mxu0 %v207
  %v422 = vpop.f32.mrb[0].mxu0
  %v423 = vadd.f32 %v168, %v422
  %v424 = vpop.f32.mrb[0].mxu0
  %v425 = vadd.f32 %v172, %v424
  %426 = vmatprep.mubr.f32.mxu0 %v261
  %427 = vmatmul.mubr.f32.gmra.mrb[0].mxu0 %v225
  %v428 = vpop.f32.mrb[0].mxu0
  %v429 = vadd.f32 %v168, %v428
  %v430 = vpop.f32.mrb[0].mxu0
  %v431 = vadd.f32 %v172, %v430
  %432 = vmatprep.mubr.f32.mxu0 %v263
  %433 = vmatmul.mubr.f32.gmra.mrb[0].mxu0 %v243
  %v434 = vpop.f32.mrb[0].mxu0
  %v435 = vadd.f32 %v168, %v434
  %v436 = vpop.f32.mrb[0].mxu0
  %v437 = vadd.f32 %v172, %v436
  %438 = vmatprep.mubr.f32.mxu0 %v265
  %439 = vmatmul.mubr.f32.gmra.mrb[0].mxu0 %v252
  %v440 = vpop.f32.mrb[0].mxu0
  %v441 = vadd.f32 %v168, %v440
  %v442 = vpop.f32.mrb[0].mxu0
  %v443 = vadd.f32 %v172, %v442
  %444 = vdwg.mxu0
  %v461 = vcombine.low %v334, %v336
  %v462 = vcombine.high %v334, %v336
  %v463 = vcombine.low %v423, %v425
  %v464 = vcombine.high %v423, %v425
  %v466 = vunpack.c.l.s4 1983009808
  %v467 = vunpack.c.0.s8 %v466
  %v468 = vlaneseq
  %v469 = vshrl.u32 %v468, 7
  %v470 = vsub.s32 %v467, %v469
  %v471 = vrot.slane %v461, %v470
  %v473 = vunpack.c.l.s4 1983009808
  %v474 = vunpack.c.0.s8 %v473
  %v475 = vlaneseq
  %v476 = vshrl.u32 %v475, 7
  %v477 = vsub.s32 %v474, %v476
  %v478 = vrot.slane %v462, %v477
  %v480 = vunpack.c.l.s4 1983009808
  %v481 = vunpack.c.0.s8 %v480
  %v482 = vlaneseq
  %v483 = vshrl.u32 %v482, 7
  %v484 = vsub.s32 %v481, %v483
  %v485 = vrot.slane %v463, %v484
  %v487 = vunpack.c.l.s4 1983009808
  %v488 = vunpack.c.0.s8 %v487
  %v489 = vlaneseq
  %v490 = vshrl.u32 %v489, 7
  %v491 = vsub.s32 %v488, %v490
  %v492 = vrot.slane %v464, %v491
  %v493 = vcombine.low %v471, %v485
  %v494 = vcombine.high %v471, %v485
  %v495 = vcombine.low %v478, %v492
  %v496 = vcombine.high %v478, %v492
  %v497 = vcombine.low %v340, %v342
  %v498 = vcombine.high %v340, %v342
  %v499 = vcombine.low %v429, %v431
  %v500 = vcombine.high %v429, %v431
  %v502 = vunpack.c.l.s4 1983009808
  %v503 = vunpack.c.0.s8 %v502
  %v504 = vlaneseq
  %v505 = vshrl.u32 %v504, 7
  %v506 = vsub.s32 %v503, %v505
  %v507 = vrot.slane %v497, %v506
  %v509 = vunpack.c.l.s4 1983009808
  %v510 = vunpack.c.0.s8 %v509
  %v511 = vlaneseq
  %v512 = vshrl.u32 %v511, 7
  %v513 = vsub.s32 %v510, %v512
  %v514 = vrot.slane %v498, %v513
  %v516 = vunpack.c.l.s4 1983009808
  %v517 = vunpack.c.0.s8 %v516
  %v518 = vlaneseq
  %v519 = vshrl.u32 %v518, 7
  %v520 = vsub.s32 %v517, %v519
  %v521 = vrot.slane %v499, %v520
  %v523 = vunpack.c.l.s4 1983009808
  %v524 = vunpack.c.0.s8 %v523
  %v525 = vlaneseq
  %v526 = vshrl.u32 %v525, 7
  %v527 = vsub.s32 %v524, %v526
  %v528 = vrot.slane %v500, %v527
  %v529 = vcombine.low %v507, %v521
  %v530 = vcombine.high %v507, %v521
  %v531 = vcombine.low %v514, %v528
  %v532 = vcombine.high %v514, %v528
  %v533 = vcombine.low %v346, %v348
  %v534 = vcombine.high %v346, %v348
  %v535 = vcombine.low %v435, %v437
  %v536 = vcombine.high %v435, %v437
  %v538 = vunpack.c.l.s4 1983009808
  %v539 = vunpack.c.0.s8 %v538
  %v540 = vlaneseq
  %v541 = vshrl.u32 %v540, 7
  %v542 = vsub.s32 %v539, %v541
  %v543 = vrot.slane %v533, %v542
  %v545 = vunpack.c.l.s4 1983009808
  %v546 = vunpack.c.0.s8 %v545
  %v547 = vlaneseq
  %v548 = vshrl.u32 %v547, 7
  %v549 = vsub.s32 %v546, %v548
  %v550 = vrot.slane %v534, %v549
  %v552 = vunpack.c.l.s4 1983009808
  %v553 = vunpack.c.0.s8 %v552
  %v554 = vlaneseq
  %v555 = vshrl.u32 %v554, 7
  %v556 = vsub.s32 %v553, %v555
  %v557 = vrot.slane %v535, %v556
  %v559 = vunpack.c.l.s4 1983009808
  %v560 = vunpack.c.0.s8 %v559
  %v561 = vlaneseq
  %v562 = vshrl.u32 %v561, 7
  %v563 = vsub.s32 %v560, %v562
  %v564 = vrot.slane %v536, %v563
  %v565 = vcombine.low %v543, %v557
  %v566 = vcombine.high %v543, %v557
  %v567 = vcombine.low %v550, %v564
  %v568 = vcombine.high %v550, %v564
  %v569 = vcombine.low %v352, %v354
  %v570 = vcombine.low %v441, %v443
  %v572 = vunpack.c.l.s4 1983009808
  %v573 = vunpack.c.0.s8 %v572
  %v574 = vlaneseq
  %v575 = vshrl.u32 %v574, 7
  %v576 = vsub.s32 %v573, %v575
  %v577 = vrot.slane %v569, %v576
  %v579 = vunpack.c.l.s4 1983009808
  %v580 = vunpack.c.0.s8 %v579
  %v581 = vlaneseq
  %v582 = vshrl.u32 %v581, 7
  %v583 = vsub.s32 %v580, %v582
  %v584 = vrot.slane %v570, %v583
  %v585 = vcombine.low %v577, %v584
  %v586 = vcombine.high %v577, %v584
  %601 = vst [vmem:[#allocation2] sm:$0xff] %v493
  %602 = vst [vmem:[#allocation2 + $0x8] sm:$0xff] %v494
  %603 = vst [vmem:[#allocation2 + $0x10] sm:$0xff] %v495
  %604 = vst [vmem:[#allocation2 + $0x18] sm:$0xff] %v496
  %605 = vst [vmem:[#allocation2 + $0x20] sm:$0xff] %v529
  %606 = vst [vmem:[#allocation2 + $0x28] sm:$0xff] %v530
  %607 = vst [vmem:[#allocation2 + $0x30] sm:$0xff] %v531
  %608 = vst [vmem:[#allocation2 + $0x38] sm:$0xff] %v532
  %609 = vst [vmem:[#allocation2 + $0x40] sm:$0xff] %v565
  %610 = vst [vmem:[#allocation2 + $0x48] sm:$0xff] %v566
  %611 = vst [vmem:[#allocation2 + $0x50] sm:$0xff] %v567
  %612 = vst [vmem:[#allocation2 + $0x58] sm:$0xff] %v568
  %613 = vst [vmem:[#allocation2 + $0x60] sm:$0xff] %v585
  %614 = vst [vmem:[#allocation2 + $0x68] sm:$0xff] %v586
  %v615 = vld [vmem:[#allocation2] sm:$0xff]
  %v616 = vld [vmem:[%s3] sm:$0xff]
  %v617 = vld [vmem:[%s3 + $0x8] sm:$0xff]
  %v618 = vld [vmem:[%s3 + $0x10] sm:$0xff]
  %v619 = vld [vmem:[%s3 + $0x18] sm:$0xff]
  %v620 = vld [vmem:[%s3 + $0x20] sm:$0xff]
  %v621 = vld [vmem:[%s3 + $0x28] sm:$0xff]
  %v622 = vld [vmem:[%s3 + $0x30] sm:$0xff]
  %v623 = vld [vmem:[%s3 + $0x38] sm:$0xff]
  %v624 = vld [vmem:[%s3 + $0x40] sm:$0xff]
  %v625 = vld [vmem:[%s3 + $0x48] sm:$0xff]
  %v626 = vld [vmem:[%s3 + $0x50] sm:$0xff]
  %v627 = vld [vmem:[%s3 + $0x58] sm:$0xff]
  %v628 = vld [vmem:[%s3 + $0x60] sm:$0xff]
  %v629 = vld [vmem:[%s3 + $0x68] sm:$0xff]
  %v630 = vld [vmem:[%s3 + $0x70] sm:$0xff]
  %v631 = vld [vmem:[%s3 + $0x78] sm:$0xff]
  %v632 = vld [vmem:[%s3 + $0x80] sm:$0xff]
  %v633 = vld [vmem:[%s3 + $0x88] sm:$0xff]
  %v634 = vld [vmem:[%s3 + $0x90] sm:$0xff]
  %v635 = vld [vmem:[%s3 + $0x98] sm:$0xff]
  %v636 = vld [vmem:[%s3 + $0xa0] sm:$0xff]
  %v637 = vld [vmem:[%s3 + $0xa8] sm:$0xff]
  %v638 = vld [vmem:[%s3 + $0xb0] sm:$0xff]
  %v639 = vld [vmem:[%s3 + $0xb8] sm:$0xff]
  %v640 = vld [vmem:[%s3 + $0xc0] sm:$0xff]
  %v641 = vld [vmem:[%s3 + $0xc8] sm:$0xff]
  %v642 = vld [vmem:[%s3 + $0xd0] sm:$0xff]
  %v643 = vld [vmem:[%s3 + $0xd8] sm:$0xff]
  %v644 = vld [vmem:[%s3 + $0xe0] sm:$0xff]
  %v645 = vld [vmem:[%s3 + $0xe8] sm:$0xff]
  %v646 = vld [vmem:[%s3 + $0xf0] sm:$0xff]
  %v647 = vld [vmem:[%s3 + $0xf8] sm:$0xff]
  %v648 = vld [vmem:[%s3 + $0x100] sm:$0xff]
  %v649 = vld [vmem:[%s3 + $0x108] sm:$0xff]
  %v650 = vld [vmem:[%s3 + $0x110] sm:$0xff]
  %v651 = vld [vmem:[%s3 + $0x118] sm:$0xff]
  %v652 = vld [vmem:[%s3 + $0x120] sm:$0xff]
  %v653 = vld [vmem:[%s3 + $0x128] sm:$0xff]
  %v654 = vld [vmem:[%s3 + $0x130] sm:$0xff]
  %v655 = vld [vmem:[%s3 + $0x138] sm:$0xff]
  %v656 = vld [vmem:[%s3 + $0x140] sm:$0xff]
  %v657 = vld [vmem:[%s3 + $0x148] sm:$0xff]
  %v658 = vld [vmem:[%s3 + $0x150] sm:$0xff]
  %v659 = vld [vmem:[%s3 + $0x158] sm:$0xff]
  %v660 = vld [vmem:[%s3 + $0x160] sm:$0xff]
  %v661 = vld [vmem:[%s3 + $0x168] sm:$0xff]
  %v662 = vld [vmem:[%s3 + $0x170] sm:$0xff]
  %v663 = vld [vmem:[%s3 + $0x178] sm:$0xff]
  %v664 = vld [vmem:[%s3 + $0x180] sm:$0xff]
  %v665 = vld [vmem:[%s3 + $0x188] sm:$0xff]
  %v666 = vld [vmem:[%s3 + $0x190] sm:$0xff]
  %v667 = vld [vmem:[%s3 + $0x198] sm:$0xff]
  %v668 = vld [vmem:[%s3 + $0x1a0] sm:$0xff]
  %v669 = vld [vmem:[%s3 + $0x1a8] sm:$0xff]
  %v670 = vld [vmem:[%s3 + $0x1b0] sm:$0xff]
  %v671 = vld [vmem:[%s3 + $0x1b8] sm:$0xff]
  %v672 = vld [vmem:[%s3 + $0x1c0] sm:$0xff]
  %v673 = vld [vmem:[%s3 + $0x1c8] sm:$0xff]
  %v674 = vld [vmem:[%s3 + $0x1d0] sm:$0xff]
  %v675 = vld [vmem:[%s3 + $0x1d8] sm:$0xff]
  %v676 = vld [vmem:[%s3 + $0x1e0] sm:$0xff]
  %v677 = vld [vmem:[%s3 + $0x1e8] sm:$0xff]
  %v678 = vld [vmem:[%s3 + $0x1f0] sm:$0xff]
  %v679 = vld [vmem:[%s3 + $0x1f8] sm:$0xff]
  %680 = vmatprep.subr.mxu0 %v617
  %681 = vmatpush1.msra.mxu0 %v616
  %682 = vmatprep.subr.mxu0 %v621
  %683 = vmatpush1.msra.mxu0 %v620
  %684 = vmatprep.subr.mxu0 %v625
  %685 = vmatpush1.msra.mxu0 %v624
  %686 = vmatprep.subr.mxu0 %v629
  %687 = vmatpush1.msra.mxu0 %v628
  %688 = vmatprep.subr.mxu0 %v633
  %689 = vmatpush1.msra.mxu0 %v632
  %690 = vmatprep.subr.mxu0 %v637
  %691 = vmatpush1.msra.mxu0 %v636
  %692 = vmatprep.subr.mxu0 %v641
  %693 = vmatpush1.msra.mxu0 %v640
  %694 = vmatprep.subr.mxu0 %v645
  %695 = vmatpush1.msra.mxu0 %v644
  %696 = vmatprep.subr.mxu0 %v649
  %697 = vmatpush1.msra.mxu0 %v648
  %698 = vmatprep.subr.mxu0 %v653
  %699 = vmatpush1.msra.mxu0 %v652
  %700 = vmatprep.subr.mxu0 %v657
  %701 = vmatpush1.msra.mxu0 %v656
  %702 = vmatprep.subr.mxu0 %v661
  %703 = vmatpush1.msra.mxu0 %v660
  %704 = vmatprep.subr.mxu0 %v665
  %705 = vmatpush1.msra.mxu0 %v664
  %706 = vmatprep.subr.mxu0 %v669
  %707 = vmatpush1.msra.mxu0 %v668
  %708 = vmatprep.subr.mxu0 %v673
  %709 = vmatpush1.msra.mxu0 %v672
  %710 = vmatprep.subr.mxu0 %v677
  %711 = vmatpush1.msra.mxu0 %v676
  %712 = vmatprep.subr.mxu0 0.0
  %713 = vmatpush1.msra.mxu0 0.0
  %714 = vmatprep.subr.mxu0 0.0
  %715 = vmatpush1.msra.mxu0 0.0
  %716 = vmatprep.subr.mxu0 0.0
  %717 = vmatpush1.msra.mxu0 0.0
  %718 = vmatprep.subr.mxu0 0.0
  %719 = vmatpush1.msra.mxu0 0.0
  %720 = vmatprep.subr.mxu0 0.0
  %721 = vmatpush1.msra.mxu0 0.0
  %722 = vmatprep.subr.mxu0 0.0
  %723 = vmatpush1.msra.mxu0 0.0
  %724 = vmatprep.subr.mxu0 0.0
  %725 = vmatpush1.msra.mxu0 0.0
  %726 = vmatprep.subr.mxu0 0.0
  %727 = vmatpush1.msra.mxu0 0.0
  %728 = vmatprep.subr.mxu0 0.0
  %729 = vmatpush1.msra.mxu0 0.0
  %730 = vmatprep.subr.mxu0 0.0
  %731 = vmatpush1.msra.mxu0 0.0
  %732 = vmatprep.subr.mxu0 0.0
  %733 = vmatpush1.msra.mxu0 0.0
  %734 = vmatprep.subr.mxu0 0.0
  %735 = vmatpush1.msra.mxu0 0.0
  %736 = vmatprep.subr.mxu0 0.0
  %737 = vmatpush1.msra.mxu0 0.0
  %738 = vmatprep.subr.mxu0 0.0
  %739 = vmatpush1.msra.mxu0 0.0
  %740 = vmatprep.subr.mxu0 0.0
  %741 = vmatpush1.msra.mxu0 0.0
  %742 = vmatprep.subr.mxu0 0.0
  %743 = vmatpush1.msra.mxu0 0.0
  %744 = vmatprep.mubr.f32.mxu0 0.0
  %745 = vmatmul.mubr.f32.gmra.mrb[0].mxu0 0.0
  %v746 = vpop.f32.mrb[0].mxu0
  %v747 = vadd.f32 0.0, %v746
  %v748 = vpop.f32.mrb[0].mxu0
  %v749 = vadd.f32 0.0, %v748
  %750 = vdwg.mxu0
  %751 = vmatprep.subr.mxu0 %v619
  %752 = vmatpush1.msra.mxu0 %v618
  %753 = vmatprep.subr.mxu0 %v623
  %754 = vmatpush1.msra.mxu0 %v622
  %755 = vmatprep.subr.mxu0 %v627
  %756 = vmatpush1.msra.mxu0 %v626
  %757 = vmatprep.subr.mxu0 %v631
  %758 = vmatpush1.msra.mxu0 %v630
  %759 = vmatprep.subr.mxu0 %v635
  %760 = vmatpush1.msra.mxu0 %v634
  %761 = vmatprep.subr.mxu0 %v639
  %762 = vmatpush1.msra.mxu0 %v638
  %763 = vmatprep.subr.mxu0 %v643
  %764 = vmatpush1.msra.mxu0 %v642
  %765 = vmatprep.subr.mxu0 %v647
  %766 = vmatpush1.msra.mxu0 %v646
  %767 = vmatprep.subr.mxu0 %v651
  %768 = vmatpush1.msra.mxu0 %v650
  %769 = vmatprep.subr.mxu0 %v655
  %770 = vmatpush1.msra.mxu0 %v654
  %771 = vmatprep.subr.mxu0 %v659
  %772 = vmatpush1.msra.mxu0 %v658
  %773 = vmatprep.subr.mxu0 %v663
  %774 = vmatpush1.msra.mxu0 %v662
  %775 = vmatprep.subr.mxu0 %v667
  %776 = vmatpush1.msra.mxu0 %v666
  %777 = vmatprep.subr.mxu0 %v671
  %778 = vmatpush1.msra.mxu0 %v670
  %779 = vmatprep.subr.mxu0 %v675
  %780 = vmatpush1.msra.mxu0 %v674
  %781 = vmatprep.subr.mxu0 %v679
  %782 = vmatpush1.msra.mxu0 %v678
  %783 = vmatprep.subr.mxu0 0.0
  %784 = vmatpush1.msra.mxu0 0.0
  %785 = vmatprep.subr.mxu0 0.0
  %786 = vmatpush1.msra.mxu0 0.0
  %787 = vmatprep.subr.mxu0 0.0
  %788 = vmatpush1.msra.mxu0 0.0
  %789 = vmatprep.subr.mxu0 0.0
  %790 = vmatpush1.msra.mxu0 0.0
  %791 = vmatprep.subr.mxu0 0.0
  %792 = vmatpush1.msra.mxu0 0.0
  %793 = vmatprep.subr.mxu0 0.0
  %794 = vmatpush1.msra.mxu0 0.0
  %795 = vmatprep.subr.mxu0 0.0
  %796 = vmatpush1.msra.mxu0 0.0
  %797 = vmatprep.subr.mxu0 0.0
  %798 = vmatpush1.msra.mxu0 0.0
  %799 = vmatprep.subr.mxu0 0.0
  %800 = vmatpush1.msra.mxu0 0.0
  %801 = vmatprep.subr.mxu0 0.0
  %802 = vmatpush1.msra.mxu0 0.0
  %803 = vmatprep.subr.mxu0 0.0
  %804 = vmatpush1.msra.mxu0 0.0
  %805 = vmatprep.subr.mxu0 0.0
  %806 = vmatpush1.msra.mxu0 0.0
  %807 = vmatprep.subr.mxu0 0.0
  %808 = vmatpush1.msra.mxu0 0.0
  %809 = vmatprep.subr.mxu0 0.0
  %810 = vmatpush1.msra.mxu0 0.0
  %811 = vmatprep.subr.mxu0 0.0
  %812 = vmatpush1.msra.mxu0 0.0
  %813 = vmatprep.subr.mxu0 0.0
  %814 = vmatpush1.msra.mxu0 0.0
  %815 = vmatprep.mubr.f32.mxu0 0.0
  %816 = vmatmul.mubr.f32.gmra.mrb[0].mxu0 0.0
  %v817 = vpop.f32.mrb[0].mxu0
  %v818 = vadd.f32 0.0, %v817
  %v819 = vpop.f32.mrb[0].mxu0
  %v820 = vadd.f32 0.0, %v819
  %821 = vdwg.mxu0
  %v826 = vcombine.low %v747, %v749
  %v827 = vcombine.low %v818, %v820
  %v829 = vunpack.c.l.s4 1983009808
  %v830 = vunpack.c.0.s8 %v829
  %v831 = vlaneseq
  %v832 = vshrl.u32 %v831, 7
  %v833 = vsub.s32 %v830, %v832
  %v834 = vrot.slane %v826, %v833
  %v836 = vunpack.c.l.s4 1983009808
  %v837 = vunpack.c.0.s8 %v836
  %v838 = vlaneseq
  %v839 = vshrl.u32 %v838, 7
  %v840 = vsub.s32 %v837, %v839
  %v841 = vrot.slane %v827, %v840
  %v842 = vcombine.low %v834, %v841
  %v844 = vadd.f32 %v615, %v842
  %v845 = vmul.f32 %v844, 0.5
  %v846 = vtanh.pop %v845
  %v847 = vmul.f32 %v846, 0.5
  %v848 = vadd.f32 %v847, 0.5
  %v850 = vrot.slane %v844, 2
  %v852 = vmul.f32 %v850, 0.5
  %v853 = vtanh.pop %v852
  %v854 = vmul.f32 %v853, 0.5
  %v855 = vadd.f32 %v854, 0.5
  %v856 = vrot.slane %v844, 4
  %v858 = vtanh.pop %v856
  %v859 = vrot.slane %v844, 6
  %v861 = vmul.f32 %v859, 0.5
  %v862 = vtanh.pop %v861
  %v863 = vmul.f32 %v862, 0.5
  %v864 = vadd.f32 %v863, 0.5
  %v865 = vmul.f32 %v855, 0.0
  %v866 = vmul.f32 %v848, %v858
  %v867 = vadd.f32 %v865, %v866
  %v868 = vtanh.pop %v867
  %v869 = vmul.f32 %v864, %v868
  %vm870 = vcmask 517120
  %871 = vst.msk [vmem:[#allocation3] sm:$0x3] %vm870, %v869
  %v874 = vunpack.c.l.s4 1983009808
  %v875 = vunpack.c.0.s8 %v874
  %v876 = vlaneseq
  %v877 = vshrl.u32 %v876, 7
  %v878 = vsub.s32 %v875, %v877
  %v879 = vrot.slane %v869, %v878
  %880 = vrot.lane.b32.xlu0 %v879, 64
  %v881 = vpop.permute.xlu0 %880
  %s883 = scalar_lea.vmem [#allocation4], 26
  %884 = vst.msk [vmem:[%s883] sm:$0x3] %vm870, %v881
  %s885 = scalar_lea.vmem [#allocation2], 8
  %v886 = vld [vmem:[%s885] sm:$0xff]
  %v887 = vld [vmem:[%s3] sm:$0xff]
  %v888 = vld [vmem:[%s3 + $0x8] sm:$0xff]
  %v889 = vld [vmem:[%s3 + $0x10] sm:$0xff]
  %v890 = vld [vmem:[%s3 + $0x18] sm:$0xff]
  %v891 = vld [vmem:[%s3 + $0x20] sm:$0xff]
  %v892 = vld [vmem:[%s3 + $0x28] sm:$0xff]
  %v893 = vld [vmem:[%s3 + $0x30] sm:$0xff]
  %v894 = vld [vmem:[%s3 + $0x38] sm:$0xff]
  %v895 = vld [vmem:[%s3 + $0x40] sm:$0xff]
  %v896 = vld [vmem:[%s3 + $0x48] sm:$0xff]
  %v897 = vld [vmem:[%s3 + $0x50] sm:$0xff]
  %v898 = vld [vmem:[%s3 + $0x58] sm:$0xff]
  %v899 = vld [vmem:[%s3 + $0x60] sm:$0xff]
  %v900 = vld [vmem:[%s3 + $0x68] sm:$0xff]
  %v901 = vld [vmem:[%s3 + $0x70] sm:$0xff]
  %v902 = vld [vmem:[%s3 + $0x78] sm:$0xff]
  %v903 = vld [vmem:[%s3 + $0x80] sm:$0xff]
  %v904 = vld [vmem:[%s3 + $0x88] sm:$0xff]
  %v905 = vld [vmem:[%s3 + $0x90] sm:$0xff]
  %v906 = vld [vmem:[%s3 + $0x98] sm:$0xff]
  %v907 = vld [vmem:[%s3 + $0xa0] sm:$0xff]
  %v908 = vld [vmem:[%s3 + $0xa8] sm:$0xff]
  %v909 = vld [vmem:[%s3 + $0xb0] sm:$0xff]
  %v910 = vld [vmem:[%s3 + $0xb8] sm:$0xff]
  %v911 = vld [vmem:[%s3 + $0xc0] sm:$0xff]
  %v912 = vld [vmem:[%s3 + $0xc8] sm:$0xff]
  %v913 = vld [vmem:[%s3 + $0xd0] sm:$0xff]
  %v914 = vld [vmem:[%s3 + $0xd8] sm:$0xff]
  %v915 = vld [vmem:[%s3 + $0xe0] sm:$0xff]
  %v916 = vld [vmem:[%s3 + $0xe8] sm:$0xff]
  %v917 = vld [vmem:[%s3 + $0xf0] sm:$0xff]
  %v918 = vld [vmem:[%s3 + $0xf8] sm:$0xff]
  %v919 = vld [vmem:[%s3 + $0x100] sm:$0xff]
  %v920 = vld [vmem:[%s3 + $0x108] sm:$0xff]
  %v921 = vld [vmem:[%s3 + $0x110] sm:$0xff]
  %v922 = vld [vmem:[%s3 + $0x118] sm:$0xff]
  %v923 = vld [vmem:[%s3 + $0x120] sm:$0xff]
  %v924 = vld [vmem:[%s3 + $0x128] sm:$0xff]
  %v925 = vld [vmem:[%s3 + $0x130] sm:$0xff]
  %v926 = vld [vmem:[%s3 + $0x138] sm:$0xff]
  %v927 = vld [vmem:[%s3 + $0x140] sm:$0xff]
  %v928 = vld [vmem:[%s3 + $0x148] sm:$0xff]
  %v929 = vld [vmem:[%s3 + $0x150] sm:$0xff]
  %v930 = vld [vmem:[%s3 + $0x158] sm:$0xff]
  %v931 = vld [vmem:[%s3 + $0x160] sm:$0xff]
  %v932 = vld [vmem:[%s3 + $0x168] sm:$0xff]
  %v933 = vld [vmem:[%s3 + $0x170] sm:$0xff]
  %v934 = vld [vmem:[%s3 + $0x178] sm:$0xff]
  %v935 = vld [vmem:[%s3 + $0x180] sm:$0xff]
  %v936 = vld [vmem:[%s3 + $0x188] sm:$0xff]
  %v937 = vld [vmem:[%s3 + $0x190] sm:$0xff]
  %v938 = vld [vmem:[%s3 + $0x198] sm:$0xff]
  %v939 = vld [vmem:[%s3 + $0x1a0] sm:$0xff]
  %v940 = vld [vmem:[%s3 + $0x1a8] sm:$0xff]
  %v941 = vld [vmem:[%s3 + $0x1b0] sm:$0xff]
  %v942 = vld [vmem:[%s3 + $0x1b8] sm:$0xff]
  %v943 = vld [vmem:[%s3 + $0x1c0] sm:$0xff]
  %v944 = vld [vmem:[%s3 + $0x1c8] sm:$0xff]
  %v945 = vld [vmem:[%s3 + $0x1d0] sm:$0xff]
  %v946 = vld [vmem:[%s3 + $0x1d8] sm:$0xff]
  %v947 = vld [vmem:[%s3 + $0x1e0] sm:$0xff]
  %v948 = vld [vmem:[%s3 + $0x1e8] sm:$0xff]
  %v949 = vld [vmem:[%s3 + $0x1f0] sm:$0xff]
  %v950 = vld [vmem:[%s3 + $0x1f8] sm:$0xff]
  %951 = vmatprep.subr.mxu0 %v888
  %952 = vmatpush1.msra.mxu0 %v887
  %953 = vmatprep.subr.mxu0 %v892
  %954 = vmatpush1.msra.mxu0 %v891
  %955 = vmatprep.subr.mxu0 %v896
  %956 = vmatpush1.msra.mxu0 %v895
  %957 = vmatprep.subr.mxu0 %v900
  %958 = vmatpush1.msra.mxu0 %v899
  %959 = vmatprep.subr.mxu0 %v904
  %960 = vmatpush1.msra.mxu0 %v903
  %961 = vmatprep.subr.mxu0 %v908
  %962 = vmatpush1.msra.mxu0 %v907
  %963 = vmatprep.subr.mxu0 %v912
  %964 = vmatpush1.msra.mxu0 %v911
  %965 = vmatprep.subr.mxu0 %v916
  %966 = vmatpush1.msra.mxu0 %v915
  %967 = vmatprep.subr.mxu0 %v920
  %968 = vmatpush1.msra.mxu0 %v919
  %969 = vmatprep.subr.mxu0 %v924
  %970 = vmatpush1.msra.mxu0 %v923
  %971 = vmatprep.subr.mxu0 %v928
  %972 = vmatpush1.msra.mxu0 %v927
  %973 = vmatprep.subr.mxu0 %v932
  %974 = vmatpush1.msra.mxu0 %v931
  %975 = vmatprep.subr.mxu0 %v936
  %976 = vmatpush1.msra.mxu0 %v935
  %977 = vmatprep.subr.mxu0 %v940
  %978 = vmatpush1.msra.mxu0 %v939
  %979 = vmatprep.subr.mxu0 %v944
  %980 = vmatpush1.msra.mxu0 %v943
  %981 = vmatprep.subr.mxu0 %v948
  %982 = vmatpush1.msra.mxu0 %v947
  %983 = vmatprep.subr.mxu0 0.0
  %984 = vmatpush1.msra.mxu0 0.0
  %985 = vmatprep.subr.mxu0 0.0
  %986 = vmatpush1.msra.mxu0 0.0
  %987 = vmatprep.subr.mxu0 0.0
  %988 = vmatpush1.msra.mxu0 0.0
  %989 = vmatprep.subr.mxu0 0.0
  %990 = vmatpush1.msra.mxu0 0.0
  %991 = vmatprep.subr.mxu0 0.0
  %992 = vmatpush1.msra.mxu0 0.0
  %993 = vmatprep.subr.mxu0 0.0
  %994 = vmatpush1.msra.mxu0 0.0
  %995 = vmatprep.subr.mxu0 0.0
  %996 = vmatpush1.msra.mxu0 0.0
  %997 = vmatprep.subr.mxu0 0.0
  %998 = vmatpush1.msra.mxu0 0.0
  %999 = vmatprep.subr.mxu0 0.0
  %1000 = vmatpush1.msra.mxu0 0.0
  %1001 = vmatprep.subr.mxu0 0.0
  %1002 = vmatpush1.msra.mxu0 0.0
  %1003 = vmatprep.subr.mxu0 0.0
  %1004 = vmatpush1.msra.mxu0 0.0
  %1005 = vmatprep.subr.mxu0 0.0
  %1006 = vmatpush1.msra.mxu0 0.0
  %1007 = vmatprep.subr.mxu0 0.0
  %1008 = vmatpush1.msra.mxu0 0.0
  %1009 = vmatprep.subr.mxu0 0.0
  %1010 = vmatpush1.msra.mxu0 0.0
  %1011 = vmatprep.subr.mxu0 0.0
  %1012 = vmatpush1.msra.mxu0 0.0
  %1013 = vmatprep.subr.mxu0 0.0
  %1014 = vmatpush1.msra.mxu0 0.0
  %1015 = vmatprep.mubr.f32.mxu0 0.0
  %1016 = vmatmul.mubr.f32.gmra.mrb[0].mxu0 %v869
  %v1017 = vpop.f32.mrb[0].mxu0
  %v1018 = vadd.f32 0.0, %v1017
  %v1019 = vpop.f32.mrb[0].mxu0
  %v1020 = vadd.f32 0.0, %v1019
  %1021 = vdwg.mxu0
  %1022 = vmatprep.subr.mxu0 %v890
  %1023 = vmatpush1.msra.mxu0 %v889
  %1024 = vmatprep.subr.mxu0 %v894
  %1025 = vmatpush1.msra.mxu0 %v893
  %1026 = vmatprep.subr.mxu0 %v898
  %1027 = vmatpush1.msra.mxu0 %v897
  %1028 = vmatprep.subr.mxu0 %v902
  %1029 = vmatpush1.msra.mxu0 %v901
  %1030 = vmatprep.subr.mxu0 %v906
  %1031 = vmatpush1.msra.mxu0 %v905
  %1032 = vmatprep.subr.mxu0 %v910
  %1033 = vmatpush1.msra.mxu0 %v909
  %1034 = vmatprep.subr.mxu0 %v914
  %1035 = vmatpush1.msra.mxu0 %v913
  %1036 = vmatprep.subr.mxu0 %v918
  %1037 = vmatpush1.msra.mxu0 %v917
  %1038 = vmatprep.subr.mxu0 %v922
  %1039 = vmatpush1.msra.mxu0 %v921
  %1040 = vmatprep.subr.mxu0 %v926
  %1041 = vmatpush1.msra.mxu0 %v925
  %1042 = vmatprep.subr.mxu0 %v930
  %1043 = vmatpush1.msra.mxu0 %v929
  %1044 = vmatprep.subr.mxu0 %v934
  %1045 = vmatpush1.msra.mxu0 %v933
  %1046 = vmatprep.subr.mxu0 %v938
  %1047 = vmatpush1.msra.mxu0 %v937
  %1048 = vmatprep.subr.mxu0 %v942
  %1049 = vmatpush1.msra.mxu0 %v941
  %1050 = vmatprep.subr.mxu0 %v946
  %1051 = vmatpush1.msra.mxu0 %v945
  %1052 = vmatprep.subr.mxu0 %v950
  %1053 = vmatpush1.msra.mxu0 %v949
  %1054 = vmatprep.subr.mxu0 0.0
  %1055 = vmatpush1.msra.mxu0 0.0
  %1056 = vmatprep.subr.mxu0 0.0
  %1057 = vmatpush1.msra.mxu0 0.0
  %1058 = vmatprep.subr.mxu0 0.0
  %1059 = vmatpush1.msra.mxu0 0.0
  %1060 = vmatprep.subr.mxu0 0.0
  %1061 = vmatpush1.msra.mxu0 0.0
  %1062 = vmatprep.subr.mxu0 0.0
  %1063 = vmatpush1.msra.mxu0 0.0
  %1064 = vmatprep.subr.mxu0 0.0
  %1065 = vmatpush1.msra.mxu0 0.0
  %1066 = vmatprep.subr.mxu0 0.0
  %1067 = vmatpush1.msra.mxu0 0.0
  %1068 = vmatprep.subr.mxu0 0.0
  %1069 = vmatpush1.msra.mxu0 0.0
  %1070 = vmatprep.subr.mxu0 0.0
  %1071 = vmatpush1.msra.mxu0 0.0
  %1072 = vmatprep.subr.mxu0 0.0
  %1073 = vmatpush1.msra.mxu0 0.0
  %1074 = vmatprep.subr.mxu0 0.0
  %1075 = vmatpush1.msra.mxu0 0.0
  %1076 = vmatprep.subr.mxu0 0.0
  %1077 = vmatpush1.msra.mxu0 0.0
  %1078 = vmatprep.subr.mxu0 0.0
  %1079 = vmatpush1.msra.mxu0 0.0
  %1080 = vmatprep.subr.mxu0 0.0
  %1081 = vmatpush1.msra.mxu0 0.0
  %1082 = vmatprep.subr.mxu0 0.0
  %1083 = vmatpush1.msra.mxu0 0.0
  %1084 = vmatprep.subr.mxu0 0.0
  %1085 = vmatpush1.msra.mxu0 0.0
  %1086 = vmatprep.mubr.f32.mxu0 0.0
  %1087 = vmatmul.mubr.f32.gmra.mrb[0].mxu0 %v869
  %v1088 = vpop.f32.mrb[0].mxu0
  %v1089 = vadd.f32 0.0, %v1088
  %v1090 = vpop.f32.mrb[0].mxu0
  %v1091 = vadd.f32 0.0, %v1090
  %1092 = vdwg.mxu0
  %v1097 = vcombine.low %v1018, %v1020
  %v1098 = vcombine.low %v1089, %v1091
  %v1100 = vunpack.c.l.s4 1983009808
  %v1101 = vunpack.c.0.s8 %v1100
  %v1102 = vlaneseq
  %v1103 = vshrl.u32 %v1102, 7
  %v1104 = vsub.s32 %v1101, %v1103
  %v1105 = vrot.slane %v1097, %v1104
  %v1107 = vunpack.c.l.s4 1983009808
  %v1108 = vunpack.c.0.s8 %v1107
  %v1109 = vlaneseq
  %v1110 = vshrl.u32 %v1109, 7
  %v1111 = vsub.s32 %v1108, %v1110
  %v1112 = vrot.slane %v1098, %v1111
  %v1113 = vcombine.low %v1105, %v1112
  %v1115 = vadd.f32 %v886, %v1113
  %v1116 = vmul.f32 %v1115, 0.5
  %v1117 = vtanh.pop %v1116
  %v1118 = vmul.f32 %v1117, 0.5
  %v1119 = vadd.f32 %v1118, 0.5
  %v1121 = vrot.slane %v1115, 2
  %v1123 = vmul.f32 %v1121, 0.5
  %v1124 = vtanh.pop %v1123
  %v1125 = vmul.f32 %v1124, 0.5
  %v1126 = vadd.f32 %v1125, 0.5
  %v1127 = vrot.slane %v1115, 4
  %v1129 = vtanh.pop %v1127
  %v1130 = vrot.slane %v1115, 6
  %v1132 = vmul.f32 %v1130, 0.5
  %v1133 = vtanh.pop %v1132
  %v1134 = vmul.f32 %v1133, 0.5
  %v1135 = vadd.f32 %v1134, 0.5
  %v1136 = vmul.f32 %v1126, %v867
  %v1137 = vmul.f32 %v1119, %v1129
  %v1138 = vadd.f32 %v1136, %v1137
  %v1139 = vtanh.pop %v1138
  %v1140 = vmul.f32 %v1135, %v1139
  %s1141 = scalar_lea.vmem [#allocation3], 2
  %1142 = vst.msk [vmem:[%s1141] sm:$0x3] %vm870, %v1140
  %v1145 = vunpack.c.l.s4 1983009808
  %v1146 = vunpack.c.0.s8 %v1145
  %v1147 = vlaneseq
  %v1148 = vshrl.u32 %v1147, 7
  %v1149 = vsub.s32 %v1146, %v1148
  %v1150 = vrot.slane %v1140, %v1149
  %1151 = vrot.lane.b32.xlu0 %v1150, 64
  %v1152 = vpop.permute.xlu0 %1151
  %s1154 = scalar_lea.vmem [#allocation4], 24
  %1155 = vst.msk [vmem:[%s1154] sm:$0x3] %vm870, %v1152
  %s1156 = scalar_lea.vmem [#allocation2], 16
  %v1157 = vld [vmem:[%s1156] sm:$0xff]
  %v1158 = vld [vmem:[%s3] sm:$0xff]
  %v1159 = vld [vmem:[%s3 + $0x8] sm:$0xff]
  %v1160 = vld [vmem:[%s3 + $0x10] sm:$0xff]
  %v1161 = vld [vmem:[%s3 + $0x18] sm:$0xff]
  %v1162 = vld [vmem:[%s3 + $0x20] sm:$0xff]
  %v1163 = vld [vmem:[%s3 + $0x28] sm:$0xff]
  %v1164 = vld [vmem:[%s3 + $0x30] sm:$0xff]
  %v1165 = vld [vmem:[%s3 + $0x38] sm:$0xff]
  %v1166 = vld [vmem:[%s3 + $0x40] sm:$0xff]
  %v1167 = vld [vmem:[%s3 + $0x48] sm:$0xff]
  %v1168 = vld [vmem:[%s3 + $0x50] sm:$0xff]
  %v1169 = vld [vmem:[%s3 + $0x58] sm:$0xff]
  %v1170 = vld [vmem:[%s3 + $0x60] sm:$0xff]
  %v1171 = vld [vmem:[%s3 + $0x68] sm:$0xff]
  %v1172 = vld [vmem:[%s3 + $0x70] sm:$0xff]
  %v1173 = vld [vmem:[%s3 + $0x78] sm:$0xff]
  %v1174 = vld [vmem:[%s3 + $0x80] sm:$0xff]
  %v1175 = vld [vmem:[%s3 + $0x88] sm:$0xff]
  %v1176 = vld [vmem:[%s3 + $0x90] sm:$0xff]
  %v1177 = vld [vmem:[%s3 + $0x98] sm:$0xff]
  %v1178 = vld [vmem:[%s3 + $0xa0] sm:$0xff]
  %v1179 = vld [vmem:[%s3 + $0xa8] sm:$0xff]
  %v1180 = vld [vmem:[%s3 + $0xb0] sm:$0xff]
  %v1181 = vld [vmem:[%s3 + $0xb8] sm:$0xff]
  %v1182 = vld [vmem:[%s3 + $0xc0] sm:$0xff]
  %v1183 = vld [vmem:[%s3 + $0xc8] sm:$0xff]
  %v1184 = vld [vmem:[%s3 + $0xd0] sm:$0xff]
  %v1185 = vld [vmem:[%s3 + $0xd8] sm:$0xff]
  %v1186 = vld [vmem:[%s3 + $0xe0] sm:$0xff]
  %v1187 = vld [vmem:[%s3 + $0xe8] sm:$0xff]
  %v1188 = vld [vmem:[%s3 + $0xf0] sm:$0xff]
  %v1189 = vld [vmem:[%s3 + $0xf8] sm:$0xff]
  %v1190 = vld [vmem:[%s3 + $0x100] sm:$0xff]
  %v1191 = vld [vmem:[%s3 + $0x108] sm:$0xff]
  %v1192 = vld [vmem:[%s3 + $0x110] sm:$0xff]
  %v1193 = vld [vmem:[%s3 + $0x118] sm:$0xff]
  %v1194 = vld [vmem:[%s3 + $0x120] sm:$0xff]
  %v1195 = vld [vmem:[%s3 + $0x128] sm:$0xff]
  %v1196 = vld [vmem:[%s3 + $0x130] sm:$0xff]
  %v1197 = vld [vmem:[%s3 + $0x138] sm:$0xff]
  %v1198 = vld [vmem:[%s3 + $0x140] sm:$0xff]
  %v1199 = vld [vmem:[%s3 + $0x148] sm:$0xff]
  %v1200 = vld [vmem:[%s3 + $0x150] sm:$0xff]
  %v1201 = vld [vmem:[%s3 + $0x158] sm:$0xff]
  %v1202 = vld [vmem:[%s3 + $0x160] sm:$0xff]
  %v1203 = vld [vmem:[%s3 + $0x168] sm:$0xff]
  %v1204 = vld [vmem:[%s3 + $0x170] sm:$0xff]
  %v1205 = vld [vmem:[%s3 + $0x178] sm:$0xff]
  %v1206 = vld [vmem:[%s3 + $0x180] sm:$0xff]
  %v1207 = vld [vmem:[%s3 + $0x188] sm:$0xff]
  %v1208 = vld [vmem:[%s3 + $0x190] sm:$0xff]
  %v1209 = vld [vmem:[%s3 + $0x198] sm:$0xff]
  %v1210 = vld [vmem:[%s3 + $0x1a0] sm:$0xff]
  %v1211 = vld [vmem:[%s3 + $0x1a8] sm:$0xff]
  %v1212 = vld [vmem:[%s3 + $0x1b0] sm:$0xff]
  %v1213 = vld [vmem:[%s3 + $0x1b8] sm:$0xff]
  %v1214 = vld [vmem:[%s3 + $0x1c0] sm:$0xff]
  %v1215 = vld [vmem:[%s3 + $0x1c8] sm:$0xff]
  %v1216 = vld [vmem:[%s3 + $0x1d0] sm:$0xff]
  %v1217 = vld [vmem:[%s3 + $0x1d8] sm:$0xff]
  %v1218 = vld [vmem:[%s3 + $0x1e0] sm:$0xff]
  %v1219 = vld [vmem:[%s3 + $0x1e8] sm:$0xff]
  %v1220 = vld [vmem:[%s3 + $0x1f0] sm:$0xff]
  %v1221 = vld [vmem:[%s3 + $0x1f8] sm:$0xff]
  %1222 = vmatprep.subr.mxu0 %v1159
  %1223 = vmatpush1.msra.mxu0 %v1158
  %1224 = vmatprep.subr.mxu0 %v1163
  %1225 = vmatpush1.msra.mxu0 %v1162
  %1226 = vmatprep.subr.mxu0 %v1167
  %1227 = vmatpush1.msra.mxu0 %v1166
  %1228 = vmatprep.subr.mxu0 %v1171
  %1229 = vmatpush1.msra.mxu0 %v1170
  %1230 = vmatprep.subr.mxu0 %v1175
  %1231 = vmatpush1.msra.mxu0 %v1174
  %1232 = vmatprep.subr.mxu0 %v1179
  %1233 = vmatpush1.msra.mxu0 %v1178
  %1234 = vmatprep.subr.mxu0 %v1183
  %1235 = vmatpush1.msra.mxu0 %v1182
  %1236 = vmatprep.subr.mxu0 %v1187
  %1237 = vmatpush1.msra.mxu0 %v1186
  %1238 = vmatprep.subr.mxu0 %v1191
  %1239 = vmatpush1.msra.mxu0 %v1190
  %1240 = vmatprep.subr.mxu0 %v1195
  %1241 = vmatpush1.msra.mxu0 %v1194
  %1242 = vmatprep.subr.mxu0 %v1199
  %1243 = vmatpush1.msra.mxu0 %v1198
  %1244 = vmatprep.subr.mxu0 %v1203
  %1245 = vmatpush1.msra.mxu0 %v1202
  %1246 = vmatprep.subr.mxu0 %v1207
  %1247 = vmatpush1.msra.mxu0 %v1206
  %1248 = vmatprep.subr.mxu0 %v1211
  %1249 = vmatpush1.msra.mxu0 %v1210
  %1250 = vmatprep.subr.mxu0 %v1215
  %1251 = vmatpush1.msra.mxu0 %v1214
  %1252 = vmatprep.subr.mxu0 %v1219
  %1253 = vmatpush1.msra.mxu0 %v1218
  %1254 = vmatprep.subr.mxu0 0.0
  %1255 = vmatpush1.msra.mxu0 0.0
  %1256 = vmatprep.subr.mxu0 0.0
  %1257 = vmatpush1.msra.mxu0 0.0
  %1258 = vmatprep.subr.mxu0 0.0
  %1259 = vmatpush1.msra.mxu0 0.0
  %1260 = vmatprep.subr.mxu0 0.0
  %1261 = vmatpush1.msra.mxu0 0.0
  %1262 = vmatprep.subr.mxu0 0.0
  %1263 = vmatpush1.msra.mxu0 0.0
  %1264 = vmatprep.subr.mxu0 0.0
  %1265 = vmatpush1.msra.mxu0 0.0
  %1266 = vmatprep.subr.mxu0 0.0
  %1267 = vmatpush1.msra.mxu0 0.0
  %1268 = vmatprep.subr.mxu0 0.0
  %1269 = vmatpush1.msra.mxu0 0.0
  %1270 = vmatprep.subr.mxu0 0.0
  %1271 = vmatpush1.msra.mxu0 0.0
  %1272 = vmatprep.subr.mxu0 0.0
  %1273 = vmatpush1.msra.mxu0 0.0
  %1274 = vmatprep.subr.mxu0 0.0
  %1275 = vmatpush1.msra.mxu0 0.0
  %1276 = vmatprep.subr.mxu0 0.0
  %1277 = vmatpush1.msra.mxu0 0.0
  %1278 = vmatprep.subr.mxu0 0.0
  %1279 = vmatpush1.msra.mxu0 0.0
  %1280 = vmatprep.subr.mxu0 0.0
  %1281 = vmatpush1.msra.mxu0 0.0
  %1282 = vmatprep.subr.mxu0 0.0
  %1283 = vmatpush1.msra.mxu0 0.0
  %1284 = vmatprep.subr.mxu0 0.0
  %1285 = vmatpush1.msra.mxu0 0.0
  %1286 = vmatprep.mubr.f32.mxu0 0.0
  %1287 = vmatmul.mubr.f32.gmra.mrb[0].mxu0 %v1140
  %v1288 = vpop.f32.mrb[0].mxu0
  %v1289 = vadd.f32 0.0, %v1288
  %v1290 = vpop.f32.mrb[0].mxu0
  %v1291 = vadd.f32 0.0, %v1290
  %1292 = vdwg.mxu0
  %1293 = vmatprep.subr.mxu0 %v1161
  %1294 = vmatpush1.msra.mxu0 %v1160
  %1295 = vmatprep.subr.mxu0 %v1165
  %1296 = vmatpush1.msra.mxu0 %v1164
  %1297 = vmatprep.subr.mxu0 %v1169
  %1298 = vmatpush1.msra.mxu0 %v1168
  %1299 = vmatprep.subr.mxu0 %v1173
  %1300 = vmatpush1.msra.mxu0 %v1172
  %1301 = vmatprep.subr.mxu0 %v1177
  %1302 = vmatpush1.msra.mxu0 %v1176
  %1303 = vmatprep.subr.mxu0 %v1181
  %1304 = vmatpush1.msra.mxu0 %v1180
  %1305 = vmatprep.subr.mxu0 %v1185
  %1306 = vmatpush1.msra.mxu0 %v1184
  %1307 = vmatprep.subr.mxu0 %v1189
  %1308 = vmatpush1.msra.mxu0 %v1188
  %1309 = vmatprep.subr.mxu0 %v1193
  %1310 = vmatpush1.msra.mxu0 %v1192
  %1311 = vmatprep.subr.mxu0 %v1197
  %1312 = vmatpush1.msra.mxu0 %v1196
  %1313 = vmatprep.subr.mxu0 %v1201
  %1314 = vmatpush1.msra.mxu0 %v1200
  %1315 = vmatprep.subr.mxu0 %v1205
  %1316 = vmatpush1.msra.mxu0 %v1204
  %1317 = vmatprep.subr.mxu0 %v1209
  %1318 = vmatpush1.msra.mxu0 %v1208
  %1319 = vmatprep.subr.mxu0 %v1213
  %1320 = vmatpush1.msra.mxu0 %v1212
  %1321 = vmatprep.subr.mxu0 %v1217
  %1322 = vmatpush1.msra.mxu0 %v1216
  %1323 = vmatprep.subr.mxu0 %v1221
  %1324 = vmatpush1.msra.mxu0 %v1220
  %1325 = vmatprep.subr.mxu0 0.0
  %1326 = vmatpush1.msra.mxu0 0.0
  %1327 = vmatprep.subr.mxu0 0.0
  %1328 = vmatpush1.msra.mxu0 0.0
  %1329 = vmatprep.subr.mxu0 0.0
  %1330 = vmatpush1.msra.mxu0 0.0
  %1331 = vmatprep.subr.mxu0 0.0
  %1332 = vmatpush1.msra.mxu0 0.0
  %1333 = vmatprep.subr.mxu0 0.0
  %1334 = vmatpush1.msra.mxu0 0.0
  %1335 = vmatprep.subr.mxu0 0.0
  %1336 = vmatpush1.msra.mxu0 0.0
  %1337 = vmatprep.subr.mxu0 0.0
  %1338 = vmatpush1.msra.mxu0 0.0
  %1339 = vmatprep.subr.mxu0 0.0
  %1340 = vmatpush1.msra.mxu0 0.0
  %1341 = vmatprep.subr.mxu0 0.0
  %1342 = vmatpush1.msra.mxu0 0.0
  %1343 = vmatprep.subr.mxu0 0.0
  %1344 = vmatpush1.msra.mxu0 0.0
  %1345 = vmatprep.subr.mxu0 0.0
  %1346 = vmatpush1.msra.mxu0 0.0
  %1347 = vmatprep.subr.mxu0 0.0
  %1348 = vmatpush1.msra.mxu0 0.0
  %1349 = vmatprep.subr.mxu0 0.0
  %1350 = vmatpush1.msra.mxu0 0.0
  %1351 = vmatprep.subr.mxu0 0.0
  %1352 = vmatpush1.msra.mxu0 0.0
  %1353 = vmatprep.subr.mxu0 0.0
  %1354 = vmatpush1.msra.mxu0 0.0
  %1355 = vmatprep.subr.mxu0 0.0
  %1356 = vmatpush1.msra.mxu0 0.0
  %1357 = vmatprep.mubr.f32.mxu0 0.0
  %1358 = vmatmul.mubr.f32.gmra.mrb[0].mxu0 %v1140
  %v1359 = vpop.f32.mrb[0].mxu0
  %v1360 = vadd.f32 0.0, %v1359
  %v1361 = vpop.f32.mrb[0].mxu0
  %v1362 = vadd.f32 0.0, %v1361
  %1363 = vdwg.mxu0
  %v1368 = vcombine.low %v1289, %v1291
  %v1369 = vcombine.low %v1360, %v1362
  %v1371 = vunpack.c.l.s4 1983009808
  %v1372 = vunpack.c.0.s8 %v1371
  %v1373 = vlaneseq
  %v1374 = vshrl.u32 %v1373, 7
  %v1375 = vsub.s32 %v1372, %v1374
  %v1376 = vrot.slane %v1368, %v1375
  %v1378 = vunpack.c.l.s4 1983009808
  %v1379 = vunpack.c.0.s8 %v1378
  %v1380 = vlaneseq
  %v1381 = vshrl.u32 %v1380, 7
  %v1382 = vsub.s32 %v1379, %v1381
  %v1383 = vrot.slane %v1369, %v1382
  %v1384 = vcombine.low %v1376, %v1383
  %v1386 = vadd.f32 %v1157, %v1384
  %v1387 = vmul.f32 %v1386, 0.5
  %v1388 = vtanh.pop %v1387
  %v1389 = vmul.f32 %v1388, 0.5
  %v1390 = vadd.f32 %v1389, 0.5
  %v1392 = vrot.slane %v1386, 2
  %v1394 = vmul.f32 %v1392, 0.5
  %v1395 = vtanh.pop %v1394
  %v1396 = vmul.f32 %v1395, 0.5
  %v1397 = vadd.f32 %v1396, 0.5
  %v1398 = vrot.slane %v1386, 4
  %v1400 = vtanh.pop %v1398
  %v1401 = vrot.slane %v1386, 6
  %v1403 = vmul.f32 %v1401, 0.5
  %v1404 = vtanh.pop %v1403
  %v1405 = vmul.f32 %v1404, 0.5
  %v1406 = vadd.f32 %v1405, 0.5
  %v1407 = vmul.f32 %v1397, %v1138
  %v1408 = vmul.f32 %v1390, %v1400
  %v1409 = vadd.f32 %v1407, %v1408
  %v1410 = vtanh.pop %v1409
  %v1411 = vmul.f32 %v1406, %v1410
  %s1412 = scalar_lea.vmem [#allocation3], 4
  %1413 = vst.msk [vmem:[%s1412] sm:$0x3] %vm870, %v1411
  %v1416 = vunpack.c.l.s4 1983009808
  %v1417 = vunpack.c.0.s8 %v1416
  %v1418 = vlaneseq
  %v1419 = vshrl.u32 %v1418, 7
  %v1420 = vsub.s32 %v1417, %v1419
  %v1421 = vrot.slane %v1411, %v1420
  %1422 = vrot.lane.b32.xlu0 %v1421, 64
  %v1423 = vpop.permute.xlu0 %1422
  %s1425 = scalar_lea.vmem [#allocation4], 22
  %1426 = vst.msk [vmem:[%s1425] sm:$0x3] %vm870, %v1423
  %s1427 = scalar_lea.vmem [#allocation2], 24
  %v1428 = vld [vmem:[%s1427] sm:$0xff]
  %v1429 = vld [vmem:[%s3] sm:$0xff]
  %v1430 = vld [vmem:[%s3 + $0x8] sm:$0xff]
  %v1431 = vld [vmem:[%s3 + $0x10] sm:$0xff]
  %v1432 = vld [vmem:[%s3 + $0x18] sm:$0xff]
  %v1433 = vld [vmem:[%s3 + $0x20] sm:$0xff]
  %v1434 = vld [vmem:[%s3 + $0x28] sm:$0xff]
  %v1435 = vld [vmem:[%s3 + $0x30] sm:$0xff]
  %v1436 = vld [vmem:[%s3 + $0x38] sm:$0xff]
  %v1437 = vld [vmem:[%s3 + $0x40] sm:$0xff]
  %v1438 = vld [vmem:[%s3 + $0x48] sm:$0xff]
  %v1439 = vld [vmem:[%s3 + $0x50] sm:$0xff]
  %v1440 = vld [vmem:[%s3 + $0x58] sm:$0xff]
  %v1441 = vld [vmem:[%s3 + $0x60] sm:$0xff]
  %v1442 = vld [vmem:[%s3 + $0x68] sm:$0xff]
  %v1443 = vld [vmem:[%s3 + $0x70] sm:$0xff]
  %v1444 = vld [vmem:[%s3 + $0x78] sm:$0xff]
  %v1445 = vld [vmem:[%s3 + $0x80] sm:$0xff]
  %v1446 = vld [vmem:[%s3 + $0x88] sm:$0xff]
  %v1447 = vld [vmem:[%s3 + $0x90] sm:$0xff]
  %v1448 = vld [vmem:[%s3 + $0x98] sm:$0xff]
  %v1449 = vld [vmem:[%s3 + $0xa0] sm:$0xff]
  %v1450 = vld [vmem:[%s3 + $0xa8] sm:$0xff]
  %v1451 = vld [vmem:[%s3 + $0xb0] sm:$0xff]
  %v1452 = vld [vmem:[%s3 + $0xb8] sm:$0xff]
  %v1453 = vld [vmem:[%s3 + $0xc0] sm:$0xff]
  %v1454 = vld [vmem:[%s3 + $0xc8] sm:$0xff]
  %v1455 = vld [vmem:[%s3 + $0xd0] sm:$0xff]
  %v1456 = vld [vmem:[%s3 + $0xd8] sm:$0xff]
  %v1457 = vld [vmem:[%s3 + $0xe0] sm:$0xff]
  %v1458 = vld [vmem:[%s3 + $0xe8] sm:$0xff]
  %v1459 = vld [vmem:[%s3 + $0xf0] sm:$0xff]
  %v1460 = vld [vmem:[%s3 + $0xf8] sm:$0xff]
  %v1461 = vld [vmem:[%s3 + $0x100] sm:$0xff]
  %v1462 = vld [vmem:[%s3 + $0x108] sm:$0xff]
  %v1463 = vld [vmem:[%s3 + $0x110] sm:$0xff]
  %v1464 = vld [vmem:[%s3 + $0x118] sm:$0xff]
  %v1465 = vld [vmem:[%s3 + $0x120] sm:$0xff]
  %v1466 = vld [vmem:[%s3 + $0x128] sm:$0xff]
  %v1467 = vld [vmem:[%s3 + $0x130] sm:$0xff]
  %v1468 = vld [vmem:[%s3 + $0x138] sm:$0xff]
  %v1469 = vld [vmem:[%s3 + $0x140] sm:$0xff]
  %v1470 = vld [vmem:[%s3 + $0x148] sm:$0xff]
  %v1471 = vld [vmem:[%s3 + $0x150] sm:$0xff]
  %v1472 = vld [vmem:[%s3 + $0x158] sm:$0xff]
  %v1473 = vld [vmem:[%s3 + $0x160] sm:$0xff]
  %v1474 = vld [vmem:[%s3 + $0x168] sm:$0xff]
  %v1475 = vld [vmem:[%s3 + $0x170] sm:$0xff]
  %v1476 = vld [vmem:[%s3 + $0x178] sm:$0xff]
  %v1477 = vld [vmem:[%s3 + $0x180] sm:$0xff]
  %v1478 = vld [vmem:[%s3 + $0x188] sm:$0xff]
  %v1479 = vld [vmem:[%s3 + $0x190] sm:$0xff]
  %v1480 = vld [vmem:[%s3 + $0x198] sm:$0xff]
  %v1481 = vld [vmem:[%s3 + $0x1a0] sm:$0xff]
  %v1482 = vld [vmem:[%s3 + $0x1a8] sm:$0xff]
  %v1483 = vld [vmem:[%s3 + $0x1b0] sm:$0xff]
  %v1484 = vld [vmem:[%s3 + $0x1b8] sm:$0xff]
  %v1485 = vld [vmem:[%s3 + $0x1c0] sm:$0xff]
  %v1486 = vld [vmem:[%s3 + $0x1c8] sm:$0xff]
  %v1487 = vld [vmem:[%s3 + $0x1d0] sm:$0xff]
  %v1488 = vld [vmem:[%s3 + $0x1d8] sm:$0xff]
  %v1489 = vld [vmem:[%s3 + $0x1e0] sm:$0xff]
  %v1490 = vld [vmem:[%s3 + $0x1e8] sm:$0xff]
  %v1491 = vld [vmem:[%s3 + $0x1f0] sm:$0xff]
  %v1492 = vld [vmem:[%s3 + $0x1f8] sm:$0xff]
  %1493 = vmatprep.subr.mxu0 %v1430
  %1494 = vmatpush1.msra.mxu0 %v1429
  %1495 = vmatprep.subr.mxu0 %v1434
  %1496 = vmatpush1.msra.mxu0 %v1433
  %1497 = vmatprep.subr.mxu0 %v1438
  %1498 = vmatpush1.msra.mxu0 %v1437
  %1499 = vmatprep.subr.mxu0 %v1442
  %1500 = vmatpush1.msra.mxu0 %v1441
  %1501 = vmatprep.subr.mxu0 %v1446
  %1502 = vmatpush1.msra.mxu0 %v1445
  %1503 = vmatprep.subr.mxu0 %v1450
  %1504 = vmatpush1.msra.mxu0 %v1449
  %1505 = vmatprep.subr.mxu0 %v1454
  %1506 = vmatpush1.msra.mxu0 %v1453
  %1507 = vmatprep.subr.mxu0 %v1458
  %1508 = vmatpush1.msra.mxu0 %v1457
  %1509 = vmatprep.subr.mxu0 %v1462
  %1510 = vmatpush1.msra.mxu0 %v1461
  %1511 = vmatprep.subr.mxu0 %v1466
  %1512 = vmatpush1.msra.mxu0 %v1465
  %1513 = vmatprep.subr.mxu0 %v1470
  %1514 = vmatpush1.msra.mxu0 %v1469
  %1515 = vmatprep.subr.mxu0 %v1474
  %1516 = vmatpush1.msra.mxu0 %v1473
  %1517 = vmatprep.subr.mxu0 %v1478
  %1518 = vmatpush1.msra.mxu0 %v1477
  %1519 = vmatprep.subr.mxu0 %v1482
  %1520 = vmatpush1.msra.mxu0 %v1481
  %1521 = vmatprep.subr.mxu0 %v1486
  %1522 = vmatpush1.msra.mxu0 %v1485
  %1523 = vmatprep.subr.mxu0 %v1490
  %1524 = vmatpush1.msra.mxu0 %v1489
  %1525 = vmatprep.subr.mxu0 0.0
  %1526 = vmatpush1.msra.mxu0 0.0
  %1527 = vmatprep.subr.mxu0 0.0
  %1528 = vmatpush1.msra.mxu0 0.0
  %1529 = vmatprep.subr.mxu0 0.0
  %1530 = vmatpush1.msra.mxu0 0.0
  %1531 = vmatprep.subr.mxu0 0.0
  %1532 = vmatpush1.msra.mxu0 0.0
  %1533 = vmatprep.subr.mxu0 0.0
  %1534 = vmatpush1.msra.mxu0 0.0
  %1535 = vmatprep.subr.mxu0 0.0
  %1536 = vmatpush1.msra.mxu0 0.0
  %1537 = vmatprep.subr.mxu0 0.0
  %1538 = vmatpush1.msra.mxu0 0.0
  %1539 = vmatprep.subr.mxu0 0.0
  %1540 = vmatpush1.msra.mxu0 0.0
  %1541 = vmatprep.subr.mxu0 0.0
  %1542 = vmatpush1.msra.mxu0 0.0
  %1543 = vmatprep.subr.mxu0 0.0
  %1544 = vmatpush1.msra.mxu0 0.0
  %1545 = vmatprep.subr.mxu0 0.0
  %1546 = vmatpush1.msra.mxu0 0.0
  %1547 = vmatprep.subr.mxu0 0.0
  %1548 = vmatpush1.msra.mxu0 0.0
  %1549 = vmatprep.subr.mxu0 0.0
  %1550 = vmatpush1.msra.mxu0 0.0
  %1551 = vmatprep.subr.mxu0 0.0
  %1552 = vmatpush1.msra.mxu0 0.0
  %1553 = vmatprep.subr.mxu0 0.0
  %1554 = vmatpush1.msra.mxu0 0.0
  %1555 = vmatprep.subr.mxu0 0.0
  %1556 = vmatpush1.msra.mxu0 0.0
  %1557 = vmatprep.mubr.f32.mxu0 0.0
  %1558 = vmatmul.mubr.f32.gmra.mrb[0].mxu0 %v1411
  %v1559 = vpop.f32.mrb[0].mxu0
  %v1560 = vadd.f32 0.0, %v1559
  %v1561 = vpop.f32.mrb[0].mxu0
  %v1562 = vadd.f32 0.0, %v1561
  %1563 = vdwg.mxu0
  %1564 = vmatprep.subr.mxu0 %v1432
  %1565 = vmatpush1.msra.mxu0 %v1431
  %1566 = vmatprep.subr.mxu0 %v1436
  %1567 = vmatpush1.msra.mxu0 %v1435
  %1568 = vmatprep.subr.mxu0 %v1440
  %1569 = vmatpush1.msra.mxu0 %v1439
  %1570 = vmatprep.subr.mxu0 %v1444
  %1571 = vmatpush1.msra.mxu0 %v1443
  %1572 = vmatprep.subr.mxu0 %v1448
  %1573 = vmatpush1.msra.mxu0 %v1447
  %1574 = vmatprep.subr.mxu0 %v1452
  %1575 = vmatpush1.msra.mxu0 %v1451
  %1576 = vmatprep.subr.mxu0 %v1456
  %1577 = vmatpush1.msra.mxu0 %v1455
  %1578 = vmatprep.subr.mxu0 %v1460
  %1579 = vmatpush1.msra.mxu0 %v1459
  %1580 = vmatprep.subr.mxu0 %v1464
  %1581 = vmatpush1.msra.mxu0 %v1463
  %1582 = vmatprep.subr.mxu0 %v1468
  %1583 = vmatpush1.msra.mxu0 %v1467
  %1584 = vmatprep.subr.mxu0 %v1472
  %1585 = vmatpush1.msra.mxu0 %v1471
  %1586 = vmatprep.subr.mxu0 %v1476
  %1587 = vmatpush1.msra.mxu0 %v1475
  %1588 = vmatprep.subr.mxu0 %v1480
  %1589 = vmatpush1.msra.mxu0 %v1479
  %1590 = vmatprep.subr.mxu0 %v1484
  %1591 = vmatpush1.msra.mxu0 %v1483
  %1592 = vmatprep.subr.mxu0 %v1488
  %1593 = vmatpush1.msra.mxu0 %v1487
  %1594 = vmatprep.subr.mxu0 %v1492
  %1595 = vmatpush1.msra.mxu0 %v1491
  %1596 = vmatprep.subr.mxu0 0.0
  %1597 = vmatpush1.msra.mxu0 0.0
  %1598 = vmatprep.subr.mxu0 0.0
  %1599 = vmatpush1.msra.mxu0 0.0
  %1600 = vmatprep.subr.mxu0 0.0
  %1601 = vmatpush1.msra.mxu0 0.0
  %1602 = vmatprep.subr.mxu0 0.0
  %1603 = vmatpush1.msra.mxu0 0.0
  %1604 = vmatprep.subr.mxu0 0.0
  %1605 = vmatpush1.msra.mxu0 0.0
  %1606 = vmatprep.subr.mxu0 0.0
  %1607 = vmatpush1.msra.mxu0 0.0
  %1608 = vmatprep.subr.mxu0 0.0
  %1609 = vmatpush1.msra.mxu0 0.0
  %1610 = vmatprep.subr.mxu0 0.0
  %1611 = vmatpush1.msra.mxu0 0.0
  %1612 = vmatprep.subr.mxu0 0.0
  %1613 = vmatpush1.msra.mxu0 0.0
  %1614 = vmatprep.subr.mxu0 0.0
  %1615 = vmatpush1.msra.mxu0 0.0
  %1616 = vmatprep.subr.mxu0 0.0
  %1617 = vmatpush1.msra.mxu0 0.0
  %1618 = vmatprep.subr.mxu0 0.0
  %1619 = vmatpush1.msra.mxu0 0.0
  %1620 = vmatprep.subr.mxu0 0.0
  %1621 = vmatpush1.msra.mxu0 0.0
  %1622 = vmatprep.subr.mxu0 0.0
  %1623 = vmatpush1.msra.mxu0 0.0
  %1624 = vmatprep.subr.mxu0 0.0
  %1625 = vmatpush1.msra.mxu0 0.0
  %1626 = vmatprep.subr.mxu0 0.0
  %1627 = vmatpush1.msra.mxu0 0.0
  %1628 = vmatprep.mubr.f32.mxu0 0.0
  %1629 = vmatmul.mubr.f32.gmra.mrb[0].mxu0 %v1411
  %v1630 = vpop.f32.mrb[0].mxu0
  %v1631 = vadd.f32 0.0, %v1630
  %v1632 = vpop.f32.mrb[0].mxu0
  %v1633 = vadd.f32 0.0, %v1632
  %1634 = vdwg.mxu0
  %v1639 = vcombine.low %v1560, %v1562
  %v1640 = vcombine.low %v1631, %v1633
  %v1642 = vunpack.c.l.s4 1983009808
  %v1643 = vunpack.c.0.s8 %v1642
  %v1644 = vlaneseq
  %v1645 = vshrl.u32 %v1644, 7
  %v1646 = vsub.s32 %v1643, %v1645
  %v1647 = vrot.slane %v1639, %v1646
  %v1649 = vunpack.c.l.s4 1983009808
  %v1650 = vunpack.c.0.s8 %v1649
  %v1651 = vlaneseq
  %v1652 = vshrl.u32 %v1651, 7
  %v1653 = vsub.s32 %v1650, %v1652
  %v1654 = vrot.slane %v1640, %v1653
  %v1655 = vcombine.low %v1647, %v1654
  %v1657 = vadd.f32 %v1428, %v1655
  %v1658 = vmul.f32 %v1657, 0.5
  %v1659 = vtanh.pop %v1658
  %v1660 = vmul.f32 %v1659, 0.5
  %v1661 = vadd.f32 %v1660, 0.5
  %v1663 = vrot.slane %v1657, 2
  %v1665 = vmul.f32 %v1663, 0.5
  %v1666 = vtanh.pop %v1665
  %v1667 = vmul.f32 %v1666, 0.5
  %v1668 = vadd.f32 %v1667, 0.5
  %v1669 = vrot.slane %v1657, 4
  %v1671 = vtanh.pop %v1669
  %v1672 = vrot.slane %v1657, 6
  %v1674 = vmul.f32 %v1672, 0.5
  %v1675 = vtanh.pop %v1674
  %v1676 = vmul.f32 %v1675, 0.5
  %v1677 = vadd.f32 %v1676, 0.5
  %v1678 = vmul.f32 %v1668, %v1409
  %v1679 = vmul.f32 %v1661, %v1671
  %v1680 = vadd.f32 %v1678, %v1679
  %v1681 = vtanh.pop %v1680
  %v1682 = vmul.f32 %v1677, %v1681
  %s1683 = scalar_lea.vmem [#allocation3], 6
  %1684 = vst.msk [vmem:[%s1683] sm:$0x3] %vm870, %v1682
  %v1687 = vunpack.c.l.s4 1983009808
  %v1688 = vunpack.c.0.s8 %v1687
  %v1689 = vlaneseq
  %v1690 = vshrl.u32 %v1689, 7
  %v1691 = vsub.s32 %v1688, %v1690
  %v1692 = vrot.slane %v1682, %v1691
  %1693 = vrot.lane.b32.xlu0 %v1692, 64
  %v1694 = vpop.permute.xlu0 %1693
  %s1696 = scalar_lea.vmem [#allocation4], 20
  %1697 = vst.msk [vmem:[%s1696] sm:$0x3] %vm870, %v1694
  %s1698 = scalar_lea.vmem [#allocation2], 32
  %v1699 = vld [vmem:[%s1698] sm:$0xff]
  %v1700 = vld [vmem:[%s3] sm:$0xff]
  %v1701 = vld [vmem:[%s3 + $0x8] sm:$0xff]
  %v1702 = vld [vmem:[%s3 + $0x10] sm:$0xff]
  %v1703 = vld [vmem:[%s3 + $0x18] sm:$0xff]
  %v1704 = vld [vmem:[%s3 + $0x20] sm:$0xff]
  %v1705 = vld [vmem:[%s3 + $0x28] sm:$0xff]
  %v1706 = vld [vmem:[%s3 + $0x30] sm:$0xff]
  %v1707 = vld [vmem:[%s3 + $0x38] sm:$0xff]
  %v1708 = vld [vmem:[%s3 + $0x40] sm:$0xff]
  %v1709 = vld [vmem:[%s3 + $0x48] sm:$0xff]
  %v1710 = vld [vmem:[%s3 + $0x50] sm:$0xff]
  %v1711 = vld [vmem:[%s3 + $0x58] sm:$0xff]
  %v1712 = vld [vmem:[%s3 + $0x60] sm:$0xff]
  %v1713 = vld [vmem:[%s3 + $0x68] sm:$0xff]
  %v1714 = vld [vmem:[%s3 + $0x70] sm:$0xff]
  %v1715 = vld [vmem:[%s3 + $0x78] sm:$0xff]
  %v1716 = vld [vmem:[%s3 + $0x80] sm:$0xff]
  %v1717 = vld [vmem:[%s3 + $0x88] sm:$0xff]
  %v1718 = vld [vmem:[%s3 + $0x90] sm:$0xff]
  %v1719 = vld [vmem:[%s3 + $0x98] sm:$0xff]
  %v1720 = vld [vmem:[%s3 + $0xa0] sm:$0xff]
  %v1721 = vld [vmem:[%s3 + $0xa8] sm:$0xff]
  %v1722 = vld [vmem:[%s3 + $0xb0] sm:$0xff]
  %v1723 = vld [vmem:[%s3 + $0xb8] sm:$0xff]
  %v1724 = vld [vmem:[%s3 + $0xc0] sm:$0xff]
  %v1725 = vld [vmem:[%s3 + $0xc8] sm:$0xff]
  %v1726 = vld [vmem:[%s3 + $0xd0] sm:$0xff]
  %v1727 = vld [vmem:[%s3 + $0xd8] sm:$0xff]
  %v1728 = vld [vmem:[%s3 + $0xe0] sm:$0xff]
  %v1729 = vld [vmem:[%s3 + $0xe8] sm:$0xff]
  %v1730 = vld [vmem:[%s3 + $0xf0] sm:$0xff]
  %v1731 = vld [vmem:[%s3 + $0xf8] sm:$0xff]
  %v1732 = vld [vmem:[%s3 + $0x100] sm:$0xff]
  %v1733 = vld [vmem:[%s3 + $0x108] sm:$0xff]
  %v1734 = vld [vmem:[%s3 + $0x110] sm:$0xff]
  %v1735 = vld [vmem:[%s3 + $0x118] sm:$0xff]
  %v1736 = vld [vmem:[%s3 + $0x120] sm:$0xff]
  %v1737 = vld [vmem:[%s3 + $0x128] sm:$0xff]
  %v1738 = vld [vmem:[%s3 + $0x130] sm:$0xff]
  %v1739 = vld [vmem:[%s3 + $0x138] sm:$0xff]
  %v1740 = vld [vmem:[%s3 + $0x140] sm:$0xff]
  %v1741 = vld [vmem:[%s3 + $0x148] sm:$0xff]
  %v1742 = vld [vmem:[%s3 + $0x150] sm:$0xff]
  %v1743 = vld [vmem:[%s3 + $0x158] sm:$0xff]
  %v1744 = vld [vmem:[%s3 + $0x160] sm:$0xff]
  %v1745 = vld [vmem:[%s3 + $0x168] sm:$0xff]
  %v1746 = vld [vmem:[%s3 + $0x170] sm:$0xff]
  %v1747 = vld [vmem:[%s3 + $0x178] sm:$0xff]
  %v1748 = vld [vmem:[%s3 + $0x180] sm:$0xff]
  %v1749 = vld [vmem:[%s3 + $0x188] sm:$0xff]
  %v1750 = vld [vmem:[%s3 + $0x190] sm:$0xff]
  %v1751 = vld [vmem:[%s3 + $0x198] sm:$0xff]
  %v1752 = vld [vmem:[%s3 + $0x1a0] sm:$0xff]
  %v1753 = vld [vmem:[%s3 + $0x1a8] sm:$0xff]
  %v1754 = vld [vmem:[%s3 + $0x1b0] sm:$0xff]
  %v1755 = vld [vmem:[%s3 + $0x1b8] sm:$0xff]
  %v1756 = vld [vmem:[%s3 + $0x1c0] sm:$0xff]
  %v1757 = vld [vmem:[%s3 + $0x1c8] sm:$0xff]
  %v1758 = vld [vmem:[%s3 + $0x1d0] sm:$0xff]
  %v1759 = vld [vmem:[%s3 + $0x1d8] sm:$0xff]
  %v1760 = vld [vmem:[%s3 + $0x1e0] sm:$0xff]
  %v1761 = vld [vmem:[%s3 + $0x1e8] sm:$0xff]
  %v1762 = vld [vmem:[%s3 + $0x1f0] sm:$0xff]
  %v1763 = vld [vmem:[%s3 + $0x1f8] sm:$0xff]
  %1764 = vmatprep.subr.mxu0 %v1701
  %1765 = vmatpush1.msra.mxu0 %v1700
  %1766 = vmatprep.subr.mxu0 %v1705
  %1767 = vmatpush1.msra.mxu0 %v1704
  %1768 = vmatprep.subr.mxu0 %v1709
  %1769 = vmatpush1.msra.mxu0 %v1708
  %1770 = vmatprep.subr.mxu0 %v1713
  %1771 = vmatpush1.msra.mxu0 %v1712
  %1772 = vmatprep.subr.mxu0 %v1717
  %1773 = vmatpush1.msra.mxu0 %v1716
  %1774 = vmatprep.subr.mxu0 %v1721
  %1775 = vmatpush1.msra.mxu0 %v1720
  %1776 = vmatprep.subr.mxu0 %v1725
  %1777 = vmatpush1.msra.mxu0 %v1724
  %1778 = vmatprep.subr.mxu0 %v1729
  %1779 = vmatpush1.msra.mxu0 %v1728
  %1780 = vmatprep.subr.mxu0 %v1733
  %1781 = vmatpush1.msra.mxu0 %v1732
  %1782 = vmatprep.subr.mxu0 %v1737
  %1783 = vmatpush1.msra.mxu0 %v1736
  %1784 = vmatprep.subr.mxu0 %v1741
  %1785 = vmatpush1.msra.mxu0 %v1740
  %1786 = vmatprep.subr.mxu0 %v1745
  %1787 = vmatpush1.msra.mxu0 %v1744
  %1788 = vmatprep.subr.mxu0 %v1749
  %1789 = vmatpush1.msra.mxu0 %v1748
  %1790 = vmatprep.subr.mxu0 %v1753
  %1791 = vmatpush1.msra.mxu0 %v1752
  %1792 = vmatprep.subr.mxu0 %v1757
  %1793 = vmatpush1.msra.mxu0 %v1756
  %1794 = vmatprep.subr.mxu0 %v1761
  %1795 = vmatpush1.msra.mxu0 %v1760
  %1796 = vmatprep.subr.mxu0 0.0
  %1797 = vmatpush1.msra.mxu0 0.0
  %1798 = vmatprep.subr.mxu0 0.0
  %1799 = vmatpush1.msra.mxu0 0.0
  %1800 = vmatprep.subr.mxu0 0.0
  %1801 = vmatpush1.msra.mxu0 0.0
  %1802 = vmatprep.subr.mxu0 0.0
  %1803 = vmatpush1.msra.mxu0 0.0
  %1804 = vmatprep.subr.mxu0 0.0
  %1805 = vmatpush1.msra.mxu0 0.0
  %1806 = vmatprep.subr.mxu0 0.0
  %1807 = vmatpush1.msra.mxu0 0.0
  %1808 = vmatprep.subr.mxu0 0.0
  %1809 = vmatpush1.msra.mxu0 0.0
  %1810 = vmatprep.subr.mxu0 0.0
  %1811 = vmatpush1.msra.mxu0 0.0
  %1812 = vmatprep.subr.mxu0 0.0
  %1813 = vmatpush1.msra.mxu0 0.0
  %1814 = vmatprep.subr.mxu0 0.0
  %1815 = vmatpush1.msra.mxu0 0.0
  %1816 = vmatprep.subr.mxu0 0.0
  %1817 = vmatpush1.msra.mxu0 0.0
  %1818 = vmatprep.subr.mxu0 0.0
  %1819 = vmatpush1.msra.mxu0 0.0
  %1820 = vmatprep.subr.mxu0 0.0
  %1821 = vmatpush1.msra.mxu0 0.0
  %1822 = vmatprep.subr.mxu0 0.0
  %1823 = vmatpush1.msra.mxu0 0.0
  %1824 = vmatprep.subr.mxu0 0.0
  %1825 = vmatpush1.msra.mxu0 0.0
  %1826 = vmatprep.subr.mxu0 0.0
  %1827 = vmatpush1.msra.mxu0 0.0
  %1828 = vmatprep.mubr.f32.mxu0 0.0
  %1829 = vmatmul.mubr.f32.gmra.mrb[0].mxu0 %v1682
  %v1830 = vpop.f32.mrb[0].mxu0
  %v1831 = vadd.f32 0.0, %v1830
  %v1832 = vpop.f32.mrb[0].mxu0
  %v1833 = vadd.f32 0.0, %v1832
  %1834 = vdwg.mxu0
  %1835 = vmatprep.subr.mxu0 %v1703
  %1836 = vmatpush1.msra.mxu0 %v1702
  %1837 = vmatprep.subr.mxu0 %v1707
  %1838 = vmatpush1.msra.mxu0 %v1706
  %1839 = vmatprep.subr.mxu0 %v1711
  %1840 = vmatpush1.msra.mxu0 %v1710
  %1841 = vmatprep.subr.mxu0 %v1715
  %1842 = vmatpush1.msra.mxu0 %v1714
  %1843 = vmatprep.subr.mxu0 %v1719
  %1844 = vmatpush1.msra.mxu0 %v1718
  %1845 = vmatprep.subr.mxu0 %v1723
  %1846 = vmatpush1.msra.mxu0 %v1722
  %1847 = vmatprep.subr.mxu0 %v1727
  %1848 = vmatpush1.msra.mxu0 %v1726
  %1849 = vmatprep.subr.mxu0 %v1731
  %1850 = vmatpush1.msra.mxu0 %v1730
  %1851 = vmatprep.subr.mxu0 %v1735
  %1852 = vmatpush1.msra.mxu0 %v1734
  %1853 = vmatprep.subr.mxu0 %v1739
  %1854 = vmatpush1.msra.mxu0 %v1738
  %1855 = vmatprep.subr.mxu0 %v1743
  %1856 = vmatpush1.msra.mxu0 %v1742
  %1857 = vmatprep.subr.mxu0 %v1747
  %1858 = vmatpush1.msra.mxu0 %v1746
  %1859 = vmatprep.subr.mxu0 %v1751
  %1860 = vmatpush1.msra.mxu0 %v1750
  %1861 = vmatprep.subr.mxu0 %v1755
  %1862 = vmatpush1.msra.mxu0 %v1754
  %1863 = vmatprep.subr.mxu0 %v1759
  %1864 = vmatpush1.msra.mxu0 %v1758
  %1865 = vmatprep.subr.mxu0 %v1763
  %1866 = vmatpush1.msra.mxu0 %v1762
  %1867 = vmatprep.subr.mxu0 0.0
  %1868 = vmatpush1.msra.mxu0 0.0
  %1869 = vmatprep.subr.mxu0 0.0
  %1870 = vmatpush1.msra.mxu0 0.0
  %1871 = vmatprep.subr.mxu0 0.0
  %1872 = vmatpush1.msra.mxu0 0.0
  %1873 = vmatprep.subr.mxu0 0.0
  %1874 = vmatpush1.msra.mxu0 0.0
  %1875 = vmatprep.subr.mxu0 0.0
  %1876 = vmatpush1.msra.mxu0 0.0
  %1877 = vmatprep.subr.mxu0 0.0
  %1878 = vmatpush1.msra.mxu0 0.0
  %1879 = vmatprep.subr.mxu0 0.0
  %1880 = vmatpush1.msra.mxu0 0.0
  %1881 = vmatprep.subr.mxu0 0.0
  %1882 = vmatpush1.msra.mxu0 0.0
  %1883 = vmatprep.subr.mxu0 0.0
  %1884 = vmatpush1.msra.mxu0 0.0
  %1885 = vmatprep.subr.mxu0 0.0
  %1886 = vmatpush1.msra.mxu0 0.0
  %1887 = vmatprep.subr.mxu0 0.0
  %1888 = vmatpush1.msra.mxu0 0.0
  %1889 = vmatprep.subr.mxu0 0.0
  %1890 = vmatpush1.msra.mxu0 0.0
  %1891 = vmatprep.subr.mxu0 0.0
  %1892 = vmatpush1.msra.mxu0 0.0
  %1893 = vmatprep.subr.mxu0 0.0
  %1894 = vmatpush1.msra.mxu0 0.0
  %1895 = vmatprep.subr.mxu0 0.0
  %1896 = vmatpush1.msra.mxu0 0.0
  %1897 = vmatprep.subr.mxu0 0.0
  %1898 = vmatpush1.msra.mxu0 0.0
  %1899 = vmatprep.mubr.f32.mxu0 0.0
  %1900 = vmatmul.mubr.f32.gmra.mrb[0].mxu0 %v1682
  %v1901 = vpop.f32.mrb[0].mxu0
  %v1902 = vadd.f32 0.0, %v1901
  %v1903 = vpop.f32.mrb[0].mxu0
  %v1904 = vadd.f32 0.0, %v1903
  %1905 = vdwg.mxu0
  %v1910 = vcombine.low %v1831, %v1833
  %v1911 = vcombine.low %v1902, %v1904
  %v1913 = vunpack.c.l.s4 1983009808
  %v1914 = vunpack.c.0.s8 %v1913
  %v1915 = vlaneseq
  %v1916 = vshrl.u32 %v1915, 7
  %v1917 = vsub.s32 %v1914, %v1916
  %v1918 = vrot.slane %v1910, %v1917
  %v1920 = vunpack.c.l.s4 1983009808
  %v1921 = vunpack.c.0.s8 %v1920
  %v1922 = vlaneseq
  %v1923 = vshrl.u32 %v1922, 7
  %v1924 = vsub.s32 %v1921, %v1923
  %v1925 = vrot.slane %v1911, %v1924
  %v1926 = vcombine.low %v1918, %v1925
  %v1928 = vadd.f32 %v1699, %v1926
  %v1929 = vmul.f32 %v1928, 0.5
  %v1930 = vtanh.pop %v1929
  %v1931 = vmul.f32 %v1930, 0.5
  %v1932 = vadd.f32 %v1931, 0.5
  %v1934 = vrot.slane %v1928, 2
  %v1936 = vmul.f32 %v1934, 0.5
  %v1937 = vtanh.pop %v1936
  %v1938 = vmul.f32 %v1937, 0.5
  %v1939 = vadd.f32 %v1938, 0.5
  %v1940 = vrot.slane %v1928, 4
  %v1942 = vtanh.pop %v1940
  %v1943 = vrot.slane %v1928, 6
  %v1945 = vmul.f32 %v1943, 0.5
  %v1946 = vtanh.pop %v1945
  %v1947 = vmul.f32 %v1946, 0.5
  %v1948 = vadd.f32 %v1947, 0.5
  %v1949 = vmul.f32 %v1939, %v1680
  %v1950 = vmul.f32 %v1932, %v1942
  %v1951 = vadd.f32 %v1949, %v1950
  %v1952 = vtanh.pop %v1951
  %v1953 = vmul.f32 %v1948, %v1952
  %s1954 = scalar_lea.vmem [#allocation3], 8
  %1955 = vst.msk [vmem:[%s1954] sm:$0x3] %vm870, %v1953
  %v1958 = vunpack.c.l.s4 1983009808
  %v1959 = vunpack.c.0.s8 %v1958
  %v1960 = vlaneseq
  %v1961 = vshrl.u32 %v1960, 7
  %v1962 = vsub.s32 %v1959, %v1961
  %v1963 = vrot.slane %v1953, %v1962
  %1964 = vrot.lane.b32.xlu0 %v1963, 64
  %v1965 = vpop.permute.xlu0 %1964
  %s1967 = scalar_lea.vmem [#allocation4], 18
  %1968 = vst.msk [vmem:[%s1967] sm:$0x3] %vm870, %v1965
  %s1969 = scalar_lea.vmem [#allocation2], 40
  %v1970 = vld [vmem:[%s1969] sm:$0xff]
  %v1971 = vld [vmem:[%s3] sm:$0xff]
  %v1972 = vld [vmem:[%s3 + $0x8] sm:$0xff]
  %v1973 = vld [vmem:[%s3 + $0x10] sm:$0xff]
  %v1974 = vld [vmem:[%s3 + $0x18] sm:$0xff]
  %v1975 = vld [vmem:[%s3 + $0x20] sm:$0xff]
  %v1976 = vld [vmem:[%s3 + $0x28] sm:$0xff]
  %v1977 = vld [vmem:[%s3 + $0x30] sm:$0xff]
  %v1978 = vld [vmem:[%s3 + $0x38] sm:$0xff]
  %v1979 = vld [vmem:[%s3 + $0x40] sm:$0xff]
  %v1980 = vld [vmem:[%s3 + $0x48] sm:$0xff]
  %v1981 = vld [vmem:[%s3 + $0x50] sm:$0xff]
  %v1982 = vld [vmem:[%s3 + $0x58] sm:$0xff]
  %v1983 = vld [vmem:[%s3 + $0x60] sm:$0xff]
  %v1984 = vld [vmem:[%s3 + $0x68] sm:$0xff]
  %v1985 = vld [vmem:[%s3 + $0x70] sm:$0xff]
  %v1986 = vld [vmem:[%s3 + $0x78] sm:$0xff]
  %v1987 = vld [vmem:[%s3 + $0x80] sm:$0xff]
  %v1988 = vld [vmem:[%s3 + $0x88] sm:$0xff]
  %v1989 = vld [vmem:[%s3 + $0x90] sm:$0xff]
  %v1990 = vld [vmem:[%s3 + $0x98] sm:$0xff]
  %v1991 = vld [vmem:[%s3 + $0xa0] sm:$0xff]
  %v1992 = vld [vmem:[%s3 + $0xa8] sm:$0xff]
  %v1993 = vld [vmem:[%s3 + $0xb0] sm:$0xff]
  %v1994 = vld [vmem:[%s3 + $0xb8] sm:$0xff]
  %v1995 = vld [vmem:[%s3 + $0xc0] sm:$0xff]
  %v1996 = vld [vmem:[%s3 + $0xc8] sm:$0xff]
  %v1997 = vld [vmem:[%s3 + $0xd0] sm:$0xff]
  %v1998 = vld [vmem:[%s3 + $0xd8] sm:$0xff]
  %v1999 = vld [vmem:[%s3 + $0xe0] sm:$0xff]
  %v2000 = vld [vmem:[%s3 + $0xe8] sm:$0xff]
  %v2001 = vld [vmem:[%s3 + $0xf0] sm:$0xff]
  %v2002 = vld [vmem:[%s3 + $0xf8] sm:$0xff]
  %v2003 = vld [vmem:[%s3 + $0x100] sm:$0xff]
  %v2004 = vld [vmem:[%s3 + $0x108] sm:$0xff]
  %v2005 = vld [vmem:[%s3 + $0x110] sm:$0xff]
  %v2006 = vld [vmem:[%s3 + $0x118] sm:$0xff]
  %v2007 = vld [vmem:[%s3 + $0x120] sm:$0xff]
  %v2008 = vld [vmem:[%s3 + $0x128] sm:$0xff]
  %v2009 = vld [vmem:[%s3 + $0x130] sm:$0xff]
  %v2010 = vld [vmem:[%s3 + $0x138] sm:$0xff]
  %v2011 = vld [vmem:[%s3 + $0x140] sm:$0xff]
  %v2012 = vld [vmem:[%s3 + $0x148] sm:$0xff]
  %v2013 = vld [vmem:[%s3 + $0x150] sm:$0xff]
  %v2014 = vld [vmem:[%s3 + $0x158] sm:$0xff]
  %v2015 = vld [vmem:[%s3 + $0x160] sm:$0xff]
  %v2016 = vld [vmem:[%s3 + $0x168] sm:$0xff]
  %v2017 = vld [vmem:[%s3 + $0x170] sm:$0xff]
  %v2018 = vld [vmem:[%s3 + $0x178] sm:$0xff]
  %v2019 = vld [vmem:[%s3 + $0x180] sm:$0xff]
  %v2020 = vld [vmem:[%s3 + $0x188] sm:$0xff]
  %v2021 = vld [vmem:[%s3 + $0x190] sm:$0xff]
  %v2022 = vld [vmem:[%s3 + $0x198] sm:$0xff]
  %v2023 = vld [vmem:[%s3 + $0x1a0] sm:$0xff]
  %v2024 = vld [vmem:[%s3 + $0x1a8] sm:$0xff]
  %v2025 = vld [vmem:[%s3 + $0x1b0] sm:$0xff]
  %v2026 = vld [vmem:[%s3 + $0x1b8] sm:$0xff]
  %v2027 = vld [vmem:[%s3 + $0x1c0] sm:$0xff]
  %v2028 = vld [vmem:[%s3 + $0x1c8] sm:$0xff]
  %v2029 = vld [vmem:[%s3 + $0x1d0] sm:$0xff]
  %v2030 = vld [vmem:[%s3 + $0x1d8] sm:$0xff]
  %v2031 = vld [vmem:[%s3 + $0x1e0] sm:$0xff]
  %v2032 = vld [vmem:[%s3 + $0x1e8] sm:$0xff]
  %v2033 = vld [vmem:[%s3 + $0x1f0] sm:$0xff]
  %v2034 = vld [vmem:[%s3 + $0x1f8] sm:$0xff]
  %2035 = vmatprep.subr.mxu0 %v1972
  %2036 = vmatpush1.msra.mxu0 %v1971
  %2037 = vmatprep.subr.mxu0 %v1976
  %2038 = vmatpush1.msra.mxu0 %v1975
  %2039 = vmatprep.subr.mxu0 %v1980
  %2040 = vmatpush1.msra.mxu0 %v1979
  %2041 = vmatprep.subr.mxu0 %v1984
  %2042 = vmatpush1.msra.mxu0 %v1983
  %2043 = vmatprep.subr.mxu0 %v1988
  %2044 = vmatpush1.msra.mxu0 %v1987
  %2045 = vmatprep.subr.mxu0 %v1992
  %2046 = vmatpush1.msra.mxu0 %v1991
  %2047 = vmatprep.subr.mxu0 %v1996
  %2048 = vmatpush1.msra.mxu0 %v1995
  %2049 = vmatprep.subr.mxu0 %v2000
  %2050 = vmatpush1.msra.mxu0 %v1999
  %2051 = vmatprep.subr.mxu0 %v2004
  %2052 = vmatpush1.msra.mxu0 %v2003
  %2053 = vmatprep.subr.mxu0 %v2008
  %2054 = vmatpush1.msra.mxu0 %v2007
  %2055 = vmatprep.subr.mxu0 %v2012
  %2056 = vmatpush1.msra.mxu0 %v2011
  %2057 = vmatprep.subr.mxu0 %v2016
  %2058 = vmatpush1.msra.mxu0 %v2015
  %2059 = vmatprep.subr.mxu0 %v2020
  %2060 = vmatpush1.msra.mxu0 %v2019
  %2061 = vmatprep.subr.mxu0 %v2024
  %2062 = vmatpush1.msra.mxu0 %v2023
  %2063 = vmatprep.subr.mxu0 %v2028
  %2064 = vmatpush1.msra.mxu0 %v2027
  %2065 = vmatprep.subr.mxu0 %v2032
  %2066 = vmatpush1.msra.mxu0 %v2031
  %2067 = vmatprep.subr.mxu0 0.0
  %2068 = vmatpush1.msra.mxu0 0.0
  %2069 = vmatprep.subr.mxu0 0.0
  %2070 = vmatpush1.msra.mxu0 0.0
  %2071 = vmatprep.subr.mxu0 0.0
  %2072 = vmatpush1.msra.mxu0 0.0
  %2073 = vmatprep.subr.mxu0 0.0
  %2074 = vmatpush1.msra.mxu0 0.0
  %2075 = vmatprep.subr.mxu0 0.0
  %2076 = vmatpush1.msra.mxu0 0.0
  %2077 = vmatprep.subr.mxu0 0.0
  %2078 = vmatpush1.msra.mxu0 0.0
  %2079 = vmatprep.subr.mxu0 0.0
  %2080 = vmatpush1.msra.mxu0 0.0
  %2081 = vmatprep.subr.mxu0 0.0
  %2082 = vmatpush1.msra.mxu0 0.0
  %2083 = vmatprep.subr.mxu0 0.0
  %2084 = vmatpush1.msra.mxu0 0.0
  %2085 = vmatprep.subr.mxu0 0.0
  %2086 = vmatpush1.msra.mxu0 0.0
  %2087 = vmatprep.subr.mxu0 0.0
  %2088 = vmatpush1.msra.mxu0 0.0
  %2089 = vmatprep.subr.mxu0 0.0
  %2090 = vmatpush1.msra.mxu0 0.0
  %2091 = vmatprep.subr.mxu0 0.0
  %2092 = vmatpush1.msra.mxu0 0.0
  %2093 = vmatprep.subr.mxu0 0.0
  %2094 = vmatpush1.msra.mxu0 0.0
  %2095 = vmatprep.subr.mxu0 0.0
  %2096 = vmatpush1.msra.mxu0 0.0
  %2097 = vmatprep.subr.mxu0 0.0
  %2098 = vmatpush1.msra.mxu0 0.0
  %2099 = vmatprep.mubr.f32.mxu0 0.0
  %2100 = vmatmul.mubr.f32.gmra.mrb[0].mxu0 %v1953
  %v2101 = vpop.f32.mrb[0].mxu0
  %v2102 = vadd.f32 0.0, %v2101
  %v2103 = vpop.f32.mrb[0].mxu0
  %v2104 = vadd.f32 0.0, %v2103
  %2105 = vdwg.mxu0
  %2106 = vmatprep.subr.mxu0 %v1974
  %2107 = vmatpush1.msra.mxu0 %v1973
  %2108 = vmatprep.subr.mxu0 %v1978
  %2109 = vmatpush1.msra.mxu0 %v1977
  %2110 = vmatprep.subr.mxu0 %v1982
  %2111 = vmatpush1.msra.mxu0 %v1981
  %2112 = vmatprep.subr.mxu0 %v1986
  %2113 = vmatpush1.msra.mxu0 %v1985
  %2114 = vmatprep.subr.mxu0 %v1990
  %2115 = vmatpush1.msra.mxu0 %v1989
  %2116 = vmatprep.subr.mxu0 %v1994
  %2117 = vmatpush1.msra.mxu0 %v1993
  %2118 = vmatprep.subr.mxu0 %v1998
  %2119 = vmatpush1.msra.mxu0 %v1997
  %2120 = vmatprep.subr.mxu0 %v2002
  %2121 = vmatpush1.msra.mxu0 %v2001
  %2122 = vmatprep.subr.mxu0 %v2006
  %2123 = vmatpush1.msra.mxu0 %v2005
  %2124 = vmatprep.subr.mxu0 %v2010
  %2125 = vmatpush1.msra.mxu0 %v2009
  %2126 = vmatprep.subr.mxu0 %v2014
  %2127 = vmatpush1.msra.mxu0 %v2013
  %2128 = vmatprep.subr.mxu0 %v2018
  %2129 = vmatpush1.msra.mxu0 %v2017
  %2130 = vmatprep.subr.mxu0 %v2022
  %2131 = vmatpush1.msra.mxu0 %v2021
  %2132 = vmatprep.subr.mxu0 %v2026
  %2133 = vmatpush1.msra.mxu0 %v2025
  %2134 = vmatprep.subr.mxu0 %v2030
  %2135 = vmatpush1.msra.mxu0 %v2029
  %2136 = vmatprep.subr.mxu0 %v2034
  %2137 = vmatpush1.msra.mxu0 %v2033
  %2138 = vmatprep.subr.mxu0 0.0
  %2139 = vmatpush1.msra.mxu0 0.0
  %2140 = vmatprep.subr.mxu0 0.0
  %2141 = vmatpush1.msra.mxu0 0.0
  %2142 = vmatprep.subr.mxu0 0.0
  %2143 = vmatpush1.msra.mxu0 0.0
  %2144 = vmatprep.subr.mxu0 0.0
  %2145 = vmatpush1.msra.mxu0 0.0
  %2146 = vmatprep.subr.mxu0 0.0
  %2147 = vmatpush1.msra.mxu0 0.0
  %2148 = vmatprep.subr.mxu0 0.0
  %2149 = vmatpush1.msra.mxu0 0.0
  %2150 = vmatprep.subr.mxu0 0.0
  %2151 = vmatpush1.msra.mxu0 0.0
  %2152 = vmatprep.subr.mxu0 0.0
  %2153 = vmatpush1.msra.mxu0 0.0
  %2154 = vmatprep.subr.mxu0 0.0
  %2155 = vmatpush1.msra.mxu0 0.0
  %2156 = vmatprep.subr.mxu0 0.0
  %2157 = vmatpush1.msra.mxu0 0.0
  %2158 = vmatprep.subr.mxu0 0.0
  %2159 = vmatpush1.msra.mxu0 0.0
  %2160 = vmatprep.subr.mxu0 0.0
  %2161 = vmatpush1.msra.mxu0 0.0
  %2162 = vmatprep.subr.mxu0 0.0
  %2163 = vmatpush1.msra.mxu0 0.0
  %2164 = vmatprep.subr.mxu0 0.0
  %2165 = vmatpush1.msra.mxu0 0.0
  %2166 = vmatprep.subr.mxu0 0.0
  %2167 = vmatpush1.msra.mxu0 0.0
  %2168 = vmatprep.subr.mxu0 0.0
  %2169 = vmatpush1.msra.mxu0 0.0
  %2170 = vmatprep.mubr.f32.mxu0 0.0
  %2171 = vmatmul.mubr.f32.gmra.mrb[0].mxu0 %v1953
  %v2172 = vpop.f32.mrb[0].mxu0
  %v2173 = vadd.f32 0.0, %v2172
  %v2174 = vpop.f32.mrb[0].mxu0
  %v2175 = vadd.f32 0.0, %v2174
  %2176 = vdwg.mxu0
  %v2181 = vcombine.low %v2102, %v2104
  %v2182 = vcombine.low %v2173, %v2175
  %v2184 = vunpack.c.l.s4 1983009808
  %v2185 = vunpack.c.0.s8 %v2184
  %v2186 = vlaneseq
  %v2187 = vshrl.u32 %v2186, 7
  %v2188 = vsub.s32 %v2185, %v2187
  %v2189 = vrot.slane %v2181, %v2188
  %v2191 = vunpack.c.l.s4 1983009808
  %v2192 = vunpack.c.0.s8 %v2191
  %v2193 = vlaneseq
  %v2194 = vshrl.u32 %v2193, 7
  %v2195 = vsub.s32 %v2192, %v2194
  %v2196 = vrot.slane %v2182, %v2195
  %v2197 = vcombine.low %v2189, %v2196
  %v2199 = vadd.f32 %v1970, %v2197
  %v2200 = vmul.f32 %v2199, 0.5
  %v2201 = vtanh.pop %v2200
  %v2202 = vmul.f32 %v2201, 0.5
  %v2203 = vadd.f32 %v2202, 0.5
  %v2205 = vrot.slane %v2199, 2
  %v2207 = vmul.f32 %v2205, 0.5
  %v2208 = vtanh.pop %v2207
  %v2209 = vmul.f32 %v2208, 0.5
  %v2210 = vadd.f32 %v2209, 0.5
  %v2211 = vrot.slane %v2199, 4
  %v2213 = vtanh.pop %v2211
  %v2214 = vrot.slane %v2199, 6
  %v2216 = vmul.f32 %v2214, 0.5
  %v2217 = vtanh.pop %v2216
  %v2218 = vmul.f32 %v2217, 0.5
  %v2219 = vadd.f32 %v2218, 0.5
  %v2220 = vmul.f32 %v2210, %v1951
  %v2221 = vmul.f32 %v2203, %v2213
  %v2222 = vadd.f32 %v2220, %v2221
  %v2223 = vtanh.pop %v2222
  %v2224 = vmul.f32 %v2219, %v2223
  %s2225 = scalar_lea.vmem [#allocation3], 10
  %2226 = vst.msk [vmem:[%s2225] sm:$0x3] %vm870, %v2224
  %v2229 = vunpack.c.l.s4 1983009808
  %v2230 = vunpack.c.0.s8 %v2229
  %v2231 = vlaneseq
  %v2232 = vshrl.u32 %v2231, 7
  %v2233 = vsub.s32 %v2230, %v2232
  %v2234 = vrot.slane %v2224, %v2233
  %2235 = vrot.lane.b32.xlu0 %v2234, 64
  %v2236 = vpop.permute.xlu0 %2235
  %s2238 = scalar_lea.vmem [#allocation4], 16
  %2239 = vst.msk [vmem:[%s2238] sm:$0x3] %vm870, %v2236
  %s2240 = scalar_lea.vmem [#allocation2], 48
  %v2241 = vld [vmem:[%s2240] sm:$0xff]
  %v2242 = vld [vmem:[%s3] sm:$0xff]
  %v2243 = vld [vmem:[%s3 + $0x8] sm:$0xff]
  %v2244 = vld [vmem:[%s3 + $0x10] sm:$0xff]
  %v2245 = vld [vmem:[%s3 + $0x18] sm:$0xff]
  %v2246 = vld [vmem:[%s3 + $0x20] sm:$0xff]
  %v2247 = vld [vmem:[%s3 + $0x28] sm:$0xff]
  %v2248 = vld [vmem:[%s3 + $0x30] sm:$0xff]
  %v2249 = vld [vmem:[%s3 + $0x38] sm:$0xff]
  %v2250 = vld [vmem:[%s3 + $0x40] sm:$0xff]
  %v2251 = vld [vmem:[%s3 + $0x48] sm:$0xff]
  %v2252 = vld [vmem:[%s3 + $0x50] sm:$0xff]
  %v2253 = vld [vmem:[%s3 + $0x58] sm:$0xff]
  %v2254 = vld [vmem:[%s3 + $0x60] sm:$0xff]
  %v2255 = vld [vmem:[%s3 + $0x68] sm:$0xff]
  %v2256 = vld [vmem:[%s3 + $0x70] sm:$0xff]
  %v2257 = vld [vmem:[%s3 + $0x78] sm:$0xff]
  %v2258 = vld [vmem:[%s3 + $0x80] sm:$0xff]
  %v2259 = vld [vmem:[%s3 + $0x88] sm:$0xff]
  %v2260 = vld [vmem:[%s3 + $0x90] sm:$0xff]
  %v2261 = vld [vmem:[%s3 + $0x98] sm:$0xff]
  %v2262 = vld [vmem:[%s3 + $0xa0] sm:$0xff]
  %v2263 = vld [vmem:[%s3 + $0xa8] sm:$0xff]
  %v2264 = vld [vmem:[%s3 + $0xb0] sm:$0xff]
  %v2265 = vld [vmem:[%s3 + $0xb8] sm:$0xff]
  %v2266 = vld [vmem:[%s3 + $0xc0] sm:$0xff]
  %v2267 = vld [vmem:[%s3 + $0xc8] sm:$0xff]
  %v2268 = vld [vmem:[%s3 + $0xd0] sm:$0xff]
  %v2269 = vld [vmem:[%s3 + $0xd8] sm:$0xff]
  %v2270 = vld [vmem:[%s3 + $0xe0] sm:$0xff]
  %v2271 = vld [vmem:[%s3 + $0xe8] sm:$0xff]
  %v2272 = vld [vmem:[%s3 + $0xf0] sm:$0xff]
  %v2273 = vld [vmem:[%s3 + $0xf8] sm:$0xff]
  %v2274 = vld [vmem:[%s3 + $0x100] sm:$0xff]
  %v2275 = vld [vmem:[%s3 + $0x108] sm:$0xff]
  %v2276 = vld [vmem:[%s3 + $0x110] sm:$0xff]
  %v2277 = vld [vmem:[%s3 + $0x118] sm:$0xff]
  %v2278 = vld [vmem:[%s3 + $0x120] sm:$0xff]
  %v2279 = vld [vmem:[%s3 + $0x128] sm:$0xff]
  %v2280 = vld [vmem:[%s3 + $0x130] sm:$0xff]
  %v2281 = vld [vmem:[%s3 + $0x138] sm:$0xff]
  %v2282 = vld [vmem:[%s3 + $0x140] sm:$0xff]
  %v2283 = vld [vmem:[%s3 + $0x148] sm:$0xff]
  %v2284 = vld [vmem:[%s3 + $0x150] sm:$0xff]
  %v2285 = vld [vmem:[%s3 + $0x158] sm:$0xff]
  %v2286 = vld [vmem:[%s3 + $0x160] sm:$0xff]
  %v2287 = vld [vmem:[%s3 + $0x168] sm:$0xff]
  %v2288 = vld [vmem:[%s3 + $0x170] sm:$0xff]
  %v2289 = vld [vmem:[%s3 + $0x178] sm:$0xff]
  %v2290 = vld [vmem:[%s3 + $0x180] sm:$0xff]
  %v2291 = vld [vmem:[%s3 + $0x188] sm:$0xff]
  %v2292 = vld [vmem:[%s3 + $0x190] sm:$0xff]
  %v2293 = vld [vmem:[%s3 + $0x198] sm:$0xff]
  %v2294 = vld [vmem:[%s3 + $0x1a0] sm:$0xff]
  %v2295 = vld [vmem:[%s3 + $0x1a8] sm:$0xff]
  %v2296 = vld [vmem:[%s3 + $0x1b0] sm:$0xff]
  %v2297 = vld [vmem:[%s3 + $0x1b8] sm:$0xff]
  %v2298 = vld [vmem:[%s3 + $0x1c0] sm:$0xff]
  %v2299 = vld [vmem:[%s3 + $0x1c8] sm:$0xff]
  %v2300 = vld [vmem:[%s3 + $0x1d0] sm:$0xff]
  %v2301 = vld [vmem:[%s3 + $0x1d8] sm:$0xff]
  %v2302 = vld [vmem:[%s3 + $0x1e0] sm:$0xff]
  %v2303 = vld [vmem:[%s3 + $0x1e8] sm:$0xff]
  %v2304 = vld [vmem:[%s3 + $0x1f0] sm:$0xff]
  %v2305 = vld [vmem:[%s3 + $0x1f8] sm:$0xff]
  %2306 = vmatprep.subr.mxu0 %v2243
  %2307 = vmatpush1.msra.mxu0 %v2242
  %2308 = vmatprep.subr.mxu0 %v2247
  %2309 = vmatpush1.msra.mxu0 %v2246
  %2310 = vmatprep.subr.mxu0 %v2251
  %2311 = vmatpush1.msra.mxu0 %v2250
  %2312 = vmatprep.subr.mxu0 %v2255
  %2313 = vmatpush1.msra.mxu0 %v2254
  %2314 = vmatprep.subr.mxu0 %v2259
  %2315 = vmatpush1.msra.mxu0 %v2258
  %2316 = vmatprep.subr.mxu0 %v2263
  %2317 = vmatpush1.msra.mxu0 %v2262
  %2318 = vmatprep.subr.mxu0 %v2267
  %2319 = vmatpush1.msra.mxu0 %v2266
  %2320 = vmatprep.subr.mxu0 %v2271
  %2321 = vmatpush1.msra.mxu0 %v2270
  %2322 = vmatprep.subr.mxu0 %v2275
  %2323 = vmatpush1.msra.mxu0 %v2274
  %2324 = vmatprep.subr.mxu0 %v2279
  %2325 = vmatpush1.msra.mxu0 %v2278
  %2326 = vmatprep.subr.mxu0 %v2283
  %2327 = vmatpush1.msra.mxu0 %v2282
  %2328 = vmatprep.subr.mxu0 %v2287
  %2329 = vmatpush1.msra.mxu0 %v2286
  %2330 = vmatprep.subr.mxu0 %v2291
  %2331 = vmatpush1.msra.mxu0 %v2290
  %2332 = vmatprep.subr.mxu0 %v2295
  %2333 = vmatpush1.msra.mxu0 %v2294
  %2334 = vmatprep.subr.mxu0 %v2299
  %2335 = vmatpush1.msra.mxu0 %v2298
  %2336 = vmatprep.subr.mxu0 %v2303
  %2337 = vmatpush1.msra.mxu0 %v2302
  %2338 = vmatprep.subr.mxu0 0.0
  %2339 = vmatpush1.msra.mxu0 0.0
  %2340 = vmatprep.subr.mxu0 0.0
  %2341 = vmatpush1.msra.mxu0 0.0
  %2342 = vmatprep.subr.mxu0 0.0
  %2343 = vmatpush1.msra.mxu0 0.0
  %2344 = vmatprep.subr.mxu0 0.0
  %2345 = vmatpush1.msra.mxu0 0.0
  %2346 = vmatprep.subr.mxu0 0.0
  %2347 = vmatpush1.msra.mxu0 0.0
  %2348 = vmatprep.subr.mxu0 0.0
  %2349 = vmatpush1.msra.mxu0 0.0
  %2350 = vmatprep.subr.mxu0 0.0
  %2351 = vmatpush1.msra.mxu0 0.0
  %2352 = vmatprep.subr.mxu0 0.0
  %2353 = vmatpush1.msra.mxu0 0.0
  %2354 = vmatprep.subr.mxu0 0.0
  %2355 = vmatpush1.msra.mxu0 0.0
  %2356 = vmatprep.subr.mxu0 0.0
  %2357 = vmatpush1.msra.mxu0 0.0
  %2358 = vmatprep.subr.mxu0 0.0
  %2359 = vmatpush1.msra.mxu0 0.0
  %2360 = vmatprep.subr.mxu0 0.0
  %2361 = vmatpush1.msra.mxu0 0.0
  %2362 = vmatprep.subr.mxu0 0.0
  %2363 = vmatpush1.msra.mxu0 0.0
  %2364 = vmatprep.subr.mxu0 0.0
  %2365 = vmatpush1.msra.mxu0 0.0
  %2366 = vmatprep.subr.mxu0 0.0
  %2367 = vmatpush1.msra.mxu0 0.0
  %2368 = vmatprep.subr.mxu0 0.0
  %2369 = vmatpush1.msra.mxu0 0.0
  %2370 = vmatprep.mubr.f32.mxu0 0.0
  %2371 = vmatmul.mubr.f32.gmra.mrb[0].mxu0 %v2224
  %v2372 = vpop.f32.mrb[0].mxu0
  %v2373 = vadd.f32 0.0, %v2372
  %v2374 = vpop.f32.mrb[0].mxu0
  %v2375 = vadd.f32 0.0, %v2374
  %2376 = vdwg.mxu0
  %2377 = vmatprep.subr.mxu0 %v2245
  %2378 = vmatpush1.msra.mxu0 %v2244
  %2379 = vmatprep.subr.mxu0 %v2249
  %2380 = vmatpush1.msra.mxu0 %v2248
  %2381 = vmatprep.subr.mxu0 %v2253
  %2382 = vmatpush1.msra.mxu0 %v2252
  %2383 = vmatprep.subr.mxu0 %v2257
  %2384 = vmatpush1.msra.mxu0 %v2256
  %2385 = vmatprep.subr.mxu0 %v2261
  %2386 = vmatpush1.msra.mxu0 %v2260
  %2387 = vmatprep.subr.mxu0 %v2265
  %2388 = vmatpush1.msra.mxu0 %v2264
  %2389 = vmatprep.subr.mxu0 %v2269
  %2390 = vmatpush1.msra.mxu0 %v2268
  %2391 = vmatprep.subr.mxu0 %v2273
  %2392 = vmatpush1.msra.mxu0 %v2272
  %2393 = vmatprep.subr.mxu0 %v2277
  %2394 = vmatpush1.msra.mxu0 %v2276
  %2395 = vmatprep.subr.mxu0 %v2281
  %2396 = vmatpush1.msra.mxu0 %v2280
  %2397 = vmatprep.subr.mxu0 %v2285
  %2398 = vmatpush1.msra.mxu0 %v2284
  %2399 = vmatprep.subr.mxu0 %v2289
  %2400 = vmatpush1.msra.mxu0 %v2288
  %2401 = vmatprep.subr.mxu0 %v2293
  %2402 = vmatpush1.msra.mxu0 %v2292
  %2403 = vmatprep.subr.mxu0 %v2297
  %2404 = vmatpush1.msra.mxu0 %v2296
  %2405 = vmatprep.subr.mxu0 %v2301
  %2406 = vmatpush1.msra.mxu0 %v2300
  %2407 = vmatprep.subr.mxu0 %v2305
  %2408 = vmatpush1.msra.mxu0 %v2304
  %2409 = vmatprep.subr.mxu0 0.0
  %2410 = vmatpush1.msra.mxu0 0.0
  %2411 = vmatprep.subr.mxu0 0.0
  %2412 = vmatpush1.msra.mxu0 0.0
  %2413 = vmatprep.subr.mxu0 0.0
  %2414 = vmatpush1.msra.mxu0 0.0
  %2415 = vmatprep.subr.mxu0 0.0
  %2416 = vmatpush1.msra.mxu0 0.0
  %2417 = vmatprep.subr.mxu0 0.0
  %2418 = vmatpush1.msra.mxu0 0.0
  %2419 = vmatprep.subr.mxu0 0.0
  %2420 = vmatpush1.msra.mxu0 0.0
  %2421 = vmatprep.subr.mxu0 0.0
  %2422 = vmatpush1.msra.mxu0 0.0
  %2423 = vmatprep.subr.mxu0 0.0
  %2424 = vmatpush1.msra.mxu0 0.0
  %2425 = vmatprep.subr.mxu0 0.0
  %2426 = vmatpush1.msra.mxu0 0.0
  %2427 = vmatprep.subr.mxu0 0.0
  %2428 = vmatpush1.msra.mxu0 0.0
  %2429 = vmatprep.subr.mxu0 0.0
  %2430 = vmatpush1.msra.mxu0 0.0
  %2431 = vmatprep.subr.mxu0 0.0
  %2432 = vmatpush1.msra.mxu0 0.0
  %2433 = vmatprep.subr.mxu0 0.0
  %2434 = vmatpush1.msra.mxu0 0.0
  %2435 = vmatprep.subr.mxu0 0.0
  %2436 = vmatpush1.msra.mxu0 0.0
  %2437 = vmatprep.subr.mxu0 0.0
  %2438 = vmatpush1.msra.mxu0 0.0
  %2439 = vmatprep.subr.mxu0 0.0
  %2440 = vmatpush1.msra.mxu0 0.0
  %2441 = vmatprep.mubr.f32.mxu0 0.0
  %2442 = vmatmul.mubr.f32.gmra.mrb[0].mxu0 %v2224
  %v2443 = vpop.f32.mrb[0].mxu0
  %v2444 = vadd.f32 0.0, %v2443
  %v2445 = vpop.f32.mrb[0].mxu0
  %v2446 = vadd.f32 0.0, %v2445
  %2447 = vdwg.mxu0
  %v2452 = vcombine.low %v2373, %v2375
  %v2453 = vcombine.low %v2444, %v2446
  %v2455 = vunpack.c.l.s4 1983009808
  %v2456 = vunpack.c.0.s8 %v2455
  %v2457 = vlaneseq
  %v2458 = vshrl.u32 %v2457, 7
  %v2459 = vsub.s32 %v2456, %v2458
  %v2460 = vrot.slane %v2452, %v2459
  %v2462 = vunpack.c.l.s4 1983009808
  %v2463 = vunpack.c.0.s8 %v2462
  %v2464 = vlaneseq
  %v2465 = vshrl.u32 %v2464, 7
  %v2466 = vsub.s32 %v2463, %v2465
  %v2467 = vrot.slane %v2453, %v2466
  %v2468 = vcombine.low %v2460, %v2467
  %v2470 = vadd.f32 %v2241, %v2468
  %v2471 = vmul.f32 %v2470, 0.5
  %v2472 = vtanh.pop %v2471
  %v2473 = vmul.f32 %v2472, 0.5
  %v2474 = vadd.f32 %v2473, 0.5
  %v2476 = vrot.slane %v2470, 2
  %v2478 = vmul.f32 %v2476, 0.5
  %v2479 = vtanh.pop %v2478
  %v2480 = vmul.f32 %v2479, 0.5
  %v2481 = vadd.f32 %v2480, 0.5
  %v2482 = vrot.slane %v2470, 4
  %v2484 = vtanh.pop %v2482
  %v2485 = vrot.slane %v2470, 6
  %v2487 = vmul.f32 %v2485, 0.5
  %v2488 = vtanh.pop %v2487
  %v2489 = vmul.f32 %v2488, 0.5
  %v2490 = vadd.f32 %v2489, 0.5
  %v2491 = vmul.f32 %v2481, %v2222
  %v2492 = vmul.f32 %v2474, %v2484
  %v2493 = vadd.f32 %v2491, %v2492
  %v2494 = vtanh.pop %v2493
  %v2495 = vmul.f32 %v2490, %v2494
  %s2496 = scalar_lea.vmem [#allocation3], 12
  %2497 = vst.msk [vmem:[%s2496] sm:$0x3] %vm870, %v2495
  %v2500 = vunpack.c.l.s4 1983009808
  %v2501 = vunpack.c.0.s8 %v2500
  %v2502 = vlaneseq
  %v2503 = vshrl.u32 %v2502, 7
  %v2504 = vsub.s32 %v2501, %v2503
  %v2505 = vrot.slane %v2495, %v2504
  %2506 = vrot.lane.b32.xlu0 %v2505, 64
  %v2507 = vpop.permute.xlu0 %2506
  %s2509 = scalar_lea.vmem [#allocation4], 14
  %2510 = vst.msk [vmem:[%s2509] sm:$0x3] %vm870, %v2507
  %s2511 = scalar_lea.vmem [#allocation2], 56
  %v2512 = vld [vmem:[%s2511] sm:$0xff]
  %v2513 = vld [vmem:[%s3] sm:$0xff]
  %v2514 = vld [vmem:[%s3 + $0x8] sm:$0xff]
  %v2515 = vld [vmem:[%s3 + $0x10] sm:$0xff]
  %v2516 = vld [vmem:[%s3 + $0x18] sm:$0xff]
  %v2517 = vld [vmem:[%s3 + $0x20] sm:$0xff]
  %v2518 = vld [vmem:[%s3 + $0x28] sm:$0xff]
  %v2519 = vld [vmem:[%s3 + $0x30] sm:$0xff]
  %v2520 = vld [vmem:[%s3 + $0x38] sm:$0xff]
  %v2521 = vld [vmem:[%s3 + $0x40] sm:$0xff]
  %v2522 = vld [vmem:[%s3 + $0x48] sm:$0xff]
  %v2523 = vld [vmem:[%s3 + $0x50] sm:$0xff]
  %v2524 = vld [vmem:[%s3 + $0x58] sm:$0xff]
  %v2525 = vld [vmem:[%s3 + $0x60] sm:$0xff]
  %v2526 = vld [vmem:[%s3 + $0x68] sm:$0xff]
  %v2527 = vld [vmem:[%s3 + $0x70] sm:$0xff]
  %v2528 = vld [vmem:[%s3 + $0x78] sm:$0xff]
  %v2529 = vld [vmem:[%s3 + $0x80] sm:$0xff]
  %v2530 = vld [vmem:[%s3 + $0x88] sm:$0xff]
  %v2531 = vld [vmem:[%s3 + $0x90] sm:$0xff]
  %v2532 = vld [vmem:[%s3 + $0x98] sm:$0xff]
  %v2533 = vld [vmem:[%s3 + $0xa0] sm:$0xff]
  %v2534 = vld [vmem:[%s3 + $0xa8] sm:$0xff]
  %v2535 = vld [vmem:[%s3 + $0xb0] sm:$0xff]
  %v2536 = vld [vmem:[%s3 + $0xb8] sm:$0xff]
  %v2537 = vld [vmem:[%s3 + $0xc0] sm:$0xff]
  %v2538 = vld [vmem:[%s3 + $0xc8] sm:$0xff]
  %v2539 = vld [vmem:[%s3 + $0xd0] sm:$0xff]
  %v2540 = vld [vmem:[%s3 + $0xd8] sm:$0xff]
  %v2541 = vld [vmem:[%s3 + $0xe0] sm:$0xff]
  %v2542 = vld [vmem:[%s3 + $0xe8] sm:$0xff]
  %v2543 = vld [vmem:[%s3 + $0xf0] sm:$0xff]
  %v2544 = vld [vmem:[%s3 + $0xf8] sm:$0xff]
  %v2545 = vld [vmem:[%s3 + $0x100] sm:$0xff]
  %v2546 = vld [vmem:[%s3 + $0x108] sm:$0xff]
  %v2547 = vld [vmem:[%s3 + $0x110] sm:$0xff]
  %v2548 = vld [vmem:[%s3 + $0x118] sm:$0xff]
  %v2549 = vld [vmem:[%s3 + $0x120] sm:$0xff]
  %v2550 = vld [vmem:[%s3 + $0x128] sm:$0xff]
  %v2551 = vld [vmem:[%s3 + $0x130] sm:$0xff]
  %v2552 = vld [vmem:[%s3 + $0x138] sm:$0xff]
  %v2553 = vld [vmem:[%s3 + $0x140] sm:$0xff]
  %v2554 = vld [vmem:[%s3 + $0x148] sm:$0xff]
  %v2555 = vld [vmem:[%s3 + $0x150] sm:$0xff]
  %v2556 = vld [vmem:[%s3 + $0x158] sm:$0xff]
  %v2557 = vld [vmem:[%s3 + $0x160] sm:$0xff]
  %v2558 = vld [vmem:[%s3 + $0x168] sm:$0xff]
  %v2559 = vld [vmem:[%s3 + $0x170] sm:$0xff]
  %v2560 = vld [vmem:[%s3 + $0x178] sm:$0xff]
  %v2561 = vld [vmem:[%s3 + $0x180] sm:$0xff]
  %v2562 = vld [vmem:[%s3 + $0x188] sm:$0xff]
  %v2563 = vld [vmem:[%s3 + $0x190] sm:$0xff]
  %v2564 = vld [vmem:[%s3 + $0x198] sm:$0xff]
  %v2565 = vld [vmem:[%s3 + $0x1a0] sm:$0xff]
  %v2566 = vld [vmem:[%s3 + $0x1a8] sm:$0xff]
  %v2567 = vld [vmem:[%s3 + $0x1b0] sm:$0xff]
  %v2568 = vld [vmem:[%s3 + $0x1b8] sm:$0xff]
  %v2569 = vld [vmem:[%s3 + $0x1c0] sm:$0xff]
  %v2570 = vld [vmem:[%s3 + $0x1c8] sm:$0xff]
  %v2571 = vld [vmem:[%s3 + $0x1d0] sm:$0xff]
  %v2572 = vld [vmem:[%s3 + $0x1d8] sm:$0xff]
  %v2573 = vld [vmem:[%s3 + $0x1e0] sm:$0xff]
  %v2574 = vld [vmem:[%s3 + $0x1e8] sm:$0xff]
  %v2575 = vld [vmem:[%s3 + $0x1f0] sm:$0xff]
  %v2576 = vld [vmem:[%s3 + $0x1f8] sm:$0xff]
  %2577 = vmatprep.subr.mxu0 %v2514
  %2578 = vmatpush1.msra.mxu0 %v2513
  %2579 = vmatprep.subr.mxu0 %v2518
  %2580 = vmatpush1.msra.mxu0 %v2517
  %2581 = vmatprep.subr.mxu0 %v2522
  %2582 = vmatpush1.msra.mxu0 %v2521
  %2583 = vmatprep.subr.mxu0 %v2526
  %2584 = vmatpush1.msra.mxu0 %v2525
  %2585 = vmatprep.subr.mxu0 %v2530
  %2586 = vmatpush1.msra.mxu0 %v2529
  %2587 = vmatprep.subr.mxu0 %v2534
  %2588 = vmatpush1.msra.mxu0 %v2533
  %2589 = vmatprep.subr.mxu0 %v2538
  %2590 = vmatpush1.msra.mxu0 %v2537
  %2591 = vmatprep.subr.mxu0 %v2542
  %2592 = vmatpush1.msra.mxu0 %v2541
  %2593 = vmatprep.subr.mxu0 %v2546
  %2594 = vmatpush1.msra.mxu0 %v2545
  %2595 = vmatprep.subr.mxu0 %v2550
  %2596 = vmatpush1.msra.mxu0 %v2549
  %2597 = vmatprep.subr.mxu0 %v2554
  %2598 = vmatpush1.msra.mxu0 %v2553
  %2599 = vmatprep.subr.mxu0 %v2558
  %2600 = vmatpush1.msra.mxu0 %v2557
  %2601 = vmatprep.subr.mxu0 %v2562
  %2602 = vmatpush1.msra.mxu0 %v2561
  %2603 = vmatprep.subr.mxu0 %v2566
  %2604 = vmatpush1.msra.mxu0 %v2565
  %2605 = vmatprep.subr.mxu0 %v2570
  %2606 = vmatpush1.msra.mxu0 %v2569
  %2607 = vmatprep.subr.mxu0 %v2574
  %2608 = vmatpush1.msra.mxu0 %v2573
  %2609 = vmatprep.subr.mxu0 0.0
  %2610 = vmatpush1.msra.mxu0 0.0
  %2611 = vmatprep.subr.mxu0 0.0
  %2612 = vmatpush1.msra.mxu0 0.0
  %2613 = vmatprep.subr.mxu0 0.0
  %2614 = vmatpush1.msra.mxu0 0.0
  %2615 = vmatprep.subr.mxu0 0.0
  %2616 = vmatpush1.msra.mxu0 0.0
  %2617 = vmatprep.subr.mxu0 0.0
  %2618 = vmatpush1.msra.mxu0 0.0
  %2619 = vmatprep.subr.mxu0 0.0
  %2620 = vmatpush1.msra.mxu0 0.0
  %2621 = vmatprep.subr.mxu0 0.0
  %2622 = vmatpush1.msra.mxu0 0.0
  %2623 = vmatprep.subr.mxu0 0.0
  %2624 = vmatpush1.msra.mxu0 0.0
  %2625 = vmatprep.subr.mxu0 0.0
  %2626 = vmatpush1.msra.mxu0 0.0
  %2627 = vmatprep.subr.mxu0 0.0
  %2628 = vmatpush1.msra.mxu0 0.0
  %2629 = vmatprep.subr.mxu0 0.0
  %2630 = vmatpush1.msra.mxu0 0.0
  %2631 = vmatprep.subr.mxu0 0.0
  %2632 = vmatpush1.msra.mxu0 0.0
  %2633 = vmatprep.subr.mxu0 0.0
  %2634 = vmatpush1.msra.mxu0 0.0
  %2635 = vmatprep.subr.mxu0 0.0
  %2636 = vmatpush1.msra.mxu0 0.0
  %2637 = vmatprep.subr.mxu0 0.0
  %2638 = vmatpush1.msra.mxu0 0.0
  %2639 = vmatprep.subr.mxu0 0.0
  %2640 = vmatpush1.msra.mxu0 0.0
  %2641 = vmatprep.mubr.f32.mxu0 0.0
  %2642 = vmatmul.mubr.f32.gmra.mrb[0].mxu0 %v2495
  %v2643 = vpop.f32.mrb[0].mxu0
  %v2644 = vadd.f32 0.0, %v2643
  %v2645 = vpop.f32.mrb[0].mxu0
  %v2646 = vadd.f32 0.0, %v2645
  %2647 = vdwg.mxu0
  %2648 = vmatprep.subr.mxu0 %v2516
  %2649 = vmatpush1.msra.mxu0 %v2515
  %2650 = vmatprep.subr.mxu0 %v2520
  %2651 = vmatpush1.msra.mxu0 %v2519
  %2652 = vmatprep.subr.mxu0 %v2524
  %2653 = vmatpush1.msra.mxu0 %v2523
  %2654 = vmatprep.subr.mxu0 %v2528
  %2655 = vmatpush1.msra.mxu0 %v2527
  %2656 = vmatprep.subr.mxu0 %v2532
  %2657 = vmatpush1.msra.mxu0 %v2531
  %2658 = vmatprep.subr.mxu0 %v2536
  %2659 = vmatpush1.msra.mxu0 %v2535
  %2660 = vmatprep.subr.mxu0 %v2540
  %2661 = vmatpush1.msra.mxu0 %v2539
  %2662 = vmatprep.subr.mxu0 %v2544
  %2663 = vmatpush1.msra.mxu0 %v2543
  %2664 = vmatprep.subr.mxu0 %v2548
  %2665 = vmatpush1.msra.mxu0 %v2547
  %2666 = vmatprep.subr.mxu0 %v2552
  %2667 = vmatpush1.msra.mxu0 %v2551
  %2668 = vmatprep.subr.mxu0 %v2556
  %2669 = vmatpush1.msra.mxu0 %v2555
  %2670 = vmatprep.subr.mxu0 %v2560
  %2671 = vmatpush1.msra.mxu0 %v2559
  %2672 = vmatprep.subr.mxu0 %v2564
  %2673 = vmatpush1.msra.mxu0 %v2563
  %2674 = vmatprep.subr.mxu0 %v2568
  %2675 = vmatpush1.msra.mxu0 %v2567
  %2676 = vmatprep.subr.mxu0 %v2572
  %2677 = vmatpush1.msra.mxu0 %v2571
  %2678 = vmatprep.subr.mxu0 %v2576
  %2679 = vmatpush1.msra.mxu0 %v2575
  %2680 = vmatprep.subr.mxu0 0.0
  %2681 = vmatpush1.msra.mxu0 0.0
  %2682 = vmatprep.subr.mxu0 0.0
  %2683 = vmatpush1.msra.mxu0 0.0
  %2684 = vmatprep.subr.mxu0 0.0
  %2685 = vmatpush1.msra.mxu0 0.0
  %2686 = vmatprep.subr.mxu0 0.0
  %2687 = vmatpush1.msra.mxu0 0.0
  %2688 = vmatprep.subr.mxu0 0.0
  %2689 = vmatpush1.msra.mxu0 0.0
  %2690 = vmatprep.subr.mxu0 0.0
  %2691 = vmatpush1.msra.mxu0 0.0
  %2692 = vmatprep.subr.mxu0 0.0
  %2693 = vmatpush1.msra.mxu0 0.0
  %2694 = vmatprep.subr.mxu0 0.0
  %2695 = vmatpush1.msra.mxu0 0.0
  %2696 = vmatprep.subr.mxu0 0.0
  %2697 = vmatpush1.msra.mxu0 0.0
  %2698 = vmatprep.subr.mxu0 0.0
  %2699 = vmatpush1.msra.mxu0 0.0
  %2700 = vmatprep.subr.mxu0 0.0
  %2701 = vmatpush1.msra.mxu0 0.0
  %2702 = vmatprep.subr.mxu0 0.0
  %2703 = vmatpush1.msra.mxu0 0.0
  %2704 = vmatprep.subr.mxu0 0.0
  %2705 = vmatpush1.msra.mxu0 0.0
  %2706 = vmatprep.subr.mxu0 0.0
  %2707 = vmatpush1.msra.mxu0 0.0
  %2708 = vmatprep.subr.mxu0 0.0
  %2709 = vmatpush1.msra.mxu0 0.0
  %2710 = vmatprep.subr.mxu0 0.0
  %2711 = vmatpush1.msra.mxu0 0.0
  %2712 = vmatprep.mubr.f32.mxu0 0.0
  %2713 = vmatmul.mubr.f32.gmra.mrb[0].mxu0 %v2495
  %v2714 = vpop.f32.mrb[0].mxu0
  %v2715 = vadd.f32 0.0, %v2714
  %v2716 = vpop.f32.mrb[0].mxu0
  %v2717 = vadd.f32 0.0, %v2716
  %2718 = vdwg.mxu0
  %v2723 = vcombine.low %v2644, %v2646
  %v2724 = vcombine.low %v2715, %v2717
  %v2726 = vunpack.c.l.s4 1983009808
  %v2727 = vunpack.c.0.s8 %v2726
  %v2728 = vlaneseq
  %v2729 = vshrl.u32 %v2728, 7
  %v2730 = vsub.s32 %v2727, %v2729
  %v2731 = vrot.slane %v2723, %v2730
  %v2733 = vunpack.c.l.s4 1983009808
  %v2734 = vunpack.c.0.s8 %v2733
  %v2735 = vlaneseq
  %v2736 = vshrl.u32 %v2735, 7
  %v2737 = vsub.s32 %v2734, %v2736
  %v2738 = vrot.slane %v2724, %v2737
  %v2739 = vcombine.low %v2731, %v2738
  %v2741 = vadd.f32 %v2512, %v2739
  %v2742 = vmul.f32 %v2741, 0.5
  %v2743 = vtanh.pop %v2742
  %v2744 = vmul.f32 %v2743, 0.5
  %v2745 = vadd.f32 %v2744, 0.5
  %v2747 = vrot.slane %v2741, 2
  %v2749 = vmul.f32 %v2747, 0.5
  %v2750 = vtanh.pop %v2749
  %v2751 = vmul.f32 %v2750, 0.5
  %v2752 = vadd.f32 %v2751, 0.5
  %v2753 = vrot.slane %v2741, 4
  %v2755 = vtanh.pop %v2753
  %v2756 = vrot.slane %v2741, 6
  %v2758 = vmul.f32 %v2756, 0.5
  %v2759 = vtanh.pop %v2758
  %v2760 = vmul.f32 %v2759, 0.5
  %v2761 = vadd.f32 %v2760, 0.5
  %v2762 = vmul.f32 %v2752, %v2493
  %v2763 = vmul.f32 %v2745, %v2755
  %v2764 = vadd.f32 %v2762, %v2763
  %v2765 = vtanh.pop %v2764
  %v2766 = vmul.f32 %v2761, %v2765
  %s2767 = scalar_lea.vmem [#allocation3], 14
  %2768 = vst.msk [vmem:[%s2767] sm:$0x3] %vm870, %v2766
  %v2771 = vunpack.c.l.s4 1983009808
  %v2772 = vunpack.c.0.s8 %v2771
  %v2773 = vlaneseq
  %v2774 = vshrl.u32 %v2773, 7
  %v2775 = vsub.s32 %v2772, %v2774
  %v2776 = vrot.slane %v2766, %v2775
  %2777 = vrot.lane.b32.xlu0 %v2776, 64
  %v2778 = vpop.permute.xlu0 %2777
  %s2780 = scalar_lea.vmem [#allocation4], 12
  %2781 = vst.msk [vmem:[%s2780] sm:$0x3] %vm870, %v2778
  %s2782 = scalar_lea.vmem [#allocation2], 64
  %v2783 = vld [vmem:[%s2782] sm:$0xff]
  %v2784 = vld [vmem:[%s3] sm:$0xff]
  %v2785 = vld [vmem:[%s3 + $0x8] sm:$0xff]
  %v2786 = vld [vmem:[%s3 + $0x10] sm:$0xff]
  %v2787 = vld [vmem:[%s3 + $0x18] sm:$0xff]
  %v2788 = vld [vmem:[%s3 + $0x20] sm:$0xff]
  %v2789 = vld [vmem:[%s3 + $0x28] sm:$0xff]
  %v2790 = vld [vmem:[%s3 + $0x30] sm:$0xff]
  %v2791 = vld [vmem:[%s3 + $0x38] sm:$0xff]
  %v2792 = vld [vmem:[%s3 + $0x40] sm:$0xff]
  %v2793 = vld [vmem:[%s3 + $0x48] sm:$0xff]
  %v2794 = vld [vmem:[%s3 + $0x50] sm:$0xff]
  %v2795 = vld [vmem:[%s3 + $0x58] sm:$0xff]
  %v2796 = vld [vmem:[%s3 + $0x60] sm:$0xff]
  %v2797 = vld [vmem:[%s3 + $0x68] sm:$0xff]
  %v2798 = vld [vmem:[%s3 + $0x70] sm:$0xff]
  %v2799 = vld [vmem:[%s3 + $0x78] sm:$0xff]
  %v2800 = vld [vmem:[%s3 + $0x80] sm:$0xff]
  %v2801 = vld [vmem:[%s3 + $0x88] sm:$0xff]
  %v2802 = vld [vmem:[%s3 + $0x90] sm:$0xff]
  %v2803 = vld [vmem:[%s3 + $0x98] sm:$0xff]
  %v2804 = vld [vmem:[%s3 + $0xa0] sm:$0xff]
  %v2805 = vld [vmem:[%s3 + $0xa8] sm:$0xff]
  %v2806 = vld [vmem:[%s3 + $0xb0] sm:$0xff]
  %v2807 = vld [vmem:[%s3 + $0xb8] sm:$0xff]
  %v2808 = vld [vmem:[%s3 + $0xc0] sm:$0xff]
  %v2809 = vld [vmem:[%s3 + $0xc8] sm:$0xff]
  %v2810 = vld [vmem:[%s3 + $0xd0] sm:$0xff]
  %v2811 = vld [vmem:[%s3 + $0xd8] sm:$0xff]
  %v2812 = vld [vmem:[%s3 + $0xe0] sm:$0xff]
  %v2813 = vld [vmem:[%s3 + $0xe8] sm:$0xff]
  %v2814 = vld [vmem:[%s3 + $0xf0] sm:$0xff]
  %v2815 = vld [vmem:[%s3 + $0xf8] sm:$0xff]
  %v2816 = vld [vmem:[%s3 + $0x100] sm:$0xff]
  %v2817 = vld [vmem:[%s3 + $0x108] sm:$0xff]
  %v2818 = vld [vmem:[%s3 + $0x110] sm:$0xff]
  %v2819 = vld [vmem:[%s3 + $0x118] sm:$0xff]
  %v2820 = vld [vmem:[%s3 + $0x120] sm:$0xff]
  %v2821 = vld [vmem:[%s3 + $0x128] sm:$0xff]
  %v2822 = vld [vmem:[%s3 + $0x130] sm:$0xff]
  %v2823 = vld [vmem:[%s3 + $0x138] sm:$0xff]
  %v2824 = vld [vmem:[%s3 + $0x140] sm:$0xff]
  %v2825 = vld [vmem:[%s3 + $0x148] sm:$0xff]
  %v2826 = vld [vmem:[%s3 + $0x150] sm:$0xff]
  %v2827 = vld [vmem:[%s3 + $0x158] sm:$0xff]
  %v2828 = vld [vmem:[%s3 + $0x160] sm:$0xff]
  %v2829 = vld [vmem:[%s3 + $0x168] sm:$0xff]
  %v2830 = vld [vmem:[%s3 + $0x170] sm:$0xff]
  %v2831 = vld [vmem:[%s3 + $0x178] sm:$0xff]
  %v2832 = vld [vmem:[%s3 + $0x180] sm:$0xff]
  %v2833 = vld [vmem:[%s3 + $0x188] sm:$0xff]
  %v2834 = vld [vmem:[%s3 + $0x190] sm:$0xff]
  %v2835 = vld [vmem:[%s3 + $0x198] sm:$0xff]
  %v2836 = vld [vmem:[%s3 + $0x1a0] sm:$0xff]
  %v2837 = vld [vmem:[%s3 + $0x1a8] sm:$0xff]
  %v2838 = vld [vmem:[%s3 + $0x1b0] sm:$0xff]
  %v2839 = vld [vmem:[%s3 + $0x1b8] sm:$0xff]
  %v2840 = vld [vmem:[%s3 + $0x1c0] sm:$0xff]
  %v2841 = vld [vmem:[%s3 + $0x1c8] sm:$0xff]
  %v2842 = vld [vmem:[%s3 + $0x1d0] sm:$0xff]
  %v2843 = vld [vmem:[%s3 + $0x1d8] sm:$0xff]
  %v2844 = vld [vmem:[%s3 + $0x1e0] sm:$0xff]
  %v2845 = vld [vmem:[%s3 + $0x1e8] sm:$0xff]
  %v2846 = vld [vmem:[%s3 + $0x1f0] sm:$0xff]
  %v2847 = vld [vmem:[%s3 + $0x1f8] sm:$0xff]
  %2848 = vmatprep.subr.mxu0 %v2785
  %2849 = vmatpush1.msra.mxu0 %v2784
  %2850 = vmatprep.subr.mxu0 %v2789
  %2851 = vmatpush1.msra.mxu0 %v2788
  %2852 = vmatprep.subr.mxu0 %v2793
  %2853 = vmatpush1.msra.mxu0 %v2792
  %2854 = vmatprep.subr.mxu0 %v2797
  %2855 = vmatpush1.msra.mxu0 %v2796
  %2856 = vmatprep.subr.mxu0 %v2801
  %2857 = vmatpush1.msra.mxu0 %v2800
  %2858 = vmatprep.subr.mxu0 %v2805
  %2859 = vmatpush1.msra.mxu0 %v2804
  %2860 = vmatprep.subr.mxu0 %v2809
  %2861 = vmatpush1.msra.mxu0 %v2808
  %2862 = vmatprep.subr.mxu0 %v2813
  %2863 = vmatpush1.msra.mxu0 %v2812
  %2864 = vmatprep.subr.mxu0 %v2817
  %2865 = vmatpush1.msra.mxu0 %v2816
  %2866 = vmatprep.subr.mxu0 %v2821
  %2867 = vmatpush1.msra.mxu0 %v2820
  %2868 = vmatprep.subr.mxu0 %v2825
  %2869 = vmatpush1.msra.mxu0 %v2824
  %2870 = vmatprep.subr.mxu0 %v2829
  %2871 = vmatpush1.msra.mxu0 %v2828
  %2872 = vmatprep.subr.mxu0 %v2833
  %2873 = vmatpush1.msra.mxu0 %v2832
  %2874 = vmatprep.subr.mxu0 %v2837
  %2875 = vmatpush1.msra.mxu0 %v2836
  %2876 = vmatprep.subr.mxu0 %v2841
  %2877 = vmatpush1.msra.mxu0 %v2840
  %2878 = vmatprep.subr.mxu0 %v2845
  %2879 = vmatpush1.msra.mxu0 %v2844
  %2880 = vmatprep.subr.mxu0 0.0
  %2881 = vmatpush1.msra.mxu0 0.0
  %2882 = vmatprep.subr.mxu0 0.0
  %2883 = vmatpush1.msra.mxu0 0.0
  %2884 = vmatprep.subr.mxu0 0.0
  %2885 = vmatpush1.msra.mxu0 0.0
  %2886 = vmatprep.subr.mxu0 0.0
  %2887 = vmatpush1.msra.mxu0 0.0
  %2888 = vmatprep.subr.mxu0 0.0
  %2889 = vmatpush1.msra.mxu0 0.0
  %2890 = vmatprep.subr.mxu0 0.0
  %2891 = vmatpush1.msra.mxu0 0.0
  %2892 = vmatprep.subr.mxu0 0.0
  %2893 = vmatpush1.msra.mxu0 0.0
  %2894 = vmatprep.subr.mxu0 0.0
  %2895 = vmatpush1.msra.mxu0 0.0
  %2896 = vmatprep.subr.mxu0 0.0
  %2897 = vmatpush1.msra.mxu0 0.0
  %2898 = vmatprep.subr.mxu0 0.0
  %2899 = vmatpush1.msra.mxu0 0.0
  %2900 = vmatprep.subr.mxu0 0.0
  %2901 = vmatpush1.msra.mxu0 0.0
  %2902 = vmatprep.subr.mxu0 0.0
  %2903 = vmatpush1.msra.mxu0 0.0
  %2904 = vmatprep.subr.mxu0 0.0
  %2905 = vmatpush1.msra.mxu0 0.0
  %2906 = vmatprep.subr.mxu0 0.0
  %2907 = vmatpush1.msra.mxu0 0.0
  %2908 = vmatprep.subr.mxu0 0.0
  %2909 = vmatpush1.msra.mxu0 0.0
  %2910 = vmatprep.subr.mxu0 0.0
  %2911 = vmatpush1.msra.mxu0 0.0
  %2912 = vmatprep.mubr.f32.mxu0 0.0
  %2913 = vmatmul.mubr.f32.gmra.mrb[0].mxu0 %v2766
  %v2914 = vpop.f32.mrb[0].mxu0
  %v2915 = vadd.f32 0.0, %v2914
  %v2916 = vpop.f32.mrb[0].mxu0
  %v2917 = vadd.f32 0.0, %v2916
  %2918 = vdwg.mxu0
  %2919 = vmatprep.subr.mxu0 %v2787
  %2920 = vmatpush1.msra.mxu0 %v2786
  %2921 = vmatprep.subr.mxu0 %v2791
  %2922 = vmatpush1.msra.mxu0 %v2790
  %2923 = vmatprep.subr.mxu0 %v2795
  %2924 = vmatpush1.msra.mxu0 %v2794
  %2925 = vmatprep.subr.mxu0 %v2799
  %2926 = vmatpush1.msra.mxu0 %v2798
  %2927 = vmatprep.subr.mxu0 %v2803
  %2928 = vmatpush1.msra.mxu0 %v2802
  %2929 = vmatprep.subr.mxu0 %v2807
  %2930 = vmatpush1.msra.mxu0 %v2806
  %2931 = vmatprep.subr.mxu0 %v2811
  %2932 = vmatpush1.msra.mxu0 %v2810
  %2933 = vmatprep.subr.mxu0 %v2815
  %2934 = vmatpush1.msra.mxu0 %v2814
  %2935 = vmatprep.subr.mxu0 %v2819
  %2936 = vmatpush1.msra.mxu0 %v2818
  %2937 = vmatprep.subr.mxu0 %v2823
  %2938 = vmatpush1.msra.mxu0 %v2822
  %2939 = vmatprep.subr.mxu0 %v2827
  %2940 = vmatpush1.msra.mxu0 %v2826
  %2941 = vmatprep.subr.mxu0 %v2831
  %2942 = vmatpush1.msra.mxu0 %v2830
  %2943 = vmatprep.subr.mxu0 %v2835
  %2944 = vmatpush1.msra.mxu0 %v2834
  %2945 = vmatprep.subr.mxu0 %v2839
  %2946 = vmatpush1.msra.mxu0 %v2838
  %2947 = vmatprep.subr.mxu0 %v2843
  %2948 = vmatpush1.msra.mxu0 %v2842
  %2949 = vmatprep.subr.mxu0 %v2847
  %2950 = vmatpush1.msra.mxu0 %v2846
  %2951 = vmatprep.subr.mxu0 0.0
  %2952 = vmatpush1.msra.mxu0 0.0
  %2953 = vmatprep.subr.mxu0 0.0
  %2954 = vmatpush1.msra.mxu0 0.0
  %2955 = vmatprep.subr.mxu0 0.0
  %2956 = vmatpush1.msra.mxu0 0.0
  %2957 = vmatprep.subr.mxu0 0.0
  %2958 = vmatpush1.msra.mxu0 0.0
  %2959 = vmatprep.subr.mxu0 0.0
  %2960 = vmatpush1.msra.mxu0 0.0
  %2961 = vmatprep.subr.mxu0 0.0
  %2962 = vmatpush1.msra.mxu0 0.0
  %2963 = vmatprep.subr.mxu0 0.0
  %2964 = vmatpush1.msra.mxu0 0.0
  %2965 = vmatprep.subr.mxu0 0.0
  %2966 = vmatpush1.msra.mxu0 0.0
  %2967 = vmatprep.subr.mxu0 0.0
  %2968 = vmatpush1.msra.mxu0 0.0
  %2969 = vmatprep.subr.mxu0 0.0
  %2970 = vmatpush1.msra.mxu0 0.0
  %2971 = vmatprep.subr.mxu0 0.0
  %2972 = vmatpush1.msra.mxu0 0.0
  %2973 = vmatprep.subr.mxu0 0.0
  %2974 = vmatpush1.msra.mxu0 0.0
  %2975 = vmatprep.subr.mxu0 0.0
  %2976 = vmatpush1.msra.mxu0 0.0
  %2977 = vmatprep.subr.mxu0 0.0
  %2978 = vmatpush1.msra.mxu0 0.0
  %2979 = vmatprep.subr.mxu0 0.0
  %2980 = vmatpush1.msra.mxu0 0.0
  %2981 = vmatprep.subr.mxu0 0.0
  %2982 = vmatpush1.msra.mxu0 0.0
  %2983 = vmatprep.mubr.f32.mxu0 0.0
  %2984 = vmatmul.mubr.f32.gmra.mrb[0].mxu0 %v2766
  %v2985 = vpop.f32.mrb[0].mxu0
  %v2986 = vadd.f32 0.0, %v2985
  %v2987 = vpop.f32.mrb[0].mxu0
  %v2988 = vadd.f32 0.0, %v2987
  %2989 = vdwg.mxu0
  %v2994 = vcombine.low %v2915, %v2917
  %v2995 = vcombine.low %v2986, %v2988
  %v2997 = vunpack.c.l.s4 1983009808
  %v2998 = vunpack.c.0.s8 %v2997
  %v2999 = vlaneseq
  %v3000 = vshrl.u32 %v2999, 7
  %v3001 = vsub.s32 %v2998, %v3000
  %v3002 = vrot.slane %v2994, %v3001
  %v3004 = vunpack.c.l.s4 1983009808
  %v3005 = vunpack.c.0.s8 %v3004
  %v3006 = vlaneseq
  %v3007 = vshrl.u32 %v3006, 7
  %v3008 = vsub.s32 %v3005, %v3007
  %v3009 = vrot.slane %v2995, %v3008
  %v3010 = vcombine.low %v3002, %v3009
  %v3012 = vadd.f32 %v2783, %v3010
  %v3013 = vmul.f32 %v3012, 0.5
  %v3014 = vtanh.pop %v3013
  %v3015 = vmul.f32 %v3014, 0.5
  %v3016 = vadd.f32 %v3015, 0.5
  %v3018 = vrot.slane %v3012, 2
  %v3020 = vmul.f32 %v3018, 0.5
  %v3021 = vtanh.pop %v3020
  %v3022 = vmul.f32 %v3021, 0.5
  %v3023 = vadd.f32 %v3022, 0.5
  %v3024 = vrot.slane %v3012, 4
  %v3026 = vtanh.pop %v3024
  %v3027 = vrot.slane %v3012, 6
  %v3029 = vmul.f32 %v3027, 0.5
  %v3030 = vtanh.pop %v3029
  %v3031 = vmul.f32 %v3030, 0.5
  %v3032 = vadd.f32 %v3031, 0.5
  %v3033 = vmul.f32 %v3023, %v2764
  %v3034 = vmul.f32 %v3016, %v3026
  %v3035 = vadd.f32 %v3033, %v3034
  %v3036 = vtanh.pop %v3035
  %v3037 = vmul.f32 %v3032, %v3036
  %s3038 = scalar_lea.vmem [#allocation3], 16
  %3039 = vst.msk [vmem:[%s3038] sm:$0x3] %vm870, %v3037
  %v3042 = vunpack.c.l.s4 1983009808
  %v3043 = vunpack.c.0.s8 %v3042
  %v3044 = vlaneseq
  %v3045 = vshrl.u32 %v3044, 7
  %v3046 = vsub.s32 %v3043, %v3045
  %v3047 = vrot.slane %v3037, %v3046
  %3048 = vrot.lane.b32.xlu0 %v3047, 64
  %v3049 = vpop.permute.xlu0 %3048
  %s3051 = scalar_lea.vmem [#allocation4], 10
  %3052 = vst.msk [vmem:[%s3051] sm:$0x3] %vm870, %v3049
  %s3053 = scalar_lea.vmem [#allocation2], 72
  %v3054 = vld [vmem:[%s3053] sm:$0xff]
  %v3055 = vld [vmem:[%s3] sm:$0xff]
  %v3056 = vld [vmem:[%s3 + $0x8] sm:$0xff]
  %v3057 = vld [vmem:[%s3 + $0x10] sm:$0xff]
  %v3058 = vld [vmem:[%s3 + $0x18] sm:$0xff]
  %v3059 = vld [vmem:[%s3 + $0x20] sm:$0xff]
  %v3060 = vld [vmem:[%s3 + $0x28] sm:$0xff]
  %v3061 = vld [vmem:[%s3 + $0x30] sm:$0xff]
  %v3062 = vld [vmem:[%s3 + $0x38] sm:$0xff]
  %v3063 = vld [vmem:[%s3 + $0x40] sm:$0xff]
  %v3064 = vld [vmem:[%s3 + $0x48] sm:$0xff]
  %v3065 = vld [vmem:[%s3 + $0x50] sm:$0xff]
  %v3066 = vld [vmem:[%s3 + $0x58] sm:$0xff]
  %v3067 = vld [vmem:[%s3 + $0x60] sm:$0xff]
  %v3068 = vld [vmem:[%s3 + $0x68] sm:$0xff]
  %v3069 = vld [vmem:[%s3 + $0x70] sm:$0xff]
  %v3070 = vld [vmem:[%s3 + $0x78] sm:$0xff]
  %v3071 = vld [vmem:[%s3 + $0x80] sm:$0xff]
  %v3072 = vld [vmem:[%s3 + $0x88] sm:$0xff]
  %v3073 = vld [vmem:[%s3 + $0x90] sm:$0xff]
  %v3074 = vld [vmem:[%s3 + $0x98] sm:$0xff]
  %v3075 = vld [vmem:[%s3 + $0xa0] sm:$0xff]
  %v3076 = vld [vmem:[%s3 + $0xa8] sm:$0xff]
  %v3077 = vld [vmem:[%s3 + $0xb0] sm:$0xff]
  %v3078 = vld [vmem:[%s3 + $0xb8] sm:$0xff]
  %v3079 = vld [vmem:[%s3 + $0xc0] sm:$0xff]
  %v3080 = vld [vmem:[%s3 + $0xc8] sm:$0xff]
  %v3081 = vld [vmem:[%s3 + $0xd0] sm:$0xff]
  %v3082 = vld [vmem:[%s3 + $0xd8] sm:$0xff]
  %v3083 = vld [vmem:[%s3 + $0xe0] sm:$0xff]
  %v3084 = vld [vmem:[%s3 + $0xe8] sm:$0xff]
  %v3085 = vld [vmem:[%s3 + $0xf0] sm:$0xff]
  %v3086 = vld [vmem:[%s3 + $0xf8] sm:$0xff]
  %v3087 = vld [vmem:[%s3 + $0x100] sm:$0xff]
  %v3088 = vld [vmem:[%s3 + $0x108] sm:$0xff]
  %v3089 = vld [vmem:[%s3 + $0x110] sm:$0xff]
  %v3090 = vld [vmem:[%s3 + $0x118] sm:$0xff]
  %v3091 = vld [vmem:[%s3 + $0x120] sm:$0xff]
  %v3092 = vld [vmem:[%s3 + $0x128] sm:$0xff]
  %v3093 = vld [vmem:[%s3 + $0x130] sm:$0xff]
  %v3094 = vld [vmem:[%s3 + $0x138] sm:$0xff]
  %v3095 = vld [vmem:[%s3 + $0x140] sm:$0xff]
  %v3096 = vld [vmem:[%s3 + $0x148] sm:$0xff]
  %v3097 = vld [vmem:[%s3 + $0x150] sm:$0xff]
  %v3098 = vld [vmem:[%s3 + $0x158] sm:$0xff]
  %v3099 = vld [vmem:[%s3 + $0x160] sm:$0xff]
  %v3100 = vld [vmem:[%s3 + $0x168] sm:$0xff]
  %v3101 = vld [vmem:[%s3 + $0x170] sm:$0xff]
  %v3102 = vld [vmem:[%s3 + $0x178] sm:$0xff]
  %v3103 = vld [vmem:[%s3 + $0x180] sm:$0xff]
  %v3104 = vld [vmem:[%s3 + $0x188] sm:$0xff]
  %v3105 = vld [vmem:[%s3 + $0x190] sm:$0xff]
  %v3106 = vld [vmem:[%s3 + $0x198] sm:$0xff]
  %v3107 = vld [vmem:[%s3 + $0x1a0] sm:$0xff]
  %v3108 = vld [vmem:[%s3 + $0x1a8] sm:$0xff]
  %v3109 = vld [vmem:[%s3 + $0x1b0] sm:$0xff]
  %v3110 = vld [vmem:[%s3 + $0x1b8] sm:$0xff]
  %v3111 = vld [vmem:[%s3 + $0x1c0] sm:$0xff]
  %v3112 = vld [vmem:[%s3 + $0x1c8] sm:$0xff]
  %v3113 = vld [vmem:[%s3 + $0x1d0] sm:$0xff]
  %v3114 = vld [vmem:[%s3 + $0x1d8] sm:$0xff]
  %v3115 = vld [vmem:[%s3 + $0x1e0] sm:$0xff]
  %v3116 = vld [vmem:[%s3 + $0x1e8] sm:$0xff]
  %v3117 = vld [vmem:[%s3 + $0x1f0] sm:$0xff]
  %v3118 = vld [vmem:[%s3 + $0x1f8] sm:$0xff]
  %3119 = vmatprep.subr.mxu0 %v3056
  %3120 = vmatpush1.msra.mxu0 %v3055
  %3121 = vmatprep.subr.mxu0 %v3060
  %3122 = vmatpush1.msra.mxu0 %v3059
  %3123 = vmatprep.subr.mxu0 %v3064
  %3124 = vmatpush1.msra.mxu0 %v3063
  %3125 = vmatprep.subr.mxu0 %v3068
  %3126 = vmatpush1.msra.mxu0 %v3067
  %3127 = vmatprep.subr.mxu0 %v3072
  %3128 = vmatpush1.msra.mxu0 %v3071
  %3129 = vmatprep.subr.mxu0 %v3076
  %3130 = vmatpush1.msra.mxu0 %v3075
  %3131 = vmatprep.subr.mxu0 %v3080
  %3132 = vmatpush1.msra.mxu0 %v3079
  %3133 = vmatprep.subr.mxu0 %v3084
  %3134 = vmatpush1.msra.mxu0 %v3083
  %3135 = vmatprep.subr.mxu0 %v3088
  %3136 = vmatpush1.msra.mxu0 %v3087
  %3137 = vmatprep.subr.mxu0 %v3092
  %3138 = vmatpush1.msra.mxu0 %v3091
  %3139 = vmatprep.subr.mxu0 %v3096
  %3140 = vmatpush1.msra.mxu0 %v3095
  %3141 = vmatprep.subr.mxu0 %v3100
  %3142 = vmatpush1.msra.mxu0 %v3099
  %3143 = vmatprep.subr.mxu0 %v3104
  %3144 = vmatpush1.msra.mxu0 %v3103
  %3145 = vmatprep.subr.mxu0 %v3108
  %3146 = vmatpush1.msra.mxu0 %v3107
  %3147 = vmatprep.subr.mxu0 %v3112
  %3148 = vmatpush1.msra.mxu0 %v3111
  %3149 = vmatprep.subr.mxu0 %v3116
  %3150 = vmatpush1.msra.mxu0 %v3115
  %3151 = vmatprep.subr.mxu0 0.0
  %3152 = vmatpush1.msra.mxu0 0.0
  %3153 = vmatprep.subr.mxu0 0.0
  %3154 = vmatpush1.msra.mxu0 0.0
  %3155 = vmatprep.subr.mxu0 0.0
  %3156 = vmatpush1.msra.mxu0 0.0
  %3157 = vmatprep.subr.mxu0 0.0
  %3158 = vmatpush1.msra.mxu0 0.0
  %3159 = vmatprep.subr.mxu0 0.0
  %3160 = vmatpush1.msra.mxu0 0.0
  %3161 = vmatprep.subr.mxu0 0.0
  %3162 = vmatpush1.msra.mxu0 0.0
  %3163 = vmatprep.subr.mxu0 0.0
  %3164 = vmatpush1.msra.mxu0 0.0
  %3165 = vmatprep.subr.mxu0 0.0
  %3166 = vmatpush1.msra.mxu0 0.0
  %3167 = vmatprep.subr.mxu0 0.0
  %3168 = vmatpush1.msra.mxu0 0.0
  %3169 = vmatprep.subr.mxu0 0.0
  %3170 = vmatpush1.msra.mxu0 0.0
  %3171 = vmatprep.subr.mxu0 0.0
  %3172 = vmatpush1.msra.mxu0 0.0
  %3173 = vmatprep.subr.mxu0 0.0
  %3174 = vmatpush1.msra.mxu0 0.0
  %3175 = vmatprep.subr.mxu0 0.0
  %3176 = vmatpush1.msra.mxu0 0.0
  %3177 = vmatprep.subr.mxu0 0.0
  %3178 = vmatpush1.msra.mxu0 0.0
  %3179 = vmatprep.subr.mxu0 0.0
  %3180 = vmatpush1.msra.mxu0 0.0
  %3181 = vmatprep.subr.mxu0 0.0
  %3182 = vmatpush1.msra.mxu0 0.0
  %3183 = vmatprep.mubr.f32.mxu0 0.0
  %3184 = vmatmul.mubr.f32.gmra.mrb[0].mxu0 %v3037
  %v3185 = vpop.f32.mrb[0].mxu0
  %v3186 = vadd.f32 0.0, %v3185
  %v3187 = vpop.f32.mrb[0].mxu0
  %v3188 = vadd.f32 0.0, %v3187
  %3189 = vdwg.mxu0
  %3190 = vmatprep.subr.mxu0 %v3058
  %3191 = vmatpush1.msra.mxu0 %v3057
  %3192 = vmatprep.subr.mxu0 %v3062
  %3193 = vmatpush1.msra.mxu0 %v3061
  %3194 = vmatprep.subr.mxu0 %v3066
  %3195 = vmatpush1.msra.mxu0 %v3065
  %3196 = vmatprep.subr.mxu0 %v3070
  %3197 = vmatpush1.msra.mxu0 %v3069
  %3198 = vmatprep.subr.mxu0 %v3074
  %3199 = vmatpush1.msra.mxu0 %v3073
  %3200 = vmatprep.subr.mxu0 %v3078
  %3201 = vmatpush1.msra.mxu0 %v3077
  %3202 = vmatprep.subr.mxu0 %v3082
  %3203 = vmatpush1.msra.mxu0 %v3081
  %3204 = vmatprep.subr.mxu0 %v3086
  %3205 = vmatpush1.msra.mxu0 %v3085
  %3206 = vmatprep.subr.mxu0 %v3090
  %3207 = vmatpush1.msra.mxu0 %v3089
  %3208 = vmatprep.subr.mxu0 %v3094
  %3209 = vmatpush1.msra.mxu0 %v3093
  %3210 = vmatprep.subr.mxu0 %v3098
  %3211 = vmatpush1.msra.mxu0 %v3097
  %3212 = vmatprep.subr.mxu0 %v3102
  %3213 = vmatpush1.msra.mxu0 %v3101
  %3214 = vmatprep.subr.mxu0 %v3106
  %3215 = vmatpush1.msra.mxu0 %v3105
  %3216 = vmatprep.subr.mxu0 %v3110
  %3217 = vmatpush1.msra.mxu0 %v3109
  %3218 = vmatprep.subr.mxu0 %v3114
  %3219 = vmatpush1.msra.mxu0 %v3113
  %3220 = vmatprep.subr.mxu0 %v3118
  %3221 = vmatpush1.msra.mxu0 %v3117
  %3222 = vmatprep.subr.mxu0 0.0
  %3223 = vmatpush1.msra.mxu0 0.0
  %3224 = vmatprep.subr.mxu0 0.0
  %3225 = vmatpush1.msra.mxu0 0.0
  %3226 = vmatprep.subr.mxu0 0.0
  %3227 = vmatpush1.msra.mxu0 0.0
  %3228 = vmatprep.subr.mxu0 0.0
  %3229 = vmatpush1.msra.mxu0 0.0
  %3230 = vmatprep.subr.mxu0 0.0
  %3231 = vmatpush1.msra.mxu0 0.0
  %3232 = vmatprep.subr.mxu0 0.0
  %3233 = vmatpush1.msra.mxu0 0.0
  %3234 = vmatprep.subr.mxu0 0.0
  %3235 = vmatpush1.msra.mxu0 0.0
  %3236 = vmatprep.subr.mxu0 0.0
  %3237 = vmatpush1.msra.mxu0 0.0
  %3238 = vmatprep.subr.mxu0 0.0
  %3239 = vmatpush1.msra.mxu0 0.0
  %3240 = vmatprep.subr.mxu0 0.0
  %3241 = vmatpush1.msra.mxu0 0.0
  %3242 = vmatprep.subr.mxu0 0.0
  %3243 = vmatpush1.msra.mxu0 0.0
  %3244 = vmatprep.subr.mxu0 0.0
  %3245 = vmatpush1.msra.mxu0 0.0
  %3246 = vmatprep.subr.mxu0 0.0
  %3247 = vmatpush1.msra.mxu0 0.0
  %3248 = vmatprep.subr.mxu0 0.0
  %3249 = vmatpush1.msra.mxu0 0.0
  %3250 = vmatprep.subr.mxu0 0.0
  %3251 = vmatpush1.msra.mxu0 0.0
  %3252 = vmatprep.subr.mxu0 0.0
  %3253 = vmatpush1.msra.mxu0 0.0
  %3254 = vmatprep.mubr.f32.mxu0 0.0
  %3255 = vmatmul.mubr.f32.gmra.mrb[0].mxu0 %v3037
  %v3256 = vpop.f32.mrb[0].mxu0
  %v3257 = vadd.f32 0.0, %v3256
  %v3258 = vpop.f32.mrb[0].mxu0
  %v3259 = vadd.f32 0.0, %v3258
  %3260 = vdwg.mxu0
  %v3265 = vcombine.low %v3186, %v3188
  %v3266 = vcombine.low %v3257, %v3259
  %v3268 = vunpack.c.l.s4 1983009808
  %v3269 = vunpack.c.0.s8 %v3268
  %v3270 = vlaneseq
  %v3271 = vshrl.u32 %v3270, 7
  %v3272 = vsub.s32 %v3269, %v3271
  %v3273 = vrot.slane %v3265, %v3272
  %v3275 = vunpack.c.l.s4 1983009808
  %v3276 = vunpack.c.0.s8 %v3275
  %v3277 = vlaneseq
  %v3278 = vshrl.u32 %v3277, 7
  %v3279 = vsub.s32 %v3276, %v3278
  %v3280 = vrot.slane %v3266, %v3279
  %v3281 = vcombine.low %v3273, %v3280
  %v3283 = vadd.f32 %v3054, %v3281
  %v3284 = vmul.f32 %v3283, 0.5
  %v3285 = vtanh.pop %v3284
  %v3286 = vmul.f32 %v3285, 0.5
  %v3287 = vadd.f32 %v3286, 0.5
  %v3289 = vrot.slane %v3283, 2
  %v3291 = vmul.f32 %v3289, 0.5
  %v3292 = vtanh.pop %v3291
  %v3293 = vmul.f32 %v3292, 0.5
  %v3294 = vadd.f32 %v3293, 0.5
  %v3295 = vrot.slane %v3283, 4
  %v3297 = vtanh.pop %v3295
  %v3298 = vrot.slane %v3283, 6
  %v3300 = vmul.f32 %v3298, 0.5
  %v3301 = vtanh.pop %v3300
  %v3302 = vmul.f32 %v3301, 0.5
  %v3303 = vadd.f32 %v3302, 0.5
  %v3304 = vmul.f32 %v3294, %v3035
  %v3305 = vmul.f32 %v3287, %v3297
  %v3306 = vadd.f32 %v3304, %v3305
  %v3307 = vtanh.pop %v3306
  %v3308 = vmul.f32 %v3303, %v3307
  %s3309 = scalar_lea.vmem [#allocation3], 18
  %3310 = vst.msk [vmem:[%s3309] sm:$0x3] %vm870, %v3308
  %v3313 = vunpack.c.l.s4 1983009808
  %v3314 = vunpack.c.0.s8 %v3313
  %v3315 = vlaneseq
  %v3316 = vshrl.u32 %v3315, 7
  %v3317 = vsub.s32 %v3314, %v3316
  %v3318 = vrot.slane %v3308, %v3317
  %3319 = vrot.lane.b32.xlu0 %v3318, 64
  %v3320 = vpop.permute.xlu0 %3319
  %s3322 = scalar_lea.vmem [#allocation4], 8
  %3323 = vst.msk [vmem:[%s3322] sm:$0x3] %vm870, %v3320
  %s3324 = scalar_lea.vmem [#allocation2], 80
  %v3325 = vld [vmem:[%s3324] sm:$0xff]
  %v3326 = vld [vmem:[%s3] sm:$0xff]
  %v3327 = vld [vmem:[%s3 + $0x8] sm:$0xff]
  %v3328 = vld [vmem:[%s3 + $0x10] sm:$0xff]
  %v3329 = vld [vmem:[%s3 + $0x18] sm:$0xff]
  %v3330 = vld [vmem:[%s3 + $0x20] sm:$0xff]
  %v3331 = vld [vmem:[%s3 + $0x28] sm:$0xff]
  %v3332 = vld [vmem:[%s3 + $0x30] sm:$0xff]
  %v3333 = vld [vmem:[%s3 + $0x38] sm:$0xff]
  %v3334 = vld [vmem:[%s3 + $0x40] sm:$0xff]
  %v3335 = vld [vmem:[%s3 + $0x48] sm:$0xff]
  %v3336 = vld [vmem:[%s3 + $0x50] sm:$0xff]
  %v3337 = vld [vmem:[%s3 + $0x58] sm:$0xff]
  %v3338 = vld [vmem:[%s3 + $0x60] sm:$0xff]
  %v3339 = vld [vmem:[%s3 + $0x68] sm:$0xff]
  %v3340 = vld [vmem:[%s3 + $0x70] sm:$0xff]
  %v3341 = vld [vmem:[%s3 + $0x78] sm:$0xff]
  %v3342 = vld [vmem:[%s3 + $0x80] sm:$0xff]
  %v3343 = vld [vmem:[%s3 + $0x88] sm:$0xff]
  %v3344 = vld [vmem:[%s3 + $0x90] sm:$0xff]
  %v3345 = vld [vmem:[%s3 + $0x98] sm:$0xff]
  %v3346 = vld [vmem:[%s3 + $0xa0] sm:$0xff]
  %v3347 = vld [vmem:[%s3 + $0xa8] sm:$0xff]
  %v3348 = vld [vmem:[%s3 + $0xb0] sm:$0xff]
  %v3349 = vld [vmem:[%s3 + $0xb8] sm:$0xff]
  %v3350 = vld [vmem:[%s3 + $0xc0] sm:$0xff]
  %v3351 = vld [vmem:[%s3 + $0xc8] sm:$0xff]
  %v3352 = vld [vmem:[%s3 + $0xd0] sm:$0xff]
  %v3353 = vld [vmem:[%s3 + $0xd8] sm:$0xff]
  %v3354 = vld [vmem:[%s3 + $0xe0] sm:$0xff]
  %v3355 = vld [vmem:[%s3 + $0xe8] sm:$0xff]
  %v3356 = vld [vmem:[%s3 + $0xf0] sm:$0xff]
  %v3357 = vld [vmem:[%s3 + $0xf8] sm:$0xff]
  %v3358 = vld [vmem:[%s3 + $0x100] sm:$0xff]
  %v3359 = vld [vmem:[%s3 + $0x108] sm:$0xff]
  %v3360 = vld [vmem:[%s3 + $0x110] sm:$0xff]
  %v3361 = vld [vmem:[%s3 + $0x118] sm:$0xff]
  %v3362 = vld [vmem:[%s3 + $0x120] sm:$0xff]
  %v3363 = vld [vmem:[%s3 + $0x128] sm:$0xff]
  %v3364 = vld [vmem:[%s3 + $0x130] sm:$0xff]
  %v3365 = vld [vmem:[%s3 + $0x138] sm:$0xff]
  %v3366 = vld [vmem:[%s3 + $0x140] sm:$0xff]
  %v3367 = vld [vmem:[%s3 + $0x148] sm:$0xff]
  %v3368 = vld [vmem:[%s3 + $0x150] sm:$0xff]
  %v3369 = vld [vmem:[%s3 + $0x158] sm:$0xff]
  %v3370 = vld [vmem:[%s3 + $0x160] sm:$0xff]
  %v3371 = vld [vmem:[%s3 + $0x168] sm:$0xff]
  %v3372 = vld [vmem:[%s3 + $0x170] sm:$0xff]
  %v3373 = vld [vmem:[%s3 + $0x178] sm:$0xff]
  %v3374 = vld [vmem:[%s3 + $0x180] sm:$0xff]
  %v3375 = vld [vmem:[%s3 + $0x188] sm:$0xff]
  %v3376 = vld [vmem:[%s3 + $0x190] sm:$0xff]
  %v3377 = vld [vmem:[%s3 + $0x198] sm:$0xff]
  %v3378 = vld [vmem:[%s3 + $0x1a0] sm:$0xff]
  %v3379 = vld [vmem:[%s3 + $0x1a8] sm:$0xff]
  %v3380 = vld [vmem:[%s3 + $0x1b0] sm:$0xff]
  %v3381 = vld [vmem:[%s3 + $0x1b8] sm:$0xff]
  %v3382 = vld [vmem:[%s3 + $0x1c0] sm:$0xff]
  %v3383 = vld [vmem:[%s3 + $0x1c8] sm:$0xff]
  %v3384 = vld [vmem:[%s3 + $0x1d0] sm:$0xff]
  %v3385 = vld [vmem:[%s3 + $0x1d8] sm:$0xff]
  %v3386 = vld [vmem:[%s3 + $0x1e0] sm:$0xff]
  %v3387 = vld [vmem:[%s3 + $0x1e8] sm:$0xff]
  %v3388 = vld [vmem:[%s3 + $0x1f0] sm:$0xff]
  %v3389 = vld [vmem:[%s3 + $0x1f8] sm:$0xff]
  %3390 = vmatprep.subr.mxu0 %v3327
  %3391 = vmatpush1.msra.mxu0 %v3326
  %3392 = vmatprep.subr.mxu0 %v3331
  %3393 = vmatpush1.msra.mxu0 %v3330
  %3394 = vmatprep.subr.mxu0 %v3335
  %3395 = vmatpush1.msra.mxu0 %v3334
  %3396 = vmatprep.subr.mxu0 %v3339
  %3397 = vmatpush1.msra.mxu0 %v3338
  %3398 = vmatprep.subr.mxu0 %v3343
  %3399 = vmatpush1.msra.mxu0 %v3342
  %3400 = vmatprep.subr.mxu0 %v3347
  %3401 = vmatpush1.msra.mxu0 %v3346
  %3402 = vmatprep.subr.mxu0 %v3351
  %3403 = vmatpush1.msra.mxu0 %v3350
  %3404 = vmatprep.subr.mxu0 %v3355
  %3405 = vmatpush1.msra.mxu0 %v3354
  %3406 = vmatprep.subr.mxu0 %v3359
  %3407 = vmatpush1.msra.mxu0 %v3358
  %3408 = vmatprep.subr.mxu0 %v3363
  %3409 = vmatpush1.msra.mxu0 %v3362
  %3410 = vmatprep.subr.mxu0 %v3367
  %3411 = vmatpush1.msra.mxu0 %v3366
  %3412 = vmatprep.subr.mxu0 %v3371
  %3413 = vmatpush1.msra.mxu0 %v3370
  %3414 = vmatprep.subr.mxu0 %v3375
  %3415 = vmatpush1.msra.mxu0 %v3374
  %3416 = vmatprep.subr.mxu0 %v3379
  %3417 = vmatpush1.msra.mxu0 %v3378
  %3418 = vmatprep.subr.mxu0 %v3383
  %3419 = vmatpush1.msra.mxu0 %v3382
  %3420 = vmatprep.subr.mxu0 %v3387
  %3421 = vmatpush1.msra.mxu0 %v3386
  %3422 = vmatprep.subr.mxu0 0.0
  %3423 = vmatpush1.msra.mxu0 0.0
  %3424 = vmatprep.subr.mxu0 0.0
  %3425 = vmatpush1.msra.mxu0 0.0
  %3426 = vmatprep.subr.mxu0 0.0
  %3427 = vmatpush1.msra.mxu0 0.0
  %3428 = vmatprep.subr.mxu0 0.0
  %3429 = vmatpush1.msra.mxu0 0.0
  %3430 = vmatprep.subr.mxu0 0.0
  %3431 = vmatpush1.msra.mxu0 0.0
  %3432 = vmatprep.subr.mxu0 0.0
  %3433 = vmatpush1.msra.mxu0 0.0
  %3434 = vmatprep.subr.mxu0 0.0
  %3435 = vmatpush1.msra.mxu0 0.0
  %3436 = vmatprep.subr.mxu0 0.0
  %3437 = vmatpush1.msra.mxu0 0.0
  %3438 = vmatprep.subr.mxu0 0.0
  %3439 = vmatpush1.msra.mxu0 0.0
  %3440 = vmatprep.subr.mxu0 0.0
  %3441 = vmatpush1.msra.mxu0 0.0
  %3442 = vmatprep.subr.mxu0 0.0
  %3443 = vmatpush1.msra.mxu0 0.0
  %3444 = vmatprep.subr.mxu0 0.0
  %3445 = vmatpush1.msra.mxu0 0.0
  %3446 = vmatprep.subr.mxu0 0.0
  %3447 = vmatpush1.msra.mxu0 0.0
  %3448 = vmatprep.subr.mxu0 0.0
  %3449 = vmatpush1.msra.mxu0 0.0
  %3450 = vmatprep.subr.mxu0 0.0
  %3451 = vmatpush1.msra.mxu0 0.0
  %3452 = vmatprep.subr.mxu0 0.0
  %3453 = vmatpush1.msra.mxu0 0.0
  %3454 = vmatprep.mubr.f32.mxu0 0.0
  %3455 = vmatmul.mubr.f32.gmra.mrb[0].mxu0 %v3308
  %v3456 = vpop.f32.mrb[0].mxu0
  %v3457 = vadd.f32 0.0, %v3456
  %v3458 = vpop.f32.mrb[0].mxu0
  %v3459 = vadd.f32 0.0, %v3458
  %3460 = vdwg.mxu0
  %3461 = vmatprep.subr.mxu0 %v3329
  %3462 = vmatpush1.msra.mxu0 %v3328
  %3463 = vmatprep.subr.mxu0 %v3333
  %3464 = vmatpush1.msra.mxu0 %v3332
  %3465 = vmatprep.subr.mxu0 %v3337
  %3466 = vmatpush1.msra.mxu0 %v3336
  %3467 = vmatprep.subr.mxu0 %v3341
  %3468 = vmatpush1.msra.mxu0 %v3340
  %3469 = vmatprep.subr.mxu0 %v3345
  %3470 = vmatpush1.msra.mxu0 %v3344
  %3471 = vmatprep.subr.mxu0 %v3349
  %3472 = vmatpush1.msra.mxu0 %v3348
  %3473 = vmatprep.subr.mxu0 %v3353
  %3474 = vmatpush1.msra.mxu0 %v3352
  %3475 = vmatprep.subr.mxu0 %v3357
  %3476 = vmatpush1.msra.mxu0 %v3356
  %3477 = vmatprep.subr.mxu0 %v3361
  %3478 = vmatpush1.msra.mxu0 %v3360
  %3479 = vmatprep.subr.mxu0 %v3365
  %3480 = vmatpush1.msra.mxu0 %v3364
  %3481 = vmatprep.subr.mxu0 %v3369
  %3482 = vmatpush1.msra.mxu0 %v3368
  %3483 = vmatprep.subr.mxu0 %v3373
  %3484 = vmatpush1.msra.mxu0 %v3372
  %3485 = vmatprep.subr.mxu0 %v3377
  %3486 = vmatpush1.msra.mxu0 %v3376
  %3487 = vmatprep.subr.mxu0 %v3381
  %3488 = vmatpush1.msra.mxu0 %v3380
  %3489 = vmatprep.subr.mxu0 %v3385
  %3490 = vmatpush1.msra.mxu0 %v3384
  %3491 = vmatprep.subr.mxu0 %v3389
  %3492 = vmatpush1.msra.mxu0 %v3388
  %3493 = vmatprep.subr.mxu0 0.0
  %3494 = vmatpush1.msra.mxu0 0.0
  %3495 = vmatprep.subr.mxu0 0.0
  %3496 = vmatpush1.msra.mxu0 0.0
  %3497 = vmatprep.subr.mxu0 0.0
  %3498 = vmatpush1.msra.mxu0 0.0
  %3499 = vmatprep.subr.mxu0 0.0
  %3500 = vmatpush1.msra.mxu0 0.0
  %3501 = vmatprep.subr.mxu0 0.0
  %3502 = vmatpush1.msra.mxu0 0.0
  %3503 = vmatprep.subr.mxu0 0.0
  %3504 = vmatpush1.msra.mxu0 0.0
  %3505 = vmatprep.subr.mxu0 0.0
  %3506 = vmatpush1.msra.mxu0 0.0
  %3507 = vmatprep.subr.mxu0 0.0
  %3508 = vmatpush1.msra.mxu0 0.0
  %3509 = vmatprep.subr.mxu0 0.0
  %3510 = vmatpush1.msra.mxu0 0.0
  %3511 = vmatprep.subr.mxu0 0.0
  %3512 = vmatpush1.msra.mxu0 0.0
  %3513 = vmatprep.subr.mxu0 0.0
  %3514 = vmatpush1.msra.mxu0 0.0
  %3515 = vmatprep.subr.mxu0 0.0
  %3516 = vmatpush1.msra.mxu0 0.0
  %3517 = vmatprep.subr.mxu0 0.0
  %3518 = vmatpush1.msra.mxu0 0.0
  %3519 = vmatprep.subr.mxu0 0.0
  %3520 = vmatpush1.msra.mxu0 0.0
  %3521 = vmatprep.subr.mxu0 0.0
  %3522 = vmatpush1.msra.mxu0 0.0
  %3523 = vmatprep.subr.mxu0 0.0
  %3524 = vmatpush1.msra.mxu0 0.0
  %3525 = vmatprep.mubr.f32.mxu0 0.0
  %3526 = vmatmul.mubr.f32.gmra.mrb[0].mxu0 %v3308
  %v3527 = vpop.f32.mrb[0].mxu0
  %v3528 = vadd.f32 0.0, %v3527
  %v3529 = vpop.f32.mrb[0].mxu0
  %v3530 = vadd.f32 0.0, %v3529
  %3531 = vdwg.mxu0
  %v3536 = vcombine.low %v3457, %v3459
  %v3537 = vcombine.low %v3528, %v3530
  %v3539 = vunpack.c.l.s4 1983009808
  %v3540 = vunpack.c.0.s8 %v3539
  %v3541 = vlaneseq
  %v3542 = vshrl.u32 %v3541, 7
  %v3543 = vsub.s32 %v3540, %v3542
  %v3544 = vrot.slane %v3536, %v3543
  %v3546 = vunpack.c.l.s4 1983009808
  %v3547 = vunpack.c.0.s8 %v3546
  %v3548 = vlaneseq
  %v3549 = vshrl.u32 %v3548, 7
  %v3550 = vsub.s32 %v3547, %v3549
  %v3551 = vrot.slane %v3537, %v3550
  %v3552 = vcombine.low %v3544, %v3551
  %v3554 = vadd.f32 %v3325, %v3552
  %v3555 = vmul.f32 %v3554, 0.5
  %v3556 = vtanh.pop %v3555
  %v3557 = vmul.f32 %v3556, 0.5
  %v3558 = vadd.f32 %v3557, 0.5
  %v3560 = vrot.slane %v3554, 2
  %v3562 = vmul.f32 %v3560, 0.5
  %v3563 = vtanh.pop %v3562
  %v3564 = vmul.f32 %v3563, 0.5
  %v3565 = vadd.f32 %v3564, 0.5
  %v3566 = vrot.slane %v3554, 4
  %v3568 = vtanh.pop %v3566
  %v3569 = vrot.slane %v3554, 6
  %v3571 = vmul.f32 %v3569, 0.5
  %v3572 = vtanh.pop %v3571
  %v3573 = vmul.f32 %v3572, 0.5
  %v3574 = vadd.f32 %v3573, 0.5
  %v3575 = vmul.f32 %v3565, %v3306
  %v3576 = vmul.f32 %v3558, %v3568
  %v3577 = vadd.f32 %v3575, %v3576
  %v3578 = vtanh.pop %v3577
  %v3579 = vmul.f32 %v3574, %v3578
  %s3580 = scalar_lea.vmem [#allocation3], 20
  %3581 = vst.msk [vmem:[%s3580] sm:$0x3] %vm870, %v3579
  %v3584 = vunpack.c.l.s4 1983009808
  %v3585 = vunpack.c.0.s8 %v3584
  %v3586 = vlaneseq
  %v3587 = vshrl.u32 %v3586, 7
  %v3588 = vsub.s32 %v3585, %v3587
  %v3589 = vrot.slane %v3579, %v3588
  %3590 = vrot.lane.b32.xlu0 %v3589, 64
  %v3591 = vpop.permute.xlu0 %3590
  %s3593 = scalar_lea.vmem [#allocation4], 6
  %3594 = vst.msk [vmem:[%s3593] sm:$0x3] %vm870, %v3591
  %s3595 = scalar_lea.vmem [#allocation2], 88
  %v3596 = vld [vmem:[%s3595] sm:$0xff]
  %v3597 = vld [vmem:[%s3] sm:$0xff]
  %v3598 = vld [vmem:[%s3 + $0x8] sm:$0xff]
  %v3599 = vld [vmem:[%s3 + $0x10] sm:$0xff]
  %v3600 = vld [vmem:[%s3 + $0x18] sm:$0xff]
  %v3601 = vld [vmem:[%s3 + $0x20] sm:$0xff]
  %v3602 = vld [vmem:[%s3 + $0x28] sm:$0xff]
  %v3603 = vld [vmem:[%s3 + $0x30] sm:$0xff]
  %v3604 = vld [vmem:[%s3 + $0x38] sm:$0xff]
  %v3605 = vld [vmem:[%s3 + $0x40] sm:$0xff]
  %v3606 = vld [vmem:[%s3 + $0x48] sm:$0xff]
  %v3607 = vld [vmem:[%s3 + $0x50] sm:$0xff]
  %v3608 = vld [vmem:[%s3 + $0x58] sm:$0xff]
  %v3609 = vld [vmem:[%s3 + $0x60] sm:$0xff]
  %v3610 = vld [vmem:[%s3 + $0x68] sm:$0xff]
  %v3611 = vld [vmem:[%s3 + $0x70] sm:$0xff]
  %v3612 = vld [vmem:[%s3 + $0x78] sm:$0xff]
  %v3613 = vld [vmem:[%s3 + $0x80] sm:$0xff]
  %v3614 = vld [vmem:[%s3 + $0x88] sm:$0xff]
  %v3615 = vld [vmem:[%s3 + $0x90] sm:$0xff]
  %v3616 = vld [vmem:[%s3 + $0x98] sm:$0xff]
  %v3617 = vld [vmem:[%s3 + $0xa0] sm:$0xff]
  %v3618 = vld [vmem:[%s3 + $0xa8] sm:$0xff]
  %v3619 = vld [vmem:[%s3 + $0xb0] sm:$0xff]
  %v3620 = vld [vmem:[%s3 + $0xb8] sm:$0xff]
  %v3621 = vld [vmem:[%s3 + $0xc0] sm:$0xff]
  %v3622 = vld [vmem:[%s3 + $0xc8] sm:$0xff]
  %v3623 = vld [vmem:[%s3 + $0xd0] sm:$0xff]
  %v3624 = vld [vmem:[%s3 + $0xd8] sm:$0xff]
  %v3625 = vld [vmem:[%s3 + $0xe0] sm:$0xff]
  %v3626 = vld [vmem:[%s3 + $0xe8] sm:$0xff]
  %v3627 = vld [vmem:[%s3 + $0xf0] sm:$0xff]
  %v3628 = vld [vmem:[%s3 + $0xf8] sm:$0xff]
  %v3629 = vld [vmem:[%s3 + $0x100] sm:$0xff]
  %v3630 = vld [vmem:[%s3 + $0x108] sm:$0xff]
  %v3631 = vld [vmem:[%s3 + $0x110] sm:$0xff]
  %v3632 = vld [vmem:[%s3 + $0x118] sm:$0xff]
  %v3633 = vld [vmem:[%s3 + $0x120] sm:$0xff]
  %v3634 = vld [vmem:[%s3 + $0x128] sm:$0xff]
  %v3635 = vld [vmem:[%s3 + $0x130] sm:$0xff]
  %v3636 = vld [vmem:[%s3 + $0x138] sm:$0xff]
  %v3637 = vld [vmem:[%s3 + $0x140] sm:$0xff]
  %v3638 = vld [vmem:[%s3 + $0x148] sm:$0xff]
  %v3639 = vld [vmem:[%s3 + $0x150] sm:$0xff]
  %v3640 = vld [vmem:[%s3 + $0x158] sm:$0xff]
  %v3641 = vld [vmem:[%s3 + $0x160] sm:$0xff]
  %v3642 = vld [vmem:[%s3 + $0x168] sm:$0xff]
  %v3643 = vld [vmem:[%s3 + $0x170] sm:$0xff]
  %v3644 = vld [vmem:[%s3 + $0x178] sm:$0xff]
  %v3645 = vld [vmem:[%s3 + $0x180] sm:$0xff]
  %v3646 = vld [vmem:[%s3 + $0x188] sm:$0xff]
  %v3647 = vld [vmem:[%s3 + $0x190] sm:$0xff]
  %v3648 = vld [vmem:[%s3 + $0x198] sm:$0xff]
  %v3649 = vld [vmem:[%s3 + $0x1a0] sm:$0xff]
  %v3650 = vld [vmem:[%s3 + $0x1a8] sm:$0xff]
  %v3651 = vld [vmem:[%s3 + $0x1b0] sm:$0xff]
  %v3652 = vld [vmem:[%s3 + $0x1b8] sm:$0xff]
  %v3653 = vld [vmem:[%s3 + $0x1c0] sm:$0xff]
  %v3654 = vld [vmem:[%s3 + $0x1c8] sm:$0xff]
  %v3655 = vld [vmem:[%s3 + $0x1d0] sm:$0xff]
  %v3656 = vld [vmem:[%s3 + $0x1d8] sm:$0xff]
  %v3657 = vld [vmem:[%s3 + $0x1e0] sm:$0xff]
  %v3658 = vld [vmem:[%s3 + $0x1e8] sm:$0xff]
  %v3659 = vld [vmem:[%s3 + $0x1f0] sm:$0xff]
  %v3660 = vld [vmem:[%s3 + $0x1f8] sm:$0xff]
  %3661 = vmatprep.subr.mxu0 %v3598
  %3662 = vmatpush1.msra.mxu0 %v3597
  %3663 = vmatprep.subr.mxu0 %v3602
  %3664 = vmatpush1.msra.mxu0 %v3601
  %3665 = vmatprep.subr.mxu0 %v3606
  %3666 = vmatpush1.msra.mxu0 %v3605
  %3667 = vmatprep.subr.mxu0 %v3610
  %3668 = vmatpush1.msra.mxu0 %v3609
  %3669 = vmatprep.subr.mxu0 %v3614
  %3670 = vmatpush1.msra.mxu0 %v3613
  %3671 = vmatprep.subr.mxu0 %v3618
  %3672 = vmatpush1.msra.mxu0 %v3617
  %3673 = vmatprep.subr.mxu0 %v3622
  %3674 = vmatpush1.msra.mxu0 %v3621
  %3675 = vmatprep.subr.mxu0 %v3626
  %3676 = vmatpush1.msra.mxu0 %v3625
  %3677 = vmatprep.subr.mxu0 %v3630
  %3678 = vmatpush1.msra.mxu0 %v3629
  %3679 = vmatprep.subr.mxu0 %v3634
  %3680 = vmatpush1.msra.mxu0 %v3633
  %3681 = vmatprep.subr.mxu0 %v3638
  %3682 = vmatpush1.msra.mxu0 %v3637
  %3683 = vmatprep.subr.mxu0 %v3642
  %3684 = vmatpush1.msra.mxu0 %v3641
  %3685 = vmatprep.subr.mxu0 %v3646
  %3686 = vmatpush1.msra.mxu0 %v3645
  %3687 = vmatprep.subr.mxu0 %v3650
  %3688 = vmatpush1.msra.mxu0 %v3649
  %3689 = vmatprep.subr.mxu0 %v3654
  %3690 = vmatpush1.msra.mxu0 %v3653
  %3691 = vmatprep.subr.mxu0 %v3658
  %3692 = vmatpush1.msra.mxu0 %v3657
  %3693 = vmatprep.subr.mxu0 0.0
  %3694 = vmatpush1.msra.mxu0 0.0
  %3695 = vmatprep.subr.mxu0 0.0
  %3696 = vmatpush1.msra.mxu0 0.0
  %3697 = vmatprep.subr.mxu0 0.0
  %3698 = vmatpush1.msra.mxu0 0.0
  %3699 = vmatprep.subr.mxu0 0.0
  %3700 = vmatpush1.msra.mxu0 0.0
  %3701 = vmatprep.subr.mxu0 0.0
  %3702 = vmatpush1.msra.mxu0 0.0
  %3703 = vmatprep.subr.mxu0 0.0
  %3704 = vmatpush1.msra.mxu0 0.0
  %3705 = vmatprep.subr.mxu0 0.0
  %3706 = vmatpush1.msra.mxu0 0.0
  %3707 = vmatprep.subr.mxu0 0.0
  %3708 = vmatpush1.msra.mxu0 0.0
  %3709 = vmatprep.subr.mxu0 0.0
  %3710 = vmatpush1.msra.mxu0 0.0
  %3711 = vmatprep.subr.mxu0 0.0
  %3712 = vmatpush1.msra.mxu0 0.0
  %3713 = vmatprep.subr.mxu0 0.0
  %3714 = vmatpush1.msra.mxu0 0.0
  %3715 = vmatprep.subr.mxu0 0.0
  %3716 = vmatpush1.msra.mxu0 0.0
  %3717 = vmatprep.subr.mxu0 0.0
  %3718 = vmatpush1.msra.mxu0 0.0
  %3719 = vmatprep.subr.mxu0 0.0
  %3720 = vmatpush1.msra.mxu0 0.0
  %3721 = vmatprep.subr.mxu0 0.0
  %3722 = vmatpush1.msra.mxu0 0.0
  %3723 = vmatprep.subr.mxu0 0.0
  %3724 = vmatpush1.msra.mxu0 0.0
  %3725 = vmatprep.mubr.f32.mxu0 0.0
  %3726 = vmatmul.mubr.f32.gmra.mrb[0].mxu0 %v3579
  %v3727 = vpop.f32.mrb[0].mxu0
  %v3728 = vadd.f32 0.0, %v3727
  %v3729 = vpop.f32.mrb[0].mxu0
  %v3730 = vadd.f32 0.0, %v3729
  %3731 = vdwg.mxu0
  %3732 = vmatprep.subr.mxu0 %v3600
  %3733 = vmatpush1.msra.mxu0 %v3599
  %3734 = vmatprep.subr.mxu0 %v3604
  %3735 = vmatpush1.msra.mxu0 %v3603
  %3736 = vmatprep.subr.mxu0 %v3608
  %3737 = vmatpush1.msra.mxu0 %v3607
  %3738 = vmatprep.subr.mxu0 %v3612
  %3739 = vmatpush1.msra.mxu0 %v3611
  %3740 = vmatprep.subr.mxu0 %v3616
  %3741 = vmatpush1.msra.mxu0 %v3615
  %3742 = vmatprep.subr.mxu0 %v3620
  %3743 = vmatpush1.msra.mxu0 %v3619
  %3744 = vmatprep.subr.mxu0 %v3624
  %3745 = vmatpush1.msra.mxu0 %v3623
  %3746 = vmatprep.subr.mxu0 %v3628
  %3747 = vmatpush1.msra.mxu0 %v3627
  %3748 = vmatprep.subr.mxu0 %v3632
  %3749 = vmatpush1.msra.mxu0 %v3631
  %3750 = vmatprep.subr.mxu0 %v3636
  %3751 = vmatpush1.msra.mxu0 %v3635
  %3752 = vmatprep.subr.mxu0 %v3640
  %3753 = vmatpush1.msra.mxu0 %v3639
  %3754 = vmatprep.subr.mxu0 %v3644
  %3755 = vmatpush1.msra.mxu0 %v3643
  %3756 = vmatprep.subr.mxu0 %v3648
  %3757 = vmatpush1.msra.mxu0 %v3647
  %3758 = vmatprep.subr.mxu0 %v3652
  %3759 = vmatpush1.msra.mxu0 %v3651
  %3760 = vmatprep.subr.mxu0 %v3656
  %3761 = vmatpush1.msra.mxu0 %v3655
  %3762 = vmatprep.subr.mxu0 %v3660
  %3763 = vmatpush1.msra.mxu0 %v3659
  %3764 = vmatprep.subr.mxu0 0.0
  %3765 = vmatpush1.msra.mxu0 0.0
  %3766 = vmatprep.subr.mxu0 0.0
  %3767 = vmatpush1.msra.mxu0 0.0
  %3768 = vmatprep.subr.mxu0 0.0
  %3769 = vmatpush1.msra.mxu0 0.0
  %3770 = vmatprep.subr.mxu0 0.0
  %3771 = vmatpush1.msra.mxu0 0.0
  %3772 = vmatprep.subr.mxu0 0.0
  %3773 = vmatpush1.msra.mxu0 0.0
  %3774 = vmatprep.subr.mxu0 0.0
  %3775 = vmatpush1.msra.mxu0 0.0
  %3776 = vmatprep.subr.mxu0 0.0
  %3777 = vmatpush1.msra.mxu0 0.0
  %3778 = vmatprep.subr.mxu0 0.0
  %3779 = vmatpush1.msra.mxu0 0.0
  %3780 = vmatprep.subr.mxu0 0.0
  %3781 = vmatpush1.msra.mxu0 0.0
  %3782 = vmatprep.subr.mxu0 0.0
  %3783 = vmatpush1.msra.mxu0 0.0
  %3784 = vmatprep.subr.mxu0 0.0
  %3785 = vmatpush1.msra.mxu0 0.0
  %3786 = vmatprep.subr.mxu0 0.0
  %3787 = vmatpush1.msra.mxu0 0.0
  %3788 = vmatprep.subr.mxu0 0.0
  %3789 = vmatpush1.msra.mxu0 0.0
  %3790 = vmatprep.subr.mxu0 0.0
  %3791 = vmatpush1.msra.mxu0 0.0
  %3792 = vmatprep.subr.mxu0 0.0
  %3793 = vmatpush1.msra.mxu0 0.0
  %3794 = vmatprep.subr.mxu0 0.0
  %3795 = vmatpush1.msra.mxu0 0.0
  %3796 = vmatprep.mubr.f32.mxu0 0.0
  %3797 = vmatmul.mubr.f32.gmra.mrb[0].mxu0 %v3579
  %v3798 = vpop.f32.mrb[0].mxu0
  %v3799 = vadd.f32 0.0, %v3798
  %v3800 = vpop.f32.mrb[0].mxu0
  %v3801 = vadd.f32 0.0, %v3800
  %3802 = vdwg.mxu0
  %v3807 = vcombine.low %v3728, %v3730
  %v3808 = vcombine.low %v3799, %v3801
  %v3810 = vunpack.c.l.s4 1983009808
  %v3811 = vunpack.c.0.s8 %v3810
  %v3812 = vlaneseq
  %v3813 = vshrl.u32 %v3812, 7
  %v3814 = vsub.s32 %v3811, %v3813
  %v3815 = vrot.slane %v3807, %v3814
  %v3817 = vunpack.c.l.s4 1983009808
  %v3818 = vunpack.c.0.s8 %v3817
  %v3819 = vlaneseq
  %v3820 = vshrl.u32 %v3819, 7
  %v3821 = vsub.s32 %v3818, %v3820
  %v3822 = vrot.slane %v3808, %v3821
  %v3823 = vcombine.low %v3815, %v3822
  %v3825 = vadd.f32 %v3596, %v3823
  %v3826 = vmul.f32 %v3825, 0.5
  %v3827 = vtanh.pop %v3826
  %v3828 = vmul.f32 %v3827, 0.5
  %v3829 = vadd.f32 %v3828, 0.5
  %v3831 = vrot.slane %v3825, 2
  %v3833 = vmul.f32 %v3831, 0.5
  %v3834 = vtanh.pop %v3833
  %v3835 = vmul.f32 %v3834, 0.5
  %v3836 = vadd.f32 %v3835, 0.5
  %v3837 = vrot.slane %v3825, 4
  %v3839 = vtanh.pop %v3837
  %v3840 = vrot.slane %v3825, 6
  %v3842 = vmul.f32 %v3840, 0.5
  %v3843 = vtanh.pop %v3842
  %v3844 = vmul.f32 %v3843, 0.5
  %v3845 = vadd.f32 %v3844, 0.5
  %v3846 = vmul.f32 %v3836, %v3577
  %v3847 = vmul.f32 %v3829, %v3839
  %v3848 = vadd.f32 %v3846, %v3847
  %v3849 = vtanh.pop %v3848
  %v3850 = vmul.f32 %v3845, %v3849
  %s3851 = scalar_lea.vmem [#allocation3], 22
  %3852 = vst.msk [vmem:[%s3851] sm:$0x3] %vm870, %v3850
  %v3855 = vunpack.c.l.s4 1983009808
  %v3856 = vunpack.c.0.s8 %v3855
  %v3857 = vlaneseq
  %v3858 = vshrl.u32 %v3857, 7
  %v3859 = vsub.s32 %v3856, %v3858
  %v3860 = vrot.slane %v3850, %v3859
  %3861 = vrot.lane.b32.xlu0 %v3860, 64
  %v3862 = vpop.permute.xlu0 %3861
  %s3864 = scalar_lea.vmem [#allocation4], 4
  %3865 = vst.msk [vmem:[%s3864] sm:$0x3] %vm870, %v3862
  %s3866 = scalar_lea.vmem [#allocation2], 96
  %v3867 = vld [vmem:[%s3866] sm:$0xff]
  %v3868 = vld [vmem:[%s3] sm:$0xff]
  %v3869 = vld [vmem:[%s3 + $0x8] sm:$0xff]
  %v3870 = vld [vmem:[%s3 + $0x10] sm:$0xff]
  %v3871 = vld [vmem:[%s3 + $0x18] sm:$0xff]
  %v3872 = vld [vmem:[%s3 + $0x20] sm:$0xff]
  %v3873 = vld [vmem:[%s3 + $0x28] sm:$0xff]
  %v3874 = vld [vmem:[%s3 + $0x30] sm:$0xff]
  %v3875 = vld [vmem:[%s3 + $0x38] sm:$0xff]
  %v3876 = vld [vmem:[%s3 + $0x40] sm:$0xff]
  %v3877 = vld [vmem:[%s3 + $0x48] sm:$0xff]
  %v3878 = vld [vmem:[%s3 + $0x50] sm:$0xff]
  %v3879 = vld [vmem:[%s3 + $0x58] sm:$0xff]
  %v3880 = vld [vmem:[%s3 + $0x60] sm:$0xff]
  %v3881 = vld [vmem:[%s3 + $0x68] sm:$0xff]
  %v3882 = vld [vmem:[%s3 + $0x70] sm:$0xff]
  %v3883 = vld [vmem:[%s3 + $0x78] sm:$0xff]
  %v3884 = vld [vmem:[%s3 + $0x80] sm:$0xff]
  %v3885 = vld [vmem:[%s3 + $0x88] sm:$0xff]
  %v3886 = vld [vmem:[%s3 + $0x90] sm:$0xff]
  %v3887 = vld [vmem:[%s3 + $0x98] sm:$0xff]
  %v3888 = vld [vmem:[%s3 + $0xa0] sm:$0xff]
  %v3889 = vld [vmem:[%s3 + $0xa8] sm:$0xff]
  %v3890 = vld [vmem:[%s3 + $0xb0] sm:$0xff]
  %v3891 = vld [vmem:[%s3 + $0xb8] sm:$0xff]
  %v3892 = vld [vmem:[%s3 + $0xc0] sm:$0xff]
  %v3893 = vld [vmem:[%s3 + $0xc8] sm:$0xff]
  %v3894 = vld [vmem:[%s3 + $0xd0] sm:$0xff]
  %v3895 = vld [vmem:[%s3 + $0xd8] sm:$0xff]
  %v3896 = vld [vmem:[%s3 + $0xe0] sm:$0xff]
  %v3897 = vld [vmem:[%s3 + $0xe8] sm:$0xff]
  %v3898 = vld [vmem:[%s3 + $0xf0] sm:$0xff]
  %v3899 = vld [vmem:[%s3 + $0xf8] sm:$0xff]
  %v3900 = vld [vmem:[%s3 + $0x100] sm:$0xff]
  %v3901 = vld [vmem:[%s3 + $0x108] sm:$0xff]
  %v3902 = vld [vmem:[%s3 + $0x110] sm:$0xff]
  %v3903 = vld [vmem:[%s3 + $0x118] sm:$0xff]
  %v3904 = vld [vmem:[%s3 + $0x120] sm:$0xff]
  %v3905 = vld [vmem:[%s3 + $0x128] sm:$0xff]
  %v3906 = vld [vmem:[%s3 + $0x130] sm:$0xff]
  %v3907 = vld [vmem:[%s3 + $0x138] sm:$0xff]
  %v3908 = vld [vmem:[%s3 + $0x140] sm:$0xff]
  %v3909 = vld [vmem:[%s3 + $0x148] sm:$0xff]
  %v3910 = vld [vmem:[%s3 + $0x150] sm:$0xff]
  %v3911 = vld [vmem:[%s3 + $0x158] sm:$0xff]
  %v3912 = vld [vmem:[%s3 + $0x160] sm:$0xff]
  %v3913 = vld [vmem:[%s3 + $0x168] sm:$0xff]
  %v3914 = vld [vmem:[%s3 + $0x170] sm:$0xff]
  %v3915 = vld [vmem:[%s3 + $0x178] sm:$0xff]
  %v3916 = vld [vmem:[%s3 + $0x180] sm:$0xff]
  %v3917 = vld [vmem:[%s3 + $0x188] sm:$0xff]
  %v3918 = vld [vmem:[%s3 + $0x190] sm:$0xff]
  %v3919 = vld [vmem:[%s3 + $0x198] sm:$0xff]
  %v3920 = vld [vmem:[%s3 + $0x1a0] sm:$0xff]
  %v3921 = vld [vmem:[%s3 + $0x1a8] sm:$0xff]
  %v3922 = vld [vmem:[%s3 + $0x1b0] sm:$0xff]
  %v3923 = vld [vmem:[%s3 + $0x1b8] sm:$0xff]
  %v3924 = vld [vmem:[%s3 + $0x1c0] sm:$0xff]
  %v3925 = vld [vmem:[%s3 + $0x1c8] sm:$0xff]
  %v3926 = vld [vmem:[%s3 + $0x1d0] sm:$0xff]
  %v3927 = vld [vmem:[%s3 + $0x1d8] sm:$0xff]
  %v3928 = vld [vmem:[%s3 + $0x1e0] sm:$0xff]
  %v3929 = vld [vmem:[%s3 + $0x1e8] sm:$0xff]
  %v3930 = vld [vmem:[%s3 + $0x1f0] sm:$0xff]
  %v3931 = vld [vmem:[%s3 + $0x1f8] sm:$0xff]
  %3932 = vmatprep.subr.mxu0 %v3869
  %3933 = vmatpush1.msra.mxu0 %v3868
  %3934 = vmatprep.subr.mxu0 %v3873
  %3935 = vmatpush1.msra.mxu0 %v3872
  %3936 = vmatprep.subr.mxu0 %v3877
  %3937 = vmatpush1.msra.mxu0 %v3876
  %3938 = vmatprep.subr.mxu0 %v3881
  %3939 = vmatpush1.msra.mxu0 %v3880
  %3940 = vmatprep.subr.mxu0 %v3885
  %3941 = vmatpush1.msra.mxu0 %v3884
  %3942 = vmatprep.subr.mxu0 %v3889
  %3943 = vmatpush1.msra.mxu0 %v3888
  %3944 = vmatprep.subr.mxu0 %v3893
  %3945 = vmatpush1.msra.mxu0 %v3892
  %3946 = vmatprep.subr.mxu0 %v3897
  %3947 = vmatpush1.msra.mxu0 %v3896
  %3948 = vmatprep.subr.mxu0 %v3901
  %3949 = vmatpush1.msra.mxu0 %v3900
  %3950 = vmatprep.subr.mxu0 %v3905
  %3951 = vmatpush1.msra.mxu0 %v3904
  %3952 = vmatprep.subr.mxu0 %v3909
  %3953 = vmatpush1.msra.mxu0 %v3908
  %3954 = vmatprep.subr.mxu0 %v3913
  %3955 = vmatpush1.msra.mxu0 %v3912
  %3956 = vmatprep.subr.mxu0 %v3917
  %3957 = vmatpush1.msra.mxu0 %v3916
  %3958 = vmatprep.subr.mxu0 %v3921
  %3959 = vmatpush1.msra.mxu0 %v3920
  %3960 = vmatprep.subr.mxu0 %v3925
  %3961 = vmatpush1.msra.mxu0 %v3924
  %3962 = vmatprep.subr.mxu0 %v3929
  %3963 = vmatpush1.msra.mxu0 %v3928
  %3964 = vmatprep.subr.mxu0 0.0
  %3965 = vmatpush1.msra.mxu0 0.0
  %3966 = vmatprep.subr.mxu0 0.0
  %3967 = vmatpush1.msra.mxu0 0.0
  %3968 = vmatprep.subr.mxu0 0.0
  %3969 = vmatpush1.msra.mxu0 0.0
  %3970 = vmatprep.subr.mxu0 0.0
  %3971 = vmatpush1.msra.mxu0 0.0
  %3972 = vmatprep.subr.mxu0 0.0
  %3973 = vmatpush1.msra.mxu0 0.0
  %3974 = vmatprep.subr.mxu0 0.0
  %3975 = vmatpush1.msra.mxu0 0.0
  %3976 = vmatprep.subr.mxu0 0.0
  %3977 = vmatpush1.msra.mxu0 0.0
  %3978 = vmatprep.subr.mxu0 0.0
  %3979 = vmatpush1.msra.mxu0 0.0
  %3980 = vmatprep.subr.mxu0 0.0
  %3981 = vmatpush1.msra.mxu0 0.0
  %3982 = vmatprep.subr.mxu0 0.0
  %3983 = vmatpush1.msra.mxu0 0.0
  %3984 = vmatprep.subr.mxu0 0.0
  %3985 = vmatpush1.msra.mxu0 0.0
  %3986 = vmatprep.subr.mxu0 0.0
  %3987 = vmatpush1.msra.mxu0 0.0
  %3988 = vmatprep.subr.mxu0 0.0
  %3989 = vmatpush1.msra.mxu0 0.0
  %3990 = vmatprep.subr.mxu0 0.0
  %3991 = vmatpush1.msra.mxu0 0.0
  %3992 = vmatprep.subr.mxu0 0.0
  %3993 = vmatpush1.msra.mxu0 0.0
  %3994 = vmatprep.subr.mxu0 0.0
  %3995 = vmatpush1.msra.mxu0 0.0
  %3996 = vmatprep.mubr.f32.mxu0 0.0
  %3997 = vmatmul.mubr.f32.gmra.mrb[0].mxu0 %v3850
  %v3998 = vpop.f32.mrb[0].mxu0
  %v3999 = vadd.f32 0.0, %v3998
  %v4000 = vpop.f32.mrb[0].mxu0
  %v4001 = vadd.f32 0.0, %v4000
  %4002 = vdwg.mxu0
  %4003 = vmatprep.subr.mxu0 %v3871
  %4004 = vmatpush1.msra.mxu0 %v3870
  %4005 = vmatprep.subr.mxu0 %v3875
  %4006 = vmatpush1.msra.mxu0 %v3874
  %4007 = vmatprep.subr.mxu0 %v3879
  %4008 = vmatpush1.msra.mxu0 %v3878
  %4009 = vmatprep.subr.mxu0 %v3883
  %4010 = vmatpush1.msra.mxu0 %v3882
  %4011 = vmatprep.subr.mxu0 %v3887
  %4012 = vmatpush1.msra.mxu0 %v3886
  %4013 = vmatprep.subr.mxu0 %v3891
  %4014 = vmatpush1.msra.mxu0 %v3890
  %4015 = vmatprep.subr.mxu0 %v3895
  %4016 = vmatpush1.msra.mxu0 %v3894
  %4017 = vmatprep.subr.mxu0 %v3899
  %4018 = vmatpush1.msra.mxu0 %v3898
  %4019 = vmatprep.subr.mxu0 %v3903
  %4020 = vmatpush1.msra.mxu0 %v3902
  %4021 = vmatprep.subr.mxu0 %v3907
  %4022 = vmatpush1.msra.mxu0 %v3906
  %4023 = vmatprep.subr.mxu0 %v3911
  %4024 = vmatpush1.msra.mxu0 %v3910
  %4025 = vmatprep.subr.mxu0 %v3915
  %4026 = vmatpush1.msra.mxu0 %v3914
  %4027 = vmatprep.subr.mxu0 %v3919
  %4028 = vmatpush1.msra.mxu0 %v3918
  %4029 = vmatprep.subr.mxu0 %v3923
  %4030 = vmatpush1.msra.mxu0 %v3922
  %4031 = vmatprep.subr.mxu0 %v3927
  %4032 = vmatpush1.msra.mxu0 %v3926
  %4033 = vmatprep.subr.mxu0 %v3931
  %4034 = vmatpush1.msra.mxu0 %v3930
  %4035 = vmatprep.subr.mxu0 0.0
  %4036 = vmatpush1.msra.mxu0 0.0
  %4037 = vmatprep.subr.mxu0 0.0
  %4038 = vmatpush1.msra.mxu0 0.0
  %4039 = vmatprep.subr.mxu0 0.0
  %4040 = vmatpush1.msra.mxu0 0.0
  %4041 = vmatprep.subr.mxu0 0.0
  %4042 = vmatpush1.msra.mxu0 0.0
  %4043 = vmatprep.subr.mxu0 0.0
  %4044 = vmatpush1.msra.mxu0 0.0
  %4045 = vmatprep.subr.mxu0 0.0
  %4046 = vmatpush1.msra.mxu0 0.0
  %4047 = vmatprep.subr.mxu0 0.0
  %4048 = vmatpush1.msra.mxu0 0.0
  %4049 = vmatprep.subr.mxu0 0.0
  %4050 = vmatpush1.msra.mxu0 0.0
  %4051 = vmatprep.subr.mxu0 0.0
  %4052 = vmatpush1.msra.mxu0 0.0
  %4053 = vmatprep.subr.mxu0 0.0
  %4054 = vmatpush1.msra.mxu0 0.0
  %4055 = vmatprep.subr.mxu0 0.0
  %4056 = vmatpush1.msra.mxu0 0.0
  %4057 = vmatprep.subr.mxu0 0.0
  %4058 = vmatpush1.msra.mxu0 0.0
  %4059 = vmatprep.subr.mxu0 0.0
  %4060 = vmatpush1.msra.mxu0 0.0
  %4061 = vmatprep.subr.mxu0 0.0
  %4062 = vmatpush1.msra.mxu0 0.0
  %4063 = vmatprep.subr.mxu0 0.0
  %4064 = vmatpush1.msra.mxu0 0.0
  %4065 = vmatprep.subr.mxu0 0.0
  %4066 = vmatpush1.msra.mxu0 0.0
  %4067 = vmatprep.mubr.f32.mxu0 0.0
  %4068 = vmatmul.mubr.f32.gmra.mrb[0].mxu0 %v3850
  %v4069 = vpop.f32.mrb[0].mxu0
  %v4070 = vadd.f32 0.0, %v4069
  %v4071 = vpop.f32.mrb[0].mxu0
  %v4072 = vadd.f32 0.0, %v4071
  %4073 = vdwg.mxu0
  %v4078 = vcombine.low %v3999, %v4001
  %v4079 = vcombine.low %v4070, %v4072
  %v4081 = vunpack.c.l.s4 1983009808
  %v4082 = vunpack.c.0.s8 %v4081
  %v4083 = vlaneseq
  %v4084 = vshrl.u32 %v4083, 7
  %v4085 = vsub.s32 %v4082, %v4084
  %v4086 = vrot.slane %v4078, %v4085
  %v4088 = vunpack.c.l.s4 1983009808
  %v4089 = vunpack.c.0.s8 %v4088
  %v4090 = vlaneseq
  %v4091 = vshrl.u32 %v4090, 7
  %v4092 = vsub.s32 %v4089, %v4091
  %v4093 = vrot.slane %v4079, %v4092
  %v4094 = vcombine.low %v4086, %v4093
  %v4096 = vadd.f32 %v3867, %v4094
  %v4097 = vmul.f32 %v4096, 0.5
  %v4098 = vtanh.pop %v4097
  %v4099 = vmul.f32 %v4098, 0.5
  %v4100 = vadd.f32 %v4099, 0.5
  %v4102 = vrot.slane %v4096, 2
  %v4104 = vmul.f32 %v4102, 0.5
  %v4105 = vtanh.pop %v4104
  %v4106 = vmul.f32 %v4105, 0.5
  %v4107 = vadd.f32 %v4106, 0.5
  %v4108 = vrot.slane %v4096, 4
  %v4110 = vtanh.pop %v4108
  %v4111 = vrot.slane %v4096, 6
  %v4113 = vmul.f32 %v4111, 0.5
  %v4114 = vtanh.pop %v4113
  %v4115 = vmul.f32 %v4114, 0.5
  %v4116 = vadd.f32 %v4115, 0.5
  %v4117 = vmul.f32 %v4107, %v3848
  %v4118 = vmul.f32 %v4100, %v4110
  %v4119 = vadd.f32 %v4117, %v4118
  %v4120 = vtanh.pop %v4119
  %v4121 = vmul.f32 %v4116, %v4120
  %s4122 = scalar_lea.vmem [#allocation3], 24
  %4123 = vst.msk [vmem:[%s4122] sm:$0x3] %vm870, %v4121
  %v4126 = vunpack.c.l.s4 1983009808
  %v4127 = vunpack.c.0.s8 %v4126
  %v4128 = vlaneseq
  %v4129 = vshrl.u32 %v4128, 7
  %v4130 = vsub.s32 %v4127, %v4129
  %v4131 = vrot.slane %v4121, %v4130
  %4132 = vrot.lane.b32.xlu0 %v4131, 64
  %v4133 = vpop.permute.xlu0 %4132
  %s4135 = scalar_lea.vmem [#allocation4], 2
  %4136 = vst.msk [vmem:[%s4135] sm:$0x3] %vm870, %v4133
  %s4137 = scalar_lea.vmem [#allocation2], 104
  %v4138 = vld [vmem:[%s4137] sm:$0xff]
  %v4139 = vld [vmem:[%s3] sm:$0xff]
  %v4140 = vld [vmem:[%s3 + $0x8] sm:$0xff]
  %v4141 = vld [vmem:[%s3 + $0x10] sm:$0xff]
  %v4142 = vld [vmem:[%s3 + $0x18] sm:$0xff]
  %v4143 = vld [vmem:[%s3 + $0x20] sm:$0xff]
  %v4144 = vld [vmem:[%s3 + $0x28] sm:$0xff]
  %v4145 = vld [vmem:[%s3 + $0x30] sm:$0xff]
  %v4146 = vld [vmem:[%s3 + $0x38] sm:$0xff]
  %v4147 = vld [vmem:[%s3 + $0x40] sm:$0xff]
  %v4148 = vld [vmem:[%s3 + $0x48] sm:$0xff]
  %v4149 = vld [vmem:[%s3 + $0x50] sm:$0xff]
  %v4150 = vld [vmem:[%s3 + $0x58] sm:$0xff]
  %v4151 = vld [vmem:[%s3 + $0x60] sm:$0xff]
  %v4152 = vld [vmem:[%s3 + $0x68] sm:$0xff]
  %v4153 = vld [vmem:[%s3 + $0x70] sm:$0xff]
  %v4154 = vld [vmem:[%s3 + $0x78] sm:$0xff]
  %v4155 = vld [vmem:[%s3 + $0x80] sm:$0xff]
  %v4156 = vld [vmem:[%s3 + $0x88] sm:$0xff]
  %v4157 = vld [vmem:[%s3 + $0x90] sm:$0xff]
  %v4158 = vld [vmem:[%s3 + $0x98] sm:$0xff]
  %v4159 = vld [vmem:[%s3 + $0xa0] sm:$0xff]
  %v4160 = vld [vmem:[%s3 + $0xa8] sm:$0xff]
  %v4161 = vld [vmem:[%s3 + $0xb0] sm:$0xff]
  %v4162 = vld [vmem:[%s3 + $0xb8] sm:$0xff]
  %v4163 = vld [vmem:[%s3 + $0xc0] sm:$0xff]
  %v4164 = vld [vmem:[%s3 + $0xc8] sm:$0xff]
  %v4165 = vld [vmem:[%s3 + $0xd0] sm:$0xff]
  %v4166 = vld [vmem:[%s3 + $0xd8] sm:$0xff]
  %v4167 = vld [vmem:[%s3 + $0xe0] sm:$0xff]
  %v4168 = vld [vmem:[%s3 + $0xe8] sm:$0xff]
  %v4169 = vld [vmem:[%s3 + $0xf0] sm:$0xff]
  %v4170 = vld [vmem:[%s3 + $0xf8] sm:$0xff]
  %v4171 = vld [vmem:[%s3 + $0x100] sm:$0xff]
  %v4172 = vld [vmem:[%s3 + $0x108] sm:$0xff]
  %v4173 = vld [vmem:[%s3 + $0x110] sm:$0xff]
  %v4174 = vld [vmem:[%s3 + $0x118] sm:$0xff]
  %v4175 = vld [vmem:[%s3 + $0x120] sm:$0xff]
  %v4176 = vld [vmem:[%s3 + $0x128] sm:$0xff]
  %v4177 = vld [vmem:[%s3 + $0x130] sm:$0xff]
  %v4178 = vld [vmem:[%s3 + $0x138] sm:$0xff]
  %v4179 = vld [vmem:[%s3 + $0x140] sm:$0xff]
  %v4180 = vld [vmem:[%s3 + $0x148] sm:$0xff]
  %v4181 = vld [vmem:[%s3 + $0x150] sm:$0xff]
  %v4182 = vld [vmem:[%s3 + $0x158] sm:$0xff]
  %v4183 = vld [vmem:[%s3 + $0x160] sm:$0xff]
  %v4184 = vld [vmem:[%s3 + $0x168] sm:$0xff]
  %v4185 = vld [vmem:[%s3 + $0x170] sm:$0xff]
  %v4186 = vld [vmem:[%s3 + $0x178] sm:$0xff]
  %v4187 = vld [vmem:[%s3 + $0x180] sm:$0xff]
  %v4188 = vld [vmem:[%s3 + $0x188] sm:$0xff]
  %v4189 = vld [vmem:[%s3 + $0x190] sm:$0xff]
  %v4190 = vld [vmem:[%s3 + $0x198] sm:$0xff]
  %v4191 = vld [vmem:[%s3 + $0x1a0] sm:$0xff]
  %v4192 = vld [vmem:[%s3 + $0x1a8] sm:$0xff]
  %v4193 = vld [vmem:[%s3 + $0x1b0] sm:$0xff]
  %v4194 = vld [vmem:[%s3 + $0x1b8] sm:$0xff]
  %v4195 = vld [vmem:[%s3 + $0x1c0] sm:$0xff]
  %v4196 = vld [vmem:[%s3 + $0x1c8] sm:$0xff]
  %v4197 = vld [vmem:[%s3 + $0x1d0] sm:$0xff]
  %v4198 = vld [vmem:[%s3 + $0x1d8] sm:$0xff]
  %v4199 = vld [vmem:[%s3 + $0x1e0] sm:$0xff]
  %v4200 = vld [vmem:[%s3 + $0x1e8] sm:$0xff]
  %v4201 = vld [vmem:[%s3 + $0x1f0] sm:$0xff]
  %v4202 = vld [vmem:[%s3 + $0x1f8] sm:$0xff]
  %4203 = vmatprep.subr.mxu0 %v4140
  %4204 = vmatpush1.msra.mxu0 %v4139
  %4205 = vmatprep.subr.mxu0 %v4144
  %4206 = vmatpush1.msra.mxu0 %v4143
  %4207 = vmatprep.subr.mxu0 %v4148
  %4208 = vmatpush1.msra.mxu0 %v4147
  %4209 = vmatprep.subr.mxu0 %v4152
  %4210 = vmatpush1.msra.mxu0 %v4151
  %4211 = vmatprep.subr.mxu0 %v4156
  %4212 = vmatpush1.msra.mxu0 %v4155
  %4213 = vmatprep.subr.mxu0 %v4160
  %4214 = vmatpush1.msra.mxu0 %v4159
  %4215 = vmatprep.subr.mxu0 %v4164
  %4216 = vmatpush1.msra.mxu0 %v4163
  %4217 = vmatprep.subr.mxu0 %v4168
  %4218 = vmatpush1.msra.mxu0 %v4167
  %4219 = vmatprep.subr.mxu0 %v4172
  %4220 = vmatpush1.msra.mxu0 %v4171
  %4221 = vmatprep.subr.mxu0 %v4176
  %4222 = vmatpush1.msra.mxu0 %v4175
  %4223 = vmatprep.subr.mxu0 %v4180
  %4224 = vmatpush1.msra.mxu0 %v4179
  %4225 = vmatprep.subr.mxu0 %v4184
  %4226 = vmatpush1.msra.mxu0 %v4183
  %4227 = vmatprep.subr.mxu0 %v4188
  %4228 = vmatpush1.msra.mxu0 %v4187
  %4229 = vmatprep.subr.mxu0 %v4192
  %4230 = vmatpush1.msra.mxu0 %v4191
  %4231 = vmatprep.subr.mxu0 %v4196
  %4232 = vmatpush1.msra.mxu0 %v4195
  %4233 = vmatprep.subr.mxu0 %v4200
  %4234 = vmatpush1.msra.mxu0 %v4199
  %4235 = vmatprep.subr.mxu0 0.0
  %4236 = vmatpush1.msra.mxu0 0.0
  %4237 = vmatprep.subr.mxu0 0.0
  %4238 = vmatpush1.msra.mxu0 0.0
  %4239 = vmatprep.subr.mxu0 0.0
  %4240 = vmatpush1.msra.mxu0 0.0
  %4241 = vmatprep.subr.mxu0 0.0
  %4242 = vmatpush1.msra.mxu0 0.0
  %4243 = vmatprep.subr.mxu0 0.0
  %4244 = vmatpush1.msra.mxu0 0.0
  %4245 = vmatprep.subr.mxu0 0.0
  %4246 = vmatpush1.msra.mxu0 0.0
  %4247 = vmatprep.subr.mxu0 0.0
  %4248 = vmatpush1.msra.mxu0 0.0
  %4249 = vmatprep.subr.mxu0 0.0
  %4250 = vmatpush1.msra.mxu0 0.0
  %4251 = vmatprep.subr.mxu0 0.0
  %4252 = vmatpush1.msra.mxu0 0.0
  %4253 = vmatprep.subr.mxu0 0.0
  %4254 = vmatpush1.msra.mxu0 0.0
  %4255 = vmatprep.subr.mxu0 0.0
  %4256 = vmatpush1.msra.mxu0 0.0
  %4257 = vmatprep.subr.mxu0 0.0
  %4258 = vmatpush1.msra.mxu0 0.0
  %4259 = vmatprep.subr.mxu0 0.0
  %4260 = vmatpush1.msra.mxu0 0.0
  %4261 = vmatprep.subr.mxu0 0.0
  %4262 = vmatpush1.msra.mxu0 0.0
  %4263 = vmatprep.subr.mxu0 0.0
  %4264 = vmatpush1.msra.mxu0 0.0
  %4265 = vmatprep.subr.mxu0 0.0
  %4266 = vmatpush1.msra.mxu0 0.0
  %4267 = vmatprep.mubr.f32.mxu0 0.0
  %4268 = vmatmul.mubr.f32.gmra.mrb[0].mxu0 %v4121
  %v4269 = vpop.f32.mrb[0].mxu0
  %v4270 = vadd.f32 0.0, %v4269
  %v4271 = vpop.f32.mrb[0].mxu0
  %v4272 = vadd.f32 0.0, %v4271
  %4273 = vdwg.mxu0
  %4274 = vmatprep.subr.mxu0 %v4142
  %4275 = vmatpush1.msra.mxu0 %v4141
  %4276 = vmatprep.subr.mxu0 %v4146
  %4277 = vmatpush1.msra.mxu0 %v4145
  %4278 = vmatprep.subr.mxu0 %v4150
  %4279 = vmatpush1.msra.mxu0 %v4149
  %4280 = vmatprep.subr.mxu0 %v4154
  %4281 = vmatpush1.msra.mxu0 %v4153
  %4282 = vmatprep.subr.mxu0 %v4158
  %4283 = vmatpush1.msra.mxu0 %v4157
  %4284 = vmatprep.subr.mxu0 %v4162
  %4285 = vmatpush1.msra.mxu0 %v4161
  %4286 = vmatprep.subr.mxu0 %v4166
  %4287 = vmatpush1.msra.mxu0 %v4165
  %4288 = vmatprep.subr.mxu0 %v4170
  %4289 = vmatpush1.msra.mxu0 %v4169
  %4290 = vmatprep.subr.mxu0 %v4174
  %4291 = vmatpush1.msra.mxu0 %v4173
  %4292 = vmatprep.subr.mxu0 %v4178
  %4293 = vmatpush1.msra.mxu0 %v4177
  %4294 = vmatprep.subr.mxu0 %v4182
  %4295 = vmatpush1.msra.mxu0 %v4181
  %4296 = vmatprep.subr.mxu0 %v4186
  %4297 = vmatpush1.msra.mxu0 %v4185
  %4298 = vmatprep.subr.mxu0 %v4190
  %4299 = vmatpush1.msra.mxu0 %v4189
  %4300 = vmatprep.subr.mxu0 %v4194
  %4301 = vmatpush1.msra.mxu0 %v4193
  %4302 = vmatprep.subr.mxu0 %v4198
  %4303 = vmatpush1.msra.mxu0 %v4197
  %4304 = vmatprep.subr.mxu0 %v4202
  %4305 = vmatpush1.msra.mxu0 %v4201
  %4306 = vmatprep.subr.mxu0 0.0
  %4307 = vmatpush1.msra.mxu0 0.0
  %4308 = vmatprep.subr.mxu0 0.0
  %4309 = vmatpush1.msra.mxu0 0.0
  %4310 = vmatprep.subr.mxu0 0.0
  %4311 = vmatpush1.msra.mxu0 0.0
  %4312 = vmatprep.subr.mxu0 0.0
  %4313 = vmatpush1.msra.mxu0 0.0
  %4314 = vmatprep.subr.mxu0 0.0
  %4315 = vmatpush1.msra.mxu0 0.0
  %4316 = vmatprep.subr.mxu0 0.0
  %4317 = vmatpush1.msra.mxu0 0.0
  %4318 = vmatprep.subr.mxu0 0.0
  %4319 = vmatpush1.msra.mxu0 0.0
  %4320 = vmatprep.subr.mxu0 0.0
  %4321 = vmatpush1.msra.mxu0 0.0
  %4322 = vmatprep.subr.mxu0 0.0
  %4323 = vmatpush1.msra.mxu0 0.0
  %4324 = vmatprep.subr.mxu0 0.0
  %4325 = vmatpush1.msra.mxu0 0.0
  %4326 = vmatprep.subr.mxu0 0.0
  %4327 = vmatpush1.msra.mxu0 0.0
  %4328 = vmatprep.subr.mxu0 0.0
  %4329 = vmatpush1.msra.mxu0 0.0
  %4330 = vmatprep.subr.mxu0 0.0
  %4331 = vmatpush1.msra.mxu0 0.0
  %4332 = vmatprep.subr.mxu0 0.0
  %4333 = vmatpush1.msra.mxu0 0.0
  %4334 = vmatprep.subr.mxu0 0.0
  %4335 = vmatpush1.msra.mxu0 0.0
  %4336 = vmatprep.subr.mxu0 0.0
  %4337 = vmatpush1.msra.mxu0 0.0
  %4338 = vmatprep.mubr.f32.mxu0 0.0
  %4339 = vmatmul.mubr.f32.gmra.mrb[0].mxu0 %v4121
  %v4340 = vpop.f32.mrb[0].mxu0
  %v4341 = vadd.f32 0.0, %v4340
  %v4342 = vpop.f32.mrb[0].mxu0
  %v4343 = vadd.f32 0.0, %v4342
  %4344 = vdwg.mxu0
  %v4349 = vcombine.low %v4270, %v4272
  %v4350 = vcombine.low %v4341, %v4343
  %v4352 = vunpack.c.l.s4 1983009808
  %v4353 = vunpack.c.0.s8 %v4352
  %v4354 = vlaneseq
  %v4355 = vshrl.u32 %v4354, 7
  %v4356 = vsub.s32 %v4353, %v4355
  %v4357 = vrot.slane %v4349, %v4356
  %v4359 = vunpack.c.l.s4 1983009808
  %v4360 = vunpack.c.0.s8 %v4359
  %v4361 = vlaneseq
  %v4362 = vshrl.u32 %v4361, 7
  %v4363 = vsub.s32 %v4360, %v4362
  %v4364 = vrot.slane %v4350, %v4363
  %v4365 = vcombine.low %v4357, %v4364
  %v4367 = vadd.f32 %v4138, %v4365
  %v4368 = vmul.f32 %v4367, 0.5
  %v4369 = vtanh.pop %v4368
  %v4370 = vmul.f32 %v4369, 0.5
  %v4371 = vadd.f32 %v4370, 0.5
  %v4373 = vrot.slane %v4367, 2
  %v4375 = vmul.f32 %v4373, 0.5
  %v4376 = vtanh.pop %v4375
  %v4377 = vmul.f32 %v4376, 0.5
  %v4378 = vadd.f32 %v4377, 0.5
  %v4379 = vrot.slane %v4367, 4
  %v4381 = vtanh.pop %v4379
  %v4382 = vrot.slane %v4367, 6
  %v4384 = vmul.f32 %v4382, 0.5
  %v4385 = vtanh.pop %v4384
  %v4386 = vmul.f32 %v4385, 0.5
  %v4387 = vadd.f32 %v4386, 0.5
  %v4388 = vmul.f32 %v4378, %v4119
  %v4389 = vmul.f32 %v4371, %v4381
  %v4390 = vadd.f32 %v4388, %v4389
  %v4391 = vtanh.pop %v4390
  %v4392 = vmul.f32 %v4387, %v4391
  %s4393 = scalar_lea.vmem [#allocation3], 26
  %4394 = vst.msk [vmem:[%s4393] sm:$0x3] %vm870, %v4392
  %v4397 = vunpack.c.l.s4 1983009808
  %v4398 = vunpack.c.0.s8 %v4397
  %v4399 = vlaneseq
  %v4400 = vshrl.u32 %v4399, 7
  %v4401 = vsub.s32 %v4398, %v4400
  %v4402 = vrot.slane %v4392, %v4401
  %4403 = vrot.lane.b32.xlu0 %v4402, 64
  %v4404 = vpop.permute.xlu0 %4403
  %4406 = vst.msk [vmem:[#allocation4] sm:$0x3] %vm870, %v4404
  %v4407 = vld [vmem:[#allocation3] sm:$0x3]
  %v4408 = vld [vmem:[#allocation3 + $0x2] sm:$0x3]
  %v4409 = vld [vmem:[#allocation3 + $0x4] sm:$0x3]
  %v4410 = vld [vmem:[#allocation3 + $0x6] sm:$0x3]
  %v4411 = vld [vmem:[#allocation3 + $0x8] sm:$0x3]
  %v4412 = vld [vmem:[#allocation3 + $0xa] sm:$0x3]
  %v4413 = vld [vmem:[#allocation3 + $0xc] sm:$0x3]
  %v4414 = vld [vmem:[#allocation3 + $0xe] sm:$0x3]
  %v4415 = vld [vmem:[#allocation3 + $0x10] sm:$0x3]
  %v4416 = vld [vmem:[#allocation3 + $0x12] sm:$0x3]
  %v4417 = vld [vmem:[#allocation3 + $0x14] sm:$0x3]
  %v4418 = vld [vmem:[#allocation3 + $0x16] sm:$0x3]
  %v4419 = vld [vmem:[#allocation3 + $0x18] sm:$0x3]
  %v4420 = vld [vmem:[#allocation3 + $0x1a] sm:$0x3]
  %v4421 = vsel %vm870, %v4407, 0.0
  %4422 = vadd.xlane.f32.xlu0 %v4421
  %v4423 = vpop.xlane.xlu0 %4422
  %v4424 = vsel %vm870, %v4408, 0.0
  %4425 = vadd.xlane.f32.xlu0 %v4424
  %v4426 = vpop.xlane.xlu0 %4425
  %v4427 = vsel %vm870, %v4409, 0.0
  %4428 = vadd.xlane.f32.xlu0 %v4427
  %v4429 = vpop.xlane.xlu0 %4428
  %v4430 = vsel %vm870, %v4410, 0.0
  %4431 = vadd.xlane.f32.xlu0 %v4430
  %v4432 = vpop.xlane.xlu0 %4431
  %v4433 = vsel %vm870, %v4411, 0.0
  %4434 = vadd.xlane.f32.xlu0 %v4433
  %v4435 = vpop.xlane.xlu0 %4434
  %v4436 = vsel %vm870, %v4412, 0.0
  %4437 = vadd.xlane.f32.xlu0 %v4436
  %v4438 = vpop.xlane.xlu0 %4437
  %v4439 = vsel %vm870, %v4413, 0.0
  %4440 = vadd.xlane.f32.xlu0 %v4439
  %v4441 = vpop.xlane.xlu0 %4440
  %v4442 = vsel %vm870, %v4414, 0.0
  %4443 = vadd.xlane.f32.xlu0 %v4442
  %v4444 = vpop.xlane.xlu0 %4443
  %v4445 = vsel %vm870, %v4415, 0.0
  %4446 = vadd.xlane.f32.xlu0 %v4445
  %v4447 = vpop.xlane.xlu0 %4446
  %v4448 = vsel %vm870, %v4416, 0.0
  %4449 = vadd.xlane.f32.xlu0 %v4448
  %v4450 = vpop.xlane.xlu0 %4449
  %v4451 = vsel %vm870, %v4417, 0.0
  %4452 = vadd.xlane.f32.xlu0 %v4451
  %v4453 = vpop.xlane.xlu0 %4452
  %v4454 = vsel %vm870, %v4418, 0.0
  %4455 = vadd.xlane.f32.xlu0 %v4454
  %v4456 = vpop.xlane.xlu0 %4455
  %v4457 = vsel %vm870, %v4419, 0.0
  %4458 = vadd.xlane.f32.xlu0 %v4457
  %v4459 = vpop.xlane.xlu0 %4458
  %v4460 = vsel %vm870, %v4420, 0.0
  %4461 = vadd.xlane.f32.xlu0 %v4460
  %v4462 = vpop.xlane.xlu0 %4461
  %v4463 = vld [vmem:[#allocation4] sm:$0x3]
  %v4464 = vld [vmem:[#allocation4 + $0x2] sm:$0x3]
  %v4465 = vld [vmem:[#allocation4 + $0x4] sm:$0x3]
  %v4466 = vld [vmem:[#allocation4 + $0x6] sm:$0x3]
  %v4467 = vld [vmem:[#allocation4 + $0x8] sm:$0x3]
  %v4468 = vld [vmem:[#allocation4 + $0xa] sm:$0x3]
  %v4469 = vld [vmem:[#allocation4 + $0xc] sm:$0x3]
  %v4470 = vld [vmem:[#allocation4 + $0xe] sm:$0x3]
  %v4471 = vld [vmem:[#allocation4 + $0x10] sm:$0x3]
  %v4472 = vld [vmem:[#allocation4 + $0x12] sm:$0x3]
  %v4473 = vld [vmem:[#allocation4 + $0x14] sm:$0x3]
  %v4474 = vld [vmem:[#allocation4 + $0x16] sm:$0x3]
  %v4475 = vld [vmem:[#allocation4 + $0x18] sm:$0x3]
  %v4476 = vld [vmem:[#allocation4 + $0x1a] sm:$0x3]
  %v4477 = vsel %vm870, %v4463, 0.0
  %4478 = vadd.xlane.f32.xlu0 %v4477
  %v4479 = vpop.xlane.xlu0 %4478
  %v4480 = vsel %vm870, %v4464, 0.0
  %4481 = vadd.xlane.f32.xlu0 %v4480
  %v4482 = vpop.xlane.xlu0 %4481
  %v4483 = vsel %vm870, %v4465, 0.0
  %4484 = vadd.xlane.f32.xlu0 %v4483
  %v4485 = vpop.xlane.xlu0 %4484
  %v4486 = vsel %vm870, %v4466, 0.0
  %4487 = vadd.xlane.f32.xlu0 %v4486
  %v4488 = vpop.xlane.xlu0 %4487
  %v4489 = vsel %vm870, %v4467, 0.0
  %4490 = vadd.xlane.f32.xlu0 %v4489
  %v4491 = vpop.xlane.xlu0 %4490
  %v4492 = vsel %vm870, %v4468, 0.0
  %4493 = vadd.xlane.f32.xlu0 %v4492
  %v4494 = vpop.xlane.xlu0 %4493
  %v4495 = vsel %vm870, %v4469, 0.0
  %4496 = vadd.xlane.f32.xlu0 %v4495
  %v4497 = vpop.xlane.xlu0 %4496
  %v4498 = vsel %vm870, %v4470, 0.0
  %4499 = vadd.xlane.f32.xlu0 %v4498
  %v4500 = vpop.xlane.xlu0 %4499
  %v4501 = vsel %vm870, %v4471, 0.0
  %4502 = vadd.xlane.f32.xlu0 %v4501
  %v4503 = vpop.xlane.xlu0 %4502
  %v4504 = vsel %vm870, %v4472, 0.0
  %4505 = vadd.xlane.f32.xlu0 %v4504
  %v4506 = vpop.xlane.xlu0 %4505
  %v4507 = vsel %vm870, %v4473, 0.0
  %4508 = vadd.xlane.f32.xlu0 %v4507
  %v4509 = vpop.xlane.xlu0 %4508
  %v4510 = vsel %vm870, %v4474, 0.0
  %4511 = vadd.xlane.f32.xlu0 %v4510
  %v4512 = vpop.xlane.xlu0 %4511
  %v4513 = vsel %vm870, %v4475, 0.0
  %4514 = vadd.xlane.f32.xlu0 %v4513
  %v4515 = vpop.xlane.xlu0 %4514
  %v4516 = vsel %vm870, %v4476, 0.0
  %4517 = vadd.xlane.f32.xlu0 %v4516
  %v4518 = vpop.xlane.xlu0 %4517
  %v4519 = vadd.f32 %v4423, %v4479
  %v4520 = vadd.f32 %v4426, %v4482
  %v4521 = vadd.f32 %v4429, %v4485
  %v4522 = vadd.f32 %v4432, %v4488
  %v4523 = vadd.f32 %v4435, %v4491
  %v4524 = vadd.f32 %v4438, %v4494
  %v4525 = vadd.f32 %v4441, %v4497
  %v4526 = vadd.f32 %v4444, %v4500
  %v4527 = vadd.f32 %v4447, %v4503
  %v4528 = vadd.f32 %v4450, %v4506
  %v4529 = vadd.f32 %v4453, %v4509
  %v4530 = vadd.f32 %v4456, %v4512
  %v4531 = vadd.f32 %v4459, %v4515
  %v4532 = vadd.f32 %v4462, %v4518
  %v4533 = vmul.f32 %v4519, 0.0078125
  %v4534 = vmul.f32 %v4520, 0.0078125
  %v4535 = vmul.f32 %v4521, 0.0078125
  %v4536 = vmul.f32 %v4522, 0.0078125
  %v4537 = vmul.f32 %v4523, 0.0078125
  %v4538 = vmul.f32 %v4524, 0.0078125
  %v4539 = vmul.f32 %v4525, 0.0078125
  %v4540 = vmul.f32 %v4526, 0.0078125
  %v4541 = vmul.f32 %v4527, 0.0078125
  %v4542 = vmul.f32 %v4528, 0.0078125
  %v4543 = vmul.f32 %v4529, 0.0078125
  %v4544 = vmul.f32 %v4530, 0.0078125
  %v4545 = vmul.f32 %v4531, 0.0078125
  %v4546 = vmul.f32 %v4532, 0.0078125
  %v4547 = vld [vmem:[%s4] sm:$0xff]
  %v4548 = vld [vmem:[%s5] sm:$0xff]
  %4550 = vset.pattern.permute.xlu0 0
  %4551 = vperm.xlu0 %4550, %v4548
  %v4552 = vpop.permute.xlu0 %4551
  %v4568 = vlaneseq
  %v4569 = vand.u32 %v4568, 127
  %v4570 = vlaneseq
  %v4571 = vshrl.u32 %v4570, 7
  %v4572 = vsub.s32 %v4569, %v4571
  %v4573 = vrot.slane %v4533, %v4572
  %v4574 = vlaneseq
  %v4575 = vshrl.u32 %v4574, 7
  %v4576 = vsub.s32 %v4569, %v4575
  %v4577 = vrot.slane %v4534, %v4576
  %v4578 = vlaneseq
  %v4579 = vshrl.u32 %v4578, 7
  %v4580 = vsub.s32 %v4569, %v4579
  %v4581 = vrot.slane %v4535, %v4580
  %v4582 = vlaneseq
  %v4583 = vshrl.u32 %v4582, 7
  %v4584 = vsub.s32 %v4569, %v4583
  %v4585 = vrot.slane %v4536, %v4584
  %v4586 = vlaneseq
  %v4587 = vshrl.u32 %v4586, 7
  %v4588 = vsub.s32 %v4569, %v4587
  %v4589 = vrot.slane %v4537, %v4588
  %v4590 = vlaneseq
  %v4591 = vshrl.u32 %v4590, 7
  %v4592 = vsub.s32 %v4569, %v4591
  %v4593 = vrot.slane %v4538, %v4592
  %v4594 = vlaneseq
  %v4595 = vshrl.u32 %v4594, 7
  %v4596 = vsub.s32 %v4569, %v4595
  %v4597 = vrot.slane %v4539, %v4596
  %v4598 = vlaneseq
  %v4599 = vshrl.u32 %v4598, 7
  %v4600 = vsub.s32 %v4569, %v4599
  %v4601 = vrot.slane %v4540, %v4600
  %v4602 = vlaneseq
  %v4603 = vshrl.u32 %v4602, 7
  %v4604 = vsub.s32 %v4569, %v4603
  %v4605 = vrot.slane %v4541, %v4604
  %v4606 = vlaneseq
  %v4607 = vshrl.u32 %v4606, 7
  %v4608 = vsub.s32 %v4569, %v4607
  %v4609 = vrot.slane %v4542, %v4608
  %v4610 = vlaneseq
  %v4611 = vshrl.u32 %v4610, 7
  %v4612 = vsub.s32 %v4569, %v4611
  %v4613 = vrot.slane %v4543, %v4612
  %v4614 = vlaneseq
  %v4615 = vshrl.u32 %v4614, 7
  %v4616 = vsub.s32 %v4569, %v4615
  %v4617 = vrot.slane %v4544, %v4616
  %v4618 = vlaneseq
  %v4619 = vshrl.u32 %v4618, 7
  %v4620 = vsub.s32 %v4569, %v4619
  %v4621 = vrot.slane %v4545, %v4620
  %v4622 = vlaneseq
  %v4623 = vshrl.u32 %v4622, 7
  %v4624 = vsub.s32 %v4569, %v4623
  %v4625 = vrot.slane %v4546, %v4624
  %vm4626 = vcmask 1041409
  %v4627 = vsel %vm4626, %v4577, %v4573
  %vm4628 = vcmask 1042434
  %v4629 = vsel %vm4628, %v4581, %v4627
  %vm4630 = vcmask 1043459
  %v4631 = vsel %vm4630, %v4585, %v4629
  %vm4632 = vcmask 1044484
  %v4633 = vsel %vm4632, %v4589, %v4631
  %vm4634 = vcmask 1045509
  %v4635 = vsel %vm4634, %v4593, %v4633
  %vm4636 = vcmask 1046534
  %v4637 = vsel %vm4636, %v4597, %v4635
  %vm4638 = vcmask 1047559
  %v4639 = vsel %vm4638, %v4601, %v4637
  %v4640 = vsel %vm4626, %v4609, %v4605
  %v4641 = vsel %vm4628, %v4613, %v4640
  %v4642 = vsel %vm4630, %v4617, %v4641
  %v4643 = vsel %vm4632, %v4621, %v4642
  %v4644 = vsel %vm4634, %v4625, %v4643
  %vm4646 = vcmask 113664
  %v4648 = vsel %vm4646, %v4547, 0
  %vm4650 = vcmask 1045504
  %v4651 = vsel %vm4650, %v4644, 0
  %4653 = vmatprep.subr.mxu0 0.0
  %4654 = vmatpush1.msra.mxu0 %v4639
  %4655 = vmatprep.subr.mxu0 0.0
  %4656 = vmatpush1.msra.mxu0 %v4651
  %4657 = vmatprep.subr.mxu0 0.0
  %4658 = vmatpush1.msra.mxu0 0.0
  %4659 = vmatprep.subr.mxu0 0.0
  %4660 = vmatpush1.msra.mxu0 0.0
  %4661 = vmatprep.subr.mxu0 0.0
  %4662 = vmatpush1.msra.mxu0 0.0
  %4663 = vmatprep.subr.mxu0 0.0
  %4664 = vmatpush1.msra.mxu0 0.0
  %4665 = vmatprep.subr.mxu0 0.0
  %4666 = vmatpush1.msra.mxu0 0.0
  %4667 = vmatprep.subr.mxu0 0.0
  %4668 = vmatpush1.msra.mxu0 0.0
  %4669 = vmatprep.subr.mxu0 0.0
  %4670 = vmatpush1.msra.mxu0 0.0
  %4671 = vmatprep.subr.mxu0 0.0
  %4672 = vmatpush1.msra.mxu0 0.0
  %4673 = vmatprep.subr.mxu0 0.0
  %4674 = vmatpush1.msra.mxu0 0.0
  %4675 = vmatprep.subr.mxu0 0.0
  %4676 = vmatpush1.msra.mxu0 0.0
  %4677 = vmatprep.subr.mxu0 0.0
  %4678 = vmatpush1.msra.mxu0 0.0
  %4679 = vmatprep.subr.mxu0 0.0
  %4680 = vmatpush1.msra.mxu0 0.0
  %4681 = vmatprep.subr.mxu0 0.0
  %4682 = vmatpush1.msra.mxu0 0.0
  %4683 = vmatprep.subr.mxu0 0.0
  %4684 = vmatpush1.msra.mxu0 0.0
  %4685 = vmatprep.subr.mxu0 0.0
  %4686 = vmatpush1.msra.mxu0 0.0
  %4687 = vmatprep.subr.mxu0 0.0
  %4688 = vmatpush1.msra.mxu0 0.0
  %4689 = vmatprep.subr.mxu0 0.0
  %4690 = vmatpush1.msra.mxu0 0.0
  %4691 = vmatprep.subr.mxu0 0.0
  %4692 = vmatpush1.msra.mxu0 0.0
  %4693 = vmatprep.subr.mxu0 0.0
  %4694 = vmatpush1.msra.mxu0 0.0
  %4695 = vmatprep.subr.mxu0 0.0
  %4696 = vmatpush1.msra.mxu0 0.0
  %4697 = vmatprep.subr.mxu0 0.0
  %4698 = vmatpush1.msra.mxu0 0.0
  %4699 = vmatprep.subr.mxu0 0.0
  %4700 = vmatpush1.msra.mxu0 0.0
  %4701 = vmatprep.subr.mxu0 0.0
  %4702 = vmatpush1.msra.mxu0 0.0
  %4703 = vmatprep.subr.mxu0 0.0
  %4704 = vmatpush1.msra.mxu0 0.0
  %4705 = vmatprep.subr.mxu0 0.0
  %4706 = vmatpush1.msra.mxu0 0.0
  %4707 = vmatprep.subr.mxu0 0.0
  %4708 = vmatpush1.msra.mxu0 0.0
  %4709 = vmatprep.subr.mxu0 0.0
  %4710 = vmatpush1.msra.mxu0 0.0
  %4711 = vmatprep.subr.mxu0 0.0
  %4712 = vmatpush1.msra.mxu0 0.0
  %4713 = vmatprep.subr.mxu0 0.0
  %4714 = vmatpush1.msra.mxu0 0.0
  %4715 = vmatprep.subr.mxu0 0.0
  %4716 = vmatpush1.msra.mxu0 0.0
  %4717 = vmatprep.mubr.f32.mxu0 0.0
  %4718 = vmatmul.mubr.f32.gmra.mrb[0].mxu0 %v4648
  %v4719 = vpop.f32.mrb[0].mxu0
  %v4720 = vadd.f32 %v4552, %v4719
  %v4721 = vpop.f32.mrb[0].mxu0
  %4722 = vdwg.mxu0
  %v4723 = vmax.f32 %v4720, 0.0
  %v4724 = vld [vmem:[%s6] sm:$0x3]
  %v4725 = vld [vmem:[%s7] sm:$0x3]
  %4727 = vset.pattern.permute.xlu0 0
  %4728 = vperm.xlu0 %4727, %v4725
  %v4729 = vpop.permute.xlu0 %4728
  %vm4731 = vcmask 64512
  %v4733 = vsel %vm4731, %v4724, 0
  %4735 = vmatprep.subr.mxu0 0.0
  %4736 = vmatpush1.msra.mxu0 %v4723
  %4737 = vmatprep.subr.mxu0 0.0
  %4738 = vmatpush1.msra.mxu0 0.0
  %4739 = vmatprep.subr.mxu0 0.0
  %4740 = vmatpush1.msra.mxu0 0.0
  %4741 = vmatprep.subr.mxu0 0.0
  %4742 = vmatpush1.msra.mxu0 0.0
  %4743 = vmatprep.subr.mxu0 0.0
  %4744 = vmatpush1.msra.mxu0 0.0
  %4745 = vmatprep.subr.mxu0 0.0
  %4746 = vmatpush1.msra.mxu0 0.0
  %4747 = vmatprep.subr.mxu0 0.0
  %4748 = vmatpush1.msra.mxu0 0.0
  %4749 = vmatprep.subr.mxu0 0.0
  %4750 = vmatpush1.msra.mxu0 0.0
  %4751 = vmatprep.subr.mxu0 0.0
  %4752 = vmatpush1.msra.mxu0 0.0
  %4753 = vmatprep.subr.mxu0 0.0
  %4754 = vmatpush1.msra.mxu0 0.0
  %4755 = vmatprep.subr.mxu0 0.0
  %4756 = vmatpush1.msra.mxu0 0.0
  %4757 = vmatprep.subr.mxu0 0.0
  %4758 = vmatpush1.msra.mxu0 0.0
  %4759 = vmatprep.subr.mxu0 0.0
  %4760 = vmatpush1.msra.mxu0 0.0
  %4761 = vmatprep.subr.mxu0 0.0
  %4762 = vmatpush1.msra.mxu0 0.0
  %4763 = vmatprep.subr.mxu0 0.0
  %4764 = vmatpush1.msra.mxu0 0.0
  %4765 = vmatprep.subr.mxu0 0.0
  %4766 = vmatpush1.msra.mxu0 0.0
  %4767 = vmatprep.subr.mxu0 0.0
  %4768 = vmatpush1.msra.mxu0 0.0
  %4769 = vmatprep.subr.mxu0 0.0
  %4770 = vmatpush1.msra.mxu0 0.0
  %4771 = vmatprep.subr.mxu0 0.0
  %4772 = vmatpush1.msra.mxu0 0.0
  %4773 = vmatprep.subr.mxu0 0.0
  %4774 = vmatpush1.msra.mxu0 0.0
  %4775 = vmatprep.subr.mxu0 0.0
  %4776 = vmatpush1.msra.mxu0 0.0
  %4777 = vmatprep.subr.mxu0 0.0
  %4778 = vmatpush1.msra.mxu0 0.0
  %4779 = vmatprep.subr.mxu0 0.0
  %4780 = vmatpush1.msra.mxu0 0.0
  %4781 = vmatprep.subr.mxu0 0.0
  %4782 = vmatpush1.msra.mxu0 0.0
  %4783 = vmatprep.subr.mxu0 0.0
  %4784 = vmatpush1.msra.mxu0 0.0
  %4785 = vmatprep.subr.mxu0 0.0
  %4786 = vmatpush1.msra.mxu0 0.0
  %4787 = vmatprep.subr.mxu0 0.0
  %4788 = vmatpush1.msra.mxu0 0.0
  %4789 = vmatprep.subr.mxu0 0.0
  %4790 = vmatpush1.msra.mxu0 0.0
  %4791 = vmatprep.subr.mxu0 0.0
  %4792 = vmatpush1.msra.mxu0 0.0
  %4793 = vmatprep.subr.mxu0 0.0
  %4794 = vmatpush1.msra.mxu0 0.0
  %4795 = vmatprep.subr.mxu0 0.0
  %4796 = vmatpush1.msra.mxu0 0.0
  %4797 = vmatprep.subr.mxu0 0.0
  %4798 = vmatpush1.msra.mxu0 0.0
  %4799 = vmatprep.mubr.f32.mxu0 0.0
  %4800 = vmatmul.mubr.f32.gmra.mrb[0].mxu0 %v4733
  %v4801 = vpop.f32.mrb[0].mxu0
  %v4802 = vadd.f32 %v4729, %v4801
  %v4803 = vpop.f32.mrb[0].mxu0
  %4804 = vdwg.mxu0
  %vm4805 = vcmask 9216
  %4806 = vst.msk [vmem:[%s8] sm:$0x3] %vm4805, %v4802
  // Predicated region
  $region34: #{clsa_entropy_forward.3} parent=0 // pred_check
    _
  $region35: #{clsa_entropy_forward.3} parent=0 // pred_check_branch
    %4808 = sbr.rel (0) target = $region37
  $region36: #{clsa_entropy_forward.3} parent=0 // pred_region
    _
  $region37: #{clsa_entropy_forward.3} parent=0 // pred_fallthru
    _
  // Predicated region
  $region38: #{clsa_entropy_forward.3} parent=0 // pred_check
    _
  $region39: #{clsa_entropy_forward.3} parent=0 // pred_check_branch
    %4810 = sbr.rel (0) target = $region41
  $region40: #{clsa_entropy_forward.3} parent=0 // pred_region
    _
  $region41: #{clsa_entropy_forward.3} parent=0 // pred_fallthru
    _

</llo_original>
